<compile_context>
chip_gen: v7x
topology: tpu7x:2x2x1
jax: 0.10.0
libtpu: 0.0.40
codegen_flags: <defaults>
</compile_context>

<pallas_src>
import functools

import numpy as np
import jax
import jax.numpy as jnp
from jax.experimental import pallas as pl
from jax.experimental.pallas import tpu as pltpu


# ----------------------------------------------------------------------------- helpers

def _round_up(x, m):
    return ((x + m - 1) // m) * m


def _pad2(x, rows, cols):
    r, c = x.shape
    if r == rows and c == cols:
        return x
    return jnp.pad(x, ((0, rows - r), (0, cols - c)))


# ----------------------------------------------------------------------------- matmul kernel

def _matmul_kernel(a_ref, b_ref, bias_ref, o_ref, acc_ref, *, apply_relu):
    @pl.when(pl.program_id(2) == 0)
    def _():
        acc_ref[...] = jnp.zeros_like(acc_ref)

    acc_ref[...] += jnp.dot(a_ref[...], b_ref[...],
                            preferred_element_type=jnp.float32)

    @pl.when(pl.program_id(2) == pl.num_programs(2) - 1)
    def _():
        out = acc_ref[...] + bias_ref[...]
        if apply_relu:
            out = jnp.maximum(out, 0.0)
        o_ref[...] = out.astype(o_ref.dtype)


def pallas_matmul(a, b, bias=None, relu=False, out_dtype=jnp.bfloat16):
    """(M,K) @ (K,N) + bias (+ReLU) as a tiled, pipelined Pallas GEMM (bf16 in, f32 acc)."""
    M, K = a.shape
    K2, N = b.shape
    assert K == K2
    a = a.astype(jnp.bfloat16)
    b = b.astype(jnp.bfloat16)
    if bias is None:
        bias = jnp.zeros((1, N), jnp.float32)
    else:
        bias = bias.reshape(1, N).astype(jnp.float32)

    # Tile sizes: 128-aligned everywhere (safe on v5e); 256-wide N tiles when N is large
    # (better MXU width on v6e/v7x).  tm multiple of 16 keeps bf16 blocks well-tiled.
    tn = 256 if N >= 256 else 128
    tk = min(512, _round_up(K, 128))
    tm = min(256, _round_up(M, 16))
    Mp, Kp, Np = _round_up(M, tm), _round_up(K, tk), _round_up(N, tn)

    a_p = _pad2(a, Mp, Kp)
    b_p = _pad2(b, Kp, Np)
    bias_p = _pad2(bias, 1, Np)
    grid = (Mp // tm, Np // tn, Kp // tk)

    out = pl.pallas_call(
        functools.partial(_matmul_kernel, apply_relu=relu),
        out_shape=jax.ShapeDtypeStruct((Mp, Np), out_dtype),
        grid=grid,
        in_specs=[
            pl.BlockSpec((tm, tk), lambda i, j, k: (i, k)),
            pl.BlockSpec((tk, tn), lambda i, j, k: (k, j)),
            pl.BlockSpec((1, tn), lambda i, j, k: (0, j)),
        ],
        out_specs=pl.BlockSpec((tm, tn), lambda i, j, k: (i, j)),
        scratch_shapes=[pltpu.VMEM((tm, tn), jnp.float32)],
        compiler_params=pltpu.CompilerParams(
            dimension_semantics=("parallel", "parallel", "arbitrary"),
            vmem_limit_bytes=32 * 1024 * 1024,
        ),
    )(a_p, b_p, bias_p)

    if (Mp, Np) != (M, N):
        out = out[:M, :N]
    return out


# ----------------------------------------------------------------------------- instance norm

def _instance_norm_kernel(x_ref, o_ref, *, apply_relu, eps):
    x = x_ref[0].astype(jnp.float32)                 # (H*W, 128) per (batch, chan-tile)
    mean = jnp.mean(x, axis=0, keepdims=True)
    xc = x - mean
    var = jnp.mean(xc * xc, axis=0, keepdims=True)   # biased variance (PyTorch InstanceNorm)
    y = xc * jax.lax.rsqrt(var + eps)
    if apply_relu:
        y = jnp.maximum(y, 0.0)
    o_ref[0] = y.astype(o_ref.dtype)


def pallas_instance_norm(x, relu=False, eps=1e-5):
    """nn.InstanceNorm2d(affine=False) over NHWC, fused with ReLU, tiled over (N, C/128)."""
    N, H, W, C = x.shape
    Cp = _round_up(C, 128)
    xr = x.reshape(N, H * W, C)
    if Cp != C:
        xr = jnp.pad(xr, ((0, 0), (0, 0), (0, Cp - C)))

    out = pl.pallas_call(
        functools.partial(_instance_norm_kernel, apply_relu=relu, eps=eps),
        out_shape=jax.ShapeDtypeStruct((N, H * W, Cp), x.dtype),
        grid=(N, Cp // 128),
        in_specs=[pl.BlockSpec((1, H * W, 128), lambda n, c: (n, 0, c))],
        out_specs=pl.BlockSpec((1, H * W, 128), lambda n, c: (n, 0, c)),
        compiler_params=pltpu.CompilerParams(
            dimension_semantics=("parallel", "parallel"),
            vmem_limit_bytes=32 * 1024 * 1024,
        ),
    )(xr)

    if Cp != C:
        out = out[:, :, :C]
    return out.reshape(N, H, W, C)


# ----------------------------------------------------------------------------- conv / resize glue

def _im2col_nhwc(x, kh, kw, stride, padding, dilation):
    """Patch extraction in NHWC (pure data movement, no MACs)."""
    N, H, W, C = x.shape
    xp = jnp.pad(x, ((0, 0), (padding, padding), (padding, padding), (0, 0)))
    Hp, Wp = H + 2 * padding, W + 2 * padding
    Hout = (Hp - dilation * (kh - 1) - 1) // stride + 1
    Wout = (Wp - dilation * (kw - 1) - 1) // stride + 1
    cols = []
    for i in range(kh):
        for j in range(kw):
            cols.append(
                xp[:,
                   i * dilation: i * dilation + (Hout - 1) * stride + 1: stride,
                   j * dilation: j * dilation + (Wout - 1) * stride + 1: stride,
                   :])
    patches = jnp.stack(cols, axis=3)                       # (N, Hout, Wout, kh*kw, C)
    patches = patches.reshape(N * Hout * Wout, kh * kw * C)
    return patches, Hout, Wout


def conv2d(x, w, b=None, stride=1, padding=0, dilation=1, relu=False,
           out_dtype=jnp.bfloat16):
    """PyTorch-semantics Conv2d (NHWC activations, OIHW weights) -> tiled Pallas GEMM."""
    N, H, W, C = x.shape
    Cout, Cin, kh, kw = w.shape
    assert Cin == C
    if kh == 1 and kw == 1 and stride == 1 and padding == 0 and dilation == 1:
        patches, Hout, Wout = x.reshape(N * H * W, C), H, W
    else:
        patches, Hout, Wout = _im2col_nhwc(x, kh, kw, stride, padding, dilation)
    wmat = jnp.transpose(w, (2, 3, 1, 0)).reshape(kh * kw * Cin, Cout)
    out = pallas_matmul(patches, wmat, b, relu=relu, out_dtype=out_dtype)
    return out.reshape(N, Hout, Wout, Cout)                 # NHWC, no transpose needed


def conv_in_relu(x, w, stride=1, padding=0, dilation=1):
    """Conv (bias=False) -> InstanceNorm2d -> ReLU."""
    y = conv2d(x, w, None, stride=stride, padding=padding, dilation=dilation, relu=False)
    return pallas_instance_norm(y, relu=True)


def _bilinear_matrix(out_size, in_size):
    """F.interpolate(mode='bilinear', align_corners=True) interpolation matrix."""
    A = np.zeros((out_size, in_size), np.float32)
    if out_size == 1:
        A[0, 0] = 1.0
        return jnp.asarray(A)
    scale = (in_size - 1) / (out_size - 1)
    for i in range(out_size):
        src = i * scale
        i0 = int(np.floor(src))
        i1 = min(i0 + 1, in_size - 1)
        frac = src - i0
        A[i, i0] += 1.0 - frac
        A[i, i1] += frac
    return jnp.asarray(A)


def bilinear_resize(x, Hout, Wout, out_dtype=jnp.bfloat16):
    """Separable bilinear (align_corners=True) resize on NHWC; both GEMMs run in Pallas.

    Both passes are left-multiplications by the interp matrices with only leading-dim
    permutations in XLA (channels stay the minor dim), keeping GEMM outputs lane-dense.
    """
    N, Hin, Win, C = x.shape
    Ah = _bilinear_matrix(Hout, Hin)
    Aw = _bilinear_matrix(Wout, Win)
    # H pass: contract Hin
    xt = jnp.transpose(x, (1, 0, 2, 3)).reshape(Hin, N * Win * C)
    y = pallas_matmul(Ah, xt, out_dtype=jnp.bfloat16)        # (Hout, N*Win*C)
    y = y.reshape(Hout, N, Win, C)
    # W pass: contract Win
    yt = jnp.transpose(y, (2, 1, 0, 3)).reshape(Win, N * Hout * C)
    z = pallas_matmul(Aw, yt, out_dtype=out_dtype)           # (Wout, N*Hout*C)
    z = z.reshape(Wout, N, Hout, C).transpose(1, 2, 0, 3)    # (N, Hout, Wout, C)
    return z


# ----------------------------------------------------------------------------- model

def _make_conv(key, cout, cin, k, with_bias=False):
    kw_, kb = jax.random.split(key)
    fan_in = cin * k * k
    w = jax.random.normal(kw_, (cout, cin, k, k), jnp.float32) / np.sqrt(fan_in)
    b = (0.01 * jax.random.normal(kb, (cout,), jnp.float32)) if with_bias else None
    return {"w": w, "b": b}


def init_params(key, num_classes=21):
    keys = jax.random.split(key, 16)
    p = {}
    # backbone (ResNet-style, output_stride=16: low-level at /4, high-level at /16)
    p["b1"] = _make_conv(keys[0], 16, 3, 3)     # /2
    p["b2"] = _make_conv(keys[1], 24, 16, 3)    # /4  -> low_level_feat
    p["b3"] = _make_conv(keys[2], 32, 24, 3)    # /8
    p["b4"] = _make_conv(keys[3], 48, 32, 3)    # /16 -> x
    # ASPP (rates 6, 12, 18 for output_stride=16) + image pooling
    p["aspp0"] = _make_conv(keys[4], 32, 48, 1)
    p["aspp1"] = _make_conv(keys[5], 32, 48, 3)
    p["aspp2"] = _make_conv(keys[6], 32, 48, 3)
    p["aspp3"] = _make_conv(keys[7], 32, 48, 3)
    p["aspp_pool"] = _make_conv(keys[8], 32, 48, 1, with_bias=True)
    p["aspp_proj"] = _make_conv(keys[9], 32, 160, 1)
    # decoder
    p["dec_low"] = _make_conv(keys[10], 16, 24, 1)
    p["dec_cad"] = _make_conv(keys[11], 8, 3, 3, with_bias=True)   # CAD branch -> /4
    p["dec1"] = _make_conv(keys[12], 32, 56, 3)
    p["dec2"] = _make_conv(keys[13], 32, 32, 3)
    p["cls"] = _make_conv(keys[14], num_classes, 32, 1, with_bias=True)
    return p


def deeplab_forward(params, x_nchw, x_cad_nchw):
    """Equivalent of DeepLab.forward(input, input_CAD) for the 'resnet' (non-Gen) branch."""
    p = params
    N, _, H, W = x_nchw.shape
    # NCHW (PyTorch) -> NHWC (lane-dense channels) + bf16 activations
    x = jnp.transpose(x_nchw, (0, 2, 3, 1)).astype(jnp.bfloat16)
    x_cad = jnp.transpose(x_cad_nchw, (0, 2, 3, 1)).astype(jnp.bfloat16)

    # ---- backbone: returns high-level x (/16) and low_level_feat (/4)
    f = conv_in_relu(x, p["b1"]["w"], stride=2, padding=1)
    low = conv_in_relu(f, p["b2"]["w"], stride=2, padding=1)
    f = conv_in_relu(low, p["b3"]["w"], stride=2, padding=1)
    f = conv_in_relu(f, p["b4"]["w"], stride=2, padding=1)

    # ---- ASPP
    a0 = conv_in_relu(f, p["aspp0"]["w"])
    a1 = conv_in_relu(f, p["aspp1"]["w"], padding=6, dilation=6)
    a2 = conv_in_relu(f, p["aspp2"]["w"], padding=12, dilation=12)
    a3 = conv_in_relu(f, p["aspp3"]["w"], padding=18, dilation=18)
    # image pooling branch: global average (plain jnp.mean) -> 1x1 conv -> ReLU -> upsample
    gp = jnp.mean(f.astype(jnp.float32), axis=(1, 2), keepdims=True)   # (N,1,1,C)
    a4 = conv2d(gp, p["aspp_pool"]["w"], p["aspp_pool"]["b"], relu=True)
    a4 = jnp.broadcast_to(a4, a0.shape)
    xcat = jnp.concatenate([a0, a1, a2, a3, a4], axis=-1)
    xa = conv_in_relu(xcat, p["aspp_proj"]["w"])
    # TODO(synk): ASPP Dropout is a no-op at inference and is omitted.

    # ---- decoder (x, low_level_feat, input_CAD)
    low_r = conv_in_relu(low, p["dec_low"]["w"])
    xd = bilinear_resize(xa, low_r.shape[1], low_r.shape[2], out_dtype=jnp.bfloat16)
    cad = conv2d(x_cad, p["dec_cad"]["w"], p["dec_cad"]["b"], stride=4, padding=1, relu=True)
    # TODO(synk): exact CAD-branch architecture of the reference decoder is not in the prompt;
    #             a stride-4 conv to match the low-level resolution is used here.
    xd = jnp.concatenate([xd, low_r, cad], axis=-1)
    xd = conv_in_relu(xd, p["dec1"]["w"], padding=1)
    xd = conv_in_relu(xd, p["dec2"]["w"], padding=1)
    logits = conv2d(xd, p["cls"]["w"], p["cls"]["b"])

    # ---- F.interpolate(x, size=input.size()[2:], mode='bilinear', align_corners=True)
    out = bilinear_resize(logits, H, W, out_dtype=jnp.float32)
    return jnp.transpose(out, (0, 3, 1, 2))                  # back to NCHW


# ----------------------------------------------------------------------------- main

if __name__ == "__main__":
    key = jax.random.PRNGKey(0)
    kp, kx, kc = jax.random.split(key, 3)

    num_classes = 21
    params = init_params(kp, num_classes=num_classes)

    # small shapes consistent with DeepLab: RGB image + CAD image, NCHW
    x = jax.random.normal(kx, (2, 3, 32, 32), jnp.float32)
    x_cad = jax.random.normal(kc, (2, 3, 32, 32), jnp.float32)

    fwd = jax.jit(deeplab_forward)
    out = fwd(params, x, x_cad)
    out = jax.block_until_ready(out)

    assert out.shape == (2, num_classes, 32, 32), out.shape
    assert out.dtype == jnp.float32
    assert bool(jnp.all(jnp.isfinite(out)))
    print("KERNEL_OK")
</pallas_src>

<mosaic_0001>
module attributes {stable_mosaic.version = 11 : i64} {
  func.func @_matmul_kernel(%arg0: i32, %arg1: i32, %arg2: i32, %arg3: memref<256x128xbf16, #tpu.memory_space<vmem>>, %arg4: memref<128x128xbf16, #tpu.memory_space<vmem>>, %arg5: memref<1x128xf32, #tpu.memory_space<vmem>>, %arg6: memref<256x128xbf16, #tpu.memory_space<vmem>>, %arg7: memref<256x128xf32, #tpu.memory_space<vmem>>) attributes {dimension_semantics = [#tpu.dimension_semantics<parallel>, #tpu.dimension_semantics<parallel>, #tpu.dimension_semantics<arbitrary>], iteration_bounds = array<i64: 2, 1, 1>, scalar_prefetch = 0 : i64, scratch_operands = 1 : i64, tpu.core_type = #tpu.core_type<tc>, window_params = [{transform_indices = @transform_0, window_bounds = array<i64: 256, 128>}, {transform_indices = @transform_1, window_bounds = array<i64: 128, 128>}, {transform_indices = @transform_2, window_bounds = array<i64: 1, 128>}, {transform_indices = @transform_3, window_bounds = array<i64: 256, 128>}]} {
    %c0_i32 = arith.constant 0 : i32
    %0 = arith.cmpi eq, %arg2, %c0_i32 : i32
    %1 = arith.extui %0 : i1 to i32
    %c0_i32_0 = arith.constant 0 : i32
    %2 = arith.cmpi ne, %1, %c0_i32_0 : i32
    scf.if %2 {
      %cst_10 = arith.constant 0.000000e+00 : f32
      %12 = vector.broadcast %cst_10 : f32 to vector<256x128xf32>
      %c0_11 = arith.constant 0 : index
      %c0_12 = arith.constant 0 : index
      %13 = vector.load %arg7[%c0_11, %c0_12] : memref<256x128xf32, #tpu.memory_space<vmem>>, vector<256x128xf32>
      tpu.vector_store %arg7[%c0_11, %c0_12], %12 {strides = array<i32>} : memref<256x128xf32, #tpu.memory_space<vmem>>, vector<256x128xf32>,
    } else {
    }
    %c0 = arith.constant 0 : index
    %c0_1 = arith.constant 0 : index
    %3 = vector.load %arg7[%c0, %c0_1] : memref<256x128xf32, #tpu.memory_space<vmem>>, vector<256x128xf32>
    %c0_2 = arith.constant 0 : index
    %c0_3 = arith.constant 0 : index
    %4 = vector.load %arg3[%c0_2, %c0_3] : memref<256x128xbf16, #tpu.memory_space<vmem>>, vector<256x128xbf16>
    %c0_4 = arith.constant 0 : index
    %c0_5 = arith.constant 0 : index
    %5 = vector.load %arg4[%c0_4, %c0_5] : memref<128x128xbf16, #tpu.memory_space<vmem>>, vector<128x128xbf16>
    %cst = arith.constant dense<0.000000e+00> : vector<256x128xf32>
    %6 = tpu.matmul %4, %5, %cst {dimension_numbers = #tpu.dot_dimension_numbers<[1], [0], [0], [1], [0, 0, 1, 1], [], []>} : vector<256x128xbf16>, vector<128x128xbf16>, vector<256x128xf32> -> vector<256x128xf32>
    %7 = arith.addf %3, %6 : vector<256x128xf32>
    %c0_6 = arith.constant 0 : index
    %c0_7 = arith.constant 0 : index
    %8 = vector.load %arg7[%c0_6, %c0_7] : memref<256x128xf32, #tpu.memory_space<vmem>>, vector<256x128xf32>
    tpu.vector_store %arg7[%c0_6, %c0_7], %7 {strides = array<i32>} : memref<256x128xf32, #tpu.memory_space<vmem>>, vector<256x128xf32>,
    %c0_i32_8 = arith.constant 0 : i32
    %9 = arith.cmpi eq, %arg2, %c0_i32_8 : i32
    %10 = arith.extui %9 : i1 to i32
    %c0_i32_9 = arith.constant 0 : i32
    %11 = arith.cmpi ne, %10, %c0_i32_9 : i32
    scf.if %11 {
      %c0_10 = arith.constant 0 : index
      %c0_11 = arith.constant 0 : index
      %12 = vector.load %arg7[%c0_10, %c0_11] : memref<256x128xf32, #tpu.memory_space<vmem>>, vector<256x128xf32>
      %c0_12 = arith.constant 0 : index
      %c0_13 = arith.constant 0 : index
      %13 = vector.load %arg5[%c0_12, %c0_13] : memref<1x128xf32, #tpu.memory_space<vmem>>, vector<1x128xf32>
      %14 = vector.broadcast %13 : vector<1x128xf32> to vector<256x128xf32>
      %15 = arith.addf %12, %14 : vector<256x128xf32>
      %16 = arith.truncf %15 : vector<256x128xf32> to vector<256x128xbf16>
      %c0_14 = arith.constant 0 : index
      %c0_15 = arith.constant 0 : index
      %17 = vector.load %arg6[%c0_14, %c0_15] : memref<256x128xbf16, #tpu.memory_space<vmem>>, vector<256x128xbf16>
      tpu.vector_store %arg6[%c0_14, %c0_15], %16 {strides = array<i32>} : memref<256x128xbf16, #tpu.memory_space<vmem>>, vector<256x128xbf16>,
    } else {
    }
    return
  }
  func.func @transform_0(%arg0: i32, %arg1: i32, %arg2: i32) -> (i32, i32) {
    %c0_i32 = arith.constant 0 : i32
    return %arg0, %arg2 : i32, i32
  }
  func.func @transform_1(%arg0: i32, %arg1: i32, %arg2: i32) -> (i32, i32) {
    %c0_i32 = arith.constant 0 : i32
    return %arg2, %arg1 : i32, i32
  }
  func.func @transform_2(%arg0: i32, %arg1: i32, %arg2: i32) -> (i32, i32) {
    %c0_i32 = arith.constant 0 : i32
    %c0_i32_0 = arith.constant 0 : i32
    return %c0_i32, %arg1 : i32, i32
  }
  func.func @transform_3(%arg0: i32, %arg1: i32, %arg2: i32) -> (i32, i32) {
    %c0_i32 = arith.constant 0 : i32
    return %arg0, %arg1 : i32, i32
  }
}

module attributes {stable_mosaic.version = 11 : i64} {
  func.func @_instance_norm_kernel(%arg0: i32, %arg1: i32, %arg2: memref<1x256x128xbf16, #tpu.memory_space<vmem>>, %arg3: memref<1x256x128xbf16, #tpu.memory_space<vmem>>) attributes {dimension_semantics = [#tpu.dimension_semantics<parallel>, #tpu.dimension_semantics<parallel>], iteration_bounds = array<i64: 2, 1>, scalar_prefetch = 0 : i64, scratch_operands = 0 : i64, tpu.core_type = #tpu.core_type<tc>, window_params = [{transform_indices = @transform_0, window_bounds = array<i64: 1, 256, 128>}, {transform_indices = @transform_1, window_bounds = array<i64: 1, 256, 128>}]} {
    %c0 = arith.constant 0 : index
    %c0_0 = arith.constant 0 : index
    %c0_1 = arith.constant 0 : index
    %0 = vector.load %arg2[%c0, %c0_0, %c0_1] : memref<1x256x128xbf16, #tpu.memory_space<vmem>>, vector<1x256x128xbf16>
    %1 = vector.shape_cast %0 : vector<1x256x128xbf16> to vector<256x128xbf16>
    %2 = arith.extf %1 : vector<256x128xbf16> to vector<256x128xf32>
    %cst = arith.constant dense<0.000000e+00> : vector<128xf32>
    %3 = vector.multi_reduction <add>, %2, %cst [0] : vector<256x128xf32> to vector<128xf32>
    %4 = vector.shape_cast %3 : vector<128xf32> to vector<1x128xf32>
    %cst_2 = arith.constant 2.560000e+02 : f32
    %5 = vector.broadcast %cst_2 : f32 to vector<1x128xf32>
    %6 = arith.divf %4, %5 : vector<1x128xf32>
    %7 = vector.broadcast %6 : vector<1x128xf32> to vector<256x128xf32>
    %8 = arith.subf %2, %7 : vector<256x128xf32>
    %9 = arith.mulf %8, %8 : vector<256x128xf32>
    %cst_3 = arith.constant dense<0.000000e+00> : vector<128xf32>
    %10 = vector.multi_reduction <add>, %9, %cst_3 [0] : vector<256x128xf32> to vector<128xf32>
    %11 = vector.shape_cast %10 : vector<128xf32> to vector<1x128xf32>
    %cst_4 = arith.constant 2.560000e+02 : f32
    %12 = vector.broadcast %cst_4 : f32 to vector<1x128xf32>
    %13 = arith.divf %11, %12 : vector<1x128xf32>
    %cst_5 = arith.constant 9.99999974E-6 : f32
    %14 = vector.broadcast %cst_5 : f32 to vector<1x128xf32>
    %15 = arith.addf %13, %14 : vector<1x128xf32>
    %16 = math.rsqrt %15 : vector<1x128xf32>
    %17 = vector.broadcast %16 : vector<1x128xf32> to vector<256x128xf32>
    %18 = arith.mulf %8, %17 : vector<256x128xf32>
    %cst_6 = arith.constant 0.000000e+00 : f32
    %19 = vector.broadcast %cst_6 : f32 to vector<256x128xf32>
    %20 = arith.maximumf %18, %19 : vector<256x128xf32>
    %21 = arith.truncf %20 : vector<256x128xf32> to vector<256x128xbf16>
    %c0_7 = arith.constant 0 : index
    %c0_8 = arith.constant 0 : index
    %c0_9 = arith.constant 0 : index
    %22 = vector.load %arg3[%c0_7, %c0_8, %c0_9] : memref<1x256x128xbf16, #tpu.memory_space<vmem>>, vector<1x256x128xbf16>
    %23 = vector.shape_cast %22 : vector<1x256x128xbf16> to vector<256x128xbf16>
    %24 = vector.shape_cast %21 : vector<256x128xbf16> to vector<1x256x128xbf16>
    tpu.vector_store %arg3[%c0_7, %c0_8, %c0_9], %24 {strides = array<i32>} : memref<1x256x128xbf16, #tpu.memory_space<vmem>>, vector<1x256x128xbf16>,
    return
  }
  func.func @transform_0(%arg0: i32, %arg1: i32) -> (i32, i32, i32) {
    %c0_i32 = arith.constant 0 : i32
    %c0_i32_0 = arith.constant 0 : i32
    return %arg0, %c0_i32, %arg1 : i32, i32, i32
  }
  func.func @transform_1(%arg0: i32, %arg1: i32) -> (i32, i32, i32) {
    %c0_i32 = arith.constant 0 : i32
    %c0_i32_0 = arith.constant 0 : i32
    return %arg0, %c0_i32, %arg1 : i32, i32, i32
  }
}

module attributes {stable_mosaic.version = 11 : i64} {
  func.func @_instance_norm_kernel(%arg0: i32, %arg1: i32, %arg2: memref<1x64x128xbf16, #tpu.memory_space<vmem>>, %arg3: memref<1x64x128xbf16, #tpu.memory_space<vmem>>) attributes {dimension_semantics = [#tpu.dimension_semantics<parallel>, #tpu.dimension_semantics<parallel>], iteration_bounds = array<i64: 2, 1>, scalar_prefetch = 0 : i64, scratch_operands = 0 : i64, tpu.core_type = #tpu.core_type<tc>, window_params = [{transform_indices = @transform_0, window_bounds = array<i64: 1, 64, 128>}, {transform_indices = @transform_1, window_bounds = array<i64: 1, 64, 128>}]} {
    %c0 = arith.constant 0 : index
    %c0_0 = arith.constant 0 : index
    %c0_1 = arith.constant 0 : index
    %0 = vector.load %arg2[%c0, %c0_0, %c0_1] : memref<1x64x128xbf16, #tpu.memory_space<vmem>>, vector<1x64x128xbf16>
    %1 = vector.shape_cast %0 : vector<1x64x128xbf16> to vector<64x128xbf16>
    %2 = arith.extf %1 : vector<64x128xbf16> to vector<64x128xf32>
    %cst = arith.constant dense<0.000000e+00> : vector<128xf32>
    %3 = vector.multi_reduction <add>, %2, %cst [0] : vector<64x128xf32> to vector<128xf32>
    %4 = vector.shape_cast %3 : vector<128xf32> to vector<1x128xf32>
    %cst_2 = arith.constant 6.400000e+01 : f32
    %5 = vector.broadcast %cst_2 : f32 to vector<1x128xf32>
    %6 = arith.divf %4, %5 : vector<1x128xf32>
    %7 = vector.broadcast %6 : vector<1x128xf32> to vector<64x128xf32>
    %8 = arith.subf %2, %7 : vector<64x128xf32>
    %9 = arith.mulf %8, %8 : vector<64x128xf32>
    %cst_3 = arith.constant dense<0.000000e+00> : vector<128xf32>
    %10 = vector.multi_reduction <add>, %9, %cst_3 [0] : vector<64x128xf32> to vector<128xf32>
    %11 = vector.shape_cast %10 : vector<128xf32> to vector<1x128xf32>
    %cst_4 = arith.constant 6.400000e+01 : f32
    %12 = vector.broadcast %cst_4 : f32 to vector<1x128xf32>
    %13 = arith.divf %11, %12 : vector<1x128xf32>
    %cst_5 = arith.constant 9.99999974E-6 : f32
    %14 = vector.broadcast %cst_5 : f32 to vector<1x128xf32>
    %15 = arith.addf %13, %14 : vector<1x128xf32>
    %16 = math.rsqrt %15 : vector<1x128xf32>
    %17 = vector.broadcast %16 : vector<1x128xf32> to vector<64x128xf32>
    %18 = arith.mulf %8, %17 : vector<64x128xf32>
    %cst_6 = arith.constant 0.000000e+00 : f32
    %19 = vector.broadcast %cst_6 : f32 to vector<64x128xf32>
    %20 = arith.maximumf %18, %19 : vector<64x128xf32>
    %21 = arith.truncf %20 : vector<64x128xf32> to vector<64x128xbf16>
    %c0_7 = arith.constant 0 : index
    %c0_8 = arith.constant 0 : index
    %c0_9 = arith.constant 0 : index
    %22 = vector.load %arg3[%c0_7, %c0_8, %c0_9] : memref<1x64x128xbf16, #tpu.memory_space<vmem>>, vector<1x64x128xbf16>
    %23 = vector.shape_cast %22 : vector<1x64x128xbf16> to vector<64x128xbf16>
    %24 = vector.shape_cast %21 : vector<64x128xbf16> to vector<1x64x128xbf16>
    tpu.vector_store %arg3[%c0_7, %c0_8, %c0_9], %24 {strides = array<i32>} : memref<1x64x128xbf16, #tpu.memory_space<vmem>>, vector<1x64x128xbf16>,
    return
  }
  func.func @transform_0(%arg0: i32, %arg1: i32) -> (i32, i32, i32) {
    %c0_i32 = arith.constant 0 : i32
    %c0_i32_0 = arith.constant 0 : i32
    return %arg0, %c0_i32, %arg1 : i32, i32, i32
  }
  func.func @transform_1(%arg0: i32, %arg1: i32) -> (i32, i32, i32) {
    %c0_i32 = arith.constant 0 : i32
    %c0_i32_0 = arith.constant 0 : i32
    return %arg0, %c0_i32, %arg1 : i32, i32, i32
  }
}

module attributes {stable_mosaic.version = 11 : i64} {
  func.func @_matmul_kernel(%arg0: i32, %arg1: i32, %arg2: i32, %arg3: memref<128x256xbf16, #tpu.memory_space<vmem>>, %arg4: memref<256x128xbf16, #tpu.memory_space<vmem>>, %arg5: memref<1x128xf32, #tpu.memory_space<vmem>>, %arg6: memref<128x128xbf16, #tpu.memory_space<vmem>>, %arg7: memref<128x128xf32, #tpu.memory_space<vmem>>) attributes {dimension_semantics = [#tpu.dimension_semantics<parallel>, #tpu.dimension_semantics<parallel>, #tpu.dimension_semantics<arbitrary>], iteration_bounds = array<i64: 1, 1, 1>, scalar_prefetch = 0 : i64, scratch_operands = 1 : i64, tpu.core_type = #tpu.core_type<tc>, window_params = [{transform_indices = @transform_0, window_bounds = array<i64: 128, 256>}, {transform_indices = @transform_1, window_bounds = array<i64: 256, 128>}, {transform_indices = @transform_2, window_bounds = array<i64: 1, 128>}, {transform_indices = @transform_3, window_bounds = array<i64: 128, 128>}]} {
    %c0_i32 = arith.constant 0 : i32
    %0 = arith.cmpi eq, %arg2, %c0_i32 : i32
    %1 = arith.extui %0 : i1 to i32
    %c0_i32_0 = arith.constant 0 : i32
    %2 = arith.cmpi ne, %1, %c0_i32_0 : i32
    scf.if %2 {
      %cst_10 = arith.constant 0.000000e+00 : f32
      %12 = vector.broadcast %cst_10 : f32 to vector<128x128xf32>
      %c0_11 = arith.constant 0 : index
      %c0_12 = arith.constant 0 : index
      %13 = vector.load %arg7[%c0_11, %c0_12] : memref<128x128xf32, #tpu.memory_space<vmem>>, vector<128x128xf32>
      tpu.vector_store %arg7[%c0_11, %c0_12], %12 {strides = array<i32>} : memref<128x128xf32, #tpu.memory_space<vmem>>, vector<128x128xf32>,
    } else {
    }
    %c0 = arith.constant 0 : index
    %c0_1 = arith.constant 0 : index
    %3 = vector.load %arg7[%c0, %c0_1] : memref<128x128xf32, #tpu.memory_space<vmem>>, vector<128x128xf32>
    %c0_2 = arith.constant 0 : index
    %c0_3 = arith.constant 0 : index
    %4 = vector.load %arg3[%c0_2, %c0_3] : memref<128x256xbf16, #tpu.memory_space<vmem>>, vector<128x256xbf16>
    %c0_4 = arith.constant 0 : index
    %c0_5 = arith.constant 0 : index
    %5 = vector.load %arg4[%c0_4, %c0_5] : memref<256x128xbf16, #tpu.memory_space<vmem>>, vector<256x128xbf16>
    %cst = arith.constant dense<0.000000e+00> : vector<128x128xf32>
    %6 = tpu.matmul %4, %5, %cst {dimension_numbers = #tpu.dot_dimension_numbers<[1], [0], [0], [1], [0, 0, 1, 1], [], []>} : vector<128x256xbf16>, vector<256x128xbf16>, vector<128x128xf32> -> vector<128x128xf32>
    %7 = arith.addf %3, %6 : vector<128x128xf32>
    %c0_6 = arith.constant 0 : index
    %c0_7 = arith.constant 0 : index
    %8 = vector.load %arg7[%c0_6, %c0_7] : memref<128x128xf32, #tpu.memory_space<vmem>>, vector<128x128xf32>
    tpu.vector_store %arg7[%c0_6, %c0_7], %7 {strides = array<i32>} : memref<128x128xf32, #tpu.memory_space<vmem>>, vector<128x128xf32>,
    %c0_i32_8 = arith.constant 0 : i32
    %9 = arith.cmpi eq, %arg2, %c0_i32_8 : i32
    %10 = arith.extui %9 : i1 to i32
    %c0_i32_9 = arith.constant 0 : i32
    %11 = arith.cmpi ne, %10, %c0_i32_9 : i32
    scf.if %11 {
      %c0_10 = arith.constant 0 : index
      %c0_11 = arith.constant 0 : index
      %12 = vector.load %arg7[%c0_10, %c0_11] : memref<128x128xf32, #tpu.memory_space<vmem>>, vector<128x128xf32>
      %c0_12 = arith.constant 0 : index
      %c0_13 = arith.constant 0 : index
      %13 = vector.load %arg5[%c0_12, %c0_13] : memref<1x128xf32, #tpu.memory_space<vmem>>, vector<1x128xf32>
      %14 = vector.broadcast %13 : vector<1x128xf32> to vector<128x128xf32>
      %15 = arith.addf %12, %14 : vector<128x128xf32>
      %16 = arith.truncf %15 : vector<128x128xf32> to vector<128x128xbf16>
      %c0_14 = arith.constant 0 : index
      %c0_15 = arith.constant 0 : index
      %17 = vector.load %arg6[%c0_14, %c0_15] : memref<128x128xbf16, #tpu.memory_space<vmem>>, vector<128x128xbf16>
      tpu.vector_store %arg6[%c0_14, %c0_15], %16 {strides = array<i32>} : memref<128x128xbf16, #tpu.memory_space<vmem>>, vector<128x128xbf16>,
    } else {
    }
    return
  }
  func.func @transform_0(%arg0: i32, %arg1: i32, %arg2: i32) -> (i32, i32) {
    %c0_i32 = arith.constant 0 : i32
    return %arg0, %arg2 : i32, i32
  }
  func.func @transform_1(%arg0: i32, %arg1: i32, %arg2: i32) -> (i32, i32) {
    %c0_i32 = arith.constant 0 : i32
    return %arg2, %arg1 : i32, i32
  }
  func.func @transform_2(%arg0: i32, %arg1: i32, %arg2: i32) -> (i32, i32) {
    %c0_i32 = arith.constant 0 : i32
    %c0_i32_0 = arith.constant 0 : i32
    return %c0_i32, %arg1 : i32, i32
  }
  func.func @transform_3(%arg0: i32, %arg1: i32, %arg2: i32) -> (i32, i32) {
    %c0_i32 = arith.constant 0 : i32
    return %arg0, %arg1 : i32, i32
  }
}

module attributes {stable_mosaic.version = 11 : i64} {
  func.func @_matmul_kernel(%arg0: i32, %arg1: i32, %arg2: i32, %arg3: memref<32x256xbf16, #tpu.memory_space<vmem>>, %arg4: memref<256x128xbf16, #tpu.memory_space<vmem>>, %arg5: memref<1x128xf32, #tpu.memory_space<vmem>>, %arg6: memref<32x128xbf16, #tpu.memory_space<vmem>>, %arg7: memref<32x128xf32, #tpu.memory_space<vmem>>) attributes {dimension_semantics = [#tpu.dimension_semantics<parallel>, #tpu.dimension_semantics<parallel>, #tpu.dimension_semantics<arbitrary>], iteration_bounds = array<i64: 1, 1, 1>, scalar_prefetch = 0 : i64, scratch_operands = 1 : i64, tpu.core_type = #tpu.core_type<tc>, window_params = [{transform_indices = @transform_0, window_bounds = array<i64: 32, 256>}, {transform_indices = @transform_1, window_bounds = array<i64: 256, 128>}, {transform_indices = @transform_2, window_bounds = array<i64: 1, 128>}, {transform_indices = @transform_3, window_bounds = array<i64: 32, 128>}]} {
    %c0_i32 = arith.constant 0 : i32
    %0 = arith.cmpi eq, %arg2, %c0_i32 : i32
    %1 = arith.extui %0 : i1 to i32
    %c0_i32_0 = arith.constant 0 : i32
    %2 = arith.cmpi ne, %1, %c0_i32_0 : i32
    scf.if %2 {
      %cst_10 = arith.constant 0.000000e+00 : f32
      %12 = vector.broadcast %cst_10 : f32 to vector<32x128xf32>
      %c0_11 = arith.constant 0 : index
      %c0_12 = arith.constant 0 : index
      %13 = vector.load %arg7[%c0_11, %c0_12] : memref<32x128xf32, #tpu.memory_space<vmem>>, vector<32x128xf32>
      tpu.vector_store %arg7[%c0_11, %c0_12], %12 {strides = array<i32>} : memref<32x128xf32, #tpu.memory_space<vmem>>, vector<32x128xf32>,
    } else {
    }
    %c0 = arith.constant 0 : index
    %c0_1 = arith.constant 0 : index
    %3 = vector.load %arg7[%c0, %c0_1] : memref<32x128xf32, #tpu.memory_space<vmem>>, vector<32x128xf32>
    %c0_2 = arith.constant 0 : index
    %c0_3 = arith.constant 0 : index
    %4 = vector.load %arg3[%c0_2, %c0_3] : memref<32x256xbf16, #tpu.memory_space<vmem>>, vector<32x256xbf16>
    %c0_4 = arith.constant 0 : index
    %c0_5 = arith.constant 0 : index
    %5 = vector.load %arg4[%c0_4, %c0_5] : memref<256x128xbf16, #tpu.memory_space<vmem>>, vector<256x128xbf16>
    %cst = arith.constant dense<0.000000e+00> : vector<32x128xf32>
    %6 = tpu.matmul %4, %5, %cst {dimension_numbers = #tpu.dot_dimension_numbers<[1], [0], [0], [1], [0, 0, 1, 1], [], []>} : vector<32x256xbf16>, vector<256x128xbf16>, vector<32x128xf32> -> vector<32x128xf32>
    %7 = arith.addf %3, %6 : vector<32x128xf32>
    %c0_6 = arith.constant 0 : index
    %c0_7 = arith.constant 0 : index
    %8 = vector.load %arg7[%c0_6, %c0_7] : memref<32x128xf32, #tpu.memory_space<vmem>>, vector<32x128xf32>
    tpu.vector_store %arg7[%c0_6, %c0_7], %7 {strides = array<i32>} : memref<32x128xf32, #tpu.memory_space<vmem>>, vector<32x128xf32>,
    %c0_i32_8 = arith.constant 0 : i32
    %9 = arith.cmpi eq, %arg2, %c0_i32_8 : i32
    %10 = arith.extui %9 : i1 to i32
    %c0_i32_9 = arith.constant 0 : i32
    %11 = arith.cmpi ne, %10, %c0_i32_9 : i32
    scf.if %11 {
      %c0_10 = arith.constant 0 : index
      %c0_11 = arith.constant 0 : index
      %12 = vector.load %arg7[%c0_10, %c0_11] : memref<32x128xf32, #tpu.memory_space<vmem>>, vector<32x128xf32>
      %c0_12 = arith.constant 0 : index
      %c0_13 = arith.constant 0 : index
      %13 = vector.load %arg5[%c0_12, %c0_13] : memref<1x128xf32, #tpu.memory_space<vmem>>, vector<1x128xf32>
      %14 = vector.broadcast %13 : vector<1x128xf32> to vector<32x128xf32>
      %15 = arith.addf %12, %14 : vector<32x128xf32>
      %16 = arith.truncf %15 : vector<32x128xf32> to vector<32x128xbf16>
      %c0_14 = arith.constant 0 : index
      %c0_15 = arith.constant 0 : index
      %17 = vector.load %arg6[%c0_14, %c0_15] : memref<32x128xbf16, #tpu.memory_space<vmem>>, vector<32x128xbf16>
      tpu.vector_store %arg6[%c0_14, %c0_15], %16 {strides = array<i32>} : memref<32x128xbf16, #tpu.memory_space<vmem>>, vector<32x128xbf16>,
    } else {
    }
    return
  }
  func.func @transform_0(%arg0: i32, %arg1: i32, %arg2: i32) -> (i32, i32) {
    %c0_i32 = arith.constant 0 : i32
    return %arg0, %arg2 : i32, i32
  }
  func.func @transform_1(%arg0: i32, %arg1: i32, %arg2: i32) -> (i32, i32) {
    %c0_i32 = arith.constant 0 : i32
    return %arg2, %arg1 : i32, i32
  }
  func.func @transform_2(%arg0: i32, %arg1: i32, %arg2: i32) -> (i32, i32) {
    %c0_i32 = arith.constant 0 : i32
    %c0_i32_0 = arith.constant 0 : i32
    return %c0_i32, %arg1 : i32, i32
  }
  func.func @transform_3(%arg0: i32, %arg1: i32, %arg2: i32) -> (i32, i32) {
    %c0_i32 = arith.constant 0 : i32
    return %arg0, %arg1 : i32, i32
  }
}

module attributes {stable_mosaic.version = 11 : i64} {
  func.func @_instance_norm_kernel(%arg0: i32, %arg1: i32, %arg2: memref<1x16x128xbf16, #tpu.memory_space<vmem>>, %arg3: memref<1x16x128xbf16, #tpu.memory_space<vmem>>) attributes {dimension_semantics = [#tpu.dimension_semantics<parallel>, #tpu.dimension_semantics<parallel>], iteration_bounds = array<i64: 2, 1>, scalar_prefetch = 0 : i64, scratch_operands = 0 : i64, tpu.core_type = #tpu.core_type<tc>, window_params = [{transform_indices = @transform_0, window_bounds = array<i64: 1, 16, 128>}, {transform_indices = @transform_1, window_bounds = array<i64: 1, 16, 128>}]} {
    %c0 = arith.constant 0 : index
    %c0_0 = arith.constant 0 : index
    %c0_1 = arith.constant 0 : index
    %0 = vector.load %arg2[%c0, %c0_0, %c0_1] : memref<1x16x128xbf16, #tpu.memory_space<vmem>>, vector<1x16x128xbf16>
    %1 = vector.shape_cast %0 : vector<1x16x128xbf16> to vector<16x128xbf16>
    %2 = arith.extf %1 : vector<16x128xbf16> to vector<16x128xf32>
    %cst = arith.constant dense<0.000000e+00> : vector<128xf32>
    %3 = vector.multi_reduction <add>, %2, %cst [0] : vector<16x128xf32> to vector<128xf32>
    %4 = vector.shape_cast %3 : vector<128xf32> to vector<1x128xf32>
    %cst_2 = arith.constant 1.600000e+01 : f32
    %5 = vector.broadcast %cst_2 : f32 to vector<1x128xf32>
    %6 = arith.divf %4, %5 : vector<1x128xf32>
    %7 = vector.broadcast %6 : vector<1x128xf32> to vector<16x128xf32>
    %8 = arith.subf %2, %7 : vector<16x128xf32>
    %9 = arith.mulf %8, %8 : vector<16x128xf32>
    %cst_3 = arith.constant dense<0.000000e+00> : vector<128xf32>
    %10 = vector.multi_reduction <add>, %9, %cst_3 [0] : vector<16x128xf32> to vector<128xf32>
    %11 = vector.shape_cast %10 : vector<128xf32> to vector<1x128xf32>
    %cst_4 = arith.constant 1.600000e+01 : f32
    %12 = vector.broadcast %cst_4 : f32 to vector<1x128xf32>
    %13 = arith.divf %11, %12 : vector<1x128xf32>
    %cst_5 = arith.constant 9.99999974E-6 : f32
    %14 = vector.broadcast %cst_5 : f32 to vector<1x128xf32>
    %15 = arith.addf %13, %14 : vector<1x128xf32>
    %16 = math.rsqrt %15 : vector<1x128xf32>
    %17 = vector.broadcast %16 : vector<1x128xf32> to vector<16x128xf32>
    %18 = arith.mulf %8, %17 : vector<16x128xf32>
    %cst_6 = arith.constant 0.000000e+00 : f32
    %19 = vector.broadcast %cst_6 : f32 to vector<16x128xf32>
    %20 = arith.maximumf %18, %19 : vector<16x128xf32>
    %21 = arith.truncf %20 : vector<16x128xf32> to vector<16x128xbf16>
    %c0_7 = arith.constant 0 : index
    %c0_8 = arith.constant 0 : index
    %c0_9 = arith.constant 0 : index
    %22 = vector.load %arg3[%c0_7, %c0_8, %c0_9] : memref<1x16x128xbf16, #tpu.memory_space<vmem>>, vector<1x16x128xbf16>
    %23 = vector.shape_cast %22 : vector<1x16x128xbf16> to vector<16x128xbf16>
    %24 = vector.shape_cast %21 : vector<16x128xbf16> to vector<1x16x128xbf16>
    tpu.vector_store %arg3[%c0_7, %c0_8, %c0_9], %24 {strides = array<i32>} : memref<1x16x128xbf16, #tpu.memory_space<vmem>>, vector<1x16x128xbf16>,
    return
  }
  func.func @transform_0(%arg0: i32, %arg1: i32) -> (i32, i32, i32) {
    %c0_i32 = arith.constant 0 : i32
    %c0_i32_0 = arith.constant 0 : i32
    return %arg0, %c0_i32, %arg1 : i32, i32, i32
  }
  func.func @transform_1(%arg0: i32, %arg1: i32) -> (i32, i32, i32) {
    %c0_i32 = arith.constant 0 : i32
    %c0_i32_0 = arith.constant 0 : i32
    return %arg0, %c0_i32, %arg1 : i32, i32, i32
  }
}

module attributes {stable_mosaic.version = 11 : i64} {
  func.func @_matmul_kernel(%arg0: i32, %arg1: i32, %arg2: i32, %arg3: memref<16x384xbf16, #tpu.memory_space<vmem>>, %arg4: memref<384x128xbf16, #tpu.memory_space<vmem>>, %arg5: memref<1x128xf32, #tpu.memory_space<vmem>>, %arg6: memref<16x128xbf16, #tpu.memory_space<vmem>>, %arg7: memref<16x128xf32, #tpu.memory_space<vmem>>) attributes {dimension_semantics = [#tpu.dimension_semantics<parallel>, #tpu.dimension_semantics<parallel>, #tpu.dimension_semantics<arbitrary>], iteration_bounds = array<i64: 1, 1, 1>, scalar_prefetch = 0 : i64, scratch_operands = 1 : i64, tpu.core_type = #tpu.core_type<tc>, window_params = [{transform_indices = @transform_0, window_bounds = array<i64: 16, 384>}, {transform_indices = @transform_1, window_bounds = array<i64: 384, 128>}, {transform_indices = @transform_2, window_bounds = array<i64: 1, 128>}, {transform_indices = @transform_3, window_bounds = array<i64: 16, 128>}]} {
    %c0_i32 = arith.constant 0 : i32
    %0 = arith.cmpi eq, %arg2, %c0_i32 : i32
    %1 = arith.extui %0 : i1 to i32
    %c0_i32_0 = arith.constant 0 : i32
    %2 = arith.cmpi ne, %1, %c0_i32_0 : i32
    scf.if %2 {
      %cst_10 = arith.constant 0.000000e+00 : f32
      %12 = vector.broadcast %cst_10 : f32 to vector<16x128xf32>
      %c0_11 = arith.constant 0 : index
      %c0_12 = arith.constant 0 : index
      %13 = vector.load %arg7[%c0_11, %c0_12] : memref<16x128xf32, #tpu.memory_space<vmem>>, vector<16x128xf32>
      tpu.vector_store %arg7[%c0_11, %c0_12], %12 {strides = array<i32>} : memref<16x128xf32, #tpu.memory_space<vmem>>, vector<16x128xf32>,
    } else {
    }
    %c0 = arith.constant 0 : index
    %c0_1 = arith.constant 0 : index
    %3 = vector.load %arg7[%c0, %c0_1] : memref<16x128xf32, #tpu.memory_space<vmem>>, vector<16x128xf32>
    %c0_2 = arith.constant 0 : index
    %c0_3 = arith.constant 0 : index
    %4 = vector.load %arg3[%c0_2, %c0_3] : memref<16x384xbf16, #tpu.memory_space<vmem>>, vector<16x384xbf16>
    %c0_4 = arith.constant 0 : index
    %c0_5 = arith.constant 0 : index
    %5 = vector.load %arg4[%c0_4, %c0_5] : memref<384x128xbf16, #tpu.memory_space<vmem>>, vector<384x128xbf16>
    %cst = arith.constant dense<0.000000e+00> : vector<16x128xf32>
    %6 = tpu.matmul %4, %5, %cst {dimension_numbers = #tpu.dot_dimension_numbers<[1], [0], [0], [1], [0, 0, 1, 1], [], []>} : vector<16x384xbf16>, vector<384x128xbf16>, vector<16x128xf32> -> vector<16x128xf32>
    %7 = arith.addf %3, %6 : vector<16x128xf32>
    %c0_6 = arith.constant 0 : index
    %c0_7 = arith.constant 0 : index
    %8 = vector.load %arg7[%c0_6, %c0_7] : memref<16x128xf32, #tpu.memory_space<vmem>>, vector<16x128xf32>
    tpu.vector_store %arg7[%c0_6, %c0_7], %7 {strides = array<i32>} : memref<16x128xf32, #tpu.memory_space<vmem>>, vector<16x128xf32>,
    %c0_i32_8 = arith.constant 0 : i32
    %9 = arith.cmpi eq, %arg2, %c0_i32_8 : i32
    %10 = arith.extui %9 : i1 to i32
    %c0_i32_9 = arith.constant 0 : i32
    %11 = arith.cmpi ne, %10, %c0_i32_9 : i32
    scf.if %11 {
      %c0_10 = arith.constant 0 : index
      %c0_11 = arith.constant 0 : index
      %12 = vector.load %arg7[%c0_10, %c0_11] : memref<16x128xf32, #tpu.memory_space<vmem>>, vector<16x128xf32>
      %c0_12 = arith.constant 0 : index
      %c0_13 = arith.constant 0 : index
      %13 = vector.load %arg5[%c0_12, %c0_13] : memref<1x128xf32, #tpu.memory_space<vmem>>, vector<1x128xf32>
      %14 = vector.broadcast %13 : vector<1x128xf32> to vector<16x128xf32>
      %15 = arith.addf %12, %14 : vector<16x128xf32>
      %16 = arith.truncf %15 : vector<16x128xf32> to vector<16x128xbf16>
      %c0_14 = arith.constant 0 : index
      %c0_15 = arith.constant 0 : index
      %17 = vector.load %arg6[%c0_14, %c0_15] : memref<16x128xbf16, #tpu.memory_space<vmem>>, vector<16x128xbf16>
      tpu.vector_store %arg6[%c0_14, %c0_15], %16 {strides = array<i32>} : memref<16x128xbf16, #tpu.memory_space<vmem>>, vector<16x128xbf16>,
    } else {
    }
    return
  }
  func.func @transform_0(%arg0: i32, %arg1: i32, %arg2: i32) -> (i32, i32) {
    %c0_i32 = arith.constant 0 : i32
    return %arg0, %arg2 : i32, i32
  }
  func.func @transform_1(%arg0: i32, %arg1: i32, %arg2: i32) -> (i32, i32) {
    %c0_i32 = arith.constant 0 : i32
    return %arg2, %arg1 : i32, i32
  }
  func.func @transform_2(%arg0: i32, %arg1: i32, %arg2: i32) -> (i32, i32) {
    %c0_i32 = arith.constant 0 : i32
    %c0_i32_0 = arith.constant 0 : i32
    return %c0_i32, %arg1 : i32, i32
  }
  func.func @transform_3(%arg0: i32, %arg1: i32, %arg2: i32) -> (i32, i32) {
    %c0_i32 = arith.constant 0 : i32
    return %arg0, %arg1 : i32, i32
  }
}

module attributes {stable_mosaic.version = 11 : i64} {
  func.func @_instance_norm_kernel(%arg0: i32, %arg1: i32, %arg2: memref<1x4x128xbf16, #tpu.memory_space<vmem>>, %arg3: memref<1x4x128xbf16, #tpu.memory_space<vmem>>) attributes {dimension_semantics = [#tpu.dimension_semantics<parallel>, #tpu.dimension_semantics<parallel>], iteration_bounds = array<i64: 2, 1>, scalar_prefetch = 0 : i64, scratch_operands = 0 : i64, tpu.core_type = #tpu.core_type<tc>, window_params = [{transform_indices = @transform_0, window_bounds = array<i64: 1, 4, 128>}, {transform_indices = @transform_1, window_bounds = array<i64: 1, 4, 128>}]} {
    %c0 = arith.constant 0 : index
    %c0_0 = arith.constant 0 : index
    %c0_1 = arith.constant 0 : index
    %0 = vector.load %arg2[%c0, %c0_0, %c0_1] : memref<1x4x128xbf16, #tpu.memory_space<vmem>>, vector<1x4x128xbf16>
    %1 = vector.shape_cast %0 : vector<1x4x128xbf16> to vector<4x128xbf16>
    %2 = arith.extf %1 : vector<4x128xbf16> to vector<4x128xf32>
    %cst = arith.constant dense<0.000000e+00> : vector<128xf32>
    %3 = vector.multi_reduction <add>, %2, %cst [0] : vector<4x128xf32> to vector<128xf32>
    %4 = vector.shape_cast %3 : vector<128xf32> to vector<1x128xf32>
    %cst_2 = arith.constant 4.000000e+00 : f32
    %5 = vector.broadcast %cst_2 : f32 to vector<1x128xf32>
    %6 = arith.divf %4, %5 : vector<1x128xf32>
    %7 = vector.broadcast %6 : vector<1x128xf32> to vector<4x128xf32>
    %8 = arith.subf %2, %7 : vector<4x128xf32>
    %9 = arith.mulf %8, %8 : vector<4x128xf32>
    %cst_3 = arith.constant dense<0.000000e+00> : vector<128xf32>
    %10 = vector.multi_reduction <add>, %9, %cst_3 [0] : vector<4x128xf32> to vector<128xf32>
    %11 = vector.shape_cast %10 : vector<128xf32> to vector<1x128xf32>
    %cst_4 = arith.constant 4.000000e+00 : f32
    %12 = vector.broadcast %cst_4 : f32 to vector<1x128xf32>
    %13 = arith.divf %11, %12 : vector<1x128xf32>
    %cst_5 = arith.constant 9.99999974E-6 : f32
    %14 = vector.broadcast %cst_5 : f32 to vector<1x128xf32>
    %15 = arith.addf %13, %14 : vector<1x128xf32>
    %16 = math.rsqrt %15 : vector<1x128xf32>
    %17 = vector.broadcast %16 : vector<1x128xf32> to vector<4x128xf32>
    %18 = arith.mulf %8, %17 : vector<4x128xf32>
    %cst_6 = arith.constant 0.000000e+00 : f32
    %19 = vector.broadcast %cst_6 : f32 to vector<4x128xf32>
    %20 = arith.maximumf %18, %19 : vector<4x128xf32>
    %21 = arith.truncf %20 : vector<4x128xf32> to vector<4x128xbf16>
    %c0_7 = arith.constant 0 : index
    %c0_8 = arith.constant 0 : index
    %c0_9 = arith.constant 0 : index
    %22 = vector.load %arg3[%c0_7, %c0_8, %c0_9] : memref<1x4x128xbf16, #tpu.memory_space<vmem>>, vector<1x4x128xbf16>
    %23 = vector.shape_cast %22 : vector<1x4x128xbf16> to vector<4x128xbf16>
    %24 = vector.shape_cast %21 : vector<4x128xbf16> to vector<1x4x128xbf16>
    tpu.vector_store %arg3[%c0_7, %c0_8, %c0_9], %24 {strides = array<i32>} : memref<1x4x128xbf16, #tpu.memory_space<vmem>>, vector<1x4x128xbf16>,
    return
  }
  func.func @transform_0(%arg0: i32, %arg1: i32) -> (i32, i32, i32) {
    %c0_i32 = arith.constant 0 : i32
    %c0_i32_0 = arith.constant 0 : i32
    return %arg0, %c0_i32, %arg1 : i32, i32, i32
  }
  func.func @transform_1(%arg0: i32, %arg1: i32) -> (i32, i32, i32) {
    %c0_i32 = arith.constant 0 : i32
    %c0_i32_0 = arith.constant 0 : i32
    return %arg0, %c0_i32, %arg1 : i32, i32, i32
  }
}

module attributes {stable_mosaic.version = 11 : i64} {
  func.func @_matmul_kernel(%arg0: i32, %arg1: i32, %arg2: i32, %arg3: memref<16x512xbf16, #tpu.memory_space<vmem>>, %arg4: memref<512x128xbf16, #tpu.memory_space<vmem>>, %arg5: memref<1x128xf32, #tpu.memory_space<vmem>>, %arg6: memref<16x128xbf16, #tpu.memory_space<vmem>>, %arg7: memref<16x128xf32, #tpu.memory_space<vmem>>) attributes {dimension_semantics = [#tpu.dimension_semantics<parallel>, #tpu.dimension_semantics<parallel>, #tpu.dimension_semantics<arbitrary>], iteration_bounds = array<i64: 1, 1, 1>, scalar_prefetch = 0 : i64, scratch_operands = 1 : i64, tpu.core_type = #tpu.core_type<tc>, window_params = [{transform_indices = @transform_0, window_bounds = array<i64: 16, 512>}, {transform_indices = @transform_1, window_bounds = array<i64: 512, 128>}, {transform_indices = @transform_2, window_bounds = array<i64: 1, 128>}, {transform_indices = @transform_3, window_bounds = array<i64: 16, 128>}]} {
    %c0_i32 = arith.constant 0 : i32
    %0 = arith.cmpi eq, %arg2, %c0_i32 : i32
    %1 = arith.extui %0 : i1 to i32
    %c0_i32_0 = arith.constant 0 : i32
    %2 = arith.cmpi ne, %1, %c0_i32_0 : i32
    scf.if %2 {
      %cst_10 = arith.constant 0.000000e+00 : f32
      %12 = vector.broadcast %cst_10 : f32 to vector<16x128xf32>
      %c0_11 = arith.constant 0 : index
      %c0_12 = arith.constant 0 : index
      %13 = vector.load %arg7[%c0_11, %c0_12] : memref<16x128xf32, #tpu.memory_space<vmem>>, vector<16x128xf32>
      tpu.vector_store %arg7[%c0_11, %c0_12], %12 {strides = array<i32>} : memref<16x128xf32, #tpu.memory_space<vmem>>, vector<16x128xf32>,
    } else {
    }
    %c0 = arith.constant 0 : index
    %c0_1 = arith.constant 0 : index
    %3 = vector.load %arg7[%c0, %c0_1] : memref<16x128xf32, #tpu.memory_space<vmem>>, vector<16x128xf32>
    %c0_2 = arith.constant 0 : index
    %c0_3 = arith.constant 0 : index
    %4 = vector.load %arg3[%c0_2, %c0_3] : memref<16x512xbf16, #tpu.memory_space<vmem>>, vector<16x512xbf16>
    %c0_4 = arith.constant 0 : index
    %c0_5 = arith.constant 0 : index
    %5 = vector.load %arg4[%c0_4, %c0_5] : memref<512x128xbf16, #tpu.memory_space<vmem>>, vector<512x128xbf16>
    %cst = arith.constant dense<0.000000e+00> : vector<16x128xf32>
    %6 = tpu.matmul %4, %5, %cst {dimension_numbers = #tpu.dot_dimension_numbers<[1], [0], [0], [1], [0, 0, 1, 1], [], []>} : vector<16x512xbf16>, vector<512x128xbf16>, vector<16x128xf32> -> vector<16x128xf32>
    %7 = arith.addf %3, %6 : vector<16x128xf32>
    %c0_6 = arith.constant 0 : index
    %c0_7 = arith.constant 0 : index
    %8 = vector.load %arg7[%c0_6, %c0_7] : memref<16x128xf32, #tpu.memory_space<vmem>>, vector<16x128xf32>
    tpu.vector_store %arg7[%c0_6, %c0_7], %7 {strides = array<i32>} : memref<16x128xf32, #tpu.memory_space<vmem>>, vector<16x128xf32>,
    %c0_i32_8 = arith.constant 0 : i32
    %9 = arith.cmpi eq, %arg2, %c0_i32_8 : i32
    %10 = arith.extui %9 : i1 to i32
    %c0_i32_9 = arith.constant 0 : i32
    %11 = arith.cmpi ne, %10, %c0_i32_9 : i32
    scf.if %11 {
      %c0_10 = arith.constant 0 : index
      %c0_11 = arith.constant 0 : index
      %12 = vector.load %arg7[%c0_10, %c0_11] : memref<16x128xf32, #tpu.memory_space<vmem>>, vector<16x128xf32>
      %c0_12 = arith.constant 0 : index
      %c0_13 = arith.constant 0 : index
      %13 = vector.load %arg5[%c0_12, %c0_13] : memref<1x128xf32, #tpu.memory_space<vmem>>, vector<1x128xf32>
      %14 = vector.broadcast %13 : vector<1x128xf32> to vector<16x128xf32>
      %15 = arith.addf %12, %14 : vector<16x128xf32>
      %16 = arith.truncf %15 : vector<16x128xf32> to vector<16x128xbf16>
      %c0_14 = arith.constant 0 : index
      %c0_15 = arith.constant 0 : index
      %17 = vector.load %arg6[%c0_14, %c0_15] : memref<16x128xbf16, #tpu.memory_space<vmem>>, vector<16x128xbf16>
      tpu.vector_store %arg6[%c0_14, %c0_15], %16 {strides = array<i32>} : memref<16x128xbf16, #tpu.memory_space<vmem>>, vector<16x128xbf16>,
    } else {
    }
    return
  }
  func.func @transform_0(%arg0: i32, %arg1: i32, %arg2: i32) -> (i32, i32) {
    %c0_i32 = arith.constant 0 : i32
    return %arg0, %arg2 : i32, i32
  }
  func.func @transform_1(%arg0: i32, %arg1: i32, %arg2: i32) -> (i32, i32) {
    %c0_i32 = arith.constant 0 : i32
    return %arg2, %arg1 : i32, i32
  }
  func.func @transform_2(%arg0: i32, %arg1: i32, %arg2: i32) -> (i32, i32) {
    %c0_i32 = arith.constant 0 : i32
    %c0_i32_0 = arith.constant 0 : i32
    return %c0_i32, %arg1 : i32, i32
  }
  func.func @transform_3(%arg0: i32, %arg1: i32, %arg2: i32) -> (i32, i32) {
    %c0_i32 = arith.constant 0 : i32
    return %arg0, %arg1 : i32, i32
  }
}

module attributes {stable_mosaic.version = 11 : i64} {
  func.func @_matmul_kernel(%arg0: i32, %arg1: i32, %arg2: i32, %arg3: memref<16x128xbf16, #tpu.memory_space<vmem>>, %arg4: memref<128x128xbf16, #tpu.memory_space<vmem>>, %arg5: memref<1x128xf32, #tpu.memory_space<vmem>>, %arg6: memref<16x128xbf16, #tpu.memory_space<vmem>>, %arg7: memref<16x128xf32, #tpu.memory_space<vmem>>) attributes {dimension_semantics = [#tpu.dimension_semantics<parallel>, #tpu.dimension_semantics<parallel>, #tpu.dimension_semantics<arbitrary>], iteration_bounds = array<i64: 1, 1, 1>, scalar_prefetch = 0 : i64, scratch_operands = 1 : i64, tpu.core_type = #tpu.core_type<tc>, window_params = [{transform_indices = @transform_0, window_bounds = array<i64: 16, 128>}, {transform_indices = @transform_1, window_bounds = array<i64: 128, 128>}, {transform_indices = @transform_2, window_bounds = array<i64: 1, 128>}, {transform_indices = @transform_3, window_bounds = array<i64: 16, 128>}]} {
    %c0_i32 = arith.constant 0 : i32
    %0 = arith.cmpi eq, %arg2, %c0_i32 : i32
    %1 = arith.extui %0 : i1 to i32
    %c0_i32_0 = arith.constant 0 : i32
    %2 = arith.cmpi ne, %1, %c0_i32_0 : i32
    scf.if %2 {
      %cst_10 = arith.constant 0.000000e+00 : f32
      %12 = vector.broadcast %cst_10 : f32 to vector<16x128xf32>
      %c0_11 = arith.constant 0 : index
      %c0_12 = arith.constant 0 : index
      %13 = vector.load %arg7[%c0_11, %c0_12] : memref<16x128xf32, #tpu.memory_space<vmem>>, vector<16x128xf32>
      tpu.vector_store %arg7[%c0_11, %c0_12], %12 {strides = array<i32>} : memref<16x128xf32, #tpu.memory_space<vmem>>, vector<16x128xf32>,
    } else {
    }
    %c0 = arith.constant 0 : index
    %c0_1 = arith.constant 0 : index
    %3 = vector.load %arg7[%c0, %c0_1] : memref<16x128xf32, #tpu.memory_space<vmem>>, vector<16x128xf32>
    %c0_2 = arith.constant 0 : index
    %c0_3 = arith.constant 0 : index
    %4 = vector.load %arg3[%c0_2, %c0_3] : memref<16x128xbf16, #tpu.memory_space<vmem>>, vector<16x128xbf16>
    %c0_4 = arith.constant 0 : index
    %c0_5 = arith.constant 0 : index
    %5 = vector.load %arg4[%c0_4, %c0_5] : memref<128x128xbf16, #tpu.memory_space<vmem>>, vector<128x128xbf16>
    %cst = arith.constant dense<0.000000e+00> : vector<16x128xf32>
    %6 = tpu.matmul %4, %5, %cst {dimension_numbers = #tpu.dot_dimension_numbers<[1], [0], [0], [1], [0, 0, 1, 1], [], []>} : vector<16x128xbf16>, vector<128x128xbf16>, vector<16x128xf32> -> vector<16x128xf32>
    %7 = arith.addf %3, %6 : vector<16x128xf32>
    %c0_6 = arith.constant 0 : index
    %c0_7 = arith.constant 0 : index
    %8 = vector.load %arg7[%c0_6, %c0_7] : memref<16x128xf32, #tpu.memory_space<vmem>>, vector<16x128xf32>
    tpu.vector_store %arg7[%c0_6, %c0_7], %7 {strides = array<i32>} : memref<16x128xf32, #tpu.memory_space<vmem>>, vector<16x128xf32>,
    %c0_i32_8 = arith.constant 0 : i32
    %9 = arith.cmpi eq, %arg2, %c0_i32_8 : i32
    %10 = arith.extui %9 : i1 to i32
    %c0_i32_9 = arith.constant 0 : i32
    %11 = arith.cmpi ne, %10, %c0_i32_9 : i32
    scf.if %11 {
      %c0_10 = arith.constant 0 : index
      %c0_11 = arith.constant 0 : index
      %12 = vector.load %arg7[%c0_10, %c0_11] : memref<16x128xf32, #tpu.memory_space<vmem>>, vector<16x128xf32>
      %c0_12 = arith.constant 0 : index
      %c0_13 = arith.constant 0 : index
      %13 = vector.load %arg5[%c0_12, %c0_13] : memref<1x128xf32, #tpu.memory_space<vmem>>, vector<1x128xf32>
      %14 = vector.broadcast %13 : vector<1x128xf32> to vector<16x128xf32>
      %15 = arith.addf %12, %14 : vector<16x128xf32>
      %cst_14 = arith.constant 0.000000e+00 : f32
      %16 = vector.broadcast %cst_14 : f32 to vector<16x128xf32>
      %17 = arith.maximumf %15, %16 : vector<16x128xf32>
      %18 = arith.truncf %17 : vector<16x128xf32> to vector<16x128xbf16>
      %c0_15 = arith.constant 0 : index
      %c0_16 = arith.constant 0 : index
      %19 = vector.load %arg6[%c0_15, %c0_16] : memref<16x128xbf16, #tpu.memory_space<vmem>>, vector<16x128xbf16>
      tpu.vector_store %arg6[%c0_15, %c0_16], %18 {strides = array<i32>} : memref<16x128xbf16, #tpu.memory_space<vmem>>, vector<16x128xbf16>,
    } else {
    }
    return
  }
  func.func @transform_0(%arg0: i32, %arg1: i32, %arg2: i32) -> (i32, i32) {
    %c0_i32 = arith.constant 0 : i32
    return %arg0, %arg2 : i32, i32
  }
  func.func @transform_1(%arg0: i32, %arg1: i32, %arg2: i32) -> (i32, i32) {
    %c0_i32 = arith.constant 0 : i32
    return %arg2, %arg1 : i32, i32
  }
  func.func @transform_2(%arg0: i32, %arg1: i32, %arg2: i32) -> (i32, i32) {
    %c0_i32 = arith.constant 0 : i32
    %c0_i32_0 = arith.constant 0 : i32
    return %c0_i32, %arg1 : i32, i32
  }
  func.func @transform_3(%arg0: i32, %arg1: i32, %arg2: i32) -> (i32, i32) {
    %c0_i32 = arith.constant 0 : i32
    return %arg0, %arg1 : i32, i32
  }
}

module attributes {stable_mosaic.version = 11 : i64} {
  func.func @_matmul_kernel(%arg0: i32, %arg1: i32, %arg2: i32, %arg3: memref<16x128xbf16, #tpu.memory_space<vmem>>, %arg4: memref<128x128xbf16, #tpu.memory_space<vmem>>, %arg5: memref<1x128xf32, #tpu.memory_space<vmem>>, %arg6: memref<16x128xbf16, #tpu.memory_space<vmem>>, %arg7: memref<16x128xf32, #tpu.memory_space<vmem>>) attributes {dimension_semantics = [#tpu.dimension_semantics<parallel>, #tpu.dimension_semantics<parallel>, #tpu.dimension_semantics<arbitrary>], iteration_bounds = array<i64: 1, 1, 1>, scalar_prefetch = 0 : i64, scratch_operands = 1 : i64, tpu.core_type = #tpu.core_type<tc>, window_params = [{transform_indices = @transform_0, window_bounds = array<i64: 16, 128>}, {transform_indices = @transform_1, window_bounds = array<i64: 128, 128>}, {transform_indices = @transform_2, window_bounds = array<i64: 1, 128>}, {transform_indices = @transform_3, window_bounds = array<i64: 16, 128>}]} {
    %c0_i32 = arith.constant 0 : i32
    %0 = arith.cmpi eq, %arg2, %c0_i32 : i32
    %1 = arith.extui %0 : i1 to i32
    %c0_i32_0 = arith.constant 0 : i32
    %2 = arith.cmpi ne, %1, %c0_i32_0 : i32
    scf.if %2 {
      %cst_10 = arith.constant 0.000000e+00 : f32
      %12 = vector.broadcast %cst_10 : f32 to vector<16x128xf32>
      %c0_11 = arith.constant 0 : index
      %c0_12 = arith.constant 0 : index
      %13 = vector.load %arg7[%c0_11, %c0_12] : memref<16x128xf32, #tpu.memory_space<vmem>>, vector<16x128xf32>
      tpu.vector_store %arg7[%c0_11, %c0_12], %12 {strides = array<i32>} : memref<16x128xf32, #tpu.memory_space<vmem>>, vector<16x128xf32>,
    } else {
    }
    %c0 = arith.constant 0 : index
    %c0_1 = arith.constant 0 : index
    %3 = vector.load %arg7[%c0, %c0_1] : memref<16x128xf32, #tpu.memory_space<vmem>>, vector<16x128xf32>
    %c0_2 = arith.constant 0 : index
    %c0_3 = arith.constant 0 : index
    %4 = vector.load %arg3[%c0_2, %c0_3] : memref<16x128xbf16, #tpu.memory_space<vmem>>, vector<16x128xbf16>
    %c0_4 = arith.constant 0 : index
    %c0_5 = arith.constant 0 : index
    %5 = vector.load %arg4[%c0_4, %c0_5] : memref<128x128xbf16, #tpu.memory_space<vmem>>, vector<128x128xbf16>
    %cst = arith.constant dense<0.000000e+00> : vector<16x128xf32>
    %6 = tpu.matmul %4, %5, %cst {dimension_numbers = #tpu.dot_dimension_numbers<[1], [0], [0], [1], [0, 0, 1, 1], [], []>} : vector<16x128xbf16>, vector<128x128xbf16>, vector<16x128xf32> -> vector<16x128xf32>
    %7 = arith.addf %3, %6 : vector<16x128xf32>
    %c0_6 = arith.constant 0 : index
    %c0_7 = arith.constant 0 : index
    %8 = vector.load %arg7[%c0_6, %c0_7] : memref<16x128xf32, #tpu.memory_space<vmem>>, vector<16x128xf32>
    tpu.vector_store %arg7[%c0_6, %c0_7], %7 {strides = array<i32>} : memref<16x128xf32, #tpu.memory_space<vmem>>, vector<16x128xf32>,
    %c0_i32_8 = arith.constant 0 : i32
    %9 = arith.cmpi eq, %arg2, %c0_i32_8 : i32
    %10 = arith.extui %9 : i1 to i32
    %c0_i32_9 = arith.constant 0 : i32
    %11 = arith.cmpi ne, %10, %c0_i32_9 : i32
    scf.if %11 {
      %c0_10 = arith.constant 0 : index
      %c0_11 = arith.constant 0 : index
      %12 = vector.load %arg7[%c0_10, %c0_11] : memref<16x128xf32, #tpu.memory_space<vmem>>, vector<16x128xf32>
      %c0_12 = arith.constant 0 : index
      %c0_13 = arith.constant 0 : index
      %13 = vector.load %arg5[%c0_12, %c0_13] : memref<1x128xf32, #tpu.memory_space<vmem>>, vector<1x128xf32>
      %14 = vector.broadcast %13 : vector<1x128xf32> to vector<16x128xf32>
      %15 = arith.addf %12, %14 : vector<16x128xf32>
      %16 = arith.truncf %15 : vector<16x128xf32> to vector<16x128xbf16>
      %c0_14 = arith.constant 0 : index
      %c0_15 = arith.constant 0 : index
      %17 = vector.load %arg6[%c0_14, %c0_15] : memref<16x128xbf16, #tpu.memory_space<vmem>>, vector<16x128xbf16>
      tpu.vector_store %arg6[%c0_14, %c0_15], %16 {strides = array<i32>} : memref<16x128xbf16, #tpu.memory_space<vmem>>, vector<16x128xbf16>,
    } else {
    }
    return
  }
  func.func @transform_0(%arg0: i32, %arg1: i32, %arg2: i32) -> (i32, i32) {
    %c0_i32 = arith.constant 0 : i32
    return %arg0, %arg2 : i32, i32
  }
  func.func @transform_1(%arg0: i32, %arg1: i32, %arg2: i32) -> (i32, i32) {
    %c0_i32 = arith.constant 0 : i32
    return %arg2, %arg1 : i32, i32
  }
  func.func @transform_2(%arg0: i32, %arg1: i32, %arg2: i32) -> (i32, i32) {
    %c0_i32 = arith.constant 0 : i32
    %c0_i32_0 = arith.constant 0 : i32
    return %c0_i32, %arg1 : i32, i32
  }
  func.func @transform_3(%arg0: i32, %arg1: i32, %arg2: i32) -> (i32, i32) {
    %c0_i32 = arith.constant 0 : i32
    return %arg0, %arg1 : i32, i32
  }
}

module attributes {stable_mosaic.version = 11 : i64} {
  func.func @_matmul_kernel(%arg0: i32, %arg1: i32, %arg2: i32, %arg3: memref<16x256xbf16, #tpu.memory_space<vmem>>, %arg4: memref<256x128xbf16, #tpu.memory_space<vmem>>, %arg5: memref<1x128xf32, #tpu.memory_space<vmem>>, %arg6: memref<16x128xbf16, #tpu.memory_space<vmem>>, %arg7: memref<16x128xf32, #tpu.memory_space<vmem>>) attributes {dimension_semantics = [#tpu.dimension_semantics<parallel>, #tpu.dimension_semantics<parallel>, #tpu.dimension_semantics<arbitrary>], iteration_bounds = array<i64: 1, 1, 1>, scalar_prefetch = 0 : i64, scratch_operands = 1 : i64, tpu.core_type = #tpu.core_type<tc>, window_params = [{transform_indices = @transform_0, window_bounds = array<i64: 16, 256>}, {transform_indices = @transform_1, window_bounds = array<i64: 256, 128>}, {transform_indices = @transform_2, window_bounds = array<i64: 1, 128>}, {transform_indices = @transform_3, window_bounds = array<i64: 16, 128>}]} {
    %c0_i32 = arith.constant 0 : i32
    %0 = arith.cmpi eq, %arg2, %c0_i32 : i32
    %1 = arith.extui %0 : i1 to i32
    %c0_i32_0 = arith.constant 0 : i32
    %2 = arith.cmpi ne, %1, %c0_i32_0 : i32
    scf.if %2 {
      %cst_10 = arith.constant 0.000000e+00 : f32
      %12 = vector.broadcast %cst_10 : f32 to vector<16x128xf32>
      %c0_11 = arith.constant 0 : index
      %c0_12 = arith.constant 0 : index
      %13 = vector.load %arg7[%c0_11, %c0_12] : memref<16x128xf32, #tpu.memory_space<vmem>>, vector<16x128xf32>
      tpu.vector_store %arg7[%c0_11, %c0_12], %12 {strides = array<i32>} : memref<16x128xf32, #tpu.memory_space<vmem>>, vector<16x128xf32>,
    } else {
    }
    %c0 = arith.constant 0 : index
    %c0_1 = arith.constant 0 : index
    %3 = vector.load %arg7[%c0, %c0_1] : memref<16x128xf32, #tpu.memory_space<vmem>>, vector<16x128xf32>
    %c0_2 = arith.constant 0 : index
    %c0_3 = arith.constant 0 : index
    %4 = vector.load %arg3[%c0_2, %c0_3] : memref<16x256xbf16, #tpu.memory_space<vmem>>, vector<16x256xbf16>
    %c0_4 = arith.constant 0 : index
    %c0_5 = arith.constant 0 : index
    %5 = vector.load %arg4[%c0_4, %c0_5] : memref<256x128xbf16, #tpu.memory_space<vmem>>, vector<256x128xbf16>
    %cst = arith.constant dense<0.000000e+00> : vector<16x128xf32>
    %6 = tpu.matmul %4, %5, %cst {dimension_numbers = #tpu.dot_dimension_numbers<[1], [0], [0], [1], [0, 0, 1, 1], [], []>} : vector<16x256xbf16>, vector<256x128xbf16>, vector<16x128xf32> -> vector<16x128xf32>
    %7 = arith.addf %3, %6 : vector<16x128xf32>
    %c0_6 = arith.constant 0 : index
    %c0_7 = arith.constant 0 : index
    %8 = vector.load %arg7[%c0_6, %c0_7] : memref<16x128xf32, #tpu.memory_space<vmem>>, vector<16x128xf32>
    tpu.vector_store %arg7[%c0_6, %c0_7], %7 {strides = array<i32>} : memref<16x128xf32, #tpu.memory_space<vmem>>, vector<16x128xf32>,
    %c0_i32_8 = arith.constant 0 : i32
    %9 = arith.cmpi eq, %arg2, %c0_i32_8 : i32
    %10 = arith.extui %9 : i1 to i32
    %c0_i32_9 = arith.constant 0 : i32
    %11 = arith.cmpi ne, %10, %c0_i32_9 : i32
    scf.if %11 {
      %c0_10 = arith.constant 0 : index
      %c0_11 = arith.constant 0 : index
      %12 = vector.load %arg7[%c0_10, %c0_11] : memref<16x128xf32, #tpu.memory_space<vmem>>, vector<16x128xf32>
      %c0_12 = arith.constant 0 : index
      %c0_13 = arith.constant 0 : index
      %13 = vector.load %arg5[%c0_12, %c0_13] : memref<1x128xf32, #tpu.memory_space<vmem>>, vector<1x128xf32>
      %14 = vector.broadcast %13 : vector<1x128xf32> to vector<16x128xf32>
      %15 = arith.addf %12, %14 : vector<16x128xf32>
      %16 = arith.truncf %15 : vector<16x128xf32> to vector<16x128xbf16>
      %c0_14 = arith.constant 0 : index
      %c0_15 = arith.constant 0 : index
      %17 = vector.load %arg6[%c0_14, %c0_15] : memref<16x128xbf16, #tpu.memory_space<vmem>>, vector<16x128xbf16>
      tpu.vector_store %arg6[%c0_14, %c0_15], %16 {strides = array<i32>} : memref<16x128xbf16, #tpu.memory_space<vmem>>, vector<16x128xbf16>,
    } else {
    }
    return
  }
  func.func @transform_0(%arg0: i32, %arg1: i32, %arg2: i32) -> (i32, i32) {
    %c0_i32 = arith.constant 0 : i32
    return %arg0, %arg2 : i32, i32
  }
  func.func @transform_1(%arg0: i32, %arg1: i32, %arg2: i32) -> (i32, i32) {
    %c0_i32 = arith.constant 0 : i32
    return %arg2, %arg1 : i32, i32
  }
  func.func @transform_2(%arg0: i32, %arg1: i32, %arg2: i32) -> (i32, i32) {
    %c0_i32 = arith.constant 0 : i32
    %c0_i32_0 = arith.constant 0 : i32
    return %c0_i32, %arg1 : i32, i32
  }
  func.func @transform_3(%arg0: i32, %arg1: i32, %arg2: i32) -> (i32, i32) {
    %c0_i32 = arith.constant 0 : i32
    return %arg0, %arg1 : i32, i32
  }
}

module attributes {stable_mosaic.version = 11 : i64} {
  func.func @_matmul_kernel(%arg0: i32, %arg1: i32, %arg2: i32, %arg3: memref<16x128xbf16, #tpu.memory_space<vmem>>, %arg4: memref<128x256xbf16, #tpu.memory_space<vmem>>, %arg5: memref<1x256xf32, #tpu.memory_space<vmem>>, %arg6: memref<16x256xbf16, #tpu.memory_space<vmem>>, %arg7: memref<16x256xf32, #tpu.memory_space<vmem>>) attributes {dimension_semantics = [#tpu.dimension_semantics<parallel>, #tpu.dimension_semantics<parallel>, #tpu.dimension_semantics<arbitrary>], iteration_bounds = array<i64: 1, 2, 1>, scalar_prefetch = 0 : i64, scratch_operands = 1 : i64, tpu.core_type = #tpu.core_type<tc>, window_params = [{transform_indices = @transform_0, window_bounds = array<i64: 16, 128>}, {transform_indices = @transform_1, window_bounds = array<i64: 128, 256>}, {transform_indices = @transform_2, window_bounds = array<i64: 1, 256>}, {transform_indices = @transform_3, window_bounds = array<i64: 16, 256>}]} {
    %c0_i32 = arith.constant 0 : i32
    %0 = arith.cmpi eq, %arg2, %c0_i32 : i32
    %1 = arith.extui %0 : i1 to i32
    %c0_i32_0 = arith.constant 0 : i32
    %2 = arith.cmpi ne, %1, %c0_i32_0 : i32
    scf.if %2 {
      %cst_10 = arith.constant 0.000000e+00 : f32
      %12 = vector.broadcast %cst_10 : f32 to vector<16x256xf32>
      %c0_11 = arith.constant 0 : index
      %c0_12 = arith.constant 0 : index
      %13 = vector.load %arg7[%c0_11, %c0_12] : memref<16x256xf32, #tpu.memory_space<vmem>>, vector<16x256xf32>
      tpu.vector_store %arg7[%c0_11, %c0_12], %12 {strides = array<i32>} : memref<16x256xf32, #tpu.memory_space<vmem>>, vector<16x256xf32>,
    } else {
    }
    %c0 = arith.constant 0 : index
    %c0_1 = arith.constant 0 : index
    %3 = vector.load %arg7[%c0, %c0_1] : memref<16x256xf32, #tpu.memory_space<vmem>>, vector<16x256xf32>
    %c0_2 = arith.constant 0 : index
    %c0_3 = arith.constant 0 : index
    %4 = vector.load %arg3[%c0_2, %c0_3] : memref<16x128xbf16, #tpu.memory_space<vmem>>, vector<16x128xbf16>
    %c0_4 = arith.constant 0 : index
    %c0_5 = arith.constant 0 : index
    %5 = vector.load %arg4[%c0_4, %c0_5] : memref<128x256xbf16, #tpu.memory_space<vmem>>, vector<128x256xbf16>
    %cst = arith.constant dense<0.000000e+00> : vector<16x256xf32>
    %6 = tpu.matmul %4, %5, %cst {dimension_numbers = #tpu.dot_dimension_numbers<[1], [0], [0], [1], [0, 0, 1, 1], [], []>} : vector<16x128xbf16>, vector<128x256xbf16>, vector<16x256xf32> -> vector<16x256xf32>
    %7 = arith.addf %3, %6 : vector<16x256xf32>
    %c0_6 = arith.constant 0 : index
    %c0_7 = arith.constant 0 : index
    %8 = vector.load %arg7[%c0_6, %c0_7] : memref<16x256xf32, #tpu.memory_space<vmem>>, vector<16x256xf32>
    tpu.vector_store %arg7[%c0_6, %c0_7], %7 {strides = array<i32>} : memref<16x256xf32, #tpu.memory_space<vmem>>, vector<16x256xf32>,
    %c0_i32_8 = arith.constant 0 : i32
    %9 = arith.cmpi eq, %arg2, %c0_i32_8 : i32
    %10 = arith.extui %9 : i1 to i32
    %c0_i32_9 = arith.constant 0 : i32
    %11 = arith.cmpi ne, %10, %c0_i32_9 : i32
    scf.if %11 {
      %c0_10 = arith.constant 0 : index
      %c0_11 = arith.constant 0 : index
      %12 = vector.load %arg7[%c0_10, %c0_11] : memref<16x256xf32, #tpu.memory_space<vmem>>, vector<16x256xf32>
      %c0_12 = arith.constant 0 : index
      %c0_13 = arith.constant 0 : index
      %13 = vector.load %arg5[%c0_12, %c0_13] : memref<1x256xf32, #tpu.memory_space<vmem>>, vector<1x256xf32>
      %14 = vector.broadcast %13 : vector<1x256xf32> to vector<16x256xf32>
      %15 = arith.addf %12, %14 : vector<16x256xf32>
      %16 = arith.truncf %15 : vector<16x256xf32> to vector<16x256xbf16>
      %c0_14 = arith.constant 0 : index
      %c0_15 = arith.constant 0 : index
      %17 = vector.load %arg6[%c0_14, %c0_15] : memref<16x256xbf16, #tpu.memory_space<vmem>>, vector<16x256xbf16>
      tpu.vector_store %arg6[%c0_14, %c0_15], %16 {strides = array<i32>} : memref<16x256xbf16, #tpu.memory_space<vmem>>, vector<16x256xbf16>,
    } else {
    }
    return
  }
  func.func @transform_0(%arg0: i32, %arg1: i32, %arg2: i32) -> (i32, i32) {
    %c0_i32 = arith.constant 0 : i32
    return %arg0, %arg2 : i32, i32
  }
  func.func @transform_1(%arg0: i32, %arg1: i32, %arg2: i32) -> (i32, i32) {
    %c0_i32 = arith.constant 0 : i32
    return %arg2, %arg1 : i32, i32
  }
  func.func @transform_2(%arg0: i32, %arg1: i32, %arg2: i32) -> (i32, i32) {
    %c0_i32 = arith.constant 0 : i32
    %c0_i32_0 = arith.constant 0 : i32
    return %c0_i32, %arg1 : i32, i32
  }
  func.func @transform_3(%arg0: i32, %arg1: i32, %arg2: i32) -> (i32, i32) {
    %c0_i32 = arith.constant 0 : i32
    return %arg0, %arg1 : i32, i32
  }
}

module attributes {stable_mosaic.version = 11 : i64} {
  func.func @_matmul_kernel(%arg0: i32, %arg1: i32, %arg2: i32, %arg3: memref<128x128xbf16, #tpu.memory_space<vmem>>, %arg4: memref<128x128xbf16, #tpu.memory_space<vmem>>, %arg5: memref<1x128xf32, #tpu.memory_space<vmem>>, %arg6: memref<128x128xbf16, #tpu.memory_space<vmem>>, %arg7: memref<128x128xf32, #tpu.memory_space<vmem>>) attributes {dimension_semantics = [#tpu.dimension_semantics<parallel>, #tpu.dimension_semantics<parallel>, #tpu.dimension_semantics<arbitrary>], iteration_bounds = array<i64: 1, 1, 1>, scalar_prefetch = 0 : i64, scratch_operands = 1 : i64, tpu.core_type = #tpu.core_type<tc>, window_params = [{transform_indices = @transform_0, window_bounds = array<i64: 128, 128>}, {transform_indices = @transform_1, window_bounds = array<i64: 128, 128>}, {transform_indices = @transform_2, window_bounds = array<i64: 1, 128>}, {transform_indices = @transform_3, window_bounds = array<i64: 128, 128>}]} {
    %c0_i32 = arith.constant 0 : i32
    %0 = arith.cmpi eq, %arg2, %c0_i32 : i32
    %1 = arith.extui %0 : i1 to i32
    %c0_i32_0 = arith.constant 0 : i32
    %2 = arith.cmpi ne, %1, %c0_i32_0 : i32
    scf.if %2 {
      %cst_10 = arith.constant 0.000000e+00 : f32
      %12 = vector.broadcast %cst_10 : f32 to vector<128x128xf32>
      %c0_11 = arith.constant 0 : index
      %c0_12 = arith.constant 0 : index
      %13 = vector.load %arg7[%c0_11, %c0_12] : memref<128x128xf32, #tpu.memory_space<vmem>>, vector<128x128xf32>
      tpu.vector_store %arg7[%c0_11, %c0_12], %12 {strides = array<i32>} : memref<128x128xf32, #tpu.memory_space<vmem>>, vector<128x128xf32>,
    } else {
    }
    %c0 = arith.constant 0 : index
    %c0_1 = arith.constant 0 : index
    %3 = vector.load %arg7[%c0, %c0_1] : memref<128x128xf32, #tpu.memory_space<vmem>>, vector<128x128xf32>
    %c0_2 = arith.constant 0 : index
    %c0_3 = arith.constant 0 : index
    %4 = vector.load %arg3[%c0_2, %c0_3] : memref<128x128xbf16, #tpu.memory_space<vmem>>, vector<128x128xbf16>
    %c0_4 = arith.constant 0 : index
    %c0_5 = arith.constant 0 : index
    %5 = vector.load %arg4[%c0_4, %c0_5] : memref<128x128xbf16, #tpu.memory_space<vmem>>, vector<128x128xbf16>
    %cst = arith.constant dense<0.000000e+00> : vector<128x128xf32>
    %6 = tpu.matmul %4, %5, %cst {dimension_numbers = #tpu.dot_dimension_numbers<[1], [0], [0], [1], [0, 0, 1, 1], [], []>} : vector<128x128xbf16>, vector<128x128xbf16>, vector<128x128xf32> -> vector<128x128xf32>
    %7 = arith.addf %3, %6 : vector<128x128xf32>
    %c0_6 = arith.constant 0 : index
    %c0_7 = arith.constant 0 : index
    %8 = vector.load %arg7[%c0_6, %c0_7] : memref<128x128xf32, #tpu.memory_space<vmem>>, vector<128x128xf32>
    tpu.vector_store %arg7[%c0_6, %c0_7], %7 {strides = array<i32>} : memref<128x128xf32, #tpu.memory_space<vmem>>, vector<128x128xf32>,
    %c0_i32_8 = arith.constant 0 : i32
    %9 = arith.cmpi eq, %arg2, %c0_i32_8 : i32
    %10 = arith.extui %9 : i1 to i32
    %c0_i32_9 = arith.constant 0 : i32
    %11 = arith.cmpi ne, %10, %c0_i32_9 : i32
    scf.if %11 {
      %c0_10 = arith.constant 0 : index
      %c0_11 = arith.constant 0 : index
      %12 = vector.load %arg7[%c0_10, %c0_11] : memref<128x128xf32, #tpu.memory_space<vmem>>, vector<128x128xf32>
      %c0_12 = arith.constant 0 : index
      %c0_13 = arith.constant 0 : index
      %13 = vector.load %arg5[%c0_12, %c0_13] : memref<1x128xf32, #tpu.memory_space<vmem>>, vector<1x128xf32>
      %14 = vector.broadcast %13 : vector<1x128xf32> to vector<128x128xf32>
      %15 = arith.addf %12, %14 : vector<128x128xf32>
      %16 = arith.truncf %15 : vector<128x128xf32> to vector<128x128xbf16>
      %c0_14 = arith.constant 0 : index
      %c0_15 = arith.constant 0 : index
      %17 = vector.load %arg6[%c0_14, %c0_15] : memref<128x128xbf16, #tpu.memory_space<vmem>>, vector<128x128xbf16>
      tpu.vector_store %arg6[%c0_14, %c0_15], %16 {strides = array<i32>} : memref<128x128xbf16, #tpu.memory_space<vmem>>, vector<128x128xbf16>,
    } else {
    }
    return
  }
  func.func @transform_0(%arg0: i32, %arg1: i32, %arg2: i32) -> (i32, i32) {
    %c0_i32 = arith.constant 0 : i32
    return %arg0, %arg2 : i32, i32
  }
  func.func @transform_1(%arg0: i32, %arg1: i32, %arg2: i32) -> (i32, i32) {
    %c0_i32 = arith.constant 0 : i32
    return %arg2, %arg1 : i32, i32
  }
  func.func @transform_2(%arg0: i32, %arg1: i32, %arg2: i32) -> (i32, i32) {
    %c0_i32 = arith.constant 0 : i32
    %c0_i32_0 = arith.constant 0 : i32
    return %c0_i32, %arg1 : i32, i32
  }
  func.func @transform_3(%arg0: i32, %arg1: i32, %arg2: i32) -> (i32, i32) {
    %c0_i32 = arith.constant 0 : i32
    return %arg0, %arg1 : i32, i32
  }
}

module attributes {stable_mosaic.version = 11 : i64} {
  func.func @_matmul_kernel(%arg0: i32, %arg1: i32, %arg2: i32, %arg3: memref<128x128xbf16, #tpu.memory_space<vmem>>, %arg4: memref<128x128xbf16, #tpu.memory_space<vmem>>, %arg5: memref<1x128xf32, #tpu.memory_space<vmem>>, %arg6: memref<128x128xbf16, #tpu.memory_space<vmem>>, %arg7: memref<128x128xf32, #tpu.memory_space<vmem>>) attributes {dimension_semantics = [#tpu.dimension_semantics<parallel>, #tpu.dimension_semantics<parallel>, #tpu.dimension_semantics<arbitrary>], iteration_bounds = array<i64: 1, 1, 1>, scalar_prefetch = 0 : i64, scratch_operands = 1 : i64, tpu.core_type = #tpu.core_type<tc>, window_params = [{transform_indices = @transform_0, window_bounds = array<i64: 128, 128>}, {transform_indices = @transform_1, window_bounds = array<i64: 128, 128>}, {transform_indices = @transform_2, window_bounds = array<i64: 1, 128>}, {transform_indices = @transform_3, window_bounds = array<i64: 128, 128>}]} {
    %c0_i32 = arith.constant 0 : i32
    %0 = arith.cmpi eq, %arg2, %c0_i32 : i32
    %1 = arith.extui %0 : i1 to i32
    %c0_i32_0 = arith.constant 0 : i32
    %2 = arith.cmpi ne, %1, %c0_i32_0 : i32
    scf.if %2 {
      %cst_10 = arith.constant 0.000000e+00 : f32
      %12 = vector.broadcast %cst_10 : f32 to vector<128x128xf32>
      %c0_11 = arith.constant 0 : index
      %c0_12 = arith.constant 0 : index
      %13 = vector.load %arg7[%c0_11, %c0_12] : memref<128x128xf32, #tpu.memory_space<vmem>>, vector<128x128xf32>
      tpu.vector_store %arg7[%c0_11, %c0_12], %12 {strides = array<i32>} : memref<128x128xf32, #tpu.memory_space<vmem>>, vector<128x128xf32>,
    } else {
    }
    %c0 = arith.constant 0 : index
    %c0_1 = arith.constant 0 : index
    %3 = vector.load %arg7[%c0, %c0_1] : memref<128x128xf32, #tpu.memory_space<vmem>>, vector<128x128xf32>
    %c0_2 = arith.constant 0 : index
    %c0_3 = arith.constant 0 : index
    %4 = vector.load %arg3[%c0_2, %c0_3] : memref<128x128xbf16, #tpu.memory_space<vmem>>, vector<128x128xbf16>
    %c0_4 = arith.constant 0 : index
    %c0_5 = arith.constant 0 : index
    %5 = vector.load %arg4[%c0_4, %c0_5] : memref<128x128xbf16, #tpu.memory_space<vmem>>, vector<128x128xbf16>
    %cst = arith.constant dense<0.000000e+00> : vector<128x128xf32>
    %6 = tpu.matmul %4, %5, %cst {dimension_numbers = #tpu.dot_dimension_numbers<[1], [0], [0], [1], [0, 0, 1, 1], [], []>} : vector<128x128xbf16>, vector<128x128xbf16>, vector<128x128xf32> -> vector<128x128xf32>
    %7 = arith.addf %3, %6 : vector<128x128xf32>
    %c0_6 = arith.constant 0 : index
    %c0_7 = arith.constant 0 : index
    %8 = vector.load %arg7[%c0_6, %c0_7] : memref<128x128xf32, #tpu.memory_space<vmem>>, vector<128x128xf32>
    tpu.vector_store %arg7[%c0_6, %c0_7], %7 {strides = array<i32>} : memref<128x128xf32, #tpu.memory_space<vmem>>, vector<128x128xf32>,
    %c0_i32_8 = arith.constant 0 : i32
    %9 = arith.cmpi eq, %arg2, %c0_i32_8 : i32
    %10 = arith.extui %9 : i1 to i32
    %c0_i32_9 = arith.constant 0 : i32
    %11 = arith.cmpi ne, %10, %c0_i32_9 : i32
    scf.if %11 {
      %c0_10 = arith.constant 0 : index
      %c0_11 = arith.constant 0 : index
      %12 = vector.load %arg7[%c0_10, %c0_11] : memref<128x128xf32, #tpu.memory_space<vmem>>, vector<128x128xf32>
      %c0_12 = arith.constant 0 : index
      %c0_13 = arith.constant 0 : index
      %13 = vector.load %arg5[%c0_12, %c0_13] : memref<1x128xf32, #tpu.memory_space<vmem>>, vector<1x128xf32>
      %14 = vector.broadcast %13 : vector<1x128xf32> to vector<128x128xf32>
      %15 = arith.addf %12, %14 : vector<128x128xf32>
      %cst_14 = arith.constant 0.000000e+00 : f32
      %16 = vector.broadcast %cst_14 : f32 to vector<128x128xf32>
      %17 = arith.maximumf %15, %16 : vector<128x128xf32>
      %18 = arith.truncf %17 : vector<128x128xf32> to vector<128x128xbf16>
      %c0_15 = arith.constant 0 : index
      %c0_16 = arith.constant 0 : index
      %19 = vector.load %arg6[%c0_15, %c0_16] : memref<128x128xbf16, #tpu.memory_space<vmem>>, vector<128x128xbf16>
      tpu.vector_store %arg6[%c0_15, %c0_16], %18 {strides = array<i32>} : memref<128x128xbf16, #tpu.memory_space<vmem>>, vector<128x128xbf16>,
    } else {
    }
    return
  }
  func.func @transform_0(%arg0: i32, %arg1: i32, %arg2: i32) -> (i32, i32) {
    %c0_i32 = arith.constant 0 : i32
    return %arg0, %arg2 : i32, i32
  }
  func.func @transform_1(%arg0: i32, %arg1: i32, %arg2: i32) -> (i32, i32) {
    %c0_i32 = arith.constant 0 : i32
    return %arg2, %arg1 : i32, i32
  }
  func.func @transform_2(%arg0: i32, %arg1: i32, %arg2: i32) -> (i32, i32) {
    %c0_i32 = arith.constant 0 : i32
    %c0_i32_0 = arith.constant 0 : i32
    return %c0_i32, %arg1 : i32, i32
  }
  func.func @transform_3(%arg0: i32, %arg1: i32, %arg2: i32) -> (i32, i32) {
    %c0_i32 = arith.constant 0 : i32
    return %arg0, %arg1 : i32, i32
  }
}

module attributes {stable_mosaic.version = 11 : i64} {
  func.func @_matmul_kernel(%arg0: i32, %arg1: i32, %arg2: i32, %arg3: memref<128x512xbf16, #tpu.memory_space<vmem>>, %arg4: memref<512x128xbf16, #tpu.memory_space<vmem>>, %arg5: memref<1x128xf32, #tpu.memory_space<vmem>>, %arg6: memref<128x128xbf16, #tpu.memory_space<vmem>>, %arg7: memref<128x128xf32, #tpu.memory_space<vmem>>) attributes {dimension_semantics = [#tpu.dimension_semantics<parallel>, #tpu.dimension_semantics<parallel>, #tpu.dimension_semantics<arbitrary>], iteration_bounds = array<i64: 1, 1, 1>, scalar_prefetch = 0 : i64, scratch_operands = 1 : i64, tpu.core_type = #tpu.core_type<tc>, window_params = [{transform_indices = @transform_0, window_bounds = array<i64: 128, 512>}, {transform_indices = @transform_1, window_bounds = array<i64: 512, 128>}, {transform_indices = @transform_2, window_bounds = array<i64: 1, 128>}, {transform_indices = @transform_3, window_bounds = array<i64: 128, 128>}]} {
    %c0_i32 = arith.constant 0 : i32
    %0 = arith.cmpi eq, %arg2, %c0_i32 : i32
    %1 = arith.extui %0 : i1 to i32
    %c0_i32_0 = arith.constant 0 : i32
    %2 = arith.cmpi ne, %1, %c0_i32_0 : i32
    scf.if %2 {
      %cst_10 = arith.constant 0.000000e+00 : f32
      %12 = vector.broadcast %cst_10 : f32 to vector<128x128xf32>
      %c0_11 = arith.constant 0 : index
      %c0_12 = arith.constant 0 : index
      %13 = vector.load %arg7[%c0_11, %c0_12] : memref<128x128xf32, #tpu.memory_space<vmem>>, vector<128x128xf32>
      tpu.vector_store %arg7[%c0_11, %c0_12], %12 {strides = array<i32>} : memref<128x128xf32, #tpu.memory_space<vmem>>, vector<128x128xf32>,
    } else {
    }
    %c0 = arith.constant 0 : index
    %c0_1 = arith.constant 0 : index
    %3 = vector.load %arg7[%c0, %c0_1] : memref<128x128xf32, #tpu.memory_space<vmem>>, vector<128x128xf32>
    %c0_2 = arith.constant 0 : index
    %c0_3 = arith.constant 0 : index
    %4 = vector.load %arg3[%c0_2, %c0_3] : memref<128x512xbf16, #tpu.memory_space<vmem>>, vector<128x512xbf16>
    %c0_4 = arith.constant 0 : index
    %c0_5 = arith.constant 0 : index
    %5 = vector.load %arg4[%c0_4, %c0_5] : memref<512x128xbf16, #tpu.memory_space<vmem>>, vector<512x128xbf16>
    %cst = arith.constant dense<0.000000e+00> : vector<128x128xf32>
    %6 = tpu.matmul %4, %5, %cst {dimension_numbers = #tpu.dot_dimension_numbers<[1], [0], [0], [1], [0, 0, 1, 1], [], []>} : vector<128x512xbf16>, vector<512x128xbf16>, vector<128x128xf32> -> vector<128x128xf32>
    %7 = arith.addf %3, %6 : vector<128x128xf32>
    %c0_6 = arith.constant 0 : index
    %c0_7 = arith.constant 0 : index
    %8 = vector.load %arg7[%c0_6, %c0_7] : memref<128x128xf32, #tpu.memory_space<vmem>>, vector<128x128xf32>
    tpu.vector_store %arg7[%c0_6, %c0_7], %7 {strides = array<i32>} : memref<128x128xf32, #tpu.memory_space<vmem>>, vector<128x128xf32>,
    %c0_i32_8 = arith.constant 0 : i32
    %9 = arith.cmpi eq, %arg2, %c0_i32_8 : i32
    %10 = arith.extui %9 : i1 to i32
    %c0_i32_9 = arith.constant 0 : i32
    %11 = arith.cmpi ne, %10, %c0_i32_9 : i32
    scf.if %11 {
      %c0_10 = arith.constant 0 : index
      %c0_11 = arith.constant 0 : index
      %12 = vector.load %arg7[%c0_10, %c0_11] : memref<128x128xf32, #tpu.memory_space<vmem>>, vector<128x128xf32>
      %c0_12 = arith.constant 0 : index
      %c0_13 = arith.constant 0 : index
      %13 = vector.load %arg5[%c0_12, %c0_13] : memref<1x128xf32, #tpu.memory_space<vmem>>, vector<1x128xf32>
      %14 = vector.broadcast %13 : vector<1x128xf32> to vector<128x128xf32>
      %15 = arith.addf %12, %14 : vector<128x128xf32>
      %16 = arith.truncf %15 : vector<128x128xf32> to vector<128x128xbf16>
      %c0_14 = arith.constant 0 : index
      %c0_15 = arith.constant 0 : index
      %17 = vector.load %arg6[%c0_14, %c0_15] : memref<128x128xbf16, #tpu.memory_space<vmem>>, vector<128x128xbf16>
      tpu.vector_store %arg6[%c0_14, %c0_15], %16 {strides = array<i32>} : memref<128x128xbf16, #tpu.memory_space<vmem>>, vector<128x128xbf16>,
    } else {
    }
    return
  }
  func.func @transform_0(%arg0: i32, %arg1: i32, %arg2: i32) -> (i32, i32) {
    %c0_i32 = arith.constant 0 : i32
    return %arg0, %arg2 : i32, i32
  }
  func.func @transform_1(%arg0: i32, %arg1: i32, %arg2: i32) -> (i32, i32) {
    %c0_i32 = arith.constant 0 : i32
    return %arg2, %arg1 : i32, i32
  }
  func.func @transform_2(%arg0: i32, %arg1: i32, %arg2: i32) -> (i32, i32) {
    %c0_i32 = arith.constant 0 : i32
    %c0_i32_0 = arith.constant 0 : i32
    return %c0_i32, %arg1 : i32, i32
  }
  func.func @transform_3(%arg0: i32, %arg1: i32, %arg2: i32) -> (i32, i32) {
    %c0_i32 = arith.constant 0 : i32
    return %arg0, %arg1 : i32, i32
  }
}

module attributes {stable_mosaic.version = 11 : i64} {
  func.func @_matmul_kernel(%arg0: i32, %arg1: i32, %arg2: i32, %arg3: memref<128x384xbf16, #tpu.memory_space<vmem>>, %arg4: memref<384x128xbf16, #tpu.memory_space<vmem>>, %arg5: memref<1x128xf32, #tpu.memory_space<vmem>>, %arg6: memref<128x128xbf16, #tpu.memory_space<vmem>>, %arg7: memref<128x128xf32, #tpu.memory_space<vmem>>) attributes {dimension_semantics = [#tpu.dimension_semantics<parallel>, #tpu.dimension_semantics<parallel>, #tpu.dimension_semantics<arbitrary>], iteration_bounds = array<i64: 1, 1, 1>, scalar_prefetch = 0 : i64, scratch_operands = 1 : i64, tpu.core_type = #tpu.core_type<tc>, window_params = [{transform_indices = @transform_0, window_bounds = array<i64: 128, 384>}, {transform_indices = @transform_1, window_bounds = array<i64: 384, 128>}, {transform_indices = @transform_2, window_bounds = array<i64: 1, 128>}, {transform_indices = @transform_3, window_bounds = array<i64: 128, 128>}]} {
    %c0_i32 = arith.constant 0 : i32
    %0 = arith.cmpi eq, %arg2, %c0_i32 : i32
    %1 = arith.extui %0 : i1 to i32
    %c0_i32_0 = arith.constant 0 : i32
    %2 = arith.cmpi ne, %1, %c0_i32_0 : i32
    scf.if %2 {
      %cst_10 = arith.constant 0.000000e+00 : f32
      %12 = vector.broadcast %cst_10 : f32 to vector<128x128xf32>
      %c0_11 = arith.constant 0 : index
      %c0_12 = arith.constant 0 : index
      %13 = vector.load %arg7[%c0_11, %c0_12] : memref<128x128xf32, #tpu.memory_space<vmem>>, vector<128x128xf32>
      tpu.vector_store %arg7[%c0_11, %c0_12], %12 {strides = array<i32>} : memref<128x128xf32, #tpu.memory_space<vmem>>, vector<128x128xf32>,
    } else {
    }
    %c0 = arith.constant 0 : index
    %c0_1 = arith.constant 0 : index
    %3 = vector.load %arg7[%c0, %c0_1] : memref<128x128xf32, #tpu.memory_space<vmem>>, vector<128x128xf32>
    %c0_2 = arith.constant 0 : index
    %c0_3 = arith.constant 0 : index
    %4 = vector.load %arg3[%c0_2, %c0_3] : memref<128x384xbf16, #tpu.memory_space<vmem>>, vector<128x384xbf16>
    %c0_4 = arith.constant 0 : index
    %c0_5 = arith.constant 0 : index
    %5 = vector.load %arg4[%c0_4, %c0_5] : memref<384x128xbf16, #tpu.memory_space<vmem>>, vector<384x128xbf16>
    %cst = arith.constant dense<0.000000e+00> : vector<128x128xf32>
    %6 = tpu.matmul %4, %5, %cst {dimension_numbers = #tpu.dot_dimension_numbers<[1], [0], [0], [1], [0, 0, 1, 1], [], []>} : vector<128x384xbf16>, vector<384x128xbf16>, vector<128x128xf32> -> vector<128x128xf32>
    %7 = arith.addf %3, %6 : vector<128x128xf32>
    %c0_6 = arith.constant 0 : index
    %c0_7 = arith.constant 0 : index
    %8 = vector.load %arg7[%c0_6, %c0_7] : memref<128x128xf32, #tpu.memory_space<vmem>>, vector<128x128xf32>
    tpu.vector_store %arg7[%c0_6, %c0_7], %7 {strides = array<i32>} : memref<128x128xf32, #tpu.memory_space<vmem>>, vector<128x128xf32>,
    %c0_i32_8 = arith.constant 0 : i32
    %9 = arith.cmpi eq, %arg2, %c0_i32_8 : i32
    %10 = arith.extui %9 : i1 to i32
    %c0_i32_9 = arith.constant 0 : i32
    %11 = arith.cmpi ne, %10, %c0_i32_9 : i32
    scf.if %11 {
      %c0_10 = arith.constant 0 : index
      %c0_11 = arith.constant 0 : index
      %12 = vector.load %arg7[%c0_10, %c0_11] : memref<128x128xf32, #tpu.memory_space<vmem>>, vector<128x128xf32>
      %c0_12 = arith.constant 0 : index
      %c0_13 = arith.constant 0 : index
      %13 = vector.load %arg5[%c0_12, %c0_13] : memref<1x128xf32, #tpu.memory_space<vmem>>, vector<1x128xf32>
      %14 = vector.broadcast %13 : vector<1x128xf32> to vector<128x128xf32>
      %15 = arith.addf %12, %14 : vector<128x128xf32>
      %16 = arith.truncf %15 : vector<128x128xf32> to vector<128x128xbf16>
      %c0_14 = arith.constant 0 : index
      %c0_15 = arith.constant 0 : index
      %17 = vector.load %arg6[%c0_14, %c0_15] : memref<128x128xbf16, #tpu.memory_space<vmem>>, vector<128x128xbf16>
      tpu.vector_store %arg6[%c0_14, %c0_15], %16 {strides = array<i32>} : memref<128x128xbf16, #tpu.memory_space<vmem>>, vector<128x128xbf16>,
    } else {
    }
    return
  }
  func.func @transform_0(%arg0: i32, %arg1: i32, %arg2: i32) -> (i32, i32) {
    %c0_i32 = arith.constant 0 : i32
    return %arg0, %arg2 : i32, i32
  }
  func.func @transform_1(%arg0: i32, %arg1: i32, %arg2: i32) -> (i32, i32) {
    %c0_i32 = arith.constant 0 : i32
    return %arg2, %arg1 : i32, i32
  }
  func.func @transform_2(%arg0: i32, %arg1: i32, %arg2: i32) -> (i32, i32) {
    %c0_i32 = arith.constant 0 : i32
    %c0_i32_0 = arith.constant 0 : i32
    return %c0_i32, %arg1 : i32, i32
  }
  func.func @transform_3(%arg0: i32, %arg1: i32, %arg2: i32) -> (i32, i32) {
    %c0_i32 = arith.constant 0 : i32
    return %arg0, %arg1 : i32, i32
  }
}

module attributes {stable_mosaic.version = 11 : i64} {
  func.func @_matmul_kernel(%arg0: i32, %arg1: i32, %arg2: i32, %arg3: memref<32x128xbf16, #tpu.memory_space<vmem>>, %arg4: memref<128x256xbf16, #tpu.memory_space<vmem>>, %arg5: memref<1x256xf32, #tpu.memory_space<vmem>>, %arg6: memref<32x256xbf16, #tpu.memory_space<vmem>>, %arg7: memref<32x256xf32, #tpu.memory_space<vmem>>) attributes {dimension_semantics = [#tpu.dimension_semantics<parallel>, #tpu.dimension_semantics<parallel>, #tpu.dimension_semantics<arbitrary>], iteration_bounds = array<i64: 1, 2, 1>, scalar_prefetch = 0 : i64, scratch_operands = 1 : i64, tpu.core_type = #tpu.core_type<tc>, window_params = [{transform_indices = @transform_0, window_bounds = array<i64: 32, 128>}, {transform_indices = @transform_1, window_bounds = array<i64: 128, 256>}, {transform_indices = @transform_2, window_bounds = array<i64: 1, 256>}, {transform_indices = @transform_3, window_bounds = array<i64: 32, 256>}]} {
    %c0_i32 = arith.constant 0 : i32
    %0 = arith.cmpi eq, %arg2, %c0_i32 : i32
    %1 = arith.extui %0 : i1 to i32
    %c0_i32_0 = arith.constant 0 : i32
    %2 = arith.cmpi ne, %1, %c0_i32_0 : i32
    scf.if %2 {
      %cst_10 = arith.constant 0.000000e+00 : f32
      %12 = vector.broadcast %cst_10 : f32 to vector<32x256xf32>
      %c0_11 = arith.constant 0 : index
      %c0_12 = arith.constant 0 : index
      %13 = vector.load %arg7[%c0_11, %c0_12] : memref<32x256xf32, #tpu.memory_space<vmem>>, vector<32x256xf32>
      tpu.vector_store %arg7[%c0_11, %c0_12], %12 {strides = array<i32>} : memref<32x256xf32, #tpu.memory_space<vmem>>, vector<32x256xf32>,
    } else {
    }
    %c0 = arith.constant 0 : index
    %c0_1 = arith.constant 0 : index
    %3 = vector.load %arg7[%c0, %c0_1] : memref<32x256xf32, #tpu.memory_space<vmem>>, vector<32x256xf32>
    %c0_2 = arith.constant 0 : index
    %c0_3 = arith.constant 0 : index
    %4 = vector.load %arg3[%c0_2, %c0_3] : memref<32x128xbf16, #tpu.memory_space<vmem>>, vector<32x128xbf16>
    %c0_4 = arith.constant 0 : index
    %c0_5 = arith.constant 0 : index
    %5 = vector.load %arg4[%c0_4, %c0_5] : memref<128x256xbf16, #tpu.memory_space<vmem>>, vector<128x256xbf16>
    %cst = arith.constant dense<0.000000e+00> : vector<32x256xf32>
    %6 = tpu.matmul %4, %5, %cst {dimension_numbers = #tpu.dot_dimension_numbers<[1], [0], [0], [1], [0, 0, 1, 1], [], []>} : vector<32x128xbf16>, vector<128x256xbf16>, vector<32x256xf32> -> vector<32x256xf32>
    %7 = arith.addf %3, %6 : vector<32x256xf32>
    %c0_6 = arith.constant 0 : index
    %c0_7 = arith.constant 0 : index
    %8 = vector.load %arg7[%c0_6, %c0_7] : memref<32x256xf32, #tpu.memory_space<vmem>>, vector<32x256xf32>
    tpu.vector_store %arg7[%c0_6, %c0_7], %7 {strides = array<i32>} : memref<32x256xf32, #tpu.memory_space<vmem>>, vector<32x256xf32>,
    %c0_i32_8 = arith.constant 0 : i32
    %9 = arith.cmpi eq, %arg2, %c0_i32_8 : i32
    %10 = arith.extui %9 : i1 to i32
    %c0_i32_9 = arith.constant 0 : i32
    %11 = arith.cmpi ne, %10, %c0_i32_9 : i32
    scf.if %11 {
      %c0_10 = arith.constant 0 : index
      %c0_11 = arith.constant 0 : index
      %12 = vector.load %arg7[%c0_10, %c0_11] : memref<32x256xf32, #tpu.memory_space<vmem>>, vector<32x256xf32>
      %c0_12 = arith.constant 0 : index
      %c0_13 = arith.constant 0 : index
      %13 = vector.load %arg5[%c0_12, %c0_13] : memref<1x256xf32, #tpu.memory_space<vmem>>, vector<1x256xf32>
      %14 = vector.broadcast %13 : vector<1x256xf32> to vector<32x256xf32>
      %15 = arith.addf %12, %14 : vector<32x256xf32>
      %16 = arith.truncf %15 : vector<32x256xf32> to vector<32x256xbf16>
      %c0_14 = arith.constant 0 : index
      %c0_15 = arith.constant 0 : index
      %17 = vector.load %arg6[%c0_14, %c0_15] : memref<32x256xbf16, #tpu.memory_space<vmem>>, vector<32x256xbf16>
      tpu.vector_store %arg6[%c0_14, %c0_15], %16 {strides = array<i32>} : memref<32x256xbf16, #tpu.memory_space<vmem>>, vector<32x256xbf16>,
    } else {
    }
    return
  }
  func.func @transform_0(%arg0: i32, %arg1: i32, %arg2: i32) -> (i32, i32) {
    %c0_i32 = arith.constant 0 : i32
    return %arg0, %arg2 : i32, i32
  }
  func.func @transform_1(%arg0: i32, %arg1: i32, %arg2: i32) -> (i32, i32) {
    %c0_i32 = arith.constant 0 : i32
    return %arg2, %arg1 : i32, i32
  }
  func.func @transform_2(%arg0: i32, %arg1: i32, %arg2: i32) -> (i32, i32) {
    %c0_i32 = arith.constant 0 : i32
    %c0_i32_0 = arith.constant 0 : i32
    return %c0_i32, %arg1 : i32, i32
  }
  func.func @transform_3(%arg0: i32, %arg1: i32, %arg2: i32) -> (i32, i32) {
    %c0_i32 = arith.constant 0 : i32
    return %arg0, %arg1 : i32, i32
  }
}

module attributes {stable_mosaic.version = 11 : i64} {
  func.func @_matmul_kernel(%arg0: i32, %arg1: i32, %arg2: i32, %arg3: memref<32x128xbf16, #tpu.memory_space<vmem>>, %arg4: memref<128x256xbf16, #tpu.memory_space<vmem>>, %arg5: memref<1x256xf32, #tpu.memory_space<vmem>>, %arg6: memref<32x256xf32, #tpu.memory_space<vmem>>, %arg7: memref<32x256xf32, #tpu.memory_space<vmem>>) attributes {dimension_semantics = [#tpu.dimension_semantics<parallel>, #tpu.dimension_semantics<parallel>, #tpu.dimension_semantics<arbitrary>], iteration_bounds = array<i64: 1, 6, 1>, scalar_prefetch = 0 : i64, scratch_operands = 1 : i64, tpu.core_type = #tpu.core_type<tc>, window_params = [{transform_indices = @transform_0, window_bounds = array<i64: 32, 128>}, {transform_indices = @transform_1, window_bounds = array<i64: 128, 256>}, {transform_indices = @transform_2, window_bounds = array<i64: 1, 256>}, {transform_indices = @transform_3, window_bounds = array<i64: 32, 256>}]} {
    %c0_i32 = arith.constant 0 : i32
    %0 = arith.cmpi eq, %arg2, %c0_i32 : i32
    %1 = arith.extui %0 : i1 to i32
    %c0_i32_0 = arith.constant 0 : i32
    %2 = arith.cmpi ne, %1, %c0_i32_0 : i32
    scf.if %2 {
      %cst_10 = arith.constant 0.000000e+00 : f32
      %12 = vector.broadcast %cst_10 : f32 to vector<32x256xf32>
      %c0_11 = arith.constant 0 : index
      %c0_12 = arith.constant 0 : index
      %13 = vector.load %arg7[%c0_11, %c0_12] : memref<32x256xf32, #tpu.memory_space<vmem>>, vector<32x256xf32>
      tpu.vector_store %arg7[%c0_11, %c0_12], %12 {strides = array<i32>} : memref<32x256xf32, #tpu.memory_space<vmem>>, vector<32x256xf32>,
    } else {
    }
    %c0 = arith.constant 0 : index
    %c0_1 = arith.constant 0 : index
    %3 = vector.load %arg7[%c0, %c0_1] : memref<32x256xf32, #tpu.memory_space<vmem>>, vector<32x256xf32>
    %c0_2 = arith.constant 0 : index
    %c0_3 = arith.constant 0 : index
    %4 = vector.load %arg3[%c0_2, %c0_3] : memref<32x128xbf16, #tpu.memory_space<vmem>>, vector<32x128xbf16>
    %c0_4 = arith.constant 0 : index
    %c0_5 = arith.constant 0 : index
    %5 = vector.load %arg4[%c0_4, %c0_5] : memref<128x256xbf16, #tpu.memory_space<vmem>>, vector<128x256xbf16>
    %cst = arith.constant dense<0.000000e+00> : vector<32x256xf32>
    %6 = tpu.matmul %4, %5, %cst {dimension_numbers = #tpu.dot_dimension_numbers<[1], [0], [0], [1], [0, 0, 1, 1], [], []>} : vector<32x128xbf16>, vector<128x256xbf16>, vector<32x256xf32> -> vector<32x256xf32>
    %7 = arith.addf %3, %6 : vector<32x256xf32>
    %c0_6 = arith.constant 0 : index
    %c0_7 = arith.constant 0 : index
    %8 = vector.load %arg7[%c0_6, %c0_7] : memref<32x256xf32, #tpu.memory_space<vmem>>, vector<32x256xf32>
    tpu.vector_store %arg7[%c0_6, %c0_7], %7 {strides = array<i32>} : memref<32x256xf32, #tpu.memory_space<vmem>>, vector<32x256xf32>,
    %c0_i32_8 = arith.constant 0 : i32
    %9 = arith.cmpi eq, %arg2, %c0_i32_8 : i32
    %10 = arith.extui %9 : i1 to i32
    %c0_i32_9 = arith.constant 0 : i32
    %11 = arith.cmpi ne, %10, %c0_i32_9 : i32
    scf.if %11 {
      %c0_10 = arith.constant 0 : index
      %c0_11 = arith.constant 0 : index
      %12 = vector.load %arg7[%c0_10, %c0_11] : memref<32x256xf32, #tpu.memory_space<vmem>>, vector<32x256xf32>
      %c0_12 = arith.constant 0 : index
      %c0_13 = arith.constant 0 : index
      %13 = vector.load %arg5[%c0_12, %c0_13] : memref<1x256xf32, #tpu.memory_space<vmem>>, vector<1x256xf32>
      %14 = vector.broadcast %13 : vector<1x256xf32> to vector<32x256xf32>
      %15 = arith.addf %12, %14 : vector<32x256xf32>
      %c0_14 = arith.constant 0 : index
      %c0_15 = arith.constant 0 : index
      %16 = vector.load %arg6[%c0_14, %c0_15] : memref<32x256xf32, #tpu.memory_space<vmem>>, vector<32x256xf32>
      tpu.vector_store %arg6[%c0_14, %c0_15], %15 {strides = array<i32>} : memref<32x256xf32, #tpu.memory_space<vmem>>, vector<32x256xf32>,
    } else {
    }
    return
  }
  func.func @transform_0(%arg0: i32, %arg1: i32, %arg2: i32) -> (i32, i32) {
    %c0_i32 = arith.constant 0 : i32
    return %arg0, %arg2 : i32, i32
  }
  func.func @transform_1(%arg0: i32, %arg1: i32, %arg2: i32) -> (i32, i32) {
    %c0_i32 = arith.constant 0 : i32
    return %arg2, %arg1 : i32, i32
  }
  func.func @transform_2(%arg0: i32, %arg1: i32, %arg2: i32) -> (i32, i32) {
    %c0_i32 = arith.constant 0 : i32
    %c0_i32_0 = arith.constant 0 : i32
    return %c0_i32, %arg1 : i32, i32
  }
  func.func @transform_3(%arg0: i32, %arg1: i32, %arg2: i32) -> (i32, i32) {
    %c0_i32 = arith.constant 0 : i32
    return %arg0, %arg1 : i32, i32
  }
}

</mosaic_0001>

<llo_original>
// kernel: deeplab_forward.32
$region0: #{deeplab_forward.32}
  #allocation0 [shape = 'u32[]', space=smem, size = 0x4, offset = 0x4, fixed_abs, tag = 'smem constant byte address 0x4 - core index']
  #allocation1 [shape = 'u32[144,128]{1,0:T(1,128)}', space=vmem, size = 0x12000, scoped, tag = 'internal scratch']
  %s0 = inlined_call_operand.vmem [shape: bf16[2,256,128], index: 0, kind: input, shape index: {}]
  %s1 = inlined_call_operand.vmem [shape: bf16[2,256,128], index: 1, kind: output, shape index: {}]
  %s2 = sld [smem:[#allocation0]]
  $region37: #{deeplab_forward.32} parent=0
    _
  %s4 = ssub.s32 1, %s2
  %s5 = scalar_select 0, %s4, %s2
  loop: start=0, step=1, limit=4
  $region2: #{deeplab_forward.32} parent=0 // loop_pre_header
    _
  $region3: #{deeplab_forward.32} parent=0 // loop_header
    %s7 = sphi 0, %s11
    %p8 = scmp.ge.s32.totalorder %s7, 4
    %s14 = sphi 0, %s26
    %s15 = sphi 0, %s22
    %s16 = sphi 0, %s14
    %s17 = sphi 0, %s15
    %s18 = sphi 0, %s16
    %s19 = sphi 0, %s17
    %s31 = sphi 0, %s33
    %s34 = sphi 0, %s31
    %s35 = sphi 0, %s34
    %s51 = sphi 0, %s35
    %s59 = sphi 0, %s61
    %s62 = sphi 0, %s59
    %s63 = sphi 0, %s62
    %s79 = sphi 0, %s63
  $region4: #{deeplab_forward.32} parent=0 // loop_header_branch
    %10 = sbr.rel (%p8) target = $region8
  $region5: #{deeplab_forward.32} parent=0 // loop_body
    %s12 = ssub.s32 %s7, 1
    %s13 = ssub.s32 %s7, 2
    %s20 = sadd.s32 1, %s15
    %p21 = scmp.ge.s32.totalorder %s20, 1
    %s22 = scalar_select %p21, 0, %s20
    %s23 = sadd.s32 1, %s14
    %s24 = scalar_select %p21, %s23, %s14
    %p25 = scmp.ge.s32.totalorder %s24, 2
    %s26 = scalar_select %p25, 0, %s24
    %s27 = ssub.s32 %s14, %s26
    %s28 = ssub.s32 %s15, %s22
    %s29 = sor.u32 %s27, %s28
    %p30 = scmp.eq.s32.totalorder %s29, 0
    %s32 = sadd.s32 %s31, 1
    %s33 = scalar_select %p30, %s31, %s32
    %p36 = pneg %p30
    %p37 = scmp.eq.s32.totalorder %s7, 1
    %p38 = por %p36, %p37
    %p39 = scmp.ne.s32.totalorder %s31, %s34
    %p40 = scmp.eq.s32.totalorder %s7, 0
    %p41 = por %p39, %p40
    %p42 = scmp.ne.s32.totalorder %s31, %s34
    %p43 = scmp.eq.s32.totalorder %s12, 1
    %p44 = por %p42, %p43
    %p45 = scmp.ne.s32.totalorder %s34, %s35
    %p46 = scmp.eq.s32.totalorder %s12, 0
    %p47 = por %p45, %p46
    %p48 = scmp.ne.s32.totalorder %s34, %s35
    %p49 = scmp.eq.s32.totalorder %s13, 1
    %p50 = por %p48, %p49
    %p52 = scmp.ne.s32.totalorder %s35, %s51
    %p53 = scmp.eq.s32.totalorder %s13, 0
    %p54 = por %p52, %p53
    %s55 = ssub.s32 %s14, %s26
    %s56 = ssub.s32 %s15, %s22
    %s57 = sor.u32 %s55, %s56
    %p58 = scmp.eq.s32.totalorder %s57, 0
    %s60 = sadd.s32 %s59, 1
    %s61 = scalar_select %p58, %s59, %s60
    %p64 = pneg %p58
    %p65 = scmp.eq.s32.totalorder %s7, 1
    %p66 = por %p64, %p65
    %p67 = scmp.ne.s32.totalorder %s59, %s62
    %p68 = scmp.eq.s32.totalorder %s7, 0
    %p69 = por %p67, %p68
    %p70 = scmp.ne.s32.totalorder %s59, %s62
    %p71 = scmp.eq.s32.totalorder %s12, 1
    %p72 = por %p70, %p71
    %p73 = scmp.ne.s32.totalorder %s62, %s63
    %p74 = scmp.eq.s32.totalorder %s12, 0
    %p75 = por %p73, %p74
    %p76 = scmp.ne.s32.totalorder %s62, %s63
    %p77 = scmp.eq.s32.totalorder %s13, 1
    %p78 = por %p76, %p77
    %p80 = scmp.ne.s32.totalorder %s63, %s79
    %p81 = scmp.eq.s32.totalorder %s13, 0
    %p82 = por %p80, %p81
    %p83 = scmp.le.s32.totalorder 1, %s7
    %p84 = scmp.lt.s32.totalorder %s7, 3
    %p85 = pnand %p83, %p84
    %p86 = pneg %p85
    // Predicated region
    $region9: #{deeplab_forward.32} parent=5 // pred_check
      _
    $region10: #{deeplab_forward.32} parent=5 // pred_check_branch
      %88 = sbr.rel (%p85) target = $region12
    $region11: #{deeplab_forward.32} parent=5 // pred_region
      %s89 = ssub.s32 %s7, 1
    $region12: #{deeplab_forward.32} parent=5 // pred_fallthru
      _
    %p90 = scmp.lt.s32.totalorder %s7, 2
    // Predicated region
    $region13: #{deeplab_forward.32} parent=5 // pred_check
      %p91 = pneg %p90
    $region14: #{deeplab_forward.32} parent=5 // pred_check_branch
      %93 = sbr.rel (%p91) target = $region16
    $region15: #{deeplab_forward.32} parent=5 // pred_region
      // Predicated region
      $region17: #{deeplab_forward.32} parent=15 // pred_check
        %p94 = pneg %p41
      $region18: #{deeplab_forward.32} parent=15 // pred_check_branch
        %96 = sbr.rel (%p94) target = $region20
      $region19: #{deeplab_forward.32} parent=15 // pred_region
        %p97 = scmp.lt.s32.totalorder %s14, 1
        %s98 = scalar_select %p97, %s14, 1
        %p99 = scmp.lt.s32.totalorder %s15, 0
        %s100 = scalar_select %p99, %s15, 0
        %s101 = smul.addr %s98, 32
        %s102 = sadd.s32 %s100, %s101
        %s103 = smul.addr %s102, 4
        %s104 = scalar_lea.vmem %s0, %s103
      $region20: #{deeplab_forward.32} parent=15 // pred_fallthru
        _
    $region16: #{deeplab_forward.32} parent=5 // pred_fallthru
      _
    %p105 = scmp.le.s32.totalorder 1, %s7
    %p106 = scmp.lt.s32.totalorder %s7, 3
    %p107 = pnand %p105, %p106
    %p108 = pneg %p107
    // Predicated region
    $region21: #{deeplab_forward.32} parent=5 // pred_check
      _
    $region22: #{deeplab_forward.32} parent=5 // pred_check_branch
      %110 = sbr.rel (%p107) target = $region24
    $region23: #{deeplab_forward.32} parent=5 // pred_region
      %s111 = ssub.s32 %s7, 1
      %p112 = scmp.lt.s32.totalorder %s16, 1
      %s113 = scalar_select %p112, %s16, 1
      %p114 = scmp.lt.s32.totalorder %s17, 0
      %s115 = scalar_select %p114, %s17, 0
      %s116 = smul.addr %s113, 32
      %s117 = sadd.s32 %s115, %s116
      %s118 = smul.addr %s117, 4
      %s119 = scalar_lea.vmem %s0, %s118
      %p120 = pneg %p47
      %p121 = pneg %p44
      %p122 = pneg %p75
      %p123 = pneg %p72
      %p124 = scmp.lt.s32.totalorder %s16, 1
      %s125 = scalar_select %p124, %s16, 1
      %p126 = scmp.lt.s32.totalorder %s17, 0
      %s127 = scalar_select %p126, %s17, 0
      %s128 = smul.addr %s125, 32
      %s129 = sadd.s32 %s127, %s128
      %s130 = smul.addr %s129, 4
      %s131 = scalar_lea.vmem %s1, %s130
      %p132 = scmp.lt.s32.totalorder %s16, 1
      %s133 = scalar_select %p132, %s16, 1
      %p134 = scmp.lt.s32.totalorder %s17, 0
      %s135 = scalar_select %p134, %s17, 0
      %s136 = smul.addr %s133, 32
      %s137 = sadd.s32 %s135, %s136
      %s138 = smul.addr %s137, 4
      %s139 = scalar_lea.vmem %s0, %s138
      %p140 = scmp.lt.s32.totalorder %s16, 1
      %s141 = scalar_select %p140, %s16, 1
      %p142 = scmp.lt.s32.totalorder %s17, 0
      %s143 = scalar_select %p142, %s17, 0
      %s144 = smul.addr %s141, 32
      %s145 = sadd.s32 %s143, %s144
      %s146 = smul.addr %s145, 4
      %s147 = scalar_lea.vmem %s1, %s146
      %v148 = vld [vmem:[%s139] sm:$0xf]
      %v149 = vld [vmem:[%s139 + $0x4] sm:$0xf]
      %v150 = vld [vmem:[%s139 + $0x8] sm:$0xf]
      %v151 = vld [vmem:[%s139 + $0xc] sm:$0xf]
      %v152 = vld [vmem:[%s139 + $0x10] sm:$0xf]
      %v153 = vld [vmem:[%s139 + $0x14] sm:$0xf]
      %v154 = vld [vmem:[%s139 + $0x18] sm:$0xf]
      %v155 = vld [vmem:[%s139 + $0x1c] sm:$0xf]
      %v156 = vld [vmem:[%s139 + $0x20] sm:$0xf]
      %v157 = vld [vmem:[%s139 + $0x24] sm:$0xf]
      %v158 = vld [vmem:[%s139 + $0x28] sm:$0xf]
      %v159 = vld [vmem:[%s139 + $0x2c] sm:$0xf]
      %v160 = vld [vmem:[%s139 + $0x30] sm:$0xf]
      %v161 = vld [vmem:[%s139 + $0x34] sm:$0xf]
      %v162 = vld [vmem:[%s139 + $0x38] sm:$0xf]
      %v163 = vld [vmem:[%s139 + $0x3c] sm:$0xf]
      %v164 = vld [vmem:[%s139 + $0x40] sm:$0xf]
      %v165 = vld [vmem:[%s139 + $0x44] sm:$0xf]
      %v166 = vld [vmem:[%s139 + $0x48] sm:$0xf]
      %v167 = vld [vmem:[%s139 + $0x4c] sm:$0xf]
      %v168 = vld [vmem:[%s139 + $0x50] sm:$0xf]
      %v169 = vld [vmem:[%s139 + $0x54] sm:$0xf]
      %v170 = vld [vmem:[%s139 + $0x58] sm:$0xf]
      %v171 = vld [vmem:[%s139 + $0x5c] sm:$0xf]
      %v172 = vld [vmem:[%s139 + $0x60] sm:$0xf]
      %v173 = vld [vmem:[%s139 + $0x64] sm:$0xf]
      %v174 = vld [vmem:[%s139 + $0x68] sm:$0xf]
      %v175 = vld [vmem:[%s139 + $0x6c] sm:$0xf]
      %v176 = vld [vmem:[%s139 + $0x70] sm:$0xf]
      %v177 = vld [vmem:[%s139 + $0x74] sm:$0xf]
      %v178 = vld [vmem:[%s139 + $0x78] sm:$0xf]
      %v179 = vld [vmem:[%s139 + $0x7c] sm:$0xf]
      %v180 = vunpack.c.l.bf16 %v148
      %v181 = vunpack.c.l.bf16 %v149
      %v182 = vunpack.c.l.bf16 %v150
      %v183 = vunpack.c.l.bf16 %v151
      %v184 = vunpack.c.l.bf16 %v152
      %v185 = vunpack.c.l.bf16 %v153
      %v186 = vunpack.c.l.bf16 %v154
      %v187 = vunpack.c.l.bf16 %v155
      %v188 = vunpack.c.l.bf16 %v156
      %v189 = vunpack.c.l.bf16 %v157
      %v190 = vunpack.c.l.bf16 %v158
      %v191 = vunpack.c.l.bf16 %v159
      %v192 = vunpack.c.l.bf16 %v160
      %v193 = vunpack.c.l.bf16 %v161
      %v194 = vunpack.c.l.bf16 %v162
      %v195 = vunpack.c.l.bf16 %v163
      %v196 = vunpack.c.l.bf16 %v164
      %v197 = vunpack.c.l.bf16 %v165
      %v198 = vunpack.c.l.bf16 %v166
      %v199 = vunpack.c.l.bf16 %v167
      %v200 = vunpack.c.l.bf16 %v168
      %v201 = vunpack.c.l.bf16 %v169
      %v202 = vunpack.c.l.bf16 %v170
      %v203 = vunpack.c.l.bf16 %v171
      %v204 = vunpack.c.l.bf16 %v172
      %v205 = vunpack.c.l.bf16 %v173
      %v206 = vunpack.c.l.bf16 %v174
      %v207 = vunpack.c.l.bf16 %v175
      %v208 = vunpack.c.l.bf16 %v176
      %v209 = vunpack.c.l.bf16 %v177
      %v210 = vunpack.c.l.bf16 %v178
      %v211 = vunpack.c.l.bf16 %v179
      %v212 = vadd.f32 %v180, %v181
      %v213 = vadd.f32 %v212, %v182
      %v214 = vadd.f32 %v213, %v183
      %v215 = vadd.f32 %v214, %v184
      %v216 = vadd.f32 %v215, %v185
      %v217 = vadd.f32 %v216, %v186
      %v218 = vadd.f32 %v217, %v187
      %v219 = vadd.f32 %v218, %v188
      %v220 = vadd.f32 %v219, %v189
      %v221 = vadd.f32 %v220, %v190
      %v222 = vadd.f32 %v221, %v191
      %v223 = vadd.f32 %v222, %v192
      %v224 = vadd.f32 %v223, %v193
      %v225 = vadd.f32 %v224, %v194
      %v226 = vadd.f32 %v225, %v195
      %v227 = vadd.f32 %v226, %v196
      %v228 = vadd.f32 %v227, %v197
      %v229 = vadd.f32 %v228, %v198
      %v230 = vadd.f32 %v229, %v199
      %v231 = vadd.f32 %v230, %v200
      %v232 = vadd.f32 %v231, %v201
      %v233 = vadd.f32 %v232, %v202
      %v234 = vadd.f32 %v233, %v203
      %v235 = vadd.f32 %v234, %v204
      %v236 = vadd.f32 %v235, %v205
      %v237 = vadd.f32 %v236, %v206
      %v238 = vadd.f32 %v237, %v207
      %v239 = vadd.f32 %v238, %v208
      %v240 = vadd.f32 %v239, %v209
      %v241 = vadd.f32 %v240, %v210
      %v242 = vadd.f32 %v241, %v211
      %v243 = vrot.slane %v242, 4
      %v244 = vadd.f32 %v242, %v243
      %v245 = vrot.slane %v244, 2
      %v246 = vadd.f32 %v244, %v245
      %v247 = vrot.slane %v246, 1
      %v248 = vadd.f32 %v246, %v247
      %v249 = vrcp.pop 256.0
      %v250 = vmul.f32 %v248, %v249
      %v251 = vsub.f32 %v180, %v250
      %v252 = vsub.f32 %v181, %v250
      %v253 = vsub.f32 %v182, %v250
      %v254 = vsub.f32 %v183, %v250
      %v255 = vsub.f32 %v184, %v250
      %v256 = vsub.f32 %v185, %v250
      %v257 = vsub.f32 %v186, %v250
      %v258 = vsub.f32 %v187, %v250
      %v259 = vsub.f32 %v188, %v250
      %v260 = vsub.f32 %v189, %v250
      %v261 = vsub.f32 %v190, %v250
      %v262 = vsub.f32 %v191, %v250
      %v263 = vsub.f32 %v192, %v250
      %v264 = vsub.f32 %v193, %v250
      %v265 = vsub.f32 %v194, %v250
      %v266 = vsub.f32 %v195, %v250
      %v267 = vsub.f32 %v196, %v250
      %v268 = vsub.f32 %v197, %v250
      %v269 = vsub.f32 %v198, %v250
      %v270 = vsub.f32 %v199, %v250
      %v271 = vsub.f32 %v200, %v250
      %v272 = vsub.f32 %v201, %v250
      %v273 = vsub.f32 %v202, %v250
      %v274 = vsub.f32 %v203, %v250
      %v275 = vsub.f32 %v204, %v250
      %v276 = vsub.f32 %v205, %v250
      %v277 = vsub.f32 %v206, %v250
      %v278 = vsub.f32 %v207, %v250
      %v279 = vsub.f32 %v208, %v250
      %v280 = vsub.f32 %v209, %v250
      %v281 = vsub.f32 %v210, %v250
      %v282 = vsub.f32 %v211, %v250
      %v283 = vmul.f32 %v251, %v251
      %v284 = vmul.f32 %v252, %v252
      %v285 = vmul.f32 %v253, %v253
      %v286 = vmul.f32 %v254, %v254
      %v287 = vmul.f32 %v255, %v255
      %v288 = vmul.f32 %v256, %v256
      %v289 = vmul.f32 %v257, %v257
      %v290 = vmul.f32 %v258, %v258
      %v291 = vmul.f32 %v259, %v259
      %v292 = vmul.f32 %v260, %v260
      %v293 = vmul.f32 %v261, %v261
      %v294 = vmul.f32 %v262, %v262
      %v295 = vmul.f32 %v263, %v263
      %v296 = vmul.f32 %v264, %v264
      %v297 = vmul.f32 %v265, %v265
      %v298 = vmul.f32 %v266, %v266
      %v299 = vmul.f32 %v267, %v267
      %v300 = vmul.f32 %v268, %v268
      %v301 = vmul.f32 %v269, %v269
      %v302 = vmul.f32 %v270, %v270
      %v303 = vmul.f32 %v271, %v271
      %v304 = vmul.f32 %v272, %v272
      %v305 = vmul.f32 %v273, %v273
      %v306 = vmul.f32 %v274, %v274
      %v307 = vmul.f32 %v275, %v275
      %v308 = vmul.f32 %v276, %v276
      %v309 = vmul.f32 %v277, %v277
      %v310 = vmul.f32 %v278, %v278
      %v311 = vmul.f32 %v279, %v279
      %v312 = vmul.f32 %v280, %v280
      %v313 = vmul.f32 %v281, %v281
      %v314 = vmul.f32 %v282, %v282
      %v315 = vadd.f32 %v283, %v284
      %v316 = vadd.f32 %v315, %v285
      %v317 = vadd.f32 %v316, %v286
      %v318 = vadd.f32 %v317, %v287
      %v319 = vadd.f32 %v318, %v288
      %v320 = vadd.f32 %v319, %v289
      %v321 = vadd.f32 %v320, %v290
      %v322 = vadd.f32 %v321, %v291
      %v323 = vadd.f32 %v322, %v292
      %v324 = vadd.f32 %v323, %v293
      %v325 = vadd.f32 %v324, %v294
      %v326 = vadd.f32 %v325, %v295
      %v327 = vadd.f32 %v326, %v296
      %v328 = vadd.f32 %v327, %v297
      %v329 = vadd.f32 %v328, %v298
      %v330 = vadd.f32 %v329, %v299
      %v331 = vadd.f32 %v330, %v300
      %v332 = vadd.f32 %v331, %v301
      %v333 = vadd.f32 %v332, %v302
      %v334 = vadd.f32 %v333, %v303
      %v335 = vadd.f32 %v334, %v304
      %v336 = vadd.f32 %v335, %v305
      %v337 = vadd.f32 %v336, %v306
      %v338 = vadd.f32 %v337, %v307
      %v339 = vadd.f32 %v338, %v308
      %v340 = vadd.f32 %v339, %v309
      %v341 = vadd.f32 %v340, %v310
      %v342 = vadd.f32 %v341, %v311
      %v343 = vadd.f32 %v342, %v312
      %v344 = vadd.f32 %v343, %v313
      %v345 = vadd.f32 %v344, %v314
      %v346 = vrot.slane %v345, 4
      %v347 = vadd.f32 %v345, %v346
      %v348 = vrot.slane %v347, 2
      %v349 = vadd.f32 %v347, %v348
      %v350 = vrot.slane %v349, 1
      %v351 = vadd.f32 %v349, %v350
      %v352 = vmul.f32 %v351, %v249
      %v353 = vadd.f32 %v352, 1e-05
      %v354 = vrsqrt.pop %v353
      %v355 = vmul.f32 %v251, %v354
      %v356 = vmul.f32 %v252, %v354
      %v357 = vmul.f32 %v253, %v354
      %v358 = vmul.f32 %v254, %v354
      %v359 = vmul.f32 %v255, %v354
      %v360 = vmul.f32 %v256, %v354
      %v361 = vmul.f32 %v257, %v354
      %v362 = vmul.f32 %v258, %v354
      %v363 = vmul.f32 %v259, %v354
      %v364 = vmul.f32 %v260, %v354
      %v365 = vmul.f32 %v261, %v354
      %v366 = vmul.f32 %v262, %v354
      %v367 = vmul.f32 %v263, %v354
      %v368 = vmul.f32 %v264, %v354
      %v369 = vmul.f32 %v265, %v354
      %v370 = vmul.f32 %v266, %v354
      %v371 = vmul.f32 %v267, %v354
      %v372 = vmul.f32 %v268, %v354
      %v373 = vmul.f32 %v269, %v354
      %v374 = vmul.f32 %v270, %v354
      %v375 = vmul.f32 %v271, %v354
      %v376 = vmul.f32 %v272, %v354
      %v377 = vmul.f32 %v273, %v354
      %v378 = vmul.f32 %v274, %v354
      %v379 = vmul.f32 %v275, %v354
      %v380 = vmul.f32 %v276, %v354
      %v381 = vmul.f32 %v277, %v354
      %v382 = vmul.f32 %v278, %v354
      %v383 = vmul.f32 %v279, %v354
      %v384 = vmul.f32 %v280, %v354
      %v385 = vmul.f32 %v281, %v354
      %v386 = vmul.f32 %v282, %v354
      %v387 = vmax.f32 %v355, 0.0
      %v388 = vmax.f32 %v356, 0.0
      %v389 = vmax.f32 %v357, 0.0
      %v390 = vmax.f32 %v358, 0.0
      %v391 = vmax.f32 %v359, 0.0
      %v392 = vmax.f32 %v360, 0.0
      %v393 = vmax.f32 %v361, 0.0
      %v394 = vmax.f32 %v362, 0.0
      %v395 = vmax.f32 %v363, 0.0
      %v396 = vmax.f32 %v364, 0.0
      %v397 = vmax.f32 %v365, 0.0
      %v398 = vmax.f32 %v366, 0.0
      %v399 = vmax.f32 %v367, 0.0
      %v400 = vmax.f32 %v368, 0.0
      %v401 = vmax.f32 %v369, 0.0
      %v402 = vmax.f32 %v370, 0.0
      %v403 = vmax.f32 %v371, 0.0
      %v404 = vmax.f32 %v372, 0.0
      %v405 = vmax.f32 %v373, 0.0
      %v406 = vmax.f32 %v374, 0.0
      %v407 = vmax.f32 %v375, 0.0
      %v408 = vmax.f32 %v376, 0.0
      %v409 = vmax.f32 %v377, 0.0
      %v410 = vmax.f32 %v378, 0.0
      %v411 = vmax.f32 %v379, 0.0
      %v412 = vmax.f32 %v380, 0.0
      %v413 = vmax.f32 %v381, 0.0
      %v414 = vmax.f32 %v382, 0.0
      %v415 = vmax.f32 %v383, 0.0
      %v416 = vmax.f32 %v384, 0.0
      %v417 = vmax.f32 %v385, 0.0
      %v418 = vmax.f32 %v386, 0.0
      %v419 = vpack.c.bf16 %v388, %v387
      %v420 = vpack.c.bf16 %v390, %v389
      %v421 = vpack.c.bf16 %v392, %v391
      %v422 = vpack.c.bf16 %v394, %v393
      %v423 = vpack.c.bf16 %v396, %v395
      %v424 = vpack.c.bf16 %v398, %v397
      %v425 = vpack.c.bf16 %v400, %v399
      %v426 = vpack.c.bf16 %v402, %v401
      %v427 = vpack.c.bf16 %v404, %v403
      %v428 = vpack.c.bf16 %v406, %v405
      %v429 = vpack.c.bf16 %v408, %v407
      %v430 = vpack.c.bf16 %v410, %v409
      %v431 = vpack.c.bf16 %v412, %v411
      %v432 = vpack.c.bf16 %v414, %v413
      %v433 = vpack.c.bf16 %v416, %v415
      %v434 = vpack.c.bf16 %v418, %v417
      %v451 = vunpack.c.l.b16 %v419
      %v452 = vunpack.c.h.b16 %v419
      %v453 = vunpack.c.l.b16 %v420
      %v454 = vunpack.c.h.b16 %v420
      %v455 = vunpack.c.l.b16 %v421
      %v456 = vunpack.c.h.b16 %v421
      %v457 = vunpack.c.l.b16 %v422
      %v458 = vunpack.c.h.b16 %v422
      %v459 = vunpack.c.l.b16 %v423
      %v460 = vunpack.c.h.b16 %v423
      %v461 = vunpack.c.l.b16 %v424
      %v462 = vunpack.c.h.b16 %v424
      %v463 = vunpack.c.l.b16 %v425
      %v464 = vunpack.c.h.b16 %v425
      %v465 = vunpack.c.l.b16 %v426
      %v466 = vunpack.c.h.b16 %v426
      %v467 = vunpack.c.l.b16 %v427
      %v468 = vunpack.c.h.b16 %v427
      %v469 = vunpack.c.l.b16 %v428
      %v470 = vunpack.c.h.b16 %v428
      %v471 = vunpack.c.l.b16 %v429
      %v472 = vunpack.c.h.b16 %v429
      %v473 = vunpack.c.l.b16 %v430
      %v474 = vunpack.c.h.b16 %v430
      %v475 = vunpack.c.l.b16 %v431
      %v476 = vunpack.c.h.b16 %v431
      %v477 = vunpack.c.l.b16 %v432
      %v478 = vunpack.c.h.b16 %v432
      %v479 = vunpack.c.l.b16 %v433
      %v480 = vunpack.c.h.b16 %v433
      %v481 = vunpack.c.l.b16 %v434
      %v482 = vunpack.c.h.b16 %v434
      %v483 = vpack.c.b16 %v451, %v451
      %v484 = vpack.c.b16 %v452, %v452
      %v485 = vpack.c.b16 %v453, %v453
      %v486 = vpack.c.b16 %v454, %v454
      %v487 = vpack.c.b16 %v455, %v455
      %v488 = vpack.c.b16 %v456, %v456
      %v489 = vpack.c.b16 %v457, %v457
      %v490 = vpack.c.b16 %v458, %v458
      %v491 = vpack.c.b16 %v459, %v459
      %v492 = vpack.c.b16 %v460, %v460
      %v493 = vpack.c.b16 %v461, %v461
      %v494 = vpack.c.b16 %v462, %v462
      %v495 = vpack.c.b16 %v463, %v463
      %v496 = vpack.c.b16 %v464, %v464
      %v497 = vpack.c.b16 %v465, %v465
      %v498 = vpack.c.b16 %v466, %v466
      %v499 = vpack.c.b16 %v467, %v467
      %v500 = vpack.c.b16 %v468, %v468
      %v501 = vpack.c.b16 %v469, %v469
      %v502 = vpack.c.b16 %v470, %v470
      %v503 = vpack.c.b16 %v471, %v471
      %v504 = vpack.c.b16 %v472, %v472
      %v505 = vpack.c.b16 %v473, %v473
      %v506 = vpack.c.b16 %v474, %v474
      %v507 = vpack.c.b16 %v475, %v475
      %v508 = vpack.c.b16 %v476, %v476
      %v509 = vpack.c.b16 %v477, %v477
      %v510 = vpack.c.b16 %v478, %v478
      %v511 = vpack.c.b16 %v479, %v479
      %v512 = vpack.c.b16 %v480, %v480
      %v513 = vpack.c.b16 %v481, %v481
      %v514 = vpack.c.b16 %v482, %v482
      %547 = vst [vmem:[%s147] sm:$0xf] %v483
      %548 = vst [vmem:[%s147 + $0x4] sm:$0xf] %v484
      %549 = vst [vmem:[%s147 + $0x8] sm:$0xf] %v485
      %550 = vst [vmem:[%s147 + $0xc] sm:$0xf] %v486
      %551 = vst [vmem:[%s147 + $0x10] sm:$0xf] %v487
      %552 = vst [vmem:[%s147 + $0x14] sm:$0xf] %v488
      %553 = vst [vmem:[%s147 + $0x18] sm:$0xf] %v489
      %554 = vst [vmem:[%s147 + $0x1c] sm:$0xf] %v490
      %555 = vst [vmem:[%s147 + $0x20] sm:$0xf] %v491
      %556 = vst [vmem:[%s147 + $0x24] sm:$0xf] %v492
      %557 = vst [vmem:[%s147 + $0x28] sm:$0xf] %v493
      %558 = vst [vmem:[%s147 + $0x2c] sm:$0xf] %v494
      %559 = vst [vmem:[%s147 + $0x30] sm:$0xf] %v495
      %560 = vst [vmem:[%s147 + $0x34] sm:$0xf] %v496
      %561 = vst [vmem:[%s147 + $0x38] sm:$0xf] %v497
      %562 = vst [vmem:[%s147 + $0x3c] sm:$0xf] %v498
      %563 = vst [vmem:[%s147 + $0x40] sm:$0xf] %v499
      %564 = vst [vmem:[%s147 + $0x44] sm:$0xf] %v500
      %565 = vst [vmem:[%s147 + $0x48] sm:$0xf] %v501
      %566 = vst [vmem:[%s147 + $0x4c] sm:$0xf] %v502
      %567 = vst [vmem:[%s147 + $0x50] sm:$0xf] %v503
      %568 = vst [vmem:[%s147 + $0x54] sm:$0xf] %v504
      %569 = vst [vmem:[%s147 + $0x58] sm:$0xf] %v505
      %570 = vst [vmem:[%s147 + $0x5c] sm:$0xf] %v506
      %571 = vst [vmem:[%s147 + $0x60] sm:$0xf] %v507
      %572 = vst [vmem:[%s147 + $0x64] sm:$0xf] %v508
      %573 = vst [vmem:[%s147 + $0x68] sm:$0xf] %v509
      %574 = vst [vmem:[%s147 + $0x6c] sm:$0xf] %v510
      %575 = vst [vmem:[%s147 + $0x70] sm:$0xf] %v511
      %576 = vst [vmem:[%s147 + $0x74] sm:$0xf] %v512
      %577 = vst [vmem:[%s147 + $0x78] sm:$0xf] %v513
      %578 = vst [vmem:[%s147 + $0x7c] sm:$0xf] %v514
      %p579 = scmp.lt.s32.totalorder %s16, 1
      %s580 = scalar_select %p579, %s16, 1
      %p581 = scmp.lt.s32.totalorder %s17, 0
      %s582 = scalar_select %p581, %s17, 0
      %s583 = smul.addr %s580, 32
      %s584 = sadd.s32 %s582, %s583
      %s585 = smul.addr %s584, 4
      %s586 = scalar_lea.vmem %s1, %s585
      // Predicated region
      $region25: #{deeplab_forward.32} parent=23 // pred_check
        %p587 = pneg %p72
      $region26: #{deeplab_forward.32} parent=23 // pred_check_branch
        %589 = sbr.rel (%p587) target = $region28
      $region27: #{deeplab_forward.32} parent=23 // pred_region
        _
      $region28: #{deeplab_forward.32} parent=23 // pred_fallthru
        _
    $region24: #{deeplab_forward.32} parent=5 // pred_fallthru
      _
    %p590 = scmp.le.s32.totalorder 2, %s7
    // Predicated region
    $region29: #{deeplab_forward.32} parent=5 // pred_check
      %p591 = pneg %p590
    $region30: #{deeplab_forward.32} parent=5 // pred_check_branch
      %593 = sbr.rel (%p591) target = $region32
    $region31: #{deeplab_forward.32} parent=5 // pred_region
      %s594 = ssub.s32 %s7, 2
      // Predicated region
      $region33: #{deeplab_forward.32} parent=31 // pred_check
        %p595 = pneg %p78
      $region34: #{deeplab_forward.32} parent=31 // pred_check_branch
        %597 = sbr.rel (%p595) target = $region36
      $region35: #{deeplab_forward.32} parent=31 // pred_region
        %p598 = scmp.lt.s32.totalorder %s18, 1
        %s599 = scalar_select %p598, %s18, 1
        %p600 = scmp.lt.s32.totalorder %s19, 0
        %s601 = scalar_select %p600, %s19, 0
        %s602 = smul.addr %s599, 32
        %s603 = sadd.s32 %s601, %s602
        %s604 = smul.addr %s603, 4
        %s605 = scalar_lea.vmem %s1, %s604
      $region36: #{deeplab_forward.32} parent=31 // pred_fallthru
        _
    $region32: #{deeplab_forward.32} parent=5 // pred_fallthru
      _
  $region6: #{deeplab_forward.32} parent=0 // loop_footer
    %s11 = sadd.s32 1, %s7
  $region7: #{deeplab_forward.32} parent=0 // loop_footer_branch
    %6 = sbr.rel target = $region3
  $region8: #{deeplab_forward.32} parent=0 // loop_exit
    _

// kernel: deeplab_forward.31
$region0: #{deeplab_forward.31}
  #allocation0 [shape = 'u32[]', space=smem, size = 0x4, offset = 0x4, fixed_abs, tag = 'smem constant byte address 0x4 - core index']
  #allocation1 [shape = 'u32[144,128]{1,0:T(1,128)}', space=vmem, size = 0x12000, scoped, tag = 'internal scratch']
  #allocation2 [shape = 'f32[256,128]{1,0:T(8,128)}', space=vmem, size = 0x20000, scoped, tag = 'scratch operand']
  %s0 = inlined_call_operand.vmem [shape: bf16[512,128], index: 0, kind: input, shape index: {}]
  %s1 = inlined_call_operand.vmem [shape: bf16[128,128], index: 1, kind: input, shape index: {}]
  %s2 = inlined_call_operand.vmem [shape: f32[1,128], index: 2, kind: input, shape index: {}]
  %s3 = inlined_call_operand.vmem [shape: bf16[512,128], index: 3, kind: output, shape index: {}]
  %s4 = sld [smem:[#allocation0]]
  $region53: #{deeplab_forward.31} parent=0
    _
  %s6 = ssub.s32 1, %s4
  %s7 = scalar_select 0, %s6, %s4
  loop: start=0, step=1, limit=4
  $region2: #{deeplab_forward.31} parent=0 // loop_pre_header
    _
  $region3: #{deeplab_forward.31} parent=0 // loop_header
    %s9 = sphi 0, %s13
    %p10 = scmp.ge.s32.totalorder %s9, 4
    %s16 = sphi 0, %s35
    %s17 = sphi 0, %s31
    %s18 = sphi 0, %s27
    %s19 = sphi 0, %s16
    %s20 = sphi 0, %s17
    %s21 = sphi 0, %s18
    %s22 = sphi 0, %s19
    %s23 = sphi 0, %s20
    %s24 = sphi 0, %s21
    %s40 = sphi 0, %s42
    %s43 = sphi 0, %s40
    %s44 = sphi 0, %s43
    %s60 = sphi 0, %s44
    %s68 = sphi 0, %s70
    %s71 = sphi 0, %s68
    %s72 = sphi 0, %s71
    %s88 = sphi 0, %s72
    %s94 = sphi 0, %s96
    %s97 = sphi 0, %s94
    %s98 = sphi 0, %s97
    %s114 = sphi 0, %s98
    %s122 = sphi 0, %s124
    %s125 = sphi 0, %s122
    %s126 = sphi 0, %s125
    %s142 = sphi 0, %s126
  $region4: #{deeplab_forward.31} parent=0 // loop_header_branch
    %12 = sbr.rel (%p10) target = $region8
  $region5: #{deeplab_forward.31} parent=0 // loop_body
    %s14 = ssub.s32 %s9, 1
    %s15 = ssub.s32 %s9, 2
    %s25 = sadd.s32 1, %s18
    %p26 = scmp.ge.s32.totalorder %s25, 1
    %s27 = scalar_select %p26, 0, %s25
    %s28 = sadd.s32 1, %s17
    %s29 = scalar_select %p26, %s28, %s17
    %p30 = scmp.ge.s32.totalorder %s29, 1
    %s31 = scalar_select %p30, 0, %s29
    %s32 = sadd.s32 1, %s16
    %s33 = scalar_select %p30, %s32, %s16
    %p34 = scmp.ge.s32.totalorder %s33, 2
    %s35 = scalar_select %p34, 0, %s33
    %s36 = ssub.s32 %s16, %s35
    %s37 = ssub.s32 %s18, %s27
    %s38 = sor.u32 %s36, %s37
    %p39 = scmp.eq.s32.totalorder %s38, 0
    %s41 = sadd.s32 %s40, 1
    %s42 = scalar_select %p39, %s40, %s41
    %p45 = pneg %p39
    %p46 = scmp.eq.s32.totalorder %s9, 1
    %p47 = por %p45, %p46
    %p48 = scmp.ne.s32.totalorder %s40, %s43
    %p49 = scmp.eq.s32.totalorder %s9, 0
    %p50 = por %p48, %p49
    %p51 = scmp.ne.s32.totalorder %s40, %s43
    %p52 = scmp.eq.s32.totalorder %s14, 1
    %p53 = por %p51, %p52
    %p54 = scmp.ne.s32.totalorder %s43, %s44
    %p55 = scmp.eq.s32.totalorder %s14, 0
    %p56 = por %p54, %p55
    %p57 = scmp.ne.s32.totalorder %s43, %s44
    %p58 = scmp.eq.s32.totalorder %s15, 1
    %p59 = por %p57, %p58
    %p61 = scmp.ne.s32.totalorder %s44, %s60
    %p62 = scmp.eq.s32.totalorder %s15, 0
    %p63 = por %p61, %p62
    %s64 = ssub.s32 %s18, %s27
    %s65 = ssub.s32 %s17, %s31
    %s66 = sor.u32 %s64, %s65
    %p67 = scmp.eq.s32.totalorder %s66, 0
    %s69 = sadd.s32 %s68, 1
    %s70 = scalar_select %p67, %s68, %s69
    %p73 = pneg %p67
    %p74 = scmp.eq.s32.totalorder %s9, 1
    %p75 = por %p73, %p74
    %p76 = scmp.ne.s32.totalorder %s68, %s71
    %p77 = scmp.eq.s32.totalorder %s9, 0
    %p78 = por %p76, %p77
    %p79 = scmp.ne.s32.totalorder %s68, %s71
    %p80 = scmp.eq.s32.totalorder %s14, 1
    %p81 = por %p79, %p80
    %p82 = scmp.ne.s32.totalorder %s71, %s72
    %p83 = scmp.eq.s32.totalorder %s14, 0
    %p84 = por %p82, %p83
    %p85 = scmp.ne.s32.totalorder %s71, %s72
    %p86 = scmp.eq.s32.totalorder %s15, 1
    %p87 = por %p85, %p86
    %p89 = scmp.ne.s32.totalorder %s72, %s88
    %p90 = scmp.eq.s32.totalorder %s15, 0
    %p91 = por %p89, %p90
    %s92 = ssub.s32 %s17, %s31
    %p93 = scmp.eq.s32.totalorder %s92, 0
    %s95 = sadd.s32 %s94, 1
    %s96 = scalar_select %p93, %s94, %s95
    %p99 = pneg %p93
    %p100 = scmp.eq.s32.totalorder %s9, 1
    %p101 = por %p99, %p100
    %p102 = scmp.ne.s32.totalorder %s94, %s97
    %p103 = scmp.eq.s32.totalorder %s9, 0
    %p104 = por %p102, %p103
    %p105 = scmp.ne.s32.totalorder %s94, %s97
    %p106 = scmp.eq.s32.totalorder %s14, 1
    %p107 = por %p105, %p106
    %p108 = scmp.ne.s32.totalorder %s97, %s98
    %p109 = scmp.eq.s32.totalorder %s14, 0
    %p110 = por %p108, %p109
    %p111 = scmp.ne.s32.totalorder %s97, %s98
    %p112 = scmp.eq.s32.totalorder %s15, 1
    %p113 = por %p111, %p112
    %p115 = scmp.ne.s32.totalorder %s98, %s114
    %p116 = scmp.eq.s32.totalorder %s15, 0
    %p117 = por %p115, %p116
    %s118 = ssub.s32 %s16, %s35
    %s119 = ssub.s32 %s17, %s31
    %s120 = sor.u32 %s118, %s119
    %p121 = scmp.eq.s32.totalorder %s120, 0
    %s123 = sadd.s32 %s122, 1
    %s124 = scalar_select %p121, %s122, %s123
    %p127 = pneg %p121
    %p128 = scmp.eq.s32.totalorder %s9, 1
    %p129 = por %p127, %p128
    %p130 = scmp.ne.s32.totalorder %s122, %s125
    %p131 = scmp.eq.s32.totalorder %s9, 0
    %p132 = por %p130, %p131
    %p133 = scmp.ne.s32.totalorder %s122, %s125
    %p134 = scmp.eq.s32.totalorder %s14, 1
    %p135 = por %p133, %p134
    %p136 = scmp.ne.s32.totalorder %s125, %s126
    %p137 = scmp.eq.s32.totalorder %s14, 0
    %p138 = por %p136, %p137
    %p139 = scmp.ne.s32.totalorder %s125, %s126
    %p140 = scmp.eq.s32.totalorder %s15, 1
    %p141 = por %p139, %p140
    %p143 = scmp.ne.s32.totalorder %s126, %s142
    %p144 = scmp.eq.s32.totalorder %s15, 0
    %p145 = por %p143, %p144
    %p146 = scmp.le.s32.totalorder 1, %s9
    %p147 = scmp.lt.s32.totalorder %s9, 3
    %p148 = pnand %p146, %p147
    %p149 = pneg %p148
    // Predicated region
    $region9: #{deeplab_forward.31} parent=5 // pred_check
      _
    $region10: #{deeplab_forward.31} parent=5 // pred_check_branch
      %151 = sbr.rel (%p148) target = $region12
    $region11: #{deeplab_forward.31} parent=5 // pred_region
      %s152 = ssub.s32 %s9, 1
      // Predicated region
      $region13: #{deeplab_forward.31} parent=11 // pred_check
        %p153 = pneg %p84
      $region14: #{deeplab_forward.31} parent=11 // pred_check_branch
        %155 = sbr.rel (%p153) target = $region16
      $region15: #{deeplab_forward.31} parent=11 // pred_region
        %s156 = smul.u32 16, %s21
        %p157 = scmp.lt.s32.totalorder %s156, 15
        %s158 = scalar_select %p157, %s156, 15
        %p159 = scmp.lt.s32.totalorder %s20, 0
        %s160 = scalar_select %p159, %s20, 0
        %s161 = sadd.s32 %s160, %s158
        %s162 = smul.addr %s161, 4
        %s163 = scalar_lea.vmem %s1, %s162
        %s164 = smul.u32 16, %s21
      $region16: #{deeplab_forward.31} parent=11 // pred_fallthru
        _
      // Predicated region
      $region17: #{deeplab_forward.31} parent=11 // pred_check
        %p165 = pneg %p110
      $region18: #{deeplab_forward.31} parent=11 // pred_check_branch
        %167 = sbr.rel (%p165) target = $region20
      $region19: #{deeplab_forward.31} parent=11 // pred_region
        %p168 = scmp.lt.s32.totalorder %s20, 0
        %s169 = scalar_select %p168, %s20, 0
        %s170 = scalar_lea.vmem %s2, %s169
      $region20: #{deeplab_forward.31} parent=11 // pred_fallthru
        _
    $region12: #{deeplab_forward.31} parent=5 // pred_fallthru
      _
    %p171 = scmp.lt.s32.totalorder %s9, 2
    // Predicated region
    $region21: #{deeplab_forward.31} parent=5 // pred_check
      %p172 = pneg %p171
    $region22: #{deeplab_forward.31} parent=5 // pred_check_branch
      %174 = sbr.rel (%p172) target = $region24
    $region23: #{deeplab_forward.31} parent=5 // pred_region
      // Predicated region
      $region25: #{deeplab_forward.31} parent=23 // pred_check
        %p175 = pneg %p50
      $region26: #{deeplab_forward.31} parent=23 // pred_check_branch
        %177 = sbr.rel (%p175) target = $region28
      $region27: #{deeplab_forward.31} parent=23 // pred_region
        %s178 = smul.u32 32, %s16
        %p179 = scmp.lt.s32.totalorder %s178, 63
        %s180 = scalar_select %p179, %s178, 63
        %p181 = scmp.lt.s32.totalorder %s18, 0
        %s182 = scalar_select %p181, %s18, 0
        %s183 = sadd.s32 %s182, %s180
        %s184 = smul.addr %s183, 4
        %s185 = scalar_lea.vmem %s0, %s184
        %s186 = smul.u32 32, %s16
      $region28: #{deeplab_forward.31} parent=23 // pred_fallthru
        _
    $region24: #{deeplab_forward.31} parent=5 // pred_fallthru
      _
    %p187 = scmp.le.s32.totalorder 1, %s9
    %p188 = scmp.lt.s32.totalorder %s9, 3
    %p189 = pnand %p187, %p188
    %p190 = pneg %p189
    // Predicated region
    $region29: #{deeplab_forward.31} parent=5 // pred_check
      _
    $region30: #{deeplab_forward.31} parent=5 // pred_check_branch
      %192 = sbr.rel (%p189) target = $region32
    $region31: #{deeplab_forward.31} parent=5 // pred_region
      %s193 = ssub.s32 %s9, 1
      %s194 = smul.u32 32, %s19
      %p195 = scmp.lt.s32.totalorder %s194, 63
      %s196 = scalar_select %p195, %s194, 63
      %p197 = scmp.lt.s32.totalorder %s21, 0
      %s198 = scalar_select %p197, %s21, 0
      %s199 = sadd.s32 %s198, %s196
      %s200 = smul.addr %s199, 4
      %s201 = scalar_lea.vmem %s0, %s200
      %p202 = pneg %p56
      %p203 = pneg %p53
      %s204 = smul.u32 16, %s21
      %p205 = scmp.lt.s32.totalorder %s204, 15
      %s206 = scalar_select %p205, %s204, 15
      %p207 = scmp.lt.s32.totalorder %s20, 0
      %s208 = scalar_select %p207, %s20, 0
      %s209 = sadd.s32 %s208, %s206
      %s210 = smul.addr %s209, 4
      %s211 = scalar_lea.vmem %s1, %s210
      %p212 = pneg %p84
      %p213 = pneg %p81
      %p214 = scmp.lt.s32.totalorder %s20, 0
      %s215 = scalar_select %p214, %s20, 0
      %s216 = scalar_lea.vmem %s2, %s215
      %p217 = pneg %p110
      %p218 = pneg %p107
      %p219 = pneg %p138
      %p220 = pneg %p135
      %s221 = smul.u32 32, %s19
      %p222 = scmp.lt.s32.totalorder %s221, 63
      %s223 = scalar_select %p222, %s221, 63
      %p224 = scmp.lt.s32.totalorder %s20, 0
      %s225 = scalar_select %p224, %s20, 0
      %s226 = sadd.s32 %s225, %s223
      %s227 = smul.addr %s226, 4
      %s228 = scalar_lea.vmem %s3, %s227
      %s229 = smul.u32 32, %s19
      %p230 = scmp.lt.s32.totalorder %s229, 63
      %s231 = scalar_select %p230, %s229, 63
      %p232 = scmp.lt.s32.totalorder %s21, 0
      %s233 = scalar_select %p232, %s21, 0
      %s234 = sadd.s32 %s233, %s231
      %s235 = smul.addr %s234, 4
      %s236 = scalar_lea.vmem %s0, %s235
      %s237 = smul.u32 32, %s19
      %s238 = smul.u32 16, %s21
      %p239 = scmp.lt.s32.totalorder %s238, 15
      %s240 = scalar_select %p239, %s238, 15
      %p241 = scmp.lt.s32.totalorder %s20, 0
      %s242 = scalar_select %p241, %s20, 0
      %s243 = sadd.s32 %s242, %s240
      %s244 = smul.addr %s243, 4
      %s245 = scalar_lea.vmem %s1, %s244
      %s246 = smul.u32 16, %s21
      %p247 = scmp.lt.s32.totalorder %s20, 0
      %s248 = scalar_select %p247, %s20, 0
      %s249 = scalar_lea.vmem %s2, %s248
      %s250 = smul.u32 32, %s19
      %p251 = scmp.lt.s32.totalorder %s250, 63
      %s252 = scalar_select %p251, %s250, 63
      %p253 = scmp.lt.s32.totalorder %s20, 0
      %s254 = scalar_select %p253, %s20, 0
      %s255 = sadd.s32 %s254, %s252
      %s256 = smul.addr %s255, 4
      %s257 = scalar_lea.vmem %s3, %s256
      %s258 = smul.u32 32, %s19
      %p260 = scmp.eq.s32.totalorder %s21, 0
      // Predicated region
      $region33: #{deeplab_forward.31} parent=31 // pred_check
        %p261 = pneg %p260
      $region34: #{deeplab_forward.31} parent=31 // pred_check_branch
        %263 = sbr.rel (%p261) target = $region36
      $region35: #{deeplab_forward.31} parent=31 // pred_region
        %264 = vst [vmem:[#allocation2] sm:$0xff] 0.0
        %265 = vst [vmem:[#allocation2 + $0x8] sm:$0xff] 0.0
        %266 = vst [vmem:[#allocation2 + $0x10] sm:$0xff] 0.0
        %267 = vst [vmem:[#allocation2 + $0x18] sm:$0xff] 0.0
        %268 = vst [vmem:[#allocation2 + $0x20] sm:$0xff] 0.0
        %269 = vst [vmem:[#allocation2 + $0x28] sm:$0xff] 0.0
        %270 = vst [vmem:[#allocation2 + $0x30] sm:$0xff] 0.0
        %271 = vst [vmem:[#allocation2 + $0x38] sm:$0xff] 0.0
        %272 = vst [vmem:[#allocation2 + $0x40] sm:$0xff] 0.0
        %273 = vst [vmem:[#allocation2 + $0x48] sm:$0xff] 0.0
        %274 = vst [vmem:[#allocation2 + $0x50] sm:$0xff] 0.0
        %275 = vst [vmem:[#allocation2 + $0x58] sm:$0xff] 0.0
        %276 = vst [vmem:[#allocation2 + $0x60] sm:$0xff] 0.0
        %277 = vst [vmem:[#allocation2 + $0x68] sm:$0xff] 0.0
        %278 = vst [vmem:[#allocation2 + $0x70] sm:$0xff] 0.0
        %279 = vst [vmem:[#allocation2 + $0x78] sm:$0xff] 0.0
        %280 = vst [vmem:[#allocation2 + $0x80] sm:$0xff] 0.0
        %281 = vst [vmem:[#allocation2 + $0x88] sm:$0xff] 0.0
        %282 = vst [vmem:[#allocation2 + $0x90] sm:$0xff] 0.0
        %283 = vst [vmem:[#allocation2 + $0x98] sm:$0xff] 0.0
        %284 = vst [vmem:[#allocation2 + $0xa0] sm:$0xff] 0.0
        %285 = vst [vmem:[#allocation2 + $0xa8] sm:$0xff] 0.0
        %286 = vst [vmem:[#allocation2 + $0xb0] sm:$0xff] 0.0
        %287 = vst [vmem:[#allocation2 + $0xb8] sm:$0xff] 0.0
        %288 = vst [vmem:[#allocation2 + $0xc0] sm:$0xff] 0.0
        %289 = vst [vmem:[#allocation2 + $0xc8] sm:$0xff] 0.0
        %290 = vst [vmem:[#allocation2 + $0xd0] sm:$0xff] 0.0
        %291 = vst [vmem:[#allocation2 + $0xd8] sm:$0xff] 0.0
        %292 = vst [vmem:[#allocation2 + $0xe0] sm:$0xff] 0.0
        %293 = vst [vmem:[#allocation2 + $0xe8] sm:$0xff] 0.0
        %294 = vst [vmem:[#allocation2 + $0xf0] sm:$0xff] 0.0
        %295 = vst [vmem:[#allocation2 + $0xf8] sm:$0xff] 0.0
      $region36: #{deeplab_forward.31} parent=31 // pred_fallthru
        _
      %v296 = vld [vmem:[#allocation2] sm:$0xff]
      %v297 = vld [vmem:[#allocation2 + $0x8] sm:$0xff]
      %v298 = vld [vmem:[#allocation2 + $0x10] sm:$0xff]
      %v299 = vld [vmem:[#allocation2 + $0x18] sm:$0xff]
      %v300 = vld [vmem:[#allocation2 + $0x20] sm:$0xff]
      %v301 = vld [vmem:[#allocation2 + $0x28] sm:$0xff]
      %v302 = vld [vmem:[#allocation2 + $0x30] sm:$0xff]
      %v303 = vld [vmem:[#allocation2 + $0x38] sm:$0xff]
      %v304 = vld [vmem:[#allocation2 + $0x40] sm:$0xff]
      %v305 = vld [vmem:[#allocation2 + $0x48] sm:$0xff]
      %v306 = vld [vmem:[#allocation2 + $0x50] sm:$0xff]
      %v307 = vld [vmem:[#allocation2 + $0x58] sm:$0xff]
      %v308 = vld [vmem:[#allocation2 + $0x60] sm:$0xff]
      %v309 = vld [vmem:[#allocation2 + $0x68] sm:$0xff]
      %v310 = vld [vmem:[#allocation2 + $0x70] sm:$0xff]
      %v311 = vld [vmem:[#allocation2 + $0x78] sm:$0xff]
      %v312 = vld [vmem:[#allocation2 + $0x80] sm:$0xff]
      %v313 = vld [vmem:[#allocation2 + $0x88] sm:$0xff]
      %v314 = vld [vmem:[#allocation2 + $0x90] sm:$0xff]
      %v315 = vld [vmem:[#allocation2 + $0x98] sm:$0xff]
      %v316 = vld [vmem:[#allocation2 + $0xa0] sm:$0xff]
      %v317 = vld [vmem:[#allocation2 + $0xa8] sm:$0xff]
      %v318 = vld [vmem:[#allocation2 + $0xb0] sm:$0xff]
      %v319 = vld [vmem:[#allocation2 + $0xb8] sm:$0xff]
      %v320 = vld [vmem:[#allocation2 + $0xc0] sm:$0xff]
      %v321 = vld [vmem:[#allocation2 + $0xc8] sm:$0xff]
      %v322 = vld [vmem:[#allocation2 + $0xd0] sm:$0xff]
      %v323 = vld [vmem:[#allocation2 + $0xd8] sm:$0xff]
      %v324 = vld [vmem:[#allocation2 + $0xe0] sm:$0xff]
      %v325 = vld [vmem:[#allocation2 + $0xe8] sm:$0xff]
      %v326 = vld [vmem:[#allocation2 + $0xf0] sm:$0xff]
      %v327 = vld [vmem:[#allocation2 + $0xf8] sm:$0xff]
      %v328 = vld [vmem:[%s236] sm:$0xf]
      %v329 = vld [vmem:[%s236 + $0x4] sm:$0xf]
      %v330 = vld [vmem:[%s236 + $0x8] sm:$0xf]
      %v331 = vld [vmem:[%s236 + $0xc] sm:$0xf]
      %v332 = vld [vmem:[%s236 + $0x10] sm:$0xf]
      %v333 = vld [vmem:[%s236 + $0x14] sm:$0xf]
      %v334 = vld [vmem:[%s236 + $0x18] sm:$0xf]
      %v335 = vld [vmem:[%s236 + $0x1c] sm:$0xf]
      %v336 = vld [vmem:[%s236 + $0x20] sm:$0xf]
      %v337 = vld [vmem:[%s236 + $0x24] sm:$0xf]
      %v338 = vld [vmem:[%s236 + $0x28] sm:$0xf]
      %v339 = vld [vmem:[%s236 + $0x2c] sm:$0xf]
      %v340 = vld [vmem:[%s236 + $0x30] sm:$0xf]
      %v341 = vld [vmem:[%s236 + $0x34] sm:$0xf]
      %v342 = vld [vmem:[%s236 + $0x38] sm:$0xf]
      %v343 = vld [vmem:[%s236 + $0x3c] sm:$0xf]
      %v344 = vld [vmem:[%s236 + $0x40] sm:$0xf]
      %v345 = vld [vmem:[%s236 + $0x44] sm:$0xf]
      %v346 = vld [vmem:[%s236 + $0x48] sm:$0xf]
      %v347 = vld [vmem:[%s236 + $0x4c] sm:$0xf]
      %v348 = vld [vmem:[%s236 + $0x50] sm:$0xf]
      %v349 = vld [vmem:[%s236 + $0x54] sm:$0xf]
      %v350 = vld [vmem:[%s236 + $0x58] sm:$0xf]
      %v351 = vld [vmem:[%s236 + $0x5c] sm:$0xf]
      %v352 = vld [vmem:[%s236 + $0x60] sm:$0xf]
      %v353 = vld [vmem:[%s236 + $0x64] sm:$0xf]
      %v354 = vld [vmem:[%s236 + $0x68] sm:$0xf]
      %v355 = vld [vmem:[%s236 + $0x6c] sm:$0xf]
      %v356 = vld [vmem:[%s236 + $0x70] sm:$0xf]
      %v357 = vld [vmem:[%s236 + $0x74] sm:$0xf]
      %v358 = vld [vmem:[%s236 + $0x78] sm:$0xf]
      %v359 = vld [vmem:[%s236 + $0x7c] sm:$0xf]
      %v360 = vld [vmem:[%s245] sm:$0xf]
      %v361 = vld [vmem:[%s245 + $0x4] sm:$0xf]
      %v362 = vld [vmem:[%s245 + $0x8] sm:$0xf]
      %v363 = vld [vmem:[%s245 + $0xc] sm:$0xf]
      %v364 = vld [vmem:[%s245 + $0x10] sm:$0xf]
      %v365 = vld [vmem:[%s245 + $0x14] sm:$0xf]
      %v366 = vld [vmem:[%s245 + $0x18] sm:$0xf]
      %v367 = vld [vmem:[%s245 + $0x1c] sm:$0xf]
      %v368 = vld [vmem:[%s245 + $0x20] sm:$0xf]
      %v369 = vld [vmem:[%s245 + $0x24] sm:$0xf]
      %v370 = vld [vmem:[%s245 + $0x28] sm:$0xf]
      %v371 = vld [vmem:[%s245 + $0x2c] sm:$0xf]
      %v372 = vld [vmem:[%s245 + $0x30] sm:$0xf]
      %v373 = vld [vmem:[%s245 + $0x34] sm:$0xf]
      %v374 = vld [vmem:[%s245 + $0x38] sm:$0xf]
      %v375 = vld [vmem:[%s245 + $0x3c] sm:$0xf]
      %v408 = vunpack.c.l.b16 %v328
      %v409 = vunpack.c.l.b16 %v329
      %v410 = vunpack.c.l.b16 %v330
      %v411 = vunpack.c.l.b16 %v331
      %v412 = vunpack.c.l.b16 %v332
      %v413 = vunpack.c.l.b16 %v333
      %v414 = vunpack.c.l.b16 %v334
      %v415 = vunpack.c.l.b16 %v335
      %v416 = vunpack.c.l.b16 %v336
      %v417 = vunpack.c.l.b16 %v337
      %v418 = vunpack.c.l.b16 %v338
      %v419 = vunpack.c.l.b16 %v339
      %v420 = vunpack.c.l.b16 %v340
      %v421 = vunpack.c.l.b16 %v341
      %v422 = vunpack.c.l.b16 %v342
      %v423 = vunpack.c.l.b16 %v343
      %v424 = vunpack.c.l.b16 %v344
      %v425 = vunpack.c.l.b16 %v345
      %v426 = vunpack.c.l.b16 %v346
      %v427 = vunpack.c.l.b16 %v347
      %v428 = vunpack.c.l.b16 %v348
      %v429 = vunpack.c.l.b16 %v349
      %v430 = vunpack.c.l.b16 %v350
      %v431 = vunpack.c.l.b16 %v351
      %v432 = vunpack.c.l.b16 %v352
      %v433 = vunpack.c.l.b16 %v353
      %v434 = vunpack.c.l.b16 %v354
      %v435 = vunpack.c.l.b16 %v355
      %v436 = vunpack.c.l.b16 %v356
      %v437 = vunpack.c.l.b16 %v357
      %v438 = vunpack.c.l.b16 %v358
      %v439 = vunpack.c.l.b16 %v359
      %v440 = vpack.c.b16 %v409, %v408
      %v441 = vpack.c.b16 %v411, %v410
      %v442 = vpack.c.b16 %v413, %v412
      %v443 = vpack.c.b16 %v415, %v414
      %v444 = vpack.c.b16 %v417, %v416
      %v445 = vpack.c.b16 %v419, %v418
      %v446 = vpack.c.b16 %v421, %v420
      %v447 = vpack.c.b16 %v423, %v422
      %v448 = vpack.c.b16 %v425, %v424
      %v449 = vpack.c.b16 %v427, %v426
      %v450 = vpack.c.b16 %v429, %v428
      %v451 = vpack.c.b16 %v431, %v430
      %v452 = vpack.c.b16 %v433, %v432
      %v453 = vpack.c.b16 %v435, %v434
      %v454 = vpack.c.b16 %v437, %v436
      %v455 = vpack.c.b16 %v439, %v438
      %v488 = vunpack.c.l.b16 %v360
      %v489 = vunpack.c.l.b16 %v361
      %v490 = vunpack.c.l.b16 %v362
      %v491 = vunpack.c.l.b16 %v363
      %v492 = vunpack.c.l.b16 %v364
      %v493 = vunpack.c.l.b16 %v365
      %v494 = vunpack.c.l.b16 %v366
      %v495 = vunpack.c.l.b16 %v367
      %v496 = vunpack.c.l.b16 %v368
      %v497 = vunpack.c.l.b16 %v369
      %v498 = vunpack.c.l.b16 %v370
      %v499 = vunpack.c.l.b16 %v371
      %v500 = vunpack.c.l.b16 %v372
      %v501 = vunpack.c.l.b16 %v373
      %v502 = vunpack.c.l.b16 %v374
      %v503 = vunpack.c.l.b16 %v375
      %v504 = vpack.c.b16 %v489, %v488
      %v505 = vpack.c.b16 %v491, %v490
      %v506 = vpack.c.b16 %v493, %v492
      %v507 = vpack.c.b16 %v495, %v494
      %v508 = vpack.c.b16 %v497, %v496
      %v509 = vpack.c.b16 %v499, %v498
      %v510 = vpack.c.b16 %v501, %v500
      %v511 = vpack.c.b16 %v503, %v502
      %520 = vmatprep.subr.bf16.mxu0 0
      %521 = vmatpush1.bf16.msra.mxu0 %v504
      %522 = vmatprep.subr.bf16.mxu0 0
      %523 = vmatpush1.bf16.msra.mxu0 %v505
      %524 = vmatprep.subr.bf16.mxu0 0
      %525 = vmatpush1.bf16.msra.mxu0 %v506
      %526 = vmatprep.subr.bf16.mxu0 0
      %527 = vmatpush1.bf16.msra.mxu0 %v507
      %528 = vmatprep.subr.bf16.mxu0 0
      %529 = vmatpush1.bf16.msra.mxu0 %v508
      %530 = vmatprep.subr.bf16.mxu0 0
      %531 = vmatpush1.bf16.msra.mxu0 %v509
      %532 = vmatprep.subr.bf16.mxu0 0
      %533 = vmatpush1.bf16.msra.mxu0 %v510
      %534 = vmatprep.subr.bf16.mxu0 0
      %535 = vmatpush1.bf16.msra.mxu0 %v511
      %536 = vmatprep.subr.bf16.mxu0 0
      %537 = vmatpush1.bf16.msra.mxu0 0
      %538 = vmatprep.subr.bf16.mxu0 0
      %539 = vmatpush1.bf16.msra.mxu0 0
      %540 = vmatprep.subr.bf16.mxu0 0
      %541 = vmatpush1.bf16.msra.mxu0 0
      %542 = vmatprep.subr.bf16.mxu0 0
      %543 = vmatpush1.bf16.msra.mxu0 0
      %544 = vmatprep.subr.bf16.mxu0 0
      %545 = vmatpush1.bf16.msra.mxu0 0
      %546 = vmatprep.subr.bf16.mxu0 0
      %547 = vmatpush1.bf16.msra.mxu0 0
      %548 = vmatprep.subr.bf16.mxu0 0
      %549 = vmatpush1.bf16.msra.mxu0 0
      %550 = vmatprep.subr.bf16.mxu0 0
      %551 = vmatpush1.bf16.msra.mxu0 0
      %552 = vmatprep.mubr.bf16.mxu0 0
      %553 = vmatmul.mubr.bf16.gmra.mrb[0].mxu0 %v440
      %v554 = vpop.f32.mrb[0].mxu0
      %v555 = vadd.f32 0.0, %v554
      %v556 = vpop.f32.mrb[0].mxu0
      %v557 = vpop.f32.mrb[0].mxu0
      %v558 = vadd.f32 0.0, %v557
      %v559 = vpop.f32.mrb[0].mxu0
      %560 = vmatprep.mubr.bf16.mxu0 0
      %561 = vmatmul.mubr.bf16.gmra.mrb[0].mxu0 %v441
      %v562 = vpop.f32.mrb[0].mxu0
      %v563 = vadd.f32 0.0, %v562
      %v564 = vpop.f32.mrb[0].mxu0
      %v565 = vpop.f32.mrb[0].mxu0
      %v566 = vadd.f32 0.0, %v565
      %v567 = vpop.f32.mrb[0].mxu0
      %568 = vmatprep.mubr.bf16.mxu0 0
      %569 = vmatmul.mubr.bf16.gmra.mrb[0].mxu0 %v442
      %v570 = vpop.f32.mrb[0].mxu0
      %v571 = vadd.f32 0.0, %v570
      %v572 = vpop.f32.mrb[0].mxu0
      %v573 = vpop.f32.mrb[0].mxu0
      %v574 = vadd.f32 0.0, %v573
      %v575 = vpop.f32.mrb[0].mxu0
      %576 = vmatprep.mubr.bf16.mxu0 0
      %577 = vmatmul.mubr.bf16.gmra.mrb[0].mxu0 %v443
      %v578 = vpop.f32.mrb[0].mxu0
      %v579 = vadd.f32 0.0, %v578
      %v580 = vpop.f32.mrb[0].mxu0
      %v581 = vpop.f32.mrb[0].mxu0
      %v582 = vadd.f32 0.0, %v581
      %v583 = vpop.f32.mrb[0].mxu0
      %584 = vmatprep.mubr.bf16.mxu0 0
      %585 = vmatmul.mubr.bf16.gmra.mrb[0].mxu0 %v444
      %v586 = vpop.f32.mrb[0].mxu0
      %v587 = vadd.f32 0.0, %v586
      %v588 = vpop.f32.mrb[0].mxu0
      %v589 = vpop.f32.mrb[0].mxu0
      %v590 = vadd.f32 0.0, %v589
      %v591 = vpop.f32.mrb[0].mxu0
      %592 = vmatprep.mubr.bf16.mxu0 0
      %593 = vmatmul.mubr.bf16.gmra.mrb[0].mxu0 %v445
      %v594 = vpop.f32.mrb[0].mxu0
      %v595 = vadd.f32 0.0, %v594
      %v596 = vpop.f32.mrb[0].mxu0
      %v597 = vpop.f32.mrb[0].mxu0
      %v598 = vadd.f32 0.0, %v597
      %v599 = vpop.f32.mrb[0].mxu0
      %600 = vmatprep.mubr.bf16.mxu0 0
      %601 = vmatmul.mubr.bf16.gmra.mrb[0].mxu0 %v446
      %v602 = vpop.f32.mrb[0].mxu0
      %v603 = vadd.f32 0.0, %v602
      %v604 = vpop.f32.mrb[0].mxu0
      %v605 = vpop.f32.mrb[0].mxu0
      %v606 = vadd.f32 0.0, %v605
      %v607 = vpop.f32.mrb[0].mxu0
      %608 = vmatprep.mubr.bf16.mxu0 0
      %609 = vmatmul.mubr.bf16.gmra.mrb[0].mxu0 %v447
      %v610 = vpop.f32.mrb[0].mxu0
      %v611 = vadd.f32 0.0, %v610
      %v612 = vpop.f32.mrb[0].mxu0
      %v613 = vpop.f32.mrb[0].mxu0
      %v614 = vadd.f32 0.0, %v613
      %v615 = vpop.f32.mrb[0].mxu0
      %616 = vmatprep.mubr.bf16.mxu0 0
      %617 = vmatmul.mubr.bf16.gmra.mrb[0].mxu0 %v448
      %v618 = vpop.f32.mrb[0].mxu0
      %v619 = vadd.f32 0.0, %v618
      %v620 = vpop.f32.mrb[0].mxu0
      %v621 = vpop.f32.mrb[0].mxu0
      %v622 = vadd.f32 0.0, %v621
      %v623 = vpop.f32.mrb[0].mxu0
      %624 = vmatprep.mubr.bf16.mxu0 0
      %625 = vmatmul.mubr.bf16.gmra.mrb[0].mxu0 %v449
      %v626 = vpop.f32.mrb[0].mxu0
      %v627 = vadd.f32 0.0, %v626
      %v628 = vpop.f32.mrb[0].mxu0
      %v629 = vpop.f32.mrb[0].mxu0
      %v630 = vadd.f32 0.0, %v629
      %v631 = vpop.f32.mrb[0].mxu0
      %632 = vmatprep.mubr.bf16.mxu0 0
      %633 = vmatmul.mubr.bf16.gmra.mrb[0].mxu0 %v450
      %v634 = vpop.f32.mrb[0].mxu0
      %v635 = vadd.f32 0.0, %v634
      %v636 = vpop.f32.mrb[0].mxu0
      %v637 = vpop.f32.mrb[0].mxu0
      %v638 = vadd.f32 0.0, %v637
      %v639 = vpop.f32.mrb[0].mxu0
      %640 = vmatprep.mubr.bf16.mxu0 0
      %641 = vmatmul.mubr.bf16.gmra.mrb[0].mxu0 %v451
      %v642 = vpop.f32.mrb[0].mxu0
      %v643 = vadd.f32 0.0, %v642
      %v644 = vpop.f32.mrb[0].mxu0
      %v645 = vpop.f32.mrb[0].mxu0
      %v646 = vadd.f32 0.0, %v645
      %v647 = vpop.f32.mrb[0].mxu0
      %648 = vmatprep.mubr.bf16.mxu0 0
      %649 = vmatmul.mubr.bf16.gmra.mrb[0].mxu0 %v452
      %v650 = vpop.f32.mrb[0].mxu0
      %v651 = vadd.f32 0.0, %v650
      %v652 = vpop.f32.mrb[0].mxu0
      %v653 = vpop.f32.mrb[0].mxu0
      %v654 = vadd.f32 0.0, %v653
      %v655 = vpop.f32.mrb[0].mxu0
      %656 = vmatprep.mubr.bf16.mxu0 0
      %657 = vmatmul.mubr.bf16.gmra.mrb[0].mxu0 %v453
      %v658 = vpop.f32.mrb[0].mxu0
      %v659 = vadd.f32 0.0, %v658
      %v660 = vpop.f32.mrb[0].mxu0
      %v661 = vpop.f32.mrb[0].mxu0
      %v662 = vadd.f32 0.0, %v661
      %v663 = vpop.f32.mrb[0].mxu0
      %664 = vmatprep.mubr.bf16.mxu0 0
      %665 = vmatmul.mubr.bf16.gmra.mrb[0].mxu0 %v454
      %v666 = vpop.f32.mrb[0].mxu0
      %v667 = vadd.f32 0.0, %v666
      %v668 = vpop.f32.mrb[0].mxu0
      %v669 = vpop.f32.mrb[0].mxu0
      %v670 = vadd.f32 0.0, %v669
      %v671 = vpop.f32.mrb[0].mxu0
      %672 = vmatprep.mubr.bf16.mxu0 0
      %673 = vmatmul.mubr.bf16.gmra.mrb[0].mxu0 %v455
      %v674 = vpop.f32.mrb[0].mxu0
      %v675 = vadd.f32 0.0, %v674
      %v676 = vpop.f32.mrb[0].mxu0
      %v677 = vpop.f32.mrb[0].mxu0
      %v678 = vadd.f32 0.0, %v677
      %v679 = vpop.f32.mrb[0].mxu0
      %680 = vdwg.mxu0
      %v681 = vadd.f32 %v296, %v555
      %v682 = vadd.f32 %v297, %v558
      %v683 = vadd.f32 %v298, %v563
      %v684 = vadd.f32 %v299, %v566
      %v685 = vadd.f32 %v300, %v571
      %v686 = vadd.f32 %v301, %v574
      %v687 = vadd.f32 %v302, %v579
      %v688 = vadd.f32 %v303, %v582
      %v689 = vadd.f32 %v304, %v587
      %v690 = vadd.f32 %v305, %v590
      %v691 = vadd.f32 %v306, %v595
      %v692 = vadd.f32 %v307, %v598
      %v693 = vadd.f32 %v308, %v603
      %v694 = vadd.f32 %v309, %v606
      %v695 = vadd.f32 %v310, %v611
      %v696 = vadd.f32 %v311, %v614
      %v697 = vadd.f32 %v312, %v619
      %v698 = vadd.f32 %v313, %v622
      %v699 = vadd.f32 %v314, %v627
      %v700 = vadd.f32 %v315, %v630
      %v701 = vadd.f32 %v316, %v635
      %v702 = vadd.f32 %v317, %v638
      %v703 = vadd.f32 %v318, %v643
      %v704 = vadd.f32 %v319, %v646
      %v705 = vadd.f32 %v320, %v651
      %v706 = vadd.f32 %v321, %v654
      %v707 = vadd.f32 %v322, %v659
      %v708 = vadd.f32 %v323, %v662
      %v709 = vadd.f32 %v324, %v667
      %v710 = vadd.f32 %v325, %v670
      %v711 = vadd.f32 %v326, %v675
      %v712 = vadd.f32 %v327, %v678
      %713 = vst [vmem:[#allocation2] sm:$0xff] %v681
      %714 = vst [vmem:[#allocation2 + $0x8] sm:$0xff] %v682
      %715 = vst [vmem:[#allocation2 + $0x10] sm:$0xff] %v683
      %716 = vst [vmem:[#allocation2 + $0x18] sm:$0xff] %v684
      %717 = vst [vmem:[#allocation2 + $0x20] sm:$0xff] %v685
      %718 = vst [vmem:[#allocation2 + $0x28] sm:$0xff] %v686
      %719 = vst [vmem:[#allocation2 + $0x30] sm:$0xff] %v687
      %720 = vst [vmem:[#allocation2 + $0x38] sm:$0xff] %v688
      %721 = vst [vmem:[#allocation2 + $0x40] sm:$0xff] %v689
      %722 = vst [vmem:[#allocation2 + $0x48] sm:$0xff] %v690
      %723 = vst [vmem:[#allocation2 + $0x50] sm:$0xff] %v691
      %724 = vst [vmem:[#allocation2 + $0x58] sm:$0xff] %v692
      %725 = vst [vmem:[#allocation2 + $0x60] sm:$0xff] %v693
      %726 = vst [vmem:[#allocation2 + $0x68] sm:$0xff] %v694
      %727 = vst [vmem:[#allocation2 + $0x70] sm:$0xff] %v695
      %728 = vst [vmem:[#allocation2 + $0x78] sm:$0xff] %v696
      %729 = vst [vmem:[#allocation2 + $0x80] sm:$0xff] %v697
      %730 = vst [vmem:[#allocation2 + $0x88] sm:$0xff] %v698
      %731 = vst [vmem:[#allocation2 + $0x90] sm:$0xff] %v699
      %732 = vst [vmem:[#allocation2 + $0x98] sm:$0xff] %v700
      %733 = vst [vmem:[#allocation2 + $0xa0] sm:$0xff] %v701
      %734 = vst [vmem:[#allocation2 + $0xa8] sm:$0xff] %v702
      %735 = vst [vmem:[#allocation2 + $0xb0] sm:$0xff] %v703
      %736 = vst [vmem:[#allocation2 + $0xb8] sm:$0xff] %v704
      %737 = vst [vmem:[#allocation2 + $0xc0] sm:$0xff] %v705
      %738 = vst [vmem:[#allocation2 + $0xc8] sm:$0xff] %v706
      %739 = vst [vmem:[#allocation2 + $0xd0] sm:$0xff] %v707
      %740 = vst [vmem:[#allocation2 + $0xd8] sm:$0xff] %v708
      %741 = vst [vmem:[#allocation2 + $0xe0] sm:$0xff] %v709
      %742 = vst [vmem:[#allocation2 + $0xe8] sm:$0xff] %v710
      %743 = vst [vmem:[#allocation2 + $0xf0] sm:$0xff] %v711
      %744 = vst [vmem:[#allocation2 + $0xf8] sm:$0xff] %v712
      // Predicated region
      $region37: #{deeplab_forward.31} parent=31 // pred_check
        %p745 = pneg %p260
      $region38: #{deeplab_forward.31} parent=31 // pred_check_branch
        %747 = sbr.rel (%p745) target = $region40
      $region39: #{deeplab_forward.31} parent=31 // pred_region
        %v748 = vld [vmem:[#allocation2] sm:$0xff]
        %v749 = vld [vmem:[#allocation2 + $0x8] sm:$0xff]
        %v750 = vld [vmem:[#allocation2 + $0x10] sm:$0xff]
        %v751 = vld [vmem:[#allocation2 + $0x18] sm:$0xff]
        %v752 = vld [vmem:[#allocation2 + $0x20] sm:$0xff]
        %v753 = vld [vmem:[#allocation2 + $0x28] sm:$0xff]
        %v754 = vld [vmem:[#allocation2 + $0x30] sm:$0xff]
        %v755 = vld [vmem:[#allocation2 + $0x38] sm:$0xff]
        %v756 = vld [vmem:[#allocation2 + $0x40] sm:$0xff]
        %v757 = vld [vmem:[#allocation2 + $0x48] sm:$0xff]
        %v758 = vld [vmem:[#allocation2 + $0x50] sm:$0xff]
        %v759 = vld [vmem:[#allocation2 + $0x58] sm:$0xff]
        %v760 = vld [vmem:[#allocation2 + $0x60] sm:$0xff]
        %v761 = vld [vmem:[#allocation2 + $0x68] sm:$0xff]
        %v762 = vld [vmem:[#allocation2 + $0x70] sm:$0xff]
        %v763 = vld [vmem:[#allocation2 + $0x78] sm:$0xff]
        %v764 = vld [vmem:[#allocation2 + $0x80] sm:$0xff]
        %v765 = vld [vmem:[#allocation2 + $0x88] sm:$0xff]
        %v766 = vld [vmem:[#allocation2 + $0x90] sm:$0xff]
        %v767 = vld [vmem:[#allocation2 + $0x98] sm:$0xff]
        %v768 = vld [vmem:[#allocation2 + $0xa0] sm:$0xff]
        %v769 = vld [vmem:[#allocation2 + $0xa8] sm:$0xff]
        %v770 = vld [vmem:[#allocation2 + $0xb0] sm:$0xff]
        %v771 = vld [vmem:[#allocation2 + $0xb8] sm:$0xff]
        %v772 = vld [vmem:[#allocation2 + $0xc0] sm:$0xff]
        %v773 = vld [vmem:[#allocation2 + $0xc8] sm:$0xff]
        %v774 = vld [vmem:[#allocation2 + $0xd0] sm:$0xff]
        %v775 = vld [vmem:[#allocation2 + $0xd8] sm:$0xff]
        %v776 = vld [vmem:[#allocation2 + $0xe0] sm:$0xff]
        %v777 = vld [vmem:[#allocation2 + $0xe8] sm:$0xff]
        %v778 = vld [vmem:[#allocation2 + $0xf0] sm:$0xff]
        %v779 = vld [vmem:[#allocation2 + $0xf8] sm:$0xff]
        %v780 = vld [vmem:[%s249] sm:$0x1]
        %v782 = vlaneseq
        %v783 = vshrl.u32 %v782, 7
        %v784 = vsub.s32 0, %v783
        %v785 = vrot.slane %v780, %v784
        %v787 = vadd.f32 %v748, %v785
        %v788 = vadd.f32 %v749, %v785
        %v789 = vadd.f32 %v750, %v785
        %v790 = vadd.f32 %v751, %v785
        %v791 = vadd.f32 %v752, %v785
        %v792 = vadd.f32 %v753, %v785
        %v793 = vadd.f32 %v754, %v785
        %v794 = vadd.f32 %v755, %v785
        %v795 = vadd.f32 %v756, %v785
        %v796 = vadd.f32 %v757, %v785
        %v797 = vadd.f32 %v758, %v785
        %v798 = vadd.f32 %v759, %v785
        %v799 = vadd.f32 %v760, %v785
        %v800 = vadd.f32 %v761, %v785
        %v801 = vadd.f32 %v762, %v785
        %v802 = vadd.f32 %v763, %v785
        %v803 = vadd.f32 %v764, %v785
        %v804 = vadd.f32 %v765, %v785
        %v805 = vadd.f32 %v766, %v785
        %v806 = vadd.f32 %v767, %v785
        %v807 = vadd.f32 %v768, %v785
        %v808 = vadd.f32 %v769, %v785
        %v809 = vadd.f32 %v770, %v785
        %v810 = vadd.f32 %v771, %v785
        %v811 = vadd.f32 %v772, %v785
        %v812 = vadd.f32 %v773, %v785
        %v813 = vadd.f32 %v774, %v785
        %v814 = vadd.f32 %v775, %v785
        %v815 = vadd.f32 %v776, %v785
        %v816 = vadd.f32 %v777, %v785
        %v817 = vadd.f32 %v778, %v785
        %v818 = vadd.f32 %v779, %v785
        %v819 = vpack.c.bf16 %v788, %v787
        %v820 = vpack.c.bf16 %v790, %v789
        %v821 = vpack.c.bf16 %v792, %v791
        %v822 = vpack.c.bf16 %v794, %v793
        %v823 = vpack.c.bf16 %v796, %v795
        %v824 = vpack.c.bf16 %v798, %v797
        %v825 = vpack.c.bf16 %v800, %v799
        %v826 = vpack.c.bf16 %v802, %v801
        %v827 = vpack.c.bf16 %v804, %v803
        %v828 = vpack.c.bf16 %v806, %v805
        %v829 = vpack.c.bf16 %v808, %v807
        %v830 = vpack.c.bf16 %v810, %v809
        %v831 = vpack.c.bf16 %v812, %v811
        %v832 = vpack.c.bf16 %v814, %v813
        %v833 = vpack.c.bf16 %v816, %v815
        %v834 = vpack.c.bf16 %v818, %v817
        %v851 = vunpack.c.l.b16 %v819
        %v852 = vunpack.c.h.b16 %v819
        %v853 = vunpack.c.l.b16 %v820
        %v854 = vunpack.c.h.b16 %v820
        %v855 = vunpack.c.l.b16 %v821
        %v856 = vunpack.c.h.b16 %v821
        %v857 = vunpack.c.l.b16 %v822
        %v858 = vunpack.c.h.b16 %v822
        %v859 = vunpack.c.l.b16 %v823
        %v860 = vunpack.c.h.b16 %v823
        %v861 = vunpack.c.l.b16 %v824
        %v862 = vunpack.c.h.b16 %v824
        %v863 = vunpack.c.l.b16 %v825
        %v864 = vunpack.c.h.b16 %v825
        %v865 = vunpack.c.l.b16 %v826
        %v866 = vunpack.c.h.b16 %v826
        %v867 = vunpack.c.l.b16 %v827
        %v868 = vunpack.c.h.b16 %v827
        %v869 = vunpack.c.l.b16 %v828
        %v870 = vunpack.c.h.b16 %v828
        %v871 = vunpack.c.l.b16 %v829
        %v872 = vunpack.c.h.b16 %v829
        %v873 = vunpack.c.l.b16 %v830
        %v874 = vunpack.c.h.b16 %v830
        %v875 = vunpack.c.l.b16 %v831
        %v876 = vunpack.c.h.b16 %v831
        %v877 = vunpack.c.l.b16 %v832
        %v878 = vunpack.c.h.b16 %v832
        %v879 = vunpack.c.l.b16 %v833
        %v880 = vunpack.c.h.b16 %v833
        %v881 = vunpack.c.l.b16 %v834
        %v882 = vunpack.c.h.b16 %v834
        %v883 = vpack.c.b16 %v851, %v851
        %v884 = vpack.c.b16 %v852, %v852
        %v885 = vpack.c.b16 %v853, %v853
        %v886 = vpack.c.b16 %v854, %v854
        %v887 = vpack.c.b16 %v855, %v855
        %v888 = vpack.c.b16 %v856, %v856
        %v889 = vpack.c.b16 %v857, %v857
        %v890 = vpack.c.b16 %v858, %v858
        %v891 = vpack.c.b16 %v859, %v859
        %v892 = vpack.c.b16 %v860, %v860
        %v893 = vpack.c.b16 %v861, %v861
        %v894 = vpack.c.b16 %v862, %v862
        %v895 = vpack.c.b16 %v863, %v863
        %v896 = vpack.c.b16 %v864, %v864
        %v897 = vpack.c.b16 %v865, %v865
        %v898 = vpack.c.b16 %v866, %v866
        %v899 = vpack.c.b16 %v867, %v867
        %v900 = vpack.c.b16 %v868, %v868
        %v901 = vpack.c.b16 %v869, %v869
        %v902 = vpack.c.b16 %v870, %v870
        %v903 = vpack.c.b16 %v871, %v871
        %v904 = vpack.c.b16 %v872, %v872
        %v905 = vpack.c.b16 %v873, %v873
        %v906 = vpack.c.b16 %v874, %v874
        %v907 = vpack.c.b16 %v875, %v875
        %v908 = vpack.c.b16 %v876, %v876
        %v909 = vpack.c.b16 %v877, %v877
        %v910 = vpack.c.b16 %v878, %v878
        %v911 = vpack.c.b16 %v879, %v879
        %v912 = vpack.c.b16 %v880, %v880
        %v913 = vpack.c.b16 %v881, %v881
        %v914 = vpack.c.b16 %v882, %v882
        %947 = vst [vmem:[%s257] sm:$0xf] %v883
        %948 = vst [vmem:[%s257 + $0x4] sm:$0xf] %v884
        %949 = vst [vmem:[%s257 + $0x8] sm:$0xf] %v885
        %950 = vst [vmem:[%s257 + $0xc] sm:$0xf] %v886
        %951 = vst [vmem:[%s257 + $0x10] sm:$0xf] %v887
        %952 = vst [vmem:[%s257 + $0x14] sm:$0xf] %v888
        %953 = vst [vmem:[%s257 + $0x18] sm:$0xf] %v889
        %954 = vst [vmem:[%s257 + $0x1c] sm:$0xf] %v890
        %955 = vst [vmem:[%s257 + $0x20] sm:$0xf] %v891
        %956 = vst [vmem:[%s257 + $0x24] sm:$0xf] %v892
        %957 = vst [vmem:[%s257 + $0x28] sm:$0xf] %v893
        %958 = vst [vmem:[%s257 + $0x2c] sm:$0xf] %v894
        %959 = vst [vmem:[%s257 + $0x30] sm:$0xf] %v895
        %960 = vst [vmem:[%s257 + $0x34] sm:$0xf] %v896
        %961 = vst [vmem:[%s257 + $0x38] sm:$0xf] %v897
        %962 = vst [vmem:[%s257 + $0x3c] sm:$0xf] %v898
        %963 = vst [vmem:[%s257 + $0x40] sm:$0xf] %v899
        %964 = vst [vmem:[%s257 + $0x44] sm:$0xf] %v900
        %965 = vst [vmem:[%s257 + $0x48] sm:$0xf] %v901
        %966 = vst [vmem:[%s257 + $0x4c] sm:$0xf] %v902
        %967 = vst [vmem:[%s257 + $0x50] sm:$0xf] %v903
        %968 = vst [vmem:[%s257 + $0x54] sm:$0xf] %v904
        %969 = vst [vmem:[%s257 + $0x58] sm:$0xf] %v905
        %970 = vst [vmem:[%s257 + $0x5c] sm:$0xf] %v906
        %971 = vst [vmem:[%s257 + $0x60] sm:$0xf] %v907
        %972 = vst [vmem:[%s257 + $0x64] sm:$0xf] %v908
        %973 = vst [vmem:[%s257 + $0x68] sm:$0xf] %v909
        %974 = vst [vmem:[%s257 + $0x6c] sm:$0xf] %v910
        %975 = vst [vmem:[%s257 + $0x70] sm:$0xf] %v911
        %976 = vst [vmem:[%s257 + $0x74] sm:$0xf] %v912
        %977 = vst [vmem:[%s257 + $0x78] sm:$0xf] %v913
        %978 = vst [vmem:[%s257 + $0x7c] sm:$0xf] %v914
      $region40: #{deeplab_forward.31} parent=31 // pred_fallthru
        _
      %s979 = smul.u32 32, %s19
      %p980 = scmp.lt.s32.totalorder %s979, 63
      %s981 = scalar_select %p980, %s979, 63
      %p982 = scmp.lt.s32.totalorder %s20, 0
      %s983 = scalar_select %p982, %s20, 0
      %s984 = sadd.s32 %s983, %s981
      %s985 = smul.addr %s984, 4
      %s986 = scalar_lea.vmem %s3, %s985
      // Predicated region
      $region41: #{deeplab_forward.31} parent=31 // pred_check
        %p987 = pneg %p135
      $region42: #{deeplab_forward.31} parent=31 // pred_check_branch
        %989 = sbr.rel (%p987) target = $region44
      $region43: #{deeplab_forward.31} parent=31 // pred_region
        %s990 = smul.u32 32, %s19
      $region44: #{deeplab_forward.31} parent=31 // pred_fallthru
        _
    $region32: #{deeplab_forward.31} parent=5 // pred_fallthru
      _
    %p991 = scmp.le.s32.totalorder 2, %s9
    // Predicated region
    $region45: #{deeplab_forward.31} parent=5 // pred_check
      %p992 = pneg %p991
    $region46: #{deeplab_forward.31} parent=5 // pred_check_branch
      %994 = sbr.rel (%p992) target = $region48
    $region47: #{deeplab_forward.31} parent=5 // pred_region
      %s995 = ssub.s32 %s9, 2
      // Predicated region
      $region49: #{deeplab_forward.31} parent=47 // pred_check
        %p996 = pneg %p141
      $region50: #{deeplab_forward.31} parent=47 // pred_check_branch
        %998 = sbr.rel (%p996) target = $region52
      $region51: #{deeplab_forward.31} parent=47 // pred_region
        %s999 = smul.u32 32, %s22
        %p1000 = scmp.lt.s32.totalorder %s999, 63
        %s1001 = scalar_select %p1000, %s999, 63
        %p1002 = scmp.lt.s32.totalorder %s23, 0
        %s1003 = scalar_select %p1002, %s23, 0
        %s1004 = sadd.s32 %s1003, %s1001
        %s1005 = smul.addr %s1004, 4
        %s1006 = scalar_lea.vmem %s3, %s1005
      $region52: #{deeplab_forward.31} parent=47 // pred_fallthru
        _
    $region48: #{deeplab_forward.31} parent=5 // pred_fallthru
      _
  $region6: #{deeplab_forward.31} parent=0 // loop_footer
    %s13 = sadd.s32 1, %s9
  $region7: #{deeplab_forward.31} parent=0 // loop_footer_branch
    %8 = sbr.rel target = $region3
  $region8: #{deeplab_forward.31} parent=0 // loop_exit
    _

// kernel: deeplab_forward.34
$region0: #{deeplab_forward.34}
  #allocation0 [shape = 'u32[]', space=smem, size = 0x4, offset = 0x4, fixed_abs, tag = 'smem constant byte address 0x4 - core index']
  #allocation1 [shape = 'u32[144,128]{1,0:T(1,128)}', space=vmem, size = 0x12000, scoped, tag = 'internal scratch']
  %s0 = inlined_call_operand.vmem [shape: bf16[2,64,128], index: 0, kind: input, shape index: {}]
  %s1 = inlined_call_operand.vmem [shape: bf16[2,64,128], index: 1, kind: output, shape index: {}]
  %s2 = sld [smem:[#allocation0]]
  $region37: #{deeplab_forward.34} parent=0
    _
  %s4 = ssub.s32 1, %s2
  %s5 = scalar_select 0, %s4, %s2
  loop: start=0, step=1, limit=4
  $region2: #{deeplab_forward.34} parent=0 // loop_pre_header
    _
  $region3: #{deeplab_forward.34} parent=0 // loop_header
    %s7 = sphi 0, %s11
    %p8 = scmp.ge.s32.totalorder %s7, 4
    %s14 = sphi 0, %s26
    %s15 = sphi 0, %s22
    %s16 = sphi 0, %s14
    %s17 = sphi 0, %s15
    %s18 = sphi 0, %s16
    %s19 = sphi 0, %s17
    %s31 = sphi 0, %s33
    %s34 = sphi 0, %s31
    %s35 = sphi 0, %s34
    %s51 = sphi 0, %s35
    %s59 = sphi 0, %s61
    %s62 = sphi 0, %s59
    %s63 = sphi 0, %s62
    %s79 = sphi 0, %s63
  $region4: #{deeplab_forward.34} parent=0 // loop_header_branch
    %10 = sbr.rel (%p8) target = $region8
  $region5: #{deeplab_forward.34} parent=0 // loop_body
    %s12 = ssub.s32 %s7, 1
    %s13 = ssub.s32 %s7, 2
    %s20 = sadd.s32 1, %s15
    %p21 = scmp.ge.s32.totalorder %s20, 1
    %s22 = scalar_select %p21, 0, %s20
    %s23 = sadd.s32 1, %s14
    %s24 = scalar_select %p21, %s23, %s14
    %p25 = scmp.ge.s32.totalorder %s24, 2
    %s26 = scalar_select %p25, 0, %s24
    %s27 = ssub.s32 %s14, %s26
    %s28 = ssub.s32 %s15, %s22
    %s29 = sor.u32 %s27, %s28
    %p30 = scmp.eq.s32.totalorder %s29, 0
    %s32 = sadd.s32 %s31, 1
    %s33 = scalar_select %p30, %s31, %s32
    %p36 = pneg %p30
    %p37 = scmp.eq.s32.totalorder %s7, 1
    %p38 = por %p36, %p37
    %p39 = scmp.ne.s32.totalorder %s31, %s34
    %p40 = scmp.eq.s32.totalorder %s7, 0
    %p41 = por %p39, %p40
    %p42 = scmp.ne.s32.totalorder %s31, %s34
    %p43 = scmp.eq.s32.totalorder %s12, 1
    %p44 = por %p42, %p43
    %p45 = scmp.ne.s32.totalorder %s34, %s35
    %p46 = scmp.eq.s32.totalorder %s12, 0
    %p47 = por %p45, %p46
    %p48 = scmp.ne.s32.totalorder %s34, %s35
    %p49 = scmp.eq.s32.totalorder %s13, 1
    %p50 = por %p48, %p49
    %p52 = scmp.ne.s32.totalorder %s35, %s51
    %p53 = scmp.eq.s32.totalorder %s13, 0
    %p54 = por %p52, %p53
    %s55 = ssub.s32 %s14, %s26
    %s56 = ssub.s32 %s15, %s22
    %s57 = sor.u32 %s55, %s56
    %p58 = scmp.eq.s32.totalorder %s57, 0
    %s60 = sadd.s32 %s59, 1
    %s61 = scalar_select %p58, %s59, %s60
    %p64 = pneg %p58
    %p65 = scmp.eq.s32.totalorder %s7, 1
    %p66 = por %p64, %p65
    %p67 = scmp.ne.s32.totalorder %s59, %s62
    %p68 = scmp.eq.s32.totalorder %s7, 0
    %p69 = por %p67, %p68
    %p70 = scmp.ne.s32.totalorder %s59, %s62
    %p71 = scmp.eq.s32.totalorder %s12, 1
    %p72 = por %p70, %p71
    %p73 = scmp.ne.s32.totalorder %s62, %s63
    %p74 = scmp.eq.s32.totalorder %s12, 0
    %p75 = por %p73, %p74
    %p76 = scmp.ne.s32.totalorder %s62, %s63
    %p77 = scmp.eq.s32.totalorder %s13, 1
    %p78 = por %p76, %p77
    %p80 = scmp.ne.s32.totalorder %s63, %s79
    %p81 = scmp.eq.s32.totalorder %s13, 0
    %p82 = por %p80, %p81
    %p83 = scmp.le.s32.totalorder 1, %s7
    %p84 = scmp.lt.s32.totalorder %s7, 3
    %p85 = pnand %p83, %p84
    %p86 = pneg %p85
    // Predicated region
    $region9: #{deeplab_forward.34} parent=5 // pred_check
      _
    $region10: #{deeplab_forward.34} parent=5 // pred_check_branch
      %88 = sbr.rel (%p85) target = $region12
    $region11: #{deeplab_forward.34} parent=5 // pred_region
      %s89 = ssub.s32 %s7, 1
    $region12: #{deeplab_forward.34} parent=5 // pred_fallthru
      _
    %p90 = scmp.lt.s32.totalorder %s7, 2
    // Predicated region
    $region13: #{deeplab_forward.34} parent=5 // pred_check
      %p91 = pneg %p90
    $region14: #{deeplab_forward.34} parent=5 // pred_check_branch
      %93 = sbr.rel (%p91) target = $region16
    $region15: #{deeplab_forward.34} parent=5 // pred_region
      // Predicated region
      $region17: #{deeplab_forward.34} parent=15 // pred_check
        %p94 = pneg %p41
      $region18: #{deeplab_forward.34} parent=15 // pred_check_branch
        %96 = sbr.rel (%p94) target = $region20
      $region19: #{deeplab_forward.34} parent=15 // pred_region
        %p97 = scmp.lt.s32.totalorder %s14, 1
        %s98 = scalar_select %p97, %s14, 1
        %p99 = scmp.lt.s32.totalorder %s15, 0
        %s100 = scalar_select %p99, %s15, 0
        %s101 = smul.addr %s98, 8
        %s102 = sadd.s32 %s100, %s101
        %s103 = smul.addr %s102, 4
        %s104 = scalar_lea.vmem %s0, %s103
      $region20: #{deeplab_forward.34} parent=15 // pred_fallthru
        _
    $region16: #{deeplab_forward.34} parent=5 // pred_fallthru
      _
    %p105 = scmp.le.s32.totalorder 1, %s7
    %p106 = scmp.lt.s32.totalorder %s7, 3
    %p107 = pnand %p105, %p106
    %p108 = pneg %p107
    // Predicated region
    $region21: #{deeplab_forward.34} parent=5 // pred_check
      _
    $region22: #{deeplab_forward.34} parent=5 // pred_check_branch
      %110 = sbr.rel (%p107) target = $region24
    $region23: #{deeplab_forward.34} parent=5 // pred_region
      %s111 = ssub.s32 %s7, 1
      %p112 = scmp.lt.s32.totalorder %s16, 1
      %s113 = scalar_select %p112, %s16, 1
      %p114 = scmp.lt.s32.totalorder %s17, 0
      %s115 = scalar_select %p114, %s17, 0
      %s116 = smul.addr %s113, 8
      %s117 = sadd.s32 %s115, %s116
      %s118 = smul.addr %s117, 4
      %s119 = scalar_lea.vmem %s0, %s118
      %p120 = pneg %p47
      %p121 = pneg %p44
      %p122 = pneg %p75
      %p123 = pneg %p72
      %p124 = scmp.lt.s32.totalorder %s16, 1
      %s125 = scalar_select %p124, %s16, 1
      %p126 = scmp.lt.s32.totalorder %s17, 0
      %s127 = scalar_select %p126, %s17, 0
      %s128 = smul.addr %s125, 8
      %s129 = sadd.s32 %s127, %s128
      %s130 = smul.addr %s129, 4
      %s131 = scalar_lea.vmem %s1, %s130
      %p132 = scmp.lt.s32.totalorder %s16, 1
      %s133 = scalar_select %p132, %s16, 1
      %p134 = scmp.lt.s32.totalorder %s17, 0
      %s135 = scalar_select %p134, %s17, 0
      %s136 = smul.addr %s133, 8
      %s137 = sadd.s32 %s135, %s136
      %s138 = smul.addr %s137, 4
      %s139 = scalar_lea.vmem %s0, %s138
      %p140 = scmp.lt.s32.totalorder %s16, 1
      %s141 = scalar_select %p140, %s16, 1
      %p142 = scmp.lt.s32.totalorder %s17, 0
      %s143 = scalar_select %p142, %s17, 0
      %s144 = smul.addr %s141, 8
      %s145 = sadd.s32 %s143, %s144
      %s146 = smul.addr %s145, 4
      %s147 = scalar_lea.vmem %s1, %s146
      %v148 = vld [vmem:[%s139] sm:$0xf]
      %v149 = vld [vmem:[%s139 + $0x4] sm:$0xf]
      %v150 = vld [vmem:[%s139 + $0x8] sm:$0xf]
      %v151 = vld [vmem:[%s139 + $0xc] sm:$0xf]
      %v152 = vld [vmem:[%s139 + $0x10] sm:$0xf]
      %v153 = vld [vmem:[%s139 + $0x14] sm:$0xf]
      %v154 = vld [vmem:[%s139 + $0x18] sm:$0xf]
      %v155 = vld [vmem:[%s139 + $0x1c] sm:$0xf]
      %v156 = vunpack.c.l.bf16 %v148
      %v157 = vunpack.c.l.bf16 %v149
      %v158 = vunpack.c.l.bf16 %v150
      %v159 = vunpack.c.l.bf16 %v151
      %v160 = vunpack.c.l.bf16 %v152
      %v161 = vunpack.c.l.bf16 %v153
      %v162 = vunpack.c.l.bf16 %v154
      %v163 = vunpack.c.l.bf16 %v155
      %v164 = vadd.f32 %v156, %v157
      %v165 = vadd.f32 %v164, %v158
      %v166 = vadd.f32 %v165, %v159
      %v167 = vadd.f32 %v166, %v160
      %v168 = vadd.f32 %v167, %v161
      %v169 = vadd.f32 %v168, %v162
      %v170 = vadd.f32 %v169, %v163
      %v171 = vrot.slane %v170, 4
      %v172 = vadd.f32 %v170, %v171
      %v173 = vrot.slane %v172, 2
      %v174 = vadd.f32 %v172, %v173
      %v175 = vrot.slane %v174, 1
      %v176 = vadd.f32 %v174, %v175
      %v177 = vrcp.pop 64.0
      %v178 = vmul.f32 %v176, %v177
      %v179 = vsub.f32 %v156, %v178
      %v180 = vsub.f32 %v157, %v178
      %v181 = vsub.f32 %v158, %v178
      %v182 = vsub.f32 %v159, %v178
      %v183 = vsub.f32 %v160, %v178
      %v184 = vsub.f32 %v161, %v178
      %v185 = vsub.f32 %v162, %v178
      %v186 = vsub.f32 %v163, %v178
      %v187 = vmul.f32 %v179, %v179
      %v188 = vmul.f32 %v180, %v180
      %v189 = vmul.f32 %v181, %v181
      %v190 = vmul.f32 %v182, %v182
      %v191 = vmul.f32 %v183, %v183
      %v192 = vmul.f32 %v184, %v184
      %v193 = vmul.f32 %v185, %v185
      %v194 = vmul.f32 %v186, %v186
      %v195 = vadd.f32 %v187, %v188
      %v196 = vadd.f32 %v195, %v189
      %v197 = vadd.f32 %v196, %v190
      %v198 = vadd.f32 %v197, %v191
      %v199 = vadd.f32 %v198, %v192
      %v200 = vadd.f32 %v199, %v193
      %v201 = vadd.f32 %v200, %v194
      %v202 = vrot.slane %v201, 4
      %v203 = vadd.f32 %v201, %v202
      %v204 = vrot.slane %v203, 2
      %v205 = vadd.f32 %v203, %v204
      %v206 = vrot.slane %v205, 1
      %v207 = vadd.f32 %v205, %v206
      %v208 = vmul.f32 %v207, %v177
      %v209 = vadd.f32 %v208, 1e-05
      %v210 = vrsqrt.pop %v209
      %v211 = vmul.f32 %v179, %v210
      %v212 = vmul.f32 %v180, %v210
      %v213 = vmul.f32 %v181, %v210
      %v214 = vmul.f32 %v182, %v210
      %v215 = vmul.f32 %v183, %v210
      %v216 = vmul.f32 %v184, %v210
      %v217 = vmul.f32 %v185, %v210
      %v218 = vmul.f32 %v186, %v210
      %v219 = vmax.f32 %v211, 0.0
      %v220 = vmax.f32 %v212, 0.0
      %v221 = vmax.f32 %v213, 0.0
      %v222 = vmax.f32 %v214, 0.0
      %v223 = vmax.f32 %v215, 0.0
      %v224 = vmax.f32 %v216, 0.0
      %v225 = vmax.f32 %v217, 0.0
      %v226 = vmax.f32 %v218, 0.0
      %v227 = vpack.c.bf16 %v220, %v219
      %v228 = vpack.c.bf16 %v222, %v221
      %v229 = vpack.c.bf16 %v224, %v223
      %v230 = vpack.c.bf16 %v226, %v225
      %v235 = vunpack.c.l.b16 %v227
      %v236 = vunpack.c.h.b16 %v227
      %v237 = vunpack.c.l.b16 %v228
      %v238 = vunpack.c.h.b16 %v228
      %v239 = vunpack.c.l.b16 %v229
      %v240 = vunpack.c.h.b16 %v229
      %v241 = vunpack.c.l.b16 %v230
      %v242 = vunpack.c.h.b16 %v230
      %v243 = vpack.c.b16 %v235, %v235
      %v244 = vpack.c.b16 %v236, %v236
      %v245 = vpack.c.b16 %v237, %v237
      %v246 = vpack.c.b16 %v238, %v238
      %v247 = vpack.c.b16 %v239, %v239
      %v248 = vpack.c.b16 %v240, %v240
      %v249 = vpack.c.b16 %v241, %v241
      %v250 = vpack.c.b16 %v242, %v242
      %259 = vst [vmem:[%s147] sm:$0xf] %v243
      %260 = vst [vmem:[%s147 + $0x4] sm:$0xf] %v244
      %261 = vst [vmem:[%s147 + $0x8] sm:$0xf] %v245
      %262 = vst [vmem:[%s147 + $0xc] sm:$0xf] %v246
      %263 = vst [vmem:[%s147 + $0x10] sm:$0xf] %v247
      %264 = vst [vmem:[%s147 + $0x14] sm:$0xf] %v248
      %265 = vst [vmem:[%s147 + $0x18] sm:$0xf] %v249
      %266 = vst [vmem:[%s147 + $0x1c] sm:$0xf] %v250
      %p267 = scmp.lt.s32.totalorder %s16, 1
      %s268 = scalar_select %p267, %s16, 1
      %p269 = scmp.lt.s32.totalorder %s17, 0
      %s270 = scalar_select %p269, %s17, 0
      %s271 = smul.addr %s268, 8
      %s272 = sadd.s32 %s270, %s271
      %s273 = smul.addr %s272, 4
      %s274 = scalar_lea.vmem %s1, %s273
      // Predicated region
      $region25: #{deeplab_forward.34} parent=23 // pred_check
        %p275 = pneg %p72
      $region26: #{deeplab_forward.34} parent=23 // pred_check_branch
        %277 = sbr.rel (%p275) target = $region28
      $region27: #{deeplab_forward.34} parent=23 // pred_region
        _
      $region28: #{deeplab_forward.34} parent=23 // pred_fallthru
        _
    $region24: #{deeplab_forward.34} parent=5 // pred_fallthru
      _
    %p278 = scmp.le.s32.totalorder 2, %s7
    // Predicated region
    $region29: #{deeplab_forward.34} parent=5 // pred_check
      %p279 = pneg %p278
    $region30: #{deeplab_forward.34} parent=5 // pred_check_branch
      %281 = sbr.rel (%p279) target = $region32
    $region31: #{deeplab_forward.34} parent=5 // pred_region
      %s282 = ssub.s32 %s7, 2
      // Predicated region
      $region33: #{deeplab_forward.34} parent=31 // pred_check
        %p283 = pneg %p78
      $region34: #{deeplab_forward.34} parent=31 // pred_check_branch
        %285 = sbr.rel (%p283) target = $region36
      $region35: #{deeplab_forward.34} parent=31 // pred_region
        %p286 = scmp.lt.s32.totalorder %s18, 1
        %s287 = scalar_select %p286, %s18, 1
        %p288 = scmp.lt.s32.totalorder %s19, 0
        %s289 = scalar_select %p288, %s19, 0
        %s290 = smul.addr %s287, 8
        %s291 = sadd.s32 %s289, %s290
        %s292 = smul.addr %s291, 4
        %s293 = scalar_lea.vmem %s1, %s292
      $region36: #{deeplab_forward.34} parent=31 // pred_fallthru
        _
    $region32: #{deeplab_forward.34} parent=5 // pred_fallthru
      _
  $region6: #{deeplab_forward.34} parent=0 // loop_footer
    %s11 = sadd.s32 1, %s7
  $region7: #{deeplab_forward.34} parent=0 // loop_footer_branch
    %6 = sbr.rel target = $region3
  $region8: #{deeplab_forward.34} parent=0 // loop_exit
    _

// kernel: deeplab_forward.33
$region0: #{deeplab_forward.33}
  #allocation0 [shape = 'u32[]', space=smem, size = 0x4, offset = 0x4, fixed_abs, tag = 'smem constant byte address 0x4 - core index']
  #allocation1 [shape = 'u32[144,128]{1,0:T(1,128)}', space=vmem, size = 0x12000, scoped, tag = 'internal scratch']
  #allocation2 [shape = 'f32[128,128]{1,0:T(8,128)}', space=vmem, size = 0x10000, scoped, tag = 'scratch operand']
  %s0 = inlined_call_operand.vmem [shape: bf16[128,256], index: 0, kind: input, shape index: {}]
  %s1 = inlined_call_operand.vmem [shape: bf16[256,128], index: 1, kind: input, shape index: {}]
  %s2 = inlined_call_operand.vmem [shape: f32[1,128], index: 2, kind: input, shape index: {}]
  %s3 = inlined_call_operand.vmem [shape: bf16[128,128], index: 3, kind: output, shape index: {}]
  %s4 = sld [smem:[#allocation0]]
  $region30: #{deeplab_forward.33} parent=0
    _
  %s6 = ssub.s32 1, %s4
  %s7 = scalar_select 0, %s6, %s4
  // Predicated region
  $region2: #{deeplab_forward.33} parent=0 // pred_check
    _
  $region3: #{deeplab_forward.33} parent=0 // pred_check_branch
    %9 = sbr.rel (0) target = $region5
  $region4: #{deeplab_forward.33} parent=0 // pred_region
    _
  $region5: #{deeplab_forward.33} parent=0 // pred_fallthru
    _
  // Predicated region
  $region6: #{deeplab_forward.33} parent=0 // pred_check
    _
  $region7: #{deeplab_forward.33} parent=0 // pred_check_branch
    %11 = sbr.rel (0) target = $region9
  $region8: #{deeplab_forward.33} parent=0 // pred_region
    _
  $region9: #{deeplab_forward.33} parent=0 // pred_fallthru
    _
  // Predicated region
  $region10: #{deeplab_forward.33} parent=0 // pred_check
    _
  $region11: #{deeplab_forward.33} parent=0 // pred_check_branch
    %13 = sbr.rel (0) target = $region13
  $region12: #{deeplab_forward.33} parent=0 // pred_region
    _
  $region13: #{deeplab_forward.33} parent=0 // pred_fallthru
    _
  %p15 = scmp.eq.s32.totalorder 0, 0
  // Predicated region
  $region14: #{deeplab_forward.33} parent=0 // pred_check
    %p16 = pneg %p15
  $region15: #{deeplab_forward.33} parent=0 // pred_check_branch
    %18 = sbr.rel (%p16) target = $region17
  $region16: #{deeplab_forward.33} parent=0 // pred_region
    %19 = vst [vmem:[#allocation2] sm:$0xff] 0.0
    %20 = vst [vmem:[#allocation2 + $0x8] sm:$0xff] 0.0
    %21 = vst [vmem:[#allocation2 + $0x10] sm:$0xff] 0.0
    %22 = vst [vmem:[#allocation2 + $0x18] sm:$0xff] 0.0
    %23 = vst [vmem:[#allocation2 + $0x20] sm:$0xff] 0.0
    %24 = vst [vmem:[#allocation2 + $0x28] sm:$0xff] 0.0
    %25 = vst [vmem:[#allocation2 + $0x30] sm:$0xff] 0.0
    %26 = vst [vmem:[#allocation2 + $0x38] sm:$0xff] 0.0
    %27 = vst [vmem:[#allocation2 + $0x40] sm:$0xff] 0.0
    %28 = vst [vmem:[#allocation2 + $0x48] sm:$0xff] 0.0
    %29 = vst [vmem:[#allocation2 + $0x50] sm:$0xff] 0.0
    %30 = vst [vmem:[#allocation2 + $0x58] sm:$0xff] 0.0
    %31 = vst [vmem:[#allocation2 + $0x60] sm:$0xff] 0.0
    %32 = vst [vmem:[#allocation2 + $0x68] sm:$0xff] 0.0
    %33 = vst [vmem:[#allocation2 + $0x70] sm:$0xff] 0.0
    %34 = vst [vmem:[#allocation2 + $0x78] sm:$0xff] 0.0
  $region17: #{deeplab_forward.33} parent=0 // pred_fallthru
    _
  %v35 = vld [vmem:[#allocation2] sm:$0xff]
  %v36 = vld [vmem:[#allocation2 + $0x8] sm:$0xff]
  %v37 = vld [vmem:[#allocation2 + $0x10] sm:$0xff]
  %v38 = vld [vmem:[#allocation2 + $0x18] sm:$0xff]
  %v39 = vld [vmem:[#allocation2 + $0x20] sm:$0xff]
  %v40 = vld [vmem:[#allocation2 + $0x28] sm:$0xff]
  %v41 = vld [vmem:[#allocation2 + $0x30] sm:$0xff]
  %v42 = vld [vmem:[#allocation2 + $0x38] sm:$0xff]
  %v43 = vld [vmem:[#allocation2 + $0x40] sm:$0xff]
  %v44 = vld [vmem:[#allocation2 + $0x48] sm:$0xff]
  %v45 = vld [vmem:[#allocation2 + $0x50] sm:$0xff]
  %v46 = vld [vmem:[#allocation2 + $0x58] sm:$0xff]
  %v47 = vld [vmem:[#allocation2 + $0x60] sm:$0xff]
  %v48 = vld [vmem:[#allocation2 + $0x68] sm:$0xff]
  %v49 = vld [vmem:[#allocation2 + $0x70] sm:$0xff]
  %v50 = vld [vmem:[#allocation2 + $0x78] sm:$0xff]
  %v51 = vld [vmem:[%s0] sm:$0xff]
  %v52 = vld [vmem:[%s0 + $0x8] sm:$0xff]
  %v53 = vld [vmem:[%s0 + $0x10] sm:$0xff]
  %v54 = vld [vmem:[%s0 + $0x18] sm:$0xff]
  %v55 = vld [vmem:[%s0 + $0x20] sm:$0xff]
  %v56 = vld [vmem:[%s0 + $0x28] sm:$0xff]
  %v57 = vld [vmem:[%s0 + $0x30] sm:$0xff]
  %v58 = vld [vmem:[%s0 + $0x38] sm:$0xff]
  %v59 = vld [vmem:[%s0 + $0x40] sm:$0xff]
  %v60 = vld [vmem:[%s0 + $0x48] sm:$0xff]
  %v61 = vld [vmem:[%s0 + $0x50] sm:$0xff]
  %v62 = vld [vmem:[%s0 + $0x58] sm:$0xff]
  %v63 = vld [vmem:[%s0 + $0x60] sm:$0xff]
  %v64 = vld [vmem:[%s0 + $0x68] sm:$0xff]
  %v65 = vld [vmem:[%s0 + $0x70] sm:$0xff]
  %v66 = vld [vmem:[%s0 + $0x78] sm:$0xff]
  %v67 = vld [vmem:[%s1] sm:$0xf]
  %v68 = vld [vmem:[%s1 + $0x4] sm:$0xf]
  %v69 = vld [vmem:[%s1 + $0x8] sm:$0xf]
  %v70 = vld [vmem:[%s1 + $0xc] sm:$0xf]
  %v71 = vld [vmem:[%s1 + $0x10] sm:$0xf]
  %v72 = vld [vmem:[%s1 + $0x14] sm:$0xf]
  %v73 = vld [vmem:[%s1 + $0x18] sm:$0xf]
  %v74 = vld [vmem:[%s1 + $0x1c] sm:$0xf]
  %v75 = vld [vmem:[%s1 + $0x20] sm:$0xf]
  %v76 = vld [vmem:[%s1 + $0x24] sm:$0xf]
  %v77 = vld [vmem:[%s1 + $0x28] sm:$0xf]
  %v78 = vld [vmem:[%s1 + $0x2c] sm:$0xf]
  %v79 = vld [vmem:[%s1 + $0x30] sm:$0xf]
  %v80 = vld [vmem:[%s1 + $0x34] sm:$0xf]
  %v81 = vld [vmem:[%s1 + $0x38] sm:$0xf]
  %v82 = vld [vmem:[%s1 + $0x3c] sm:$0xf]
  %v83 = vld [vmem:[%s1 + $0x40] sm:$0xf]
  %v84 = vld [vmem:[%s1 + $0x44] sm:$0xf]
  %v85 = vld [vmem:[%s1 + $0x48] sm:$0xf]
  %v86 = vld [vmem:[%s1 + $0x4c] sm:$0xf]
  %v87 = vld [vmem:[%s1 + $0x50] sm:$0xf]
  %v88 = vld [vmem:[%s1 + $0x54] sm:$0xf]
  %v89 = vld [vmem:[%s1 + $0x58] sm:$0xf]
  %v90 = vld [vmem:[%s1 + $0x5c] sm:$0xf]
  %v91 = vld [vmem:[%s1 + $0x60] sm:$0xf]
  %v92 = vld [vmem:[%s1 + $0x64] sm:$0xf]
  %v93 = vld [vmem:[%s1 + $0x68] sm:$0xf]
  %v94 = vld [vmem:[%s1 + $0x6c] sm:$0xf]
  %v95 = vld [vmem:[%s1 + $0x70] sm:$0xf]
  %v96 = vld [vmem:[%s1 + $0x74] sm:$0xf]
  %v97 = vld [vmem:[%s1 + $0x78] sm:$0xf]
  %v98 = vld [vmem:[%s1 + $0x7c] sm:$0xf]
  %v115 = vunpack.c.l.b16 %v51
  %v116 = vunpack.c.h.b16 %v51
  %v117 = vunpack.c.l.b16 %v52
  %v118 = vunpack.c.h.b16 %v52
  %v119 = vunpack.c.l.b16 %v53
  %v120 = vunpack.c.h.b16 %v53
  %v121 = vunpack.c.l.b16 %v54
  %v122 = vunpack.c.h.b16 %v54
  %v123 = vunpack.c.l.b16 %v55
  %v124 = vunpack.c.h.b16 %v55
  %v125 = vunpack.c.l.b16 %v56
  %v126 = vunpack.c.h.b16 %v56
  %v127 = vunpack.c.l.b16 %v57
  %v128 = vunpack.c.h.b16 %v57
  %v129 = vunpack.c.l.b16 %v58
  %v130 = vunpack.c.h.b16 %v58
  %v131 = vunpack.c.l.b16 %v59
  %v132 = vunpack.c.h.b16 %v59
  %v133 = vunpack.c.l.b16 %v60
  %v134 = vunpack.c.h.b16 %v60
  %v135 = vunpack.c.l.b16 %v61
  %v136 = vunpack.c.h.b16 %v61
  %v137 = vunpack.c.l.b16 %v62
  %v138 = vunpack.c.h.b16 %v62
  %v139 = vunpack.c.l.b16 %v63
  %v140 = vunpack.c.h.b16 %v63
  %v141 = vunpack.c.l.b16 %v64
  %v142 = vunpack.c.h.b16 %v64
  %v143 = vunpack.c.l.b16 %v65
  %v144 = vunpack.c.h.b16 %v65
  %v145 = vunpack.c.l.b16 %v66
  %v146 = vunpack.c.h.b16 %v66
  %v147 = vpack.c.b16 %v117, %v115
  %v148 = vpack.c.b16 %v118, %v116
  %v149 = vpack.c.b16 %v121, %v119
  %v150 = vpack.c.b16 %v122, %v120
  %v151 = vpack.c.b16 %v125, %v123
  %v152 = vpack.c.b16 %v126, %v124
  %v153 = vpack.c.b16 %v129, %v127
  %v154 = vpack.c.b16 %v130, %v128
  %v155 = vpack.c.b16 %v133, %v131
  %v156 = vpack.c.b16 %v134, %v132
  %v157 = vpack.c.b16 %v137, %v135
  %v158 = vpack.c.b16 %v138, %v136
  %v159 = vpack.c.b16 %v141, %v139
  %v160 = vpack.c.b16 %v142, %v140
  %v161 = vpack.c.b16 %v145, %v143
  %v162 = vpack.c.b16 %v146, %v144
  %v211 = vunpack.c.l.b16 %v67
  %v212 = vunpack.c.l.b16 %v68
  %v213 = vunpack.c.l.b16 %v69
  %v214 = vunpack.c.l.b16 %v70
  %v215 = vunpack.c.l.b16 %v71
  %v216 = vunpack.c.l.b16 %v72
  %v217 = vunpack.c.l.b16 %v73
  %v218 = vunpack.c.l.b16 %v74
  %v219 = vunpack.c.l.b16 %v75
  %v220 = vunpack.c.l.b16 %v76
  %v221 = vunpack.c.l.b16 %v77
  %v222 = vunpack.c.l.b16 %v78
  %v223 = vunpack.c.l.b16 %v79
  %v224 = vunpack.c.l.b16 %v80
  %v225 = vunpack.c.l.b16 %v81
  %v226 = vunpack.c.l.b16 %v82
  %v227 = vunpack.c.l.b16 %v83
  %v228 = vunpack.c.l.b16 %v84
  %v229 = vunpack.c.l.b16 %v85
  %v230 = vunpack.c.l.b16 %v86
  %v231 = vunpack.c.l.b16 %v87
  %v232 = vunpack.c.l.b16 %v88
  %v233 = vunpack.c.l.b16 %v89
  %v234 = vunpack.c.l.b16 %v90
  %v235 = vunpack.c.l.b16 %v91
  %v236 = vunpack.c.l.b16 %v92
  %v237 = vunpack.c.l.b16 %v93
  %v238 = vunpack.c.l.b16 %v94
  %v239 = vunpack.c.l.b16 %v95
  %v240 = vunpack.c.l.b16 %v96
  %v241 = vunpack.c.l.b16 %v97
  %v242 = vunpack.c.l.b16 %v98
  %v243 = vpack.c.b16 %v212, %v211
  %v244 = vpack.c.b16 %v214, %v213
  %v245 = vpack.c.b16 %v216, %v215
  %v246 = vpack.c.b16 %v218, %v217
  %v247 = vpack.c.b16 %v220, %v219
  %v248 = vpack.c.b16 %v222, %v221
  %v249 = vpack.c.b16 %v224, %v223
  %v250 = vpack.c.b16 %v226, %v225
  %v251 = vpack.c.b16 %v228, %v227
  %v252 = vpack.c.b16 %v230, %v229
  %v253 = vpack.c.b16 %v232, %v231
  %v254 = vpack.c.b16 %v234, %v233
  %v255 = vpack.c.b16 %v236, %v235
  %v256 = vpack.c.b16 %v238, %v237
  %v257 = vpack.c.b16 %v240, %v239
  %v258 = vpack.c.b16 %v242, %v241
  %275 = vmatprep.subr.bf16.mxu0 0
  %276 = vmatpush1.bf16.msra.mxu0 %v243
  %277 = vmatprep.subr.bf16.mxu0 0
  %278 = vmatpush1.bf16.msra.mxu0 %v244
  %279 = vmatprep.subr.bf16.mxu0 0
  %280 = vmatpush1.bf16.msra.mxu0 %v245
  %281 = vmatprep.subr.bf16.mxu0 0
  %282 = vmatpush1.bf16.msra.mxu0 %v246
  %283 = vmatprep.subr.bf16.mxu0 0
  %284 = vmatpush1.bf16.msra.mxu0 %v247
  %285 = vmatprep.subr.bf16.mxu0 0
  %286 = vmatpush1.bf16.msra.mxu0 %v248
  %287 = vmatprep.subr.bf16.mxu0 0
  %288 = vmatpush1.bf16.msra.mxu0 %v249
  %289 = vmatprep.subr.bf16.mxu0 0
  %290 = vmatpush1.bf16.msra.mxu0 %v250
  %291 = vmatprep.subr.bf16.mxu0 0
  %292 = vmatpush1.bf16.msra.mxu0 %v251
  %293 = vmatprep.subr.bf16.mxu0 0
  %294 = vmatpush1.bf16.msra.mxu0 %v252
  %295 = vmatprep.subr.bf16.mxu0 0
  %296 = vmatpush1.bf16.msra.mxu0 %v253
  %297 = vmatprep.subr.bf16.mxu0 0
  %298 = vmatpush1.bf16.msra.mxu0 %v254
  %299 = vmatprep.subr.bf16.mxu0 0
  %300 = vmatpush1.bf16.msra.mxu0 %v255
  %301 = vmatprep.subr.bf16.mxu0 0
  %302 = vmatpush1.bf16.msra.mxu0 %v256
  %303 = vmatprep.subr.bf16.mxu0 0
  %304 = vmatpush1.bf16.msra.mxu0 %v257
  %305 = vmatprep.subr.bf16.mxu0 0
  %306 = vmatpush1.bf16.msra.mxu0 %v258
  %307 = vmatprep.mubr.bf16.mxu0 %v148
  %308 = vmatmul.mubr.bf16.gmra.mrb[0].mxu0 %v147
  %v309 = vpop.f32.mrb[0].mxu0
  %v310 = vadd.f32 0.0, %v309
  %v311 = vpop.f32.mrb[0].mxu0
  %v312 = vpop.f32.mrb[0].mxu0
  %v313 = vadd.f32 0.0, %v312
  %v314 = vpop.f32.mrb[0].mxu0
  %315 = vmatprep.mubr.bf16.mxu0 %v150
  %316 = vmatmul.mubr.bf16.gmra.mrb[0].mxu0 %v149
  %v317 = vpop.f32.mrb[0].mxu0
  %v318 = vadd.f32 0.0, %v317
  %v319 = vpop.f32.mrb[0].mxu0
  %v320 = vpop.f32.mrb[0].mxu0
  %v321 = vadd.f32 0.0, %v320
  %v322 = vpop.f32.mrb[0].mxu0
  %323 = vmatprep.mubr.bf16.mxu0 %v152
  %324 = vmatmul.mubr.bf16.gmra.mrb[0].mxu0 %v151
  %v325 = vpop.f32.mrb[0].mxu0
  %v326 = vadd.f32 0.0, %v325
  %v327 = vpop.f32.mrb[0].mxu0
  %v328 = vpop.f32.mrb[0].mxu0
  %v329 = vadd.f32 0.0, %v328
  %v330 = vpop.f32.mrb[0].mxu0
  %331 = vmatprep.mubr.bf16.mxu0 %v154
  %332 = vmatmul.mubr.bf16.gmra.mrb[0].mxu0 %v153
  %v333 = vpop.f32.mrb[0].mxu0
  %v334 = vadd.f32 0.0, %v333
  %v335 = vpop.f32.mrb[0].mxu0
  %v336 = vpop.f32.mrb[0].mxu0
  %v337 = vadd.f32 0.0, %v336
  %v338 = vpop.f32.mrb[0].mxu0
  %339 = vmatprep.mubr.bf16.mxu0 %v156
  %340 = vmatmul.mubr.bf16.gmra.mrb[0].mxu0 %v155
  %v341 = vpop.f32.mrb[0].mxu0
  %v342 = vadd.f32 0.0, %v341
  %v343 = vpop.f32.mrb[0].mxu0
  %v344 = vpop.f32.mrb[0].mxu0
  %v345 = vadd.f32 0.0, %v344
  %v346 = vpop.f32.mrb[0].mxu0
  %347 = vmatprep.mubr.bf16.mxu0 %v158
  %348 = vmatmul.mubr.bf16.gmra.mrb[0].mxu0 %v157
  %v349 = vpop.f32.mrb[0].mxu0
  %v350 = vadd.f32 0.0, %v349
  %v351 = vpop.f32.mrb[0].mxu0
  %v352 = vpop.f32.mrb[0].mxu0
  %v353 = vadd.f32 0.0, %v352
  %v354 = vpop.f32.mrb[0].mxu0
  %355 = vmatprep.mubr.bf16.mxu0 %v160
  %356 = vmatmul.mubr.bf16.gmra.mrb[0].mxu0 %v159
  %v357 = vpop.f32.mrb[0].mxu0
  %v358 = vadd.f32 0.0, %v357
  %v359 = vpop.f32.mrb[0].mxu0
  %v360 = vpop.f32.mrb[0].mxu0
  %v361 = vadd.f32 0.0, %v360
  %v362 = vpop.f32.mrb[0].mxu0
  %363 = vmatprep.mubr.bf16.mxu0 %v162
  %364 = vmatmul.mubr.bf16.gmra.mrb[0].mxu0 %v161
  %v365 = vpop.f32.mrb[0].mxu0
  %v366 = vadd.f32 0.0, %v365
  %v367 = vpop.f32.mrb[0].mxu0
  %v368 = vpop.f32.mrb[0].mxu0
  %v369 = vadd.f32 0.0, %v368
  %v370 = vpop.f32.mrb[0].mxu0
  %371 = vdwg.mxu0
  %v372 = vadd.f32 %v35, %v310
  %v373 = vadd.f32 %v36, %v313
  %v374 = vadd.f32 %v37, %v318
  %v375 = vadd.f32 %v38, %v321
  %v376 = vadd.f32 %v39, %v326
  %v377 = vadd.f32 %v40, %v329
  %v378 = vadd.f32 %v41, %v334
  %v379 = vadd.f32 %v42, %v337
  %v380 = vadd.f32 %v43, %v342
  %v381 = vadd.f32 %v44, %v345
  %v382 = vadd.f32 %v45, %v350
  %v383 = vadd.f32 %v46, %v353
  %v384 = vadd.f32 %v47, %v358
  %v385 = vadd.f32 %v48, %v361
  %v386 = vadd.f32 %v49, %v366
  %v387 = vadd.f32 %v50, %v369
  %388 = vst [vmem:[#allocation2] sm:$0xff] %v372
  %389 = vst [vmem:[#allocation2 + $0x8] sm:$0xff] %v373
  %390 = vst [vmem:[#allocation2 + $0x10] sm:$0xff] %v374
  %391 = vst [vmem:[#allocation2 + $0x18] sm:$0xff] %v375
  %392 = vst [vmem:[#allocation2 + $0x20] sm:$0xff] %v376
  %393 = vst [vmem:[#allocation2 + $0x28] sm:$0xff] %v377
  %394 = vst [vmem:[#allocation2 + $0x30] sm:$0xff] %v378
  %395 = vst [vmem:[#allocation2 + $0x38] sm:$0xff] %v379
  %396 = vst [vmem:[#allocation2 + $0x40] sm:$0xff] %v380
  %397 = vst [vmem:[#allocation2 + $0x48] sm:$0xff] %v381
  %398 = vst [vmem:[#allocation2 + $0x50] sm:$0xff] %v382
  %399 = vst [vmem:[#allocation2 + $0x58] sm:$0xff] %v383
  %400 = vst [vmem:[#allocation2 + $0x60] sm:$0xff] %v384
  %401 = vst [vmem:[#allocation2 + $0x68] sm:$0xff] %v385
  %402 = vst [vmem:[#allocation2 + $0x70] sm:$0xff] %v386
  %403 = vst [vmem:[#allocation2 + $0x78] sm:$0xff] %v387
  // Predicated region
  $region18: #{deeplab_forward.33} parent=0 // pred_check
    %p404 = pneg %p15
  $region19: #{deeplab_forward.33} parent=0 // pred_check_branch
    %406 = sbr.rel (%p404) target = $region21
  $region20: #{deeplab_forward.33} parent=0 // pred_region
    %v407 = vld [vmem:[#allocation2] sm:$0xff]
    %v408 = vld [vmem:[#allocation2 + $0x8] sm:$0xff]
    %v409 = vld [vmem:[#allocation2 + $0x10] sm:$0xff]
    %v410 = vld [vmem:[#allocation2 + $0x18] sm:$0xff]
    %v411 = vld [vmem:[#allocation2 + $0x20] sm:$0xff]
    %v412 = vld [vmem:[#allocation2 + $0x28] sm:$0xff]
    %v413 = vld [vmem:[#allocation2 + $0x30] sm:$0xff]
    %v414 = vld [vmem:[#allocation2 + $0x38] sm:$0xff]
    %v415 = vld [vmem:[#allocation2 + $0x40] sm:$0xff]
    %v416 = vld [vmem:[#allocation2 + $0x48] sm:$0xff]
    %v417 = vld [vmem:[#allocation2 + $0x50] sm:$0xff]
    %v418 = vld [vmem:[#allocation2 + $0x58] sm:$0xff]
    %v419 = vld [vmem:[#allocation2 + $0x60] sm:$0xff]
    %v420 = vld [vmem:[#allocation2 + $0x68] sm:$0xff]
    %v421 = vld [vmem:[#allocation2 + $0x70] sm:$0xff]
    %v422 = vld [vmem:[#allocation2 + $0x78] sm:$0xff]
    %v423 = vld [vmem:[%s2] sm:$0x1]
    %v425 = vlaneseq
    %v426 = vshrl.u32 %v425, 7
    %v427 = vsub.s32 0, %v426
    %v428 = vrot.slane %v423, %v427
    %v430 = vadd.f32 %v407, %v428
    %v431 = vadd.f32 %v408, %v428
    %v432 = vadd.f32 %v409, %v428
    %v433 = vadd.f32 %v410, %v428
    %v434 = vadd.f32 %v411, %v428
    %v435 = vadd.f32 %v412, %v428
    %v436 = vadd.f32 %v413, %v428
    %v437 = vadd.f32 %v414, %v428
    %v438 = vadd.f32 %v415, %v428
    %v439 = vadd.f32 %v416, %v428
    %v440 = vadd.f32 %v417, %v428
    %v441 = vadd.f32 %v418, %v428
    %v442 = vadd.f32 %v419, %v428
    %v443 = vadd.f32 %v420, %v428
    %v444 = vadd.f32 %v421, %v428
    %v445 = vadd.f32 %v422, %v428
    %v446 = vpack.c.bf16 %v431, %v430
    %v447 = vpack.c.bf16 %v433, %v432
    %v448 = vpack.c.bf16 %v435, %v434
    %v449 = vpack.c.bf16 %v437, %v436
    %v450 = vpack.c.bf16 %v439, %v438
    %v451 = vpack.c.bf16 %v441, %v440
    %v452 = vpack.c.bf16 %v443, %v442
    %v453 = vpack.c.bf16 %v445, %v444
    %v462 = vunpack.c.l.b16 %v446
    %v463 = vunpack.c.h.b16 %v446
    %v464 = vunpack.c.l.b16 %v447
    %v465 = vunpack.c.h.b16 %v447
    %v466 = vunpack.c.l.b16 %v448
    %v467 = vunpack.c.h.b16 %v448
    %v468 = vunpack.c.l.b16 %v449
    %v469 = vunpack.c.h.b16 %v449
    %v470 = vunpack.c.l.b16 %v450
    %v471 = vunpack.c.h.b16 %v450
    %v472 = vunpack.c.l.b16 %v451
    %v473 = vunpack.c.h.b16 %v451
    %v474 = vunpack.c.l.b16 %v452
    %v475 = vunpack.c.h.b16 %v452
    %v476 = vunpack.c.l.b16 %v453
    %v477 = vunpack.c.h.b16 %v453
    %v478 = vpack.c.b16 %v462, %v462
    %v479 = vpack.c.b16 %v463, %v463
    %v480 = vpack.c.b16 %v464, %v464
    %v481 = vpack.c.b16 %v465, %v465
    %v482 = vpack.c.b16 %v466, %v466
    %v483 = vpack.c.b16 %v467, %v467
    %v484 = vpack.c.b16 %v468, %v468
    %v485 = vpack.c.b16 %v469, %v469
    %v486 = vpack.c.b16 %v470, %v470
    %v487 = vpack.c.b16 %v471, %v471
    %v488 = vpack.c.b16 %v472, %v472
    %v489 = vpack.c.b16 %v473, %v473
    %v490 = vpack.c.b16 %v474, %v474
    %v491 = vpack.c.b16 %v475, %v475
    %v492 = vpack.c.b16 %v476, %v476
    %v493 = vpack.c.b16 %v477, %v477
    %510 = vst [vmem:[%s3] sm:$0xf] %v478
    %511 = vst [vmem:[%s3 + $0x4] sm:$0xf] %v479
    %512 = vst [vmem:[%s3 + $0x8] sm:$0xf] %v480
    %513 = vst [vmem:[%s3 + $0xc] sm:$0xf] %v481
    %514 = vst [vmem:[%s3 + $0x10] sm:$0xf] %v482
    %515 = vst [vmem:[%s3 + $0x14] sm:$0xf] %v483
    %516 = vst [vmem:[%s3 + $0x18] sm:$0xf] %v484
    %517 = vst [vmem:[%s3 + $0x1c] sm:$0xf] %v485
    %518 = vst [vmem:[%s3 + $0x20] sm:$0xf] %v486
    %519 = vst [vmem:[%s3 + $0x24] sm:$0xf] %v487
    %520 = vst [vmem:[%s3 + $0x28] sm:$0xf] %v488
    %521 = vst [vmem:[%s3 + $0x2c] sm:$0xf] %v489
    %522 = vst [vmem:[%s3 + $0x30] sm:$0xf] %v490
    %523 = vst [vmem:[%s3 + $0x34] sm:$0xf] %v491
    %524 = vst [vmem:[%s3 + $0x38] sm:$0xf] %v492
    %525 = vst [vmem:[%s3 + $0x3c] sm:$0xf] %v493
  $region21: #{deeplab_forward.33} parent=0 // pred_fallthru
    _
  // Predicated region
  $region22: #{deeplab_forward.33} parent=0 // pred_check
    _
  $region23: #{deeplab_forward.33} parent=0 // pred_check_branch
    %527 = sbr.rel (0) target = $region25
  $region24: #{deeplab_forward.33} parent=0 // pred_region
    _
  $region25: #{deeplab_forward.33} parent=0 // pred_fallthru
    _
  // Predicated region
  $region26: #{deeplab_forward.33} parent=0 // pred_check
    _
  $region27: #{deeplab_forward.33} parent=0 // pred_check_branch
    %529 = sbr.rel (0) target = $region29
  $region28: #{deeplab_forward.33} parent=0 // pred_region
    _
  $region29: #{deeplab_forward.33} parent=0 // pred_fallthru
    _

// kernel: deeplab_forward.36
$region0: #{deeplab_forward.36}
  #allocation0 [shape = 'u32[]', space=smem, size = 0x4, offset = 0x4, fixed_abs, tag = 'smem constant byte address 0x4 - core index']
  #allocation1 [shape = 'u32[144,128]{1,0:T(1,128)}', space=vmem, size = 0x12000, scoped, tag = 'internal scratch']
  %s0 = inlined_call_operand.vmem [shape: bf16[2,16,128], index: 0, kind: input, shape index: {}]
  %s1 = inlined_call_operand.vmem [shape: bf16[2,16,128], index: 1, kind: output, shape index: {}]
  %s2 = sld [smem:[#allocation0]]
  $region37: #{deeplab_forward.36} parent=0
    _
  %s4 = ssub.s32 1, %s2
  %s5 = scalar_select 0, %s4, %s2
  loop: start=0, step=1, limit=4
  $region2: #{deeplab_forward.36} parent=0 // loop_pre_header
    _
  $region3: #{deeplab_forward.36} parent=0 // loop_header
    %s7 = sphi 0, %s11
    %p8 = scmp.ge.s32.totalorder %s7, 4
    %s14 = sphi 0, %s26
    %s15 = sphi 0, %s22
    %s16 = sphi 0, %s14
    %s17 = sphi 0, %s15
    %s18 = sphi 0, %s16
    %s19 = sphi 0, %s17
    %s31 = sphi 0, %s33
    %s34 = sphi 0, %s31
    %s35 = sphi 0, %s34
    %s51 = sphi 0, %s35
    %s59 = sphi 0, %s61
    %s62 = sphi 0, %s59
    %s63 = sphi 0, %s62
    %s79 = sphi 0, %s63
  $region4: #{deeplab_forward.36} parent=0 // loop_header_branch
    %10 = sbr.rel (%p8) target = $region8
  $region5: #{deeplab_forward.36} parent=0 // loop_body
    %s12 = ssub.s32 %s7, 1
    %s13 = ssub.s32 %s7, 2
    %s20 = sadd.s32 1, %s15
    %p21 = scmp.ge.s32.totalorder %s20, 1
    %s22 = scalar_select %p21, 0, %s20
    %s23 = sadd.s32 1, %s14
    %s24 = scalar_select %p21, %s23, %s14
    %p25 = scmp.ge.s32.totalorder %s24, 2
    %s26 = scalar_select %p25, 0, %s24
    %s27 = ssub.s32 %s14, %s26
    %s28 = ssub.s32 %s15, %s22
    %s29 = sor.u32 %s27, %s28
    %p30 = scmp.eq.s32.totalorder %s29, 0
    %s32 = sadd.s32 %s31, 1
    %s33 = scalar_select %p30, %s31, %s32
    %p36 = pneg %p30
    %p37 = scmp.eq.s32.totalorder %s7, 1
    %p38 = por %p36, %p37
    %p39 = scmp.ne.s32.totalorder %s31, %s34
    %p40 = scmp.eq.s32.totalorder %s7, 0
    %p41 = por %p39, %p40
    %p42 = scmp.ne.s32.totalorder %s31, %s34
    %p43 = scmp.eq.s32.totalorder %s12, 1
    %p44 = por %p42, %p43
    %p45 = scmp.ne.s32.totalorder %s34, %s35
    %p46 = scmp.eq.s32.totalorder %s12, 0
    %p47 = por %p45, %p46
    %p48 = scmp.ne.s32.totalorder %s34, %s35
    %p49 = scmp.eq.s32.totalorder %s13, 1
    %p50 = por %p48, %p49
    %p52 = scmp.ne.s32.totalorder %s35, %s51
    %p53 = scmp.eq.s32.totalorder %s13, 0
    %p54 = por %p52, %p53
    %s55 = ssub.s32 %s14, %s26
    %s56 = ssub.s32 %s15, %s22
    %s57 = sor.u32 %s55, %s56
    %p58 = scmp.eq.s32.totalorder %s57, 0
    %s60 = sadd.s32 %s59, 1
    %s61 = scalar_select %p58, %s59, %s60
    %p64 = pneg %p58
    %p65 = scmp.eq.s32.totalorder %s7, 1
    %p66 = por %p64, %p65
    %p67 = scmp.ne.s32.totalorder %s59, %s62
    %p68 = scmp.eq.s32.totalorder %s7, 0
    %p69 = por %p67, %p68
    %p70 = scmp.ne.s32.totalorder %s59, %s62
    %p71 = scmp.eq.s32.totalorder %s12, 1
    %p72 = por %p70, %p71
    %p73 = scmp.ne.s32.totalorder %s62, %s63
    %p74 = scmp.eq.s32.totalorder %s12, 0
    %p75 = por %p73, %p74
    %p76 = scmp.ne.s32.totalorder %s62, %s63
    %p77 = scmp.eq.s32.totalorder %s13, 1
    %p78 = por %p76, %p77
    %p80 = scmp.ne.s32.totalorder %s63, %s79
    %p81 = scmp.eq.s32.totalorder %s13, 0
    %p82 = por %p80, %p81
    %p83 = scmp.le.s32.totalorder 1, %s7
    %p84 = scmp.lt.s32.totalorder %s7, 3
    %p85 = pnand %p83, %p84
    %p86 = pneg %p85
    // Predicated region
    $region9: #{deeplab_forward.36} parent=5 // pred_check
      _
    $region10: #{deeplab_forward.36} parent=5 // pred_check_branch
      %88 = sbr.rel (%p85) target = $region12
    $region11: #{deeplab_forward.36} parent=5 // pred_region
      %s89 = ssub.s32 %s7, 1
    $region12: #{deeplab_forward.36} parent=5 // pred_fallthru
      _
    %p90 = scmp.lt.s32.totalorder %s7, 2
    // Predicated region
    $region13: #{deeplab_forward.36} parent=5 // pred_check
      %p91 = pneg %p90
    $region14: #{deeplab_forward.36} parent=5 // pred_check_branch
      %93 = sbr.rel (%p91) target = $region16
    $region15: #{deeplab_forward.36} parent=5 // pred_region
      // Predicated region
      $region17: #{deeplab_forward.36} parent=15 // pred_check
        %p94 = pneg %p41
      $region18: #{deeplab_forward.36} parent=15 // pred_check_branch
        %96 = sbr.rel (%p94) target = $region20
      $region19: #{deeplab_forward.36} parent=15 // pred_region
        %p97 = scmp.lt.s32.totalorder %s14, 1
        %s98 = scalar_select %p97, %s14, 1
        %p99 = scmp.lt.s32.totalorder %s15, 0
        %s100 = scalar_select %p99, %s15, 0
        %s101 = smul.addr %s98, 2
        %s102 = sadd.s32 %s100, %s101
        %s103 = smul.addr %s102, 4
        %s104 = scalar_lea.vmem %s0, %s103
      $region20: #{deeplab_forward.36} parent=15 // pred_fallthru
        _
    $region16: #{deeplab_forward.36} parent=5 // pred_fallthru
      _
    %p105 = scmp.le.s32.totalorder 1, %s7
    %p106 = scmp.lt.s32.totalorder %s7, 3
    %p107 = pnand %p105, %p106
    %p108 = pneg %p107
    // Predicated region
    $region21: #{deeplab_forward.36} parent=5 // pred_check
      _
    $region22: #{deeplab_forward.36} parent=5 // pred_check_branch
      %110 = sbr.rel (%p107) target = $region24
    $region23: #{deeplab_forward.36} parent=5 // pred_region
      %s111 = ssub.s32 %s7, 1
      %p112 = scmp.lt.s32.totalorder %s16, 1
      %s113 = scalar_select %p112, %s16, 1
      %p114 = scmp.lt.s32.totalorder %s17, 0
      %s115 = scalar_select %p114, %s17, 0
      %s116 = smul.addr %s113, 2
      %s117 = sadd.s32 %s115, %s116
      %s118 = smul.addr %s117, 4
      %s119 = scalar_lea.vmem %s0, %s118
      %p120 = pneg %p47
      %p121 = pneg %p44
      %p122 = pneg %p75
      %p123 = pneg %p72
      %p124 = scmp.lt.s32.totalorder %s16, 1
      %s125 = scalar_select %p124, %s16, 1
      %p126 = scmp.lt.s32.totalorder %s17, 0
      %s127 = scalar_select %p126, %s17, 0
      %s128 = smul.addr %s125, 2
      %s129 = sadd.s32 %s127, %s128
      %s130 = smul.addr %s129, 4
      %s131 = scalar_lea.vmem %s1, %s130
      %p132 = scmp.lt.s32.totalorder %s16, 1
      %s133 = scalar_select %p132, %s16, 1
      %p134 = scmp.lt.s32.totalorder %s17, 0
      %s135 = scalar_select %p134, %s17, 0
      %s136 = smul.addr %s133, 2
      %s137 = sadd.s32 %s135, %s136
      %s138 = smul.addr %s137, 4
      %s139 = scalar_lea.vmem %s0, %s138
      %p140 = scmp.lt.s32.totalorder %s16, 1
      %s141 = scalar_select %p140, %s16, 1
      %p142 = scmp.lt.s32.totalorder %s17, 0
      %s143 = scalar_select %p142, %s17, 0
      %s144 = smul.addr %s141, 2
      %s145 = sadd.s32 %s143, %s144
      %s146 = smul.addr %s145, 4
      %s147 = scalar_lea.vmem %s1, %s146
      %v148 = vld [vmem:[%s139] sm:$0xf]
      %v149 = vld [vmem:[%s139 + $0x4] sm:$0xf]
      %v150 = vunpack.c.l.bf16 %v148
      %v151 = vunpack.c.l.bf16 %v149
      %v152 = vadd.f32 %v150, %v151
      %v153 = vrot.slane %v152, 4
      %v154 = vadd.f32 %v152, %v153
      %v155 = vrot.slane %v154, 2
      %v156 = vadd.f32 %v154, %v155
      %v157 = vrot.slane %v156, 1
      %v158 = vadd.f32 %v156, %v157
      %v159 = vrcp.pop 16.0
      %v160 = vmul.f32 %v158, %v159
      %v161 = vsub.f32 %v150, %v160
      %v162 = vsub.f32 %v151, %v160
      %v163 = vmul.f32 %v161, %v161
      %v164 = vmul.f32 %v162, %v162
      %v165 = vadd.f32 %v163, %v164
      %v166 = vrot.slane %v165, 4
      %v167 = vadd.f32 %v165, %v166
      %v168 = vrot.slane %v167, 2
      %v169 = vadd.f32 %v167, %v168
      %v170 = vrot.slane %v169, 1
      %v171 = vadd.f32 %v169, %v170
      %v172 = vmul.f32 %v171, %v159
      %v173 = vadd.f32 %v172, 1e-05
      %v174 = vrsqrt.pop %v173
      %v175 = vmul.f32 %v161, %v174
      %v176 = vmul.f32 %v162, %v174
      %v177 = vmax.f32 %v175, 0.0
      %v178 = vmax.f32 %v176, 0.0
      %v179 = vpack.c.bf16 %v178, %v177
      %v181 = vunpack.c.l.b16 %v179
      %v182 = vunpack.c.h.b16 %v179
      %v183 = vpack.c.b16 %v181, %v181
      %v184 = vpack.c.b16 %v182, %v182
      %187 = vst [vmem:[%s147] sm:$0xf] %v183
      %188 = vst [vmem:[%s147 + $0x4] sm:$0xf] %v184
      %p189 = scmp.lt.s32.totalorder %s16, 1
      %s190 = scalar_select %p189, %s16, 1
      %p191 = scmp.lt.s32.totalorder %s17, 0
      %s192 = scalar_select %p191, %s17, 0
      %s193 = smul.addr %s190, 2
      %s194 = sadd.s32 %s192, %s193
      %s195 = smul.addr %s194, 4
      %s196 = scalar_lea.vmem %s1, %s195
      // Predicated region
      $region25: #{deeplab_forward.36} parent=23 // pred_check
        %p197 = pneg %p72
      $region26: #{deeplab_forward.36} parent=23 // pred_check_branch
        %199 = sbr.rel (%p197) target = $region28
      $region27: #{deeplab_forward.36} parent=23 // pred_region
        _
      $region28: #{deeplab_forward.36} parent=23 // pred_fallthru
        _
    $region24: #{deeplab_forward.36} parent=5 // pred_fallthru
      _
    %p200 = scmp.le.s32.totalorder 2, %s7
    // Predicated region
    $region29: #{deeplab_forward.36} parent=5 // pred_check
      %p201 = pneg %p200
    $region30: #{deeplab_forward.36} parent=5 // pred_check_branch
      %203 = sbr.rel (%p201) target = $region32
    $region31: #{deeplab_forward.36} parent=5 // pred_region
      %s204 = ssub.s32 %s7, 2
      // Predicated region
      $region33: #{deeplab_forward.36} parent=31 // pred_check
        %p205 = pneg %p78
      $region34: #{deeplab_forward.36} parent=31 // pred_check_branch
        %207 = sbr.rel (%p205) target = $region36
      $region35: #{deeplab_forward.36} parent=31 // pred_region
        %p208 = scmp.lt.s32.totalorder %s18, 1
        %s209 = scalar_select %p208, %s18, 1
        %p210 = scmp.lt.s32.totalorder %s19, 0
        %s211 = scalar_select %p210, %s19, 0
        %s212 = smul.addr %s209, 2
        %s213 = sadd.s32 %s211, %s212
        %s214 = smul.addr %s213, 4
        %s215 = scalar_lea.vmem %s1, %s214
      $region36: #{deeplab_forward.36} parent=31 // pred_fallthru
        _
    $region32: #{deeplab_forward.36} parent=5 // pred_fallthru
      _
  $region6: #{deeplab_forward.36} parent=0 // loop_footer
    %s11 = sadd.s32 1, %s7
  $region7: #{deeplab_forward.36} parent=0 // loop_footer_branch
    %6 = sbr.rel target = $region3
  $region8: #{deeplab_forward.36} parent=0 // loop_exit
    _

// kernel: deeplab_forward.35
$region0: #{deeplab_forward.35}
  #allocation0 [shape = 'u32[]', space=smem, size = 0x4, offset = 0x4, fixed_abs, tag = 'smem constant byte address 0x4 - core index']
  #allocation1 [shape = 'u32[144,128]{1,0:T(1,128)}', space=vmem, size = 0x12000, scoped, tag = 'internal scratch']
  #allocation2 [shape = 'f32[32,128]{1,0:T(8,128)}', space=vmem, size = 0x4000, scoped, tag = 'scratch operand']
  %s0 = inlined_call_operand.vmem [shape: bf16[32,256], index: 0, kind: input, shape index: {}]
  %s1 = inlined_call_operand.vmem [shape: bf16[256,128], index: 1, kind: input, shape index: {}]
  %s2 = inlined_call_operand.vmem [shape: f32[1,128], index: 2, kind: input, shape index: {}]
  %s3 = inlined_call_operand.vmem [shape: bf16[32,128], index: 3, kind: output, shape index: {}]
  %s4 = sld [smem:[#allocation0]]
  $region30: #{deeplab_forward.35} parent=0
    _
  %s6 = ssub.s32 1, %s4
  %s7 = scalar_select 0, %s6, %s4
  // Predicated region
  $region2: #{deeplab_forward.35} parent=0 // pred_check
    _
  $region3: #{deeplab_forward.35} parent=0 // pred_check_branch
    %9 = sbr.rel (0) target = $region5
  $region4: #{deeplab_forward.35} parent=0 // pred_region
    _
  $region5: #{deeplab_forward.35} parent=0 // pred_fallthru
    _
  // Predicated region
  $region6: #{deeplab_forward.35} parent=0 // pred_check
    _
  $region7: #{deeplab_forward.35} parent=0 // pred_check_branch
    %11 = sbr.rel (0) target = $region9
  $region8: #{deeplab_forward.35} parent=0 // pred_region
    _
  $region9: #{deeplab_forward.35} parent=0 // pred_fallthru
    _
  // Predicated region
  $region10: #{deeplab_forward.35} parent=0 // pred_check
    _
  $region11: #{deeplab_forward.35} parent=0 // pred_check_branch
    %13 = sbr.rel (0) target = $region13
  $region12: #{deeplab_forward.35} parent=0 // pred_region
    _
  $region13: #{deeplab_forward.35} parent=0 // pred_fallthru
    _
  %p15 = scmp.eq.s32.totalorder 0, 0
  // Predicated region
  $region14: #{deeplab_forward.35} parent=0 // pred_check
    %p16 = pneg %p15
  $region15: #{deeplab_forward.35} parent=0 // pred_check_branch
    %18 = sbr.rel (%p16) target = $region17
  $region16: #{deeplab_forward.35} parent=0 // pred_region
    %19 = vst [vmem:[#allocation2] sm:$0xff] 0.0
    %20 = vst [vmem:[#allocation2 + $0x8] sm:$0xff] 0.0
    %21 = vst [vmem:[#allocation2 + $0x10] sm:$0xff] 0.0
    %22 = vst [vmem:[#allocation2 + $0x18] sm:$0xff] 0.0
  $region17: #{deeplab_forward.35} parent=0 // pred_fallthru
    _
  %v23 = vld [vmem:[#allocation2] sm:$0xff]
  %v24 = vld [vmem:[#allocation2 + $0x8] sm:$0xff]
  %v25 = vld [vmem:[#allocation2 + $0x10] sm:$0xff]
  %v26 = vld [vmem:[#allocation2 + $0x18] sm:$0xff]
  %v27 = vld [vmem:[%s0] sm:$0xff]
  %v28 = vld [vmem:[%s0 + $0x8] sm:$0xff]
  %v29 = vld [vmem:[%s0 + $0x10] sm:$0xff]
  %v30 = vld [vmem:[%s0 + $0x18] sm:$0xff]
  %v31 = vld [vmem:[%s1] sm:$0xf]
  %v32 = vld [vmem:[%s1 + $0x4] sm:$0xf]
  %v33 = vld [vmem:[%s1 + $0x8] sm:$0xf]
  %v34 = vld [vmem:[%s1 + $0xc] sm:$0xf]
  %v35 = vld [vmem:[%s1 + $0x10] sm:$0xf]
  %v36 = vld [vmem:[%s1 + $0x14] sm:$0xf]
  %v37 = vld [vmem:[%s1 + $0x18] sm:$0xf]
  %v38 = vld [vmem:[%s1 + $0x1c] sm:$0xf]
  %v39 = vld [vmem:[%s1 + $0x20] sm:$0xf]
  %v40 = vld [vmem:[%s1 + $0x24] sm:$0xf]
  %v41 = vld [vmem:[%s1 + $0x28] sm:$0xf]
  %v42 = vld [vmem:[%s1 + $0x2c] sm:$0xf]
  %v43 = vld [vmem:[%s1 + $0x30] sm:$0xf]
  %v44 = vld [vmem:[%s1 + $0x34] sm:$0xf]
  %v45 = vld [vmem:[%s1 + $0x38] sm:$0xf]
  %v46 = vld [vmem:[%s1 + $0x3c] sm:$0xf]
  %v47 = vld [vmem:[%s1 + $0x40] sm:$0xf]
  %v48 = vld [vmem:[%s1 + $0x44] sm:$0xf]
  %v49 = vld [vmem:[%s1 + $0x48] sm:$0xf]
  %v50 = vld [vmem:[%s1 + $0x4c] sm:$0xf]
  %v51 = vld [vmem:[%s1 + $0x50] sm:$0xf]
  %v52 = vld [vmem:[%s1 + $0x54] sm:$0xf]
  %v53 = vld [vmem:[%s1 + $0x58] sm:$0xf]
  %v54 = vld [vmem:[%s1 + $0x5c] sm:$0xf]
  %v55 = vld [vmem:[%s1 + $0x60] sm:$0xf]
  %v56 = vld [vmem:[%s1 + $0x64] sm:$0xf]
  %v57 = vld [vmem:[%s1 + $0x68] sm:$0xf]
  %v58 = vld [vmem:[%s1 + $0x6c] sm:$0xf]
  %v59 = vld [vmem:[%s1 + $0x70] sm:$0xf]
  %v60 = vld [vmem:[%s1 + $0x74] sm:$0xf]
  %v61 = vld [vmem:[%s1 + $0x78] sm:$0xf]
  %v62 = vld [vmem:[%s1 + $0x7c] sm:$0xf]
  %v67 = vunpack.c.l.b16 %v27
  %v68 = vunpack.c.h.b16 %v27
  %v69 = vunpack.c.l.b16 %v28
  %v70 = vunpack.c.h.b16 %v28
  %v71 = vunpack.c.l.b16 %v29
  %v72 = vunpack.c.h.b16 %v29
  %v73 = vunpack.c.l.b16 %v30
  %v74 = vunpack.c.h.b16 %v30
  %v75 = vpack.c.b16 %v69, %v67
  %v76 = vpack.c.b16 %v70, %v68
  %v77 = vpack.c.b16 %v73, %v71
  %v78 = vpack.c.b16 %v74, %v72
  %v115 = vunpack.c.l.b16 %v31
  %v116 = vunpack.c.l.b16 %v32
  %v117 = vunpack.c.l.b16 %v33
  %v118 = vunpack.c.l.b16 %v34
  %v119 = vunpack.c.l.b16 %v35
  %v120 = vunpack.c.l.b16 %v36
  %v121 = vunpack.c.l.b16 %v37
  %v122 = vunpack.c.l.b16 %v38
  %v123 = vunpack.c.l.b16 %v39
  %v124 = vunpack.c.l.b16 %v40
  %v125 = vunpack.c.l.b16 %v41
  %v126 = vunpack.c.l.b16 %v42
  %v127 = vunpack.c.l.b16 %v43
  %v128 = vunpack.c.l.b16 %v44
  %v129 = vunpack.c.l.b16 %v45
  %v130 = vunpack.c.l.b16 %v46
  %v131 = vunpack.c.l.b16 %v47
  %v132 = vunpack.c.l.b16 %v48
  %v133 = vunpack.c.l.b16 %v49
  %v134 = vunpack.c.l.b16 %v50
  %v135 = vunpack.c.l.b16 %v51
  %v136 = vunpack.c.l.b16 %v52
  %v137 = vunpack.c.l.b16 %v53
  %v138 = vunpack.c.l.b16 %v54
  %v139 = vunpack.c.l.b16 %v55
  %v140 = vunpack.c.l.b16 %v56
  %v141 = vunpack.c.l.b16 %v57
  %v142 = vunpack.c.l.b16 %v58
  %v143 = vunpack.c.l.b16 %v59
  %v144 = vunpack.c.l.b16 %v60
  %v145 = vunpack.c.l.b16 %v61
  %v146 = vunpack.c.l.b16 %v62
  %v147 = vpack.c.b16 %v116, %v115
  %v148 = vpack.c.b16 %v118, %v117
  %v149 = vpack.c.b16 %v120, %v119
  %v150 = vpack.c.b16 %v122, %v121
  %v151 = vpack.c.b16 %v124, %v123
  %v152 = vpack.c.b16 %v126, %v125
  %v153 = vpack.c.b16 %v128, %v127
  %v154 = vpack.c.b16 %v130, %v129
  %v155 = vpack.c.b16 %v132, %v131
  %v156 = vpack.c.b16 %v134, %v133
  %v157 = vpack.c.b16 %v136, %v135
  %v158 = vpack.c.b16 %v138, %v137
  %v159 = vpack.c.b16 %v140, %v139
  %v160 = vpack.c.b16 %v142, %v141
  %v161 = vpack.c.b16 %v144, %v143
  %v162 = vpack.c.b16 %v146, %v145
  %179 = vmatprep.subr.bf16.mxu0 0
  %180 = vmatpush1.bf16.msra.mxu0 %v147
  %181 = vmatprep.subr.bf16.mxu0 0
  %182 = vmatpush1.bf16.msra.mxu0 %v148
  %183 = vmatprep.subr.bf16.mxu0 0
  %184 = vmatpush1.bf16.msra.mxu0 %v149
  %185 = vmatprep.subr.bf16.mxu0 0
  %186 = vmatpush1.bf16.msra.mxu0 %v150
  %187 = vmatprep.subr.bf16.mxu0 0
  %188 = vmatpush1.bf16.msra.mxu0 %v151
  %189 = vmatprep.subr.bf16.mxu0 0
  %190 = vmatpush1.bf16.msra.mxu0 %v152
  %191 = vmatprep.subr.bf16.mxu0 0
  %192 = vmatpush1.bf16.msra.mxu0 %v153
  %193 = vmatprep.subr.bf16.mxu0 0
  %194 = vmatpush1.bf16.msra.mxu0 %v154
  %195 = vmatprep.subr.bf16.mxu0 0
  %196 = vmatpush1.bf16.msra.mxu0 %v155
  %197 = vmatprep.subr.bf16.mxu0 0
  %198 = vmatpush1.bf16.msra.mxu0 %v156
  %199 = vmatprep.subr.bf16.mxu0 0
  %200 = vmatpush1.bf16.msra.mxu0 %v157
  %201 = vmatprep.subr.bf16.mxu0 0
  %202 = vmatpush1.bf16.msra.mxu0 %v158
  %203 = vmatprep.subr.bf16.mxu0 0
  %204 = vmatpush1.bf16.msra.mxu0 %v159
  %205 = vmatprep.subr.bf16.mxu0 0
  %206 = vmatpush1.bf16.msra.mxu0 %v160
  %207 = vmatprep.subr.bf16.mxu0 0
  %208 = vmatpush1.bf16.msra.mxu0 %v161
  %209 = vmatprep.subr.bf16.mxu0 0
  %210 = vmatpush1.bf16.msra.mxu0 %v162
  %211 = vmatprep.mubr.bf16.mxu0 %v76
  %212 = vmatmul.mubr.bf16.gmra.mrb[0].mxu0 %v75
  %v213 = vpop.f32.mrb[0].mxu0
  %v214 = vadd.f32 0.0, %v213
  %v215 = vpop.f32.mrb[0].mxu0
  %v216 = vpop.f32.mrb[0].mxu0
  %v217 = vadd.f32 0.0, %v216
  %v218 = vpop.f32.mrb[0].mxu0
  %219 = vmatprep.mubr.bf16.mxu0 %v78
  %220 = vmatmul.mubr.bf16.gmra.mrb[0].mxu0 %v77
  %v221 = vpop.f32.mrb[0].mxu0
  %v222 = vadd.f32 0.0, %v221
  %v223 = vpop.f32.mrb[0].mxu0
  %v224 = vpop.f32.mrb[0].mxu0
  %v225 = vadd.f32 0.0, %v224
  %v226 = vpop.f32.mrb[0].mxu0
  %227 = vdwg.mxu0
  %v228 = vadd.f32 %v23, %v214
  %v229 = vadd.f32 %v24, %v217
  %v230 = vadd.f32 %v25, %v222
  %v231 = vadd.f32 %v26, %v225
  %232 = vst [vmem:[#allocation2] sm:$0xff] %v228
  %233 = vst [vmem:[#allocation2 + $0x8] sm:$0xff] %v229
  %234 = vst [vmem:[#allocation2 + $0x10] sm:$0xff] %v230
  %235 = vst [vmem:[#allocation2 + $0x18] sm:$0xff] %v231
  // Predicated region
  $region18: #{deeplab_forward.35} parent=0 // pred_check
    %p236 = pneg %p15
  $region19: #{deeplab_forward.35} parent=0 // pred_check_branch
    %238 = sbr.rel (%p236) target = $region21
  $region20: #{deeplab_forward.35} parent=0 // pred_region
    %v239 = vld [vmem:[#allocation2] sm:$0xff]
    %v240 = vld [vmem:[#allocation2 + $0x8] sm:$0xff]
    %v241 = vld [vmem:[#allocation2 + $0x10] sm:$0xff]
    %v242 = vld [vmem:[#allocation2 + $0x18] sm:$0xff]
    %v243 = vld [vmem:[%s2] sm:$0x1]
    %v245 = vlaneseq
    %v246 = vshrl.u32 %v245, 7
    %v247 = vsub.s32 0, %v246
    %v248 = vrot.slane %v243, %v247
    %v250 = vadd.f32 %v239, %v248
    %v251 = vadd.f32 %v240, %v248
    %v252 = vadd.f32 %v241, %v248
    %v253 = vadd.f32 %v242, %v248
    %v254 = vpack.c.bf16 %v251, %v250
    %v255 = vpack.c.bf16 %v253, %v252
    %v258 = vunpack.c.l.b16 %v254
    %v259 = vunpack.c.h.b16 %v254
    %v260 = vunpack.c.l.b16 %v255
    %v261 = vunpack.c.h.b16 %v255
    %v262 = vpack.c.b16 %v258, %v258
    %v263 = vpack.c.b16 %v259, %v259
    %v264 = vpack.c.b16 %v260, %v260
    %v265 = vpack.c.b16 %v261, %v261
    %270 = vst [vmem:[%s3] sm:$0xf] %v262
    %271 = vst [vmem:[%s3 + $0x4] sm:$0xf] %v263
    %272 = vst [vmem:[%s3 + $0x8] sm:$0xf] %v264
    %273 = vst [vmem:[%s3 + $0xc] sm:$0xf] %v265
  $region21: #{deeplab_forward.35} parent=0 // pred_fallthru
    _
  // Predicated region
  $region22: #{deeplab_forward.35} parent=0 // pred_check
    _
  $region23: #{deeplab_forward.35} parent=0 // pred_check_branch
    %275 = sbr.rel (0) target = $region25
  $region24: #{deeplab_forward.35} parent=0 // pred_region
    _
  $region25: #{deeplab_forward.35} parent=0 // pred_fallthru
    _
  // Predicated region
  $region26: #{deeplab_forward.35} parent=0 // pred_check
    _
  $region27: #{deeplab_forward.35} parent=0 // pred_check_branch
    %277 = sbr.rel (0) target = $region29
  $region28: #{deeplab_forward.35} parent=0 // pred_region
    _
  $region29: #{deeplab_forward.35} parent=0 // pred_fallthru
    _

// kernel: deeplab_forward.38
$region0: #{deeplab_forward.38}
  #allocation0 [shape = 'u32[]', space=smem, size = 0x4, offset = 0x4, fixed_abs, tag = 'smem constant byte address 0x4 - core index']
  #allocation1 [shape = 'u32[144,128]{1,0:T(1,128)}', space=vmem, size = 0x12000, scoped, tag = 'internal scratch']
  %s0 = inlined_call_operand.vmem [shape: bf16[2,4,128], index: 0, kind: input, shape index: {}]
  %s1 = inlined_call_operand.vmem [shape: bf16[2,4,128], index: 1, kind: output, shape index: {}]
  %s2 = sld [smem:[#allocation0]]
  $region37: #{deeplab_forward.38} parent=0
    _
  %s4 = ssub.s32 1, %s2
  %s5 = scalar_select 0, %s4, %s2
  loop: start=0, step=1, limit=4
  $region2: #{deeplab_forward.38} parent=0 // loop_pre_header
    _
  $region3: #{deeplab_forward.38} parent=0 // loop_header
    %s7 = sphi 0, %s11
    %p8 = scmp.ge.s32.totalorder %s7, 4
    %s14 = sphi 0, %s26
    %s15 = sphi 0, %s22
    %s16 = sphi 0, %s14
    %s17 = sphi 0, %s15
    %s18 = sphi 0, %s16
    %s19 = sphi 0, %s17
    %s31 = sphi 0, %s33
    %s34 = sphi 0, %s31
    %s35 = sphi 0, %s34
    %s51 = sphi 0, %s35
    %s59 = sphi 0, %s61
    %s62 = sphi 0, %s59
    %s63 = sphi 0, %s62
    %s79 = sphi 0, %s63
  $region4: #{deeplab_forward.38} parent=0 // loop_header_branch
    %10 = sbr.rel (%p8) target = $region8
  $region5: #{deeplab_forward.38} parent=0 // loop_body
    %s12 = ssub.s32 %s7, 1
    %s13 = ssub.s32 %s7, 2
    %s20 = sadd.s32 1, %s15
    %p21 = scmp.ge.s32.totalorder %s20, 1
    %s22 = scalar_select %p21, 0, %s20
    %s23 = sadd.s32 1, %s14
    %s24 = scalar_select %p21, %s23, %s14
    %p25 = scmp.ge.s32.totalorder %s24, 2
    %s26 = scalar_select %p25, 0, %s24
    %s27 = ssub.s32 %s14, %s26
    %s28 = ssub.s32 %s15, %s22
    %s29 = sor.u32 %s27, %s28
    %p30 = scmp.eq.s32.totalorder %s29, 0
    %s32 = sadd.s32 %s31, 1
    %s33 = scalar_select %p30, %s31, %s32
    %p36 = pneg %p30
    %p37 = scmp.eq.s32.totalorder %s7, 1
    %p38 = por %p36, %p37
    %p39 = scmp.ne.s32.totalorder %s31, %s34
    %p40 = scmp.eq.s32.totalorder %s7, 0
    %p41 = por %p39, %p40
    %p42 = scmp.ne.s32.totalorder %s31, %s34
    %p43 = scmp.eq.s32.totalorder %s12, 1
    %p44 = por %p42, %p43
    %p45 = scmp.ne.s32.totalorder %s34, %s35
    %p46 = scmp.eq.s32.totalorder %s12, 0
    %p47 = por %p45, %p46
    %p48 = scmp.ne.s32.totalorder %s34, %s35
    %p49 = scmp.eq.s32.totalorder %s13, 1
    %p50 = por %p48, %p49
    %p52 = scmp.ne.s32.totalorder %s35, %s51
    %p53 = scmp.eq.s32.totalorder %s13, 0
    %p54 = por %p52, %p53
    %s55 = ssub.s32 %s14, %s26
    %s56 = ssub.s32 %s15, %s22
    %s57 = sor.u32 %s55, %s56
    %p58 = scmp.eq.s32.totalorder %s57, 0
    %s60 = sadd.s32 %s59, 1
    %s61 = scalar_select %p58, %s59, %s60
    %p64 = pneg %p58
    %p65 = scmp.eq.s32.totalorder %s7, 1
    %p66 = por %p64, %p65
    %p67 = scmp.ne.s32.totalorder %s59, %s62
    %p68 = scmp.eq.s32.totalorder %s7, 0
    %p69 = por %p67, %p68
    %p70 = scmp.ne.s32.totalorder %s59, %s62
    %p71 = scmp.eq.s32.totalorder %s12, 1
    %p72 = por %p70, %p71
    %p73 = scmp.ne.s32.totalorder %s62, %s63
    %p74 = scmp.eq.s32.totalorder %s12, 0
    %p75 = por %p73, %p74
    %p76 = scmp.ne.s32.totalorder %s62, %s63
    %p77 = scmp.eq.s32.totalorder %s13, 1
    %p78 = por %p76, %p77
    %p80 = scmp.ne.s32.totalorder %s63, %s79
    %p81 = scmp.eq.s32.totalorder %s13, 0
    %p82 = por %p80, %p81
    %p83 = scmp.le.s32.totalorder 1, %s7
    %p84 = scmp.lt.s32.totalorder %s7, 3
    %p85 = pnand %p83, %p84
    %p86 = pneg %p85
    // Predicated region
    $region9: #{deeplab_forward.38} parent=5 // pred_check
      _
    $region10: #{deeplab_forward.38} parent=5 // pred_check_branch
      %88 = sbr.rel (%p85) target = $region12
    $region11: #{deeplab_forward.38} parent=5 // pred_region
      %s89 = ssub.s32 %s7, 1
    $region12: #{deeplab_forward.38} parent=5 // pred_fallthru
      _
    %p90 = scmp.lt.s32.totalorder %s7, 2
    // Predicated region
    $region13: #{deeplab_forward.38} parent=5 // pred_check
      %p91 = pneg %p90
    $region14: #{deeplab_forward.38} parent=5 // pred_check_branch
      %93 = sbr.rel (%p91) target = $region16
    $region15: #{deeplab_forward.38} parent=5 // pred_region
      // Predicated region
      $region17: #{deeplab_forward.38} parent=15 // pred_check
        %p94 = pneg %p41
      $region18: #{deeplab_forward.38} parent=15 // pred_check_branch
        %96 = sbr.rel (%p94) target = $region20
      $region19: #{deeplab_forward.38} parent=15 // pred_region
        %p97 = scmp.lt.s32.totalorder %s14, 1
        %s98 = scalar_select %p97, %s14, 1
        %p99 = scmp.lt.s32.totalorder %s15, 0
        %s100 = scalar_select %p99, %s15, 0
        %s101 = sadd.s32 %s100, %s98
        %s102 = smul.addr %s101, 2
        %s103 = scalar_lea.vmem %s0, %s102
      $region20: #{deeplab_forward.38} parent=15 // pred_fallthru
        _
    $region16: #{deeplab_forward.38} parent=5 // pred_fallthru
      _
    %p104 = scmp.le.s32.totalorder 1, %s7
    %p105 = scmp.lt.s32.totalorder %s7, 3
    %p106 = pnand %p104, %p105
    %p107 = pneg %p106
    // Predicated region
    $region21: #{deeplab_forward.38} parent=5 // pred_check
      _
    $region22: #{deeplab_forward.38} parent=5 // pred_check_branch
      %109 = sbr.rel (%p106) target = $region24
    $region23: #{deeplab_forward.38} parent=5 // pred_region
      %s110 = ssub.s32 %s7, 1
      %p111 = scmp.lt.s32.totalorder %s16, 1
      %s112 = scalar_select %p111, %s16, 1
      %p113 = scmp.lt.s32.totalorder %s17, 0
      %s114 = scalar_select %p113, %s17, 0
      %s115 = sadd.s32 %s114, %s112
      %s116 = smul.addr %s115, 2
      %s117 = scalar_lea.vmem %s0, %s116
      %p118 = pneg %p47
      %p119 = pneg %p44
      %p120 = pneg %p75
      %p121 = pneg %p72
      %p122 = scmp.lt.s32.totalorder %s16, 1
      %s123 = scalar_select %p122, %s16, 1
      %p124 = scmp.lt.s32.totalorder %s17, 0
      %s125 = scalar_select %p124, %s17, 0
      %s126 = sadd.s32 %s125, %s123
      %s127 = smul.addr %s126, 2
      %s128 = scalar_lea.vmem %s1, %s127
      %p129 = scmp.lt.s32.totalorder %s16, 1
      %s130 = scalar_select %p129, %s16, 1
      %p131 = scmp.lt.s32.totalorder %s17, 0
      %s132 = scalar_select %p131, %s17, 0
      %s133 = sadd.s32 %s132, %s130
      %s134 = smul.addr %s133, 2
      %s135 = scalar_lea.vmem %s0, %s134
      %p136 = scmp.lt.s32.totalorder %s16, 1
      %s137 = scalar_select %p136, %s16, 1
      %p138 = scmp.lt.s32.totalorder %s17, 0
      %s139 = scalar_select %p138, %s17, 0
      %s140 = sadd.s32 %s139, %s137
      %s141 = smul.addr %s140, 2
      %s142 = scalar_lea.vmem %s1, %s141
      %v143 = vld [vmem:[%s135] sm:$0x3]
      %v144 = vunpack.c.l.bf16 %v143
      %vm145 = vcmask 1043456
      %v146 = vsel %vm145, %v144, 0.0
      %v147 = vrot.slane %v146, 4
      %v148 = vadd.f32 %v146, %v147
      %v149 = vrot.slane %v148, 2
      %v150 = vadd.f32 %v148, %v149
      %v151 = vrot.slane %v150, 1
      %v152 = vadd.f32 %v150, %v151
      %v153 = vrcp.pop 4.0
      %v154 = vmul.f32 %v152, %v153
      %v155 = vsub.f32 %v144, %v154
      %v156 = vmul.f32 %v155, %v155
      %v157 = vsel %vm145, %v156, 0.0
      %v158 = vrot.slane %v157, 4
      %v159 = vadd.f32 %v157, %v158
      %v160 = vrot.slane %v159, 2
      %v161 = vadd.f32 %v159, %v160
      %v162 = vrot.slane %v161, 1
      %v163 = vadd.f32 %v161, %v162
      %v164 = vmul.f32 %v163, %v153
      %v165 = vadd.f32 %v164, 1e-05
      %v166 = vrsqrt.pop %v165
      %v167 = vmul.f32 %v155, %v166
      %v168 = vmax.f32 %v167, 0.0
      %v169 = vpack.c.bf16 %v168, %v168
      %170 = vst [vmem:[%s142] sm:$0x3] %v169
      %p171 = scmp.lt.s32.totalorder %s16, 1
      %s172 = scalar_select %p171, %s16, 1
      %p173 = scmp.lt.s32.totalorder %s17, 0
      %s174 = scalar_select %p173, %s17, 0
      %s175 = sadd.s32 %s174, %s172
      %s176 = smul.addr %s175, 2
      %s177 = scalar_lea.vmem %s1, %s176
      // Predicated region
      $region25: #{deeplab_forward.38} parent=23 // pred_check
        %p178 = pneg %p72
      $region26: #{deeplab_forward.38} parent=23 // pred_check_branch
        %180 = sbr.rel (%p178) target = $region28
      $region27: #{deeplab_forward.38} parent=23 // pred_region
        _
      $region28: #{deeplab_forward.38} parent=23 // pred_fallthru
        _
    $region24: #{deeplab_forward.38} parent=5 // pred_fallthru
      _
    %p181 = scmp.le.s32.totalorder 2, %s7
    // Predicated region
    $region29: #{deeplab_forward.38} parent=5 // pred_check
      %p182 = pneg %p181
    $region30: #{deeplab_forward.38} parent=5 // pred_check_branch
      %184 = sbr.rel (%p182) target = $region32
    $region31: #{deeplab_forward.38} parent=5 // pred_region
      %s185 = ssub.s32 %s7, 2
      // Predicated region
      $region33: #{deeplab_forward.38} parent=31 // pred_check
        %p186 = pneg %p78
      $region34: #{deeplab_forward.38} parent=31 // pred_check_branch
        %188 = sbr.rel (%p186) target = $region36
      $region35: #{deeplab_forward.38} parent=31 // pred_region
        %p189 = scmp.lt.s32.totalorder %s18, 1
        %s190 = scalar_select %p189, %s18, 1
        %p191 = scmp.lt.s32.totalorder %s19, 0
        %s192 = scalar_select %p191, %s19, 0
        %s193 = sadd.s32 %s192, %s190
        %s194 = smul.addr %s193, 2
        %s195 = scalar_lea.vmem %s1, %s194
      $region36: #{deeplab_forward.38} parent=31 // pred_fallthru
        _
    $region32: #{deeplab_forward.38} parent=5 // pred_fallthru
      _
  $region6: #{deeplab_forward.38} parent=0 // loop_footer
    %s11 = sadd.s32 1, %s7
  $region7: #{deeplab_forward.38} parent=0 // loop_footer_branch
    %6 = sbr.rel target = $region3
  $region8: #{deeplab_forward.38} parent=0 // loop_exit
    _

// kernel: deeplab_forward.37
$region0: #{deeplab_forward.37}
  #allocation0 [shape = 'u32[]', space=smem, size = 0x4, offset = 0x4, fixed_abs, tag = 'smem constant byte address 0x4 - core index']
  #allocation1 [shape = 'u32[144,128]{1,0:T(1,128)}', space=vmem, size = 0x12000, scoped, tag = 'internal scratch']
  #allocation2 [shape = 'f32[16,128]{1,0:T(8,128)}', space=vmem, size = 0x2000, scoped, tag = 'scratch operand']
  %s0 = inlined_call_operand.vmem [shape: bf16[16,384], index: 0, kind: input, shape index: {}]
  %s1 = inlined_call_operand.vmem [shape: bf16[384,128], index: 1, kind: input, shape index: {}]
  %s2 = inlined_call_operand.vmem [shape: f32[1,128], index: 2, kind: input, shape index: {}]
  %s3 = inlined_call_operand.vmem [shape: bf16[16,128], index: 3, kind: output, shape index: {}]
  %s4 = sld [smem:[#allocation0]]
  $region30: #{deeplab_forward.37} parent=0
    _
  %s6 = ssub.s32 1, %s4
  %s7 = scalar_select 0, %s6, %s4
  // Predicated region
  $region2: #{deeplab_forward.37} parent=0 // pred_check
    _
  $region3: #{deeplab_forward.37} parent=0 // pred_check_branch
    %9 = sbr.rel (0) target = $region5
  $region4: #{deeplab_forward.37} parent=0 // pred_region
    _
  $region5: #{deeplab_forward.37} parent=0 // pred_fallthru
    _
  // Predicated region
  $region6: #{deeplab_forward.37} parent=0 // pred_check
    _
  $region7: #{deeplab_forward.37} parent=0 // pred_check_branch
    %11 = sbr.rel (0) target = $region9
  $region8: #{deeplab_forward.37} parent=0 // pred_region
    _
  $region9: #{deeplab_forward.37} parent=0 // pred_fallthru
    _
  // Predicated region
  $region10: #{deeplab_forward.37} parent=0 // pred_check
    _
  $region11: #{deeplab_forward.37} parent=0 // pred_check_branch
    %13 = sbr.rel (0) target = $region13
  $region12: #{deeplab_forward.37} parent=0 // pred_region
    _
  $region13: #{deeplab_forward.37} parent=0 // pred_fallthru
    _
  %p15 = scmp.eq.s32.totalorder 0, 0
  // Predicated region
  $region14: #{deeplab_forward.37} parent=0 // pred_check
    %p16 = pneg %p15
  $region15: #{deeplab_forward.37} parent=0 // pred_check_branch
    %18 = sbr.rel (%p16) target = $region17
  $region16: #{deeplab_forward.37} parent=0 // pred_region
    %19 = vst [vmem:[#allocation2] sm:$0xff] 0.0
    %20 = vst [vmem:[#allocation2 + $0x8] sm:$0xff] 0.0
  $region17: #{deeplab_forward.37} parent=0 // pred_fallthru
    _
  %v21 = vld [vmem:[#allocation2] sm:$0xff]
  %v22 = vld [vmem:[#allocation2 + $0x8] sm:$0xff]
  %v23 = vld [vmem:[%s0] sm:$0xff]
  %v24 = vld [vmem:[%s0 + $0x8] sm:$0xf]
  %v25 = vld [vmem:[%s0 + $0xc] sm:$0xff]
  %v26 = vld [vmem:[%s0 + $0x14] sm:$0xf]
  %v27 = vld [vmem:[%s1] sm:$0xf]
  %v28 = vld [vmem:[%s1 + $0x4] sm:$0xf]
  %v29 = vld [vmem:[%s1 + $0x8] sm:$0xf]
  %v30 = vld [vmem:[%s1 + $0xc] sm:$0xf]
  %v31 = vld [vmem:[%s1 + $0x10] sm:$0xf]
  %v32 = vld [vmem:[%s1 + $0x14] sm:$0xf]
  %v33 = vld [vmem:[%s1 + $0x18] sm:$0xf]
  %v34 = vld [vmem:[%s1 + $0x1c] sm:$0xf]
  %v35 = vld [vmem:[%s1 + $0x20] sm:$0xf]
  %v36 = vld [vmem:[%s1 + $0x24] sm:$0xf]
  %v37 = vld [vmem:[%s1 + $0x28] sm:$0xf]
  %v38 = vld [vmem:[%s1 + $0x2c] sm:$0xf]
  %v39 = vld [vmem:[%s1 + $0x30] sm:$0xf]
  %v40 = vld [vmem:[%s1 + $0x34] sm:$0xf]
  %v41 = vld [vmem:[%s1 + $0x38] sm:$0xf]
  %v42 = vld [vmem:[%s1 + $0x3c] sm:$0xf]
  %v43 = vld [vmem:[%s1 + $0x40] sm:$0xf]
  %v44 = vld [vmem:[%s1 + $0x44] sm:$0xf]
  %v45 = vld [vmem:[%s1 + $0x48] sm:$0xf]
  %v46 = vld [vmem:[%s1 + $0x4c] sm:$0xf]
  %v47 = vld [vmem:[%s1 + $0x50] sm:$0xf]
  %v48 = vld [vmem:[%s1 + $0x54] sm:$0xf]
  %v49 = vld [vmem:[%s1 + $0x58] sm:$0xf]
  %v50 = vld [vmem:[%s1 + $0x5c] sm:$0xf]
  %v51 = vld [vmem:[%s1 + $0x60] sm:$0xf]
  %v52 = vld [vmem:[%s1 + $0x64] sm:$0xf]
  %v53 = vld [vmem:[%s1 + $0x68] sm:$0xf]
  %v54 = vld [vmem:[%s1 + $0x6c] sm:$0xf]
  %v55 = vld [vmem:[%s1 + $0x70] sm:$0xf]
  %v56 = vld [vmem:[%s1 + $0x74] sm:$0xf]
  %v57 = vld [vmem:[%s1 + $0x78] sm:$0xf]
  %v58 = vld [vmem:[%s1 + $0x7c] sm:$0xf]
  %v59 = vld [vmem:[%s1 + $0x80] sm:$0xf]
  %v60 = vld [vmem:[%s1 + $0x84] sm:$0xf]
  %v61 = vld [vmem:[%s1 + $0x88] sm:$0xf]
  %v62 = vld [vmem:[%s1 + $0x8c] sm:$0xf]
  %v63 = vld [vmem:[%s1 + $0x90] sm:$0xf]
  %v64 = vld [vmem:[%s1 + $0x94] sm:$0xf]
  %v65 = vld [vmem:[%s1 + $0x98] sm:$0xf]
  %v66 = vld [vmem:[%s1 + $0x9c] sm:$0xf]
  %v67 = vld [vmem:[%s1 + $0xa0] sm:$0xf]
  %v68 = vld [vmem:[%s1 + $0xa4] sm:$0xf]
  %v69 = vld [vmem:[%s1 + $0xa8] sm:$0xf]
  %v70 = vld [vmem:[%s1 + $0xac] sm:$0xf]
  %v71 = vld [vmem:[%s1 + $0xb0] sm:$0xf]
  %v72 = vld [vmem:[%s1 + $0xb4] sm:$0xf]
  %v73 = vld [vmem:[%s1 + $0xb8] sm:$0xf]
  %v74 = vld [vmem:[%s1 + $0xbc] sm:$0xf]
  %v79 = vunpack.c.l.b16 %v23
  %v80 = vunpack.c.h.b16 %v23
  %v81 = vunpack.c.l.b16 %v24
  %v82 = vunpack.c.l.b16 %v25
  %v83 = vunpack.c.h.b16 %v25
  %v84 = vunpack.c.l.b16 %v26
  %v85 = vpack.c.b16 %v82, %v79
  %v86 = vpack.c.b16 %v83, %v80
  %v87 = vpack.c.b16 %v84, %v81
  %v139 = vunpack.c.l.b16 %v27
  %v140 = vunpack.c.l.b16 %v28
  %v141 = vunpack.c.l.b16 %v29
  %v142 = vunpack.c.l.b16 %v30
  %v143 = vunpack.c.l.b16 %v31
  %v144 = vunpack.c.l.b16 %v32
  %v145 = vunpack.c.l.b16 %v33
  %v146 = vunpack.c.l.b16 %v34
  %v147 = vunpack.c.l.b16 %v35
  %v148 = vunpack.c.l.b16 %v36
  %v149 = vunpack.c.l.b16 %v37
  %v150 = vunpack.c.l.b16 %v38
  %v151 = vunpack.c.l.b16 %v39
  %v152 = vunpack.c.l.b16 %v40
  %v153 = vunpack.c.l.b16 %v41
  %v154 = vunpack.c.l.b16 %v42
  %v155 = vunpack.c.l.b16 %v43
  %v156 = vunpack.c.l.b16 %v44
  %v157 = vunpack.c.l.b16 %v45
  %v158 = vunpack.c.l.b16 %v46
  %v159 = vunpack.c.l.b16 %v47
  %v160 = vunpack.c.l.b16 %v48
  %v161 = vunpack.c.l.b16 %v49
  %v162 = vunpack.c.l.b16 %v50
  %v163 = vunpack.c.l.b16 %v51
  %v164 = vunpack.c.l.b16 %v52
  %v165 = vunpack.c.l.b16 %v53
  %v166 = vunpack.c.l.b16 %v54
  %v167 = vunpack.c.l.b16 %v55
  %v168 = vunpack.c.l.b16 %v56
  %v169 = vunpack.c.l.b16 %v57
  %v170 = vunpack.c.l.b16 %v58
  %v171 = vunpack.c.l.b16 %v59
  %v172 = vunpack.c.l.b16 %v60
  %v173 = vunpack.c.l.b16 %v61
  %v174 = vunpack.c.l.b16 %v62
  %v175 = vunpack.c.l.b16 %v63
  %v176 = vunpack.c.l.b16 %v64
  %v177 = vunpack.c.l.b16 %v65
  %v178 = vunpack.c.l.b16 %v66
  %v179 = vunpack.c.l.b16 %v67
  %v180 = vunpack.c.l.b16 %v68
  %v181 = vunpack.c.l.b16 %v69
  %v182 = vunpack.c.l.b16 %v70
  %v183 = vunpack.c.l.b16 %v71
  %v184 = vunpack.c.l.b16 %v72
  %v185 = vunpack.c.l.b16 %v73
  %v186 = vunpack.c.l.b16 %v74
  %v187 = vpack.c.b16 %v140, %v139
  %v188 = vpack.c.b16 %v142, %v141
  %v189 = vpack.c.b16 %v144, %v143
  %v190 = vpack.c.b16 %v146, %v145
  %v191 = vpack.c.b16 %v148, %v147
  %v192 = vpack.c.b16 %v150, %v149
  %v193 = vpack.c.b16 %v152, %v151
  %v194 = vpack.c.b16 %v154, %v153
  %v195 = vpack.c.b16 %v156, %v155
  %v196 = vpack.c.b16 %v158, %v157
  %v197 = vpack.c.b16 %v160, %v159
  %v198 = vpack.c.b16 %v162, %v161
  %v199 = vpack.c.b16 %v164, %v163
  %v200 = vpack.c.b16 %v166, %v165
  %v201 = vpack.c.b16 %v168, %v167
  %v202 = vpack.c.b16 %v170, %v169
  %v203 = vpack.c.b16 %v172, %v171
  %v204 = vpack.c.b16 %v174, %v173
  %v205 = vpack.c.b16 %v176, %v175
  %v206 = vpack.c.b16 %v178, %v177
  %v207 = vpack.c.b16 %v180, %v179
  %v208 = vpack.c.b16 %v182, %v181
  %v209 = vpack.c.b16 %v184, %v183
  %v210 = vpack.c.b16 %v186, %v185
  %235 = vmatprep.subr.bf16.mxu0 0
  %236 = vmatpush1.bf16.msra.mxu0 %v187
  %237 = vmatprep.subr.bf16.mxu0 0
  %238 = vmatpush1.bf16.msra.mxu0 %v188
  %239 = vmatprep.subr.bf16.mxu0 0
  %240 = vmatpush1.bf16.msra.mxu0 %v189
  %241 = vmatprep.subr.bf16.mxu0 0
  %242 = vmatpush1.bf16.msra.mxu0 %v190
  %243 = vmatprep.subr.bf16.mxu0 0
  %244 = vmatpush1.bf16.msra.mxu0 %v191
  %245 = vmatprep.subr.bf16.mxu0 0
  %246 = vmatpush1.bf16.msra.mxu0 %v192
  %247 = vmatprep.subr.bf16.mxu0 0
  %248 = vmatpush1.bf16.msra.mxu0 %v193
  %249 = vmatprep.subr.bf16.mxu0 0
  %250 = vmatpush1.bf16.msra.mxu0 %v194
  %251 = vmatprep.subr.bf16.mxu0 0
  %252 = vmatpush1.bf16.msra.mxu0 %v195
  %253 = vmatprep.subr.bf16.mxu0 0
  %254 = vmatpush1.bf16.msra.mxu0 %v196
  %255 = vmatprep.subr.bf16.mxu0 0
  %256 = vmatpush1.bf16.msra.mxu0 %v197
  %257 = vmatprep.subr.bf16.mxu0 0
  %258 = vmatpush1.bf16.msra.mxu0 %v198
  %259 = vmatprep.subr.bf16.mxu0 0
  %260 = vmatpush1.bf16.msra.mxu0 %v199
  %261 = vmatprep.subr.bf16.mxu0 0
  %262 = vmatpush1.bf16.msra.mxu0 %v200
  %263 = vmatprep.subr.bf16.mxu0 0
  %264 = vmatpush1.bf16.msra.mxu0 %v201
  %265 = vmatprep.subr.bf16.mxu0 0
  %266 = vmatpush1.bf16.msra.mxu0 %v202
  %267 = vmatprep.mubr.bf16.mxu0 %v86
  %268 = vmatmul.mubr.bf16.gmra.mrb[0].mxu0 %v85
  %v269 = vpop.f32.mrb[0].mxu0
  %v270 = vadd.f32 0.0, %v269
  %v271 = vpop.f32.mrb[0].mxu0
  %v272 = vpop.f32.mrb[0].mxu0
  %v273 = vadd.f32 0.0, %v272
  %v274 = vpop.f32.mrb[0].mxu0
  %275 = vdwg.mxu0
  %276 = vmatprep.subr.bf16.mxu0 0
  %277 = vmatpush1.bf16.msra.mxu0 %v203
  %278 = vmatprep.subr.bf16.mxu0 0
  %279 = vmatpush1.bf16.msra.mxu0 %v204
  %280 = vmatprep.subr.bf16.mxu0 0
  %281 = vmatpush1.bf16.msra.mxu0 %v205
  %282 = vmatprep.subr.bf16.mxu0 0
  %283 = vmatpush1.bf16.msra.mxu0 %v206
  %284 = vmatprep.subr.bf16.mxu0 0
  %285 = vmatpush1.bf16.msra.mxu0 %v207
  %286 = vmatprep.subr.bf16.mxu0 0
  %287 = vmatpush1.bf16.msra.mxu0 %v208
  %288 = vmatprep.subr.bf16.mxu0 0
  %289 = vmatpush1.bf16.msra.mxu0 %v209
  %290 = vmatprep.subr.bf16.mxu0 0
  %291 = vmatpush1.bf16.msra.mxu0 %v210
  %292 = vmatprep.subr.bf16.mxu0 0
  %293 = vmatpush1.bf16.msra.mxu0 0
  %294 = vmatprep.subr.bf16.mxu0 0
  %295 = vmatpush1.bf16.msra.mxu0 0
  %296 = vmatprep.subr.bf16.mxu0 0
  %297 = vmatpush1.bf16.msra.mxu0 0
  %298 = vmatprep.subr.bf16.mxu0 0
  %299 = vmatpush1.bf16.msra.mxu0 0
  %300 = vmatprep.subr.bf16.mxu0 0
  %301 = vmatpush1.bf16.msra.mxu0 0
  %302 = vmatprep.subr.bf16.mxu0 0
  %303 = vmatpush1.bf16.msra.mxu0 0
  %304 = vmatprep.subr.bf16.mxu0 0
  %305 = vmatpush1.bf16.msra.mxu0 0
  %306 = vmatprep.subr.bf16.mxu0 0
  %307 = vmatpush1.bf16.msra.mxu0 0
  %308 = vmatprep.mubr.bf16.mxu0 0
  %309 = vmatmul.mubr.bf16.gmra.mrb[0].mxu0 %v87
  %v310 = vpop.f32.mrb[0].mxu0
  %v311 = vadd.f32 %v270, %v310
  %v312 = vpop.f32.mrb[0].mxu0
  %v313 = vpop.f32.mrb[0].mxu0
  %v314 = vadd.f32 %v273, %v313
  %v315 = vpop.f32.mrb[0].mxu0
  %316 = vdwg.mxu0
  %v317 = vadd.f32 %v21, %v311
  %v318 = vadd.f32 %v22, %v314
  %319 = vst [vmem:[#allocation2] sm:$0xff] %v317
  %320 = vst [vmem:[#allocation2 + $0x8] sm:$0xff] %v318
  // Predicated region
  $region18: #{deeplab_forward.37} parent=0 // pred_check
    %p321 = pneg %p15
  $region19: #{deeplab_forward.37} parent=0 // pred_check_branch
    %323 = sbr.rel (%p321) target = $region21
  $region20: #{deeplab_forward.37} parent=0 // pred_region
    %v324 = vld [vmem:[#allocation2] sm:$0xff]
    %v325 = vld [vmem:[#allocation2 + $0x8] sm:$0xff]
    %v326 = vld [vmem:[%s2] sm:$0x1]
    %v328 = vlaneseq
    %v329 = vshrl.u32 %v328, 7
    %v330 = vsub.s32 0, %v329
    %v331 = vrot.slane %v326, %v330
    %v333 = vadd.f32 %v324, %v331
    %v334 = vadd.f32 %v325, %v331
    %v335 = vpack.c.bf16 %v334, %v333
    %v337 = vunpack.c.l.b16 %v335
    %v338 = vunpack.c.h.b16 %v335
    %v339 = vpack.c.b16 %v337, %v337
    %v340 = vpack.c.b16 %v338, %v338
    %343 = vst [vmem:[%s3] sm:$0xf] %v339
    %344 = vst [vmem:[%s3 + $0x4] sm:$0xf] %v340
  $region21: #{deeplab_forward.37} parent=0 // pred_fallthru
    _
  // Predicated region
  $region22: #{deeplab_forward.37} parent=0 // pred_check
    _
  $region23: #{deeplab_forward.37} parent=0 // pred_check_branch
    %346 = sbr.rel (0) target = $region25
  $region24: #{deeplab_forward.37} parent=0 // pred_region
    _
  $region25: #{deeplab_forward.37} parent=0 // pred_fallthru
    _
  // Predicated region
  $region26: #{deeplab_forward.37} parent=0 // pred_check
    _
  $region27: #{deeplab_forward.37} parent=0 // pred_check_branch
    %348 = sbr.rel (0) target = $region29
  $region28: #{deeplab_forward.37} parent=0 // pred_region
    _
  $region29: #{deeplab_forward.37} parent=0 // pred_fallthru
    _

// kernel: deeplab_forward.41
$region0: #{deeplab_forward.41}
  #allocation0 [shape = 'u32[]', space=smem, size = 0x4, offset = 0x4, fixed_abs, tag = 'smem constant byte address 0x4 - core index']
  #allocation1 [shape = 'u32[144,128]{1,0:T(1,128)}', space=vmem, size = 0x12000, scoped, tag = 'internal scratch']
  #allocation2 [shape = 'f32[16,128]{1,0:T(8,128)}', space=vmem, size = 0x2000, scoped, tag = 'scratch operand']
  %s0 = inlined_call_operand.vmem [shape: bf16[16,512], index: 0, kind: input, shape index: {}]
  %s1 = inlined_call_operand.vmem [shape: bf16[512,128], index: 1, kind: input, shape index: {}]
  %s2 = inlined_call_operand.vmem [shape: f32[1,128], index: 2, kind: input, shape index: {}]
  %s3 = inlined_call_operand.vmem [shape: bf16[16,128], index: 3, kind: output, shape index: {}]
  %s4 = sld [smem:[#allocation0]]
  $region30: #{deeplab_forward.41} parent=0
    _
  %s6 = ssub.s32 1, %s4
  %s7 = scalar_select 0, %s6, %s4
  // Predicated region
  $region2: #{deeplab_forward.41} parent=0 // pred_check
    _
  $region3: #{deeplab_forward.41} parent=0 // pred_check_branch
    %9 = sbr.rel (0) target = $region5
  $region4: #{deeplab_forward.41} parent=0 // pred_region
    _
  $region5: #{deeplab_forward.41} parent=0 // pred_fallthru
    _
  // Predicated region
  $region6: #{deeplab_forward.41} parent=0 // pred_check
    _
  $region7: #{deeplab_forward.41} parent=0 // pred_check_branch
    %11 = sbr.rel (0) target = $region9
  $region8: #{deeplab_forward.41} parent=0 // pred_region
    _
  $region9: #{deeplab_forward.41} parent=0 // pred_fallthru
    _
  // Predicated region
  $region10: #{deeplab_forward.41} parent=0 // pred_check
    _
  $region11: #{deeplab_forward.41} parent=0 // pred_check_branch
    %13 = sbr.rel (0) target = $region13
  $region12: #{deeplab_forward.41} parent=0 // pred_region
    _
  $region13: #{deeplab_forward.41} parent=0 // pred_fallthru
    _
  %p15 = scmp.eq.s32.totalorder 0, 0
  // Predicated region
  $region14: #{deeplab_forward.41} parent=0 // pred_check
    %p16 = pneg %p15
  $region15: #{deeplab_forward.41} parent=0 // pred_check_branch
    %18 = sbr.rel (%p16) target = $region17
  $region16: #{deeplab_forward.41} parent=0 // pred_region
    %19 = vst [vmem:[#allocation2] sm:$0xff] 0.0
    %20 = vst [vmem:[#allocation2 + $0x8] sm:$0xff] 0.0
  $region17: #{deeplab_forward.41} parent=0 // pred_fallthru
    _
  %v21 = vld [vmem:[#allocation2] sm:$0xff]
  %v22 = vld [vmem:[#allocation2 + $0x8] sm:$0xff]
  %v23 = vld [vmem:[%s0] sm:$0xff]
  %v24 = vld [vmem:[%s0 + $0x8] sm:$0xff]
  %v25 = vld [vmem:[%s0 + $0x10] sm:$0xff]
  %v26 = vld [vmem:[%s0 + $0x18] sm:$0xff]
  %v27 = vld [vmem:[%s1] sm:$0xf]
  %v28 = vld [vmem:[%s1 + $0x4] sm:$0xf]
  %v29 = vld [vmem:[%s1 + $0x8] sm:$0xf]
  %v30 = vld [vmem:[%s1 + $0xc] sm:$0xf]
  %v31 = vld [vmem:[%s1 + $0x10] sm:$0xf]
  %v32 = vld [vmem:[%s1 + $0x14] sm:$0xf]
  %v33 = vld [vmem:[%s1 + $0x18] sm:$0xf]
  %v34 = vld [vmem:[%s1 + $0x1c] sm:$0xf]
  %v35 = vld [vmem:[%s1 + $0x20] sm:$0xf]
  %v36 = vld [vmem:[%s1 + $0x24] sm:$0xf]
  %v37 = vld [vmem:[%s1 + $0x28] sm:$0xf]
  %v38 = vld [vmem:[%s1 + $0x2c] sm:$0xf]
  %v39 = vld [vmem:[%s1 + $0x30] sm:$0xf]
  %v40 = vld [vmem:[%s1 + $0x34] sm:$0xf]
  %v41 = vld [vmem:[%s1 + $0x38] sm:$0xf]
  %v42 = vld [vmem:[%s1 + $0x3c] sm:$0xf]
  %v43 = vld [vmem:[%s1 + $0x40] sm:$0xf]
  %v44 = vld [vmem:[%s1 + $0x44] sm:$0xf]
  %v45 = vld [vmem:[%s1 + $0x48] sm:$0xf]
  %v46 = vld [vmem:[%s1 + $0x4c] sm:$0xf]
  %v47 = vld [vmem:[%s1 + $0x50] sm:$0xf]
  %v48 = vld [vmem:[%s1 + $0x54] sm:$0xf]
  %v49 = vld [vmem:[%s1 + $0x58] sm:$0xf]
  %v50 = vld [vmem:[%s1 + $0x5c] sm:$0xf]
  %v51 = vld [vmem:[%s1 + $0x60] sm:$0xf]
  %v52 = vld [vmem:[%s1 + $0x64] sm:$0xf]
  %v53 = vld [vmem:[%s1 + $0x68] sm:$0xf]
  %v54 = vld [vmem:[%s1 + $0x6c] sm:$0xf]
  %v55 = vld [vmem:[%s1 + $0x70] sm:$0xf]
  %v56 = vld [vmem:[%s1 + $0x74] sm:$0xf]
  %v57 = vld [vmem:[%s1 + $0x78] sm:$0xf]
  %v58 = vld [vmem:[%s1 + $0x7c] sm:$0xf]
  %v59 = vld [vmem:[%s1 + $0x80] sm:$0xf]
  %v60 = vld [vmem:[%s1 + $0x84] sm:$0xf]
  %v61 = vld [vmem:[%s1 + $0x88] sm:$0xf]
  %v62 = vld [vmem:[%s1 + $0x8c] sm:$0xf]
  %v63 = vld [vmem:[%s1 + $0x90] sm:$0xf]
  %v64 = vld [vmem:[%s1 + $0x94] sm:$0xf]
  %v65 = vld [vmem:[%s1 + $0x98] sm:$0xf]
  %v66 = vld [vmem:[%s1 + $0x9c] sm:$0xf]
  %v67 = vld [vmem:[%s1 + $0xa0] sm:$0xf]
  %v68 = vld [vmem:[%s1 + $0xa4] sm:$0xf]
  %v69 = vld [vmem:[%s1 + $0xa8] sm:$0xf]
  %v70 = vld [vmem:[%s1 + $0xac] sm:$0xf]
  %v71 = vld [vmem:[%s1 + $0xb0] sm:$0xf]
  %v72 = vld [vmem:[%s1 + $0xb4] sm:$0xf]
  %v73 = vld [vmem:[%s1 + $0xb8] sm:$0xf]
  %v74 = vld [vmem:[%s1 + $0xbc] sm:$0xf]
  %v75 = vld [vmem:[%s1 + $0xc0] sm:$0xf]
  %v76 = vld [vmem:[%s1 + $0xc4] sm:$0xf]
  %v77 = vld [vmem:[%s1 + $0xc8] sm:$0xf]
  %v78 = vld [vmem:[%s1 + $0xcc] sm:$0xf]
  %v79 = vld [vmem:[%s1 + $0xd0] sm:$0xf]
  %v80 = vld [vmem:[%s1 + $0xd4] sm:$0xf]
  %v81 = vld [vmem:[%s1 + $0xd8] sm:$0xf]
  %v82 = vld [vmem:[%s1 + $0xdc] sm:$0xf]
  %v83 = vld [vmem:[%s1 + $0xe0] sm:$0xf]
  %v84 = vld [vmem:[%s1 + $0xe4] sm:$0xf]
  %v85 = vld [vmem:[%s1 + $0xe8] sm:$0xf]
  %v86 = vld [vmem:[%s1 + $0xec] sm:$0xf]
  %v87 = vld [vmem:[%s1 + $0xf0] sm:$0xf]
  %v88 = vld [vmem:[%s1 + $0xf4] sm:$0xf]
  %v89 = vld [vmem:[%s1 + $0xf8] sm:$0xf]
  %v90 = vld [vmem:[%s1 + $0xfc] sm:$0xf]
  %v95 = vunpack.c.l.b16 %v23
  %v96 = vunpack.c.h.b16 %v23
  %v97 = vunpack.c.l.b16 %v24
  %v98 = vunpack.c.h.b16 %v24
  %v99 = vunpack.c.l.b16 %v25
  %v100 = vunpack.c.h.b16 %v25
  %v101 = vunpack.c.l.b16 %v26
  %v102 = vunpack.c.h.b16 %v26
  %v103 = vpack.c.b16 %v99, %v95
  %v104 = vpack.c.b16 %v100, %v96
  %v105 = vpack.c.b16 %v101, %v97
  %v106 = vpack.c.b16 %v102, %v98
  %v175 = vunpack.c.l.b16 %v27
  %v176 = vunpack.c.l.b16 %v28
  %v177 = vunpack.c.l.b16 %v29
  %v178 = vunpack.c.l.b16 %v30
  %v179 = vunpack.c.l.b16 %v31
  %v180 = vunpack.c.l.b16 %v32
  %v181 = vunpack.c.l.b16 %v33
  %v182 = vunpack.c.l.b16 %v34
  %v183 = vunpack.c.l.b16 %v35
  %v184 = vunpack.c.l.b16 %v36
  %v185 = vunpack.c.l.b16 %v37
  %v186 = vunpack.c.l.b16 %v38
  %v187 = vunpack.c.l.b16 %v39
  %v188 = vunpack.c.l.b16 %v40
  %v189 = vunpack.c.l.b16 %v41
  %v190 = vunpack.c.l.b16 %v42
  %v191 = vunpack.c.l.b16 %v43
  %v192 = vunpack.c.l.b16 %v44
  %v193 = vunpack.c.l.b16 %v45
  %v194 = vunpack.c.l.b16 %v46
  %v195 = vunpack.c.l.b16 %v47
  %v196 = vunpack.c.l.b16 %v48
  %v197 = vunpack.c.l.b16 %v49
  %v198 = vunpack.c.l.b16 %v50
  %v199 = vunpack.c.l.b16 %v51
  %v200 = vunpack.c.l.b16 %v52
  %v201 = vunpack.c.l.b16 %v53
  %v202 = vunpack.c.l.b16 %v54
  %v203 = vunpack.c.l.b16 %v55
  %v204 = vunpack.c.l.b16 %v56
  %v205 = vunpack.c.l.b16 %v57
  %v206 = vunpack.c.l.b16 %v58
  %v207 = vunpack.c.l.b16 %v59
  %v208 = vunpack.c.l.b16 %v60
  %v209 = vunpack.c.l.b16 %v61
  %v210 = vunpack.c.l.b16 %v62
  %v211 = vunpack.c.l.b16 %v63
  %v212 = vunpack.c.l.b16 %v64
  %v213 = vunpack.c.l.b16 %v65
  %v214 = vunpack.c.l.b16 %v66
  %v215 = vunpack.c.l.b16 %v67
  %v216 = vunpack.c.l.b16 %v68
  %v217 = vunpack.c.l.b16 %v69
  %v218 = vunpack.c.l.b16 %v70
  %v219 = vunpack.c.l.b16 %v71
  %v220 = vunpack.c.l.b16 %v72
  %v221 = vunpack.c.l.b16 %v73
  %v222 = vunpack.c.l.b16 %v74
  %v223 = vunpack.c.l.b16 %v75
  %v224 = vunpack.c.l.b16 %v76
  %v225 = vunpack.c.l.b16 %v77
  %v226 = vunpack.c.l.b16 %v78
  %v227 = vunpack.c.l.b16 %v79
  %v228 = vunpack.c.l.b16 %v80
  %v229 = vunpack.c.l.b16 %v81
  %v230 = vunpack.c.l.b16 %v82
  %v231 = vunpack.c.l.b16 %v83
  %v232 = vunpack.c.l.b16 %v84
  %v233 = vunpack.c.l.b16 %v85
  %v234 = vunpack.c.l.b16 %v86
  %v235 = vunpack.c.l.b16 %v87
  %v236 = vunpack.c.l.b16 %v88
  %v237 = vunpack.c.l.b16 %v89
  %v238 = vunpack.c.l.b16 %v90
  %v239 = vpack.c.b16 %v176, %v175
  %v240 = vpack.c.b16 %v178, %v177
  %v241 = vpack.c.b16 %v180, %v179
  %v242 = vpack.c.b16 %v182, %v181
  %v243 = vpack.c.b16 %v184, %v183
  %v244 = vpack.c.b16 %v186, %v185
  %v245 = vpack.c.b16 %v188, %v187
  %v246 = vpack.c.b16 %v190, %v189
  %v247 = vpack.c.b16 %v192, %v191
  %v248 = vpack.c.b16 %v194, %v193
  %v249 = vpack.c.b16 %v196, %v195
  %v250 = vpack.c.b16 %v198, %v197
  %v251 = vpack.c.b16 %v200, %v199
  %v252 = vpack.c.b16 %v202, %v201
  %v253 = vpack.c.b16 %v204, %v203
  %v254 = vpack.c.b16 %v206, %v205
  %v255 = vpack.c.b16 %v208, %v207
  %v256 = vpack.c.b16 %v210, %v209
  %v257 = vpack.c.b16 %v212, %v211
  %v258 = vpack.c.b16 %v214, %v213
  %v259 = vpack.c.b16 %v216, %v215
  %v260 = vpack.c.b16 %v218, %v217
  %v261 = vpack.c.b16 %v220, %v219
  %v262 = vpack.c.b16 %v222, %v221
  %v263 = vpack.c.b16 %v224, %v223
  %v264 = vpack.c.b16 %v226, %v225
  %v265 = vpack.c.b16 %v228, %v227
  %v266 = vpack.c.b16 %v230, %v229
  %v267 = vpack.c.b16 %v232, %v231
  %v268 = vpack.c.b16 %v234, %v233
  %v269 = vpack.c.b16 %v236, %v235
  %v270 = vpack.c.b16 %v238, %v237
  %303 = vmatprep.subr.bf16.mxu0 0
  %304 = vmatpush1.bf16.msra.mxu0 %v239
  %305 = vmatprep.subr.bf16.mxu0 0
  %306 = vmatpush1.bf16.msra.mxu0 %v240
  %307 = vmatprep.subr.bf16.mxu0 0
  %308 = vmatpush1.bf16.msra.mxu0 %v241
  %309 = vmatprep.subr.bf16.mxu0 0
  %310 = vmatpush1.bf16.msra.mxu0 %v242
  %311 = vmatprep.subr.bf16.mxu0 0
  %312 = vmatpush1.bf16.msra.mxu0 %v243
  %313 = vmatprep.subr.bf16.mxu0 0
  %314 = vmatpush1.bf16.msra.mxu0 %v244
  %315 = vmatprep.subr.bf16.mxu0 0
  %316 = vmatpush1.bf16.msra.mxu0 %v245
  %317 = vmatprep.subr.bf16.mxu0 0
  %318 = vmatpush1.bf16.msra.mxu0 %v246
  %319 = vmatprep.subr.bf16.mxu0 0
  %320 = vmatpush1.bf16.msra.mxu0 %v247
  %321 = vmatprep.subr.bf16.mxu0 0
  %322 = vmatpush1.bf16.msra.mxu0 %v248
  %323 = vmatprep.subr.bf16.mxu0 0
  %324 = vmatpush1.bf16.msra.mxu0 %v249
  %325 = vmatprep.subr.bf16.mxu0 0
  %326 = vmatpush1.bf16.msra.mxu0 %v250
  %327 = vmatprep.subr.bf16.mxu0 0
  %328 = vmatpush1.bf16.msra.mxu0 %v251
  %329 = vmatprep.subr.bf16.mxu0 0
  %330 = vmatpush1.bf16.msra.mxu0 %v252
  %331 = vmatprep.subr.bf16.mxu0 0
  %332 = vmatpush1.bf16.msra.mxu0 %v253
  %333 = vmatprep.subr.bf16.mxu0 0
  %334 = vmatpush1.bf16.msra.mxu0 %v254
  %335 = vmatprep.mubr.bf16.mxu0 %v104
  %336 = vmatmul.mubr.bf16.gmra.mrb[0].mxu0 %v103
  %v337 = vpop.f32.mrb[0].mxu0
  %v338 = vadd.f32 0.0, %v337
  %v339 = vpop.f32.mrb[0].mxu0
  %v340 = vpop.f32.mrb[0].mxu0
  %v341 = vadd.f32 0.0, %v340
  %v342 = vpop.f32.mrb[0].mxu0
  %343 = vdwg.mxu0
  %344 = vmatprep.subr.bf16.mxu0 0
  %345 = vmatpush1.bf16.msra.mxu0 %v255
  %346 = vmatprep.subr.bf16.mxu0 0
  %347 = vmatpush1.bf16.msra.mxu0 %v256
  %348 = vmatprep.subr.bf16.mxu0 0
  %349 = vmatpush1.bf16.msra.mxu0 %v257
  %350 = vmatprep.subr.bf16.mxu0 0
  %351 = vmatpush1.bf16.msra.mxu0 %v258
  %352 = vmatprep.subr.bf16.mxu0 0
  %353 = vmatpush1.bf16.msra.mxu0 %v259
  %354 = vmatprep.subr.bf16.mxu0 0
  %355 = vmatpush1.bf16.msra.mxu0 %v260
  %356 = vmatprep.subr.bf16.mxu0 0
  %357 = vmatpush1.bf16.msra.mxu0 %v261
  %358 = vmatprep.subr.bf16.mxu0 0
  %359 = vmatpush1.bf16.msra.mxu0 %v262
  %360 = vmatprep.subr.bf16.mxu0 0
  %361 = vmatpush1.bf16.msra.mxu0 %v263
  %362 = vmatprep.subr.bf16.mxu0 0
  %363 = vmatpush1.bf16.msra.mxu0 %v264
  %364 = vmatprep.subr.bf16.mxu0 0
  %365 = vmatpush1.bf16.msra.mxu0 %v265
  %366 = vmatprep.subr.bf16.mxu0 0
  %367 = vmatpush1.bf16.msra.mxu0 %v266
  %368 = vmatprep.subr.bf16.mxu0 0
  %369 = vmatpush1.bf16.msra.mxu0 %v267
  %370 = vmatprep.subr.bf16.mxu0 0
  %371 = vmatpush1.bf16.msra.mxu0 %v268
  %372 = vmatprep.subr.bf16.mxu0 0
  %373 = vmatpush1.bf16.msra.mxu0 %v269
  %374 = vmatprep.subr.bf16.mxu0 0
  %375 = vmatpush1.bf16.msra.mxu0 %v270
  %376 = vmatprep.mubr.bf16.mxu0 %v106
  %377 = vmatmul.mubr.bf16.gmra.mrb[0].mxu0 %v105
  %v378 = vpop.f32.mrb[0].mxu0
  %v379 = vadd.f32 %v338, %v378
  %v380 = vpop.f32.mrb[0].mxu0
  %v381 = vpop.f32.mrb[0].mxu0
  %v382 = vadd.f32 %v341, %v381
  %v383 = vpop.f32.mrb[0].mxu0
  %384 = vdwg.mxu0
  %v385 = vadd.f32 %v21, %v379
  %v386 = vadd.f32 %v22, %v382
  %387 = vst [vmem:[#allocation2] sm:$0xff] %v385
  %388 = vst [vmem:[#allocation2 + $0x8] sm:$0xff] %v386
  // Predicated region
  $region18: #{deeplab_forward.41} parent=0 // pred_check
    %p389 = pneg %p15
  $region19: #{deeplab_forward.41} parent=0 // pred_check_branch
    %391 = sbr.rel (%p389) target = $region21
  $region20: #{deeplab_forward.41} parent=0 // pred_region
    %v392 = vld [vmem:[#allocation2] sm:$0xff]
    %v393 = vld [vmem:[#allocation2 + $0x8] sm:$0xff]
    %v394 = vld [vmem:[%s2] sm:$0x1]
    %v396 = vlaneseq
    %v397 = vshrl.u32 %v396, 7
    %v398 = vsub.s32 0, %v397
    %v399 = vrot.slane %v394, %v398
    %v401 = vadd.f32 %v392, %v399
    %v402 = vadd.f32 %v393, %v399
    %v403 = vpack.c.bf16 %v402, %v401
    %v405 = vunpack.c.l.b16 %v403
    %v406 = vunpack.c.h.b16 %v403
    %v407 = vpack.c.b16 %v405, %v405
    %v408 = vpack.c.b16 %v406, %v406
    %411 = vst [vmem:[%s3] sm:$0xf] %v407
    %412 = vst [vmem:[%s3 + $0x4] sm:$0xf] %v408
  $region21: #{deeplab_forward.41} parent=0 // pred_fallthru
    _
  // Predicated region
  $region22: #{deeplab_forward.41} parent=0 // pred_check
    _
  $region23: #{deeplab_forward.41} parent=0 // pred_check_branch
    %414 = sbr.rel (0) target = $region25
  $region24: #{deeplab_forward.41} parent=0 // pred_region
    _
  $region25: #{deeplab_forward.41} parent=0 // pred_fallthru
    _
  // Predicated region
  $region26: #{deeplab_forward.41} parent=0 // pred_check
    _
  $region27: #{deeplab_forward.41} parent=0 // pred_check_branch
    %416 = sbr.rel (0) target = $region29
  $region28: #{deeplab_forward.41} parent=0 // pred_region
    _
  $region29: #{deeplab_forward.41} parent=0 // pred_fallthru
    _

// kernel: deeplab_forward.47
$region0: #{deeplab_forward.47}
  #allocation0 [shape = 'u32[]', space=smem, size = 0x4, offset = 0x4, fixed_abs, tag = 'smem constant byte address 0x4 - core index']
  #allocation1 [shape = 'u32[144,128]{1,0:T(1,128)}', space=vmem, size = 0x12000, scoped, tag = 'internal scratch']
  #allocation2 [shape = 'f32[16,128]{1,0:T(8,128)}', space=vmem, size = 0x2000, scoped, tag = 'scratch operand']
  %s0 = inlined_call_operand.vmem [shape: bf16[16,128], index: 0, kind: input, shape index: {}]
  %s1 = inlined_call_operand.vmem [shape: bf16[128,128], index: 1, kind: input, shape index: {}]
  %s2 = inlined_call_operand.vmem [shape: f32[1,128], index: 2, kind: input, shape index: {}]
  %s3 = inlined_call_operand.vmem [shape: bf16[16,128], index: 3, kind: output, shape index: {}]
  %s4 = sld [smem:[#allocation0]]
  $region30: #{deeplab_forward.47} parent=0
    _
  %s6 = ssub.s32 1, %s4
  %s7 = scalar_select 0, %s6, %s4
  // Predicated region
  $region2: #{deeplab_forward.47} parent=0 // pred_check
    _
  $region3: #{deeplab_forward.47} parent=0 // pred_check_branch
    %9 = sbr.rel (0) target = $region5
  $region4: #{deeplab_forward.47} parent=0 // pred_region
    _
  $region5: #{deeplab_forward.47} parent=0 // pred_fallthru
    _
  // Predicated region
  $region6: #{deeplab_forward.47} parent=0 // pred_check
    _
  $region7: #{deeplab_forward.47} parent=0 // pred_check_branch
    %11 = sbr.rel (0) target = $region9
  $region8: #{deeplab_forward.47} parent=0 // pred_region
    _
  $region9: #{deeplab_forward.47} parent=0 // pred_fallthru
    _
  // Predicated region
  $region10: #{deeplab_forward.47} parent=0 // pred_check
    _
  $region11: #{deeplab_forward.47} parent=0 // pred_check_branch
    %13 = sbr.rel (0) target = $region13
  $region12: #{deeplab_forward.47} parent=0 // pred_region
    _
  $region13: #{deeplab_forward.47} parent=0 // pred_fallthru
    _
  %p15 = scmp.eq.s32.totalorder 0, 0
  // Predicated region
  $region14: #{deeplab_forward.47} parent=0 // pred_check
    %p16 = pneg %p15
  $region15: #{deeplab_forward.47} parent=0 // pred_check_branch
    %18 = sbr.rel (%p16) target = $region17
  $region16: #{deeplab_forward.47} parent=0 // pred_region
    %19 = vst [vmem:[#allocation2] sm:$0xff] 0.0
    %20 = vst [vmem:[#allocation2 + $0x8] sm:$0xff] 0.0
  $region17: #{deeplab_forward.47} parent=0 // pred_fallthru
    _
  %v21 = vld [vmem:[#allocation2] sm:$0xff]
  %v22 = vld [vmem:[#allocation2 + $0x8] sm:$0xff]
  %v23 = vld [vmem:[%s0] sm:$0xf]
  %v24 = vld [vmem:[%s0 + $0x4] sm:$0xf]
  %v25 = vld [vmem:[%s1] sm:$0xf]
  %v26 = vld [vmem:[%s1 + $0x4] sm:$0xf]
  %v27 = vld [vmem:[%s1 + $0x8] sm:$0xf]
  %v28 = vld [vmem:[%s1 + $0xc] sm:$0xf]
  %v29 = vld [vmem:[%s1 + $0x10] sm:$0xf]
  %v30 = vld [vmem:[%s1 + $0x14] sm:$0xf]
  %v31 = vld [vmem:[%s1 + $0x18] sm:$0xf]
  %v32 = vld [vmem:[%s1 + $0x1c] sm:$0xf]
  %v33 = vld [vmem:[%s1 + $0x20] sm:$0xf]
  %v34 = vld [vmem:[%s1 + $0x24] sm:$0xf]
  %v35 = vld [vmem:[%s1 + $0x28] sm:$0xf]
  %v36 = vld [vmem:[%s1 + $0x2c] sm:$0xf]
  %v37 = vld [vmem:[%s1 + $0x30] sm:$0xf]
  %v38 = vld [vmem:[%s1 + $0x34] sm:$0xf]
  %v39 = vld [vmem:[%s1 + $0x38] sm:$0xf]
  %v40 = vld [vmem:[%s1 + $0x3c] sm:$0xf]
  %v43 = vunpack.c.l.b16 %v23
  %v44 = vunpack.c.l.b16 %v24
  %v45 = vpack.c.b16 %v44, %v43
  %v63 = vunpack.c.l.b16 %v25
  %v64 = vunpack.c.l.b16 %v26
  %v65 = vunpack.c.l.b16 %v27
  %v66 = vunpack.c.l.b16 %v28
  %v67 = vunpack.c.l.b16 %v29
  %v68 = vunpack.c.l.b16 %v30
  %v69 = vunpack.c.l.b16 %v31
  %v70 = vunpack.c.l.b16 %v32
  %v71 = vunpack.c.l.b16 %v33
  %v72 = vunpack.c.l.b16 %v34
  %v73 = vunpack.c.l.b16 %v35
  %v74 = vunpack.c.l.b16 %v36
  %v75 = vunpack.c.l.b16 %v37
  %v76 = vunpack.c.l.b16 %v38
  %v77 = vunpack.c.l.b16 %v39
  %v78 = vunpack.c.l.b16 %v40
  %v79 = vpack.c.b16 %v64, %v63
  %v80 = vpack.c.b16 %v66, %v65
  %v81 = vpack.c.b16 %v68, %v67
  %v82 = vpack.c.b16 %v70, %v69
  %v83 = vpack.c.b16 %v72, %v71
  %v84 = vpack.c.b16 %v74, %v73
  %v85 = vpack.c.b16 %v76, %v75
  %v86 = vpack.c.b16 %v78, %v77
  %95 = vmatprep.subr.bf16.mxu0 0
  %96 = vmatpush1.bf16.msra.mxu0 %v79
  %97 = vmatprep.subr.bf16.mxu0 0
  %98 = vmatpush1.bf16.msra.mxu0 %v80
  %99 = vmatprep.subr.bf16.mxu0 0
  %100 = vmatpush1.bf16.msra.mxu0 %v81
  %101 = vmatprep.subr.bf16.mxu0 0
  %102 = vmatpush1.bf16.msra.mxu0 %v82
  %103 = vmatprep.subr.bf16.mxu0 0
  %104 = vmatpush1.bf16.msra.mxu0 %v83
  %105 = vmatprep.subr.bf16.mxu0 0
  %106 = vmatpush1.bf16.msra.mxu0 %v84
  %107 = vmatprep.subr.bf16.mxu0 0
  %108 = vmatpush1.bf16.msra.mxu0 %v85
  %109 = vmatprep.subr.bf16.mxu0 0
  %110 = vmatpush1.bf16.msra.mxu0 %v86
  %111 = vmatprep.subr.bf16.mxu0 0
  %112 = vmatpush1.bf16.msra.mxu0 0
  %113 = vmatprep.subr.bf16.mxu0 0
  %114 = vmatpush1.bf16.msra.mxu0 0
  %115 = vmatprep.subr.bf16.mxu0 0
  %116 = vmatpush1.bf16.msra.mxu0 0
  %117 = vmatprep.subr.bf16.mxu0 0
  %118 = vmatpush1.bf16.msra.mxu0 0
  %119 = vmatprep.subr.bf16.mxu0 0
  %120 = vmatpush1.bf16.msra.mxu0 0
  %121 = vmatprep.subr.bf16.mxu0 0
  %122 = vmatpush1.bf16.msra.mxu0 0
  %123 = vmatprep.subr.bf16.mxu0 0
  %124 = vmatpush1.bf16.msra.mxu0 0
  %125 = vmatprep.subr.bf16.mxu0 0
  %126 = vmatpush1.bf16.msra.mxu0 0
  %127 = vmatprep.mubr.bf16.mxu0 0
  %128 = vmatmul.mubr.bf16.gmra.mrb[0].mxu0 %v45
  %v129 = vpop.f32.mrb[0].mxu0
  %v130 = vadd.f32 0.0, %v129
  %v131 = vpop.f32.mrb[0].mxu0
  %v132 = vpop.f32.mrb[0].mxu0
  %v133 = vadd.f32 0.0, %v132
  %v134 = vpop.f32.mrb[0].mxu0
  %135 = vdwg.mxu0
  %v136 = vadd.f32 %v21, %v130
  %v137 = vadd.f32 %v22, %v133
  %138 = vst [vmem:[#allocation2] sm:$0xff] %v136
  %139 = vst [vmem:[#allocation2 + $0x8] sm:$0xff] %v137
  // Predicated region
  $region18: #{deeplab_forward.47} parent=0 // pred_check
    %p140 = pneg %p15
  $region19: #{deeplab_forward.47} parent=0 // pred_check_branch
    %142 = sbr.rel (%p140) target = $region21
  $region20: #{deeplab_forward.47} parent=0 // pred_region
    %v143 = vld [vmem:[#allocation2] sm:$0xff]
    %v144 = vld [vmem:[#allocation2 + $0x8] sm:$0xff]
    %v145 = vld [vmem:[%s2] sm:$0x1]
    %v147 = vlaneseq
    %v148 = vshrl.u32 %v147, 7
    %v149 = vsub.s32 0, %v148
    %v150 = vrot.slane %v145, %v149
    %v152 = vadd.f32 %v143, %v150
    %v153 = vadd.f32 %v144, %v150
    %v154 = vmax.f32 %v152, 0.0
    %v155 = vmax.f32 %v153, 0.0
    %v156 = vpack.c.bf16 %v155, %v154
    %v158 = vunpack.c.l.b16 %v156
    %v159 = vunpack.c.h.b16 %v156
    %v160 = vpack.c.b16 %v158, %v158
    %v161 = vpack.c.b16 %v159, %v159
    %164 = vst [vmem:[%s3] sm:$0xf] %v160
    %165 = vst [vmem:[%s3 + $0x4] sm:$0xf] %v161
  $region21: #{deeplab_forward.47} parent=0 // pred_fallthru
    _
  // Predicated region
  $region22: #{deeplab_forward.47} parent=0 // pred_check
    _
  $region23: #{deeplab_forward.47} parent=0 // pred_check_branch
    %167 = sbr.rel (0) target = $region25
  $region24: #{deeplab_forward.47} parent=0 // pred_region
    _
  $region25: #{deeplab_forward.47} parent=0 // pred_fallthru
    _
  // Predicated region
  $region26: #{deeplab_forward.47} parent=0 // pred_check
    _
  $region27: #{deeplab_forward.47} parent=0 // pred_check_branch
    %169 = sbr.rel (0) target = $region29
  $region28: #{deeplab_forward.47} parent=0 // pred_region
    _
  $region29: #{deeplab_forward.47} parent=0 // pred_fallthru
    _

// kernel: deeplab_forward.39
$region0: #{deeplab_forward.39}
  #allocation0 [shape = 'u32[]', space=smem, size = 0x4, offset = 0x4, fixed_abs, tag = 'smem constant byte address 0x4 - core index']
  #allocation1 [shape = 'u32[144,128]{1,0:T(1,128)}', space=vmem, size = 0x12000, scoped, tag = 'internal scratch']
  #allocation2 [shape = 'f32[16,128]{1,0:T(8,128)}', space=vmem, size = 0x2000, scoped, tag = 'scratch operand']
  %s0 = inlined_call_operand.vmem [shape: bf16[16,128], index: 0, kind: input, shape index: {}]
  %s1 = inlined_call_operand.vmem [shape: bf16[128,128], index: 1, kind: input, shape index: {}]
  %s2 = inlined_call_operand.vmem [shape: f32[1,128], index: 2, kind: input, shape index: {}]
  %s3 = inlined_call_operand.vmem [shape: bf16[16,128], index: 3, kind: output, shape index: {}]
  %s4 = sld [smem:[#allocation0]]
  $region30: #{deeplab_forward.39} parent=0
    _
  %s6 = ssub.s32 1, %s4
  %s7 = scalar_select 0, %s6, %s4
  // Predicated region
  $region2: #{deeplab_forward.39} parent=0 // pred_check
    _
  $region3: #{deeplab_forward.39} parent=0 // pred_check_branch
    %9 = sbr.rel (0) target = $region5
  $region4: #{deeplab_forward.39} parent=0 // pred_region
    _
  $region5: #{deeplab_forward.39} parent=0 // pred_fallthru
    _
  // Predicated region
  $region6: #{deeplab_forward.39} parent=0 // pred_check
    _
  $region7: #{deeplab_forward.39} parent=0 // pred_check_branch
    %11 = sbr.rel (0) target = $region9
  $region8: #{deeplab_forward.39} parent=0 // pred_region
    _
  $region9: #{deeplab_forward.39} parent=0 // pred_fallthru
    _
  // Predicated region
  $region10: #{deeplab_forward.39} parent=0 // pred_check
    _
  $region11: #{deeplab_forward.39} parent=0 // pred_check_branch
    %13 = sbr.rel (0) target = $region13
  $region12: #{deeplab_forward.39} parent=0 // pred_region
    _
  $region13: #{deeplab_forward.39} parent=0 // pred_fallthru
    _
  %p15 = scmp.eq.s32.totalorder 0, 0
  // Predicated region
  $region14: #{deeplab_forward.39} parent=0 // pred_check
    %p16 = pneg %p15
  $region15: #{deeplab_forward.39} parent=0 // pred_check_branch
    %18 = sbr.rel (%p16) target = $region17
  $region16: #{deeplab_forward.39} parent=0 // pred_region
    %19 = vst [vmem:[#allocation2] sm:$0xff] 0.0
    %20 = vst [vmem:[#allocation2 + $0x8] sm:$0xff] 0.0
  $region17: #{deeplab_forward.39} parent=0 // pred_fallthru
    _
  %v21 = vld [vmem:[#allocation2] sm:$0xff]
  %v22 = vld [vmem:[#allocation2 + $0x8] sm:$0xff]
  %v23 = vld [vmem:[%s0] sm:$0xf]
  %v24 = vld [vmem:[%s0 + $0x4] sm:$0xf]
  %v25 = vld [vmem:[%s1] sm:$0xf]
  %v26 = vld [vmem:[%s1 + $0x4] sm:$0xf]
  %v27 = vld [vmem:[%s1 + $0x8] sm:$0xf]
  %v28 = vld [vmem:[%s1 + $0xc] sm:$0xf]
  %v29 = vld [vmem:[%s1 + $0x10] sm:$0xf]
  %v30 = vld [vmem:[%s1 + $0x14] sm:$0xf]
  %v31 = vld [vmem:[%s1 + $0x18] sm:$0xf]
  %v32 = vld [vmem:[%s1 + $0x1c] sm:$0xf]
  %v33 = vld [vmem:[%s1 + $0x20] sm:$0xf]
  %v34 = vld [vmem:[%s1 + $0x24] sm:$0xf]
  %v35 = vld [vmem:[%s1 + $0x28] sm:$0xf]
  %v36 = vld [vmem:[%s1 + $0x2c] sm:$0xf]
  %v37 = vld [vmem:[%s1 + $0x30] sm:$0xf]
  %v38 = vld [vmem:[%s1 + $0x34] sm:$0xf]
  %v39 = vld [vmem:[%s1 + $0x38] sm:$0xf]
  %v40 = vld [vmem:[%s1 + $0x3c] sm:$0xf]
  %v43 = vunpack.c.l.b16 %v23
  %v44 = vunpack.c.l.b16 %v24
  %v45 = vpack.c.b16 %v44, %v43
  %v63 = vunpack.c.l.b16 %v25
  %v64 = vunpack.c.l.b16 %v26
  %v65 = vunpack.c.l.b16 %v27
  %v66 = vunpack.c.l.b16 %v28
  %v67 = vunpack.c.l.b16 %v29
  %v68 = vunpack.c.l.b16 %v30
  %v69 = vunpack.c.l.b16 %v31
  %v70 = vunpack.c.l.b16 %v32
  %v71 = vunpack.c.l.b16 %v33
  %v72 = vunpack.c.l.b16 %v34
  %v73 = vunpack.c.l.b16 %v35
  %v74 = vunpack.c.l.b16 %v36
  %v75 = vunpack.c.l.b16 %v37
  %v76 = vunpack.c.l.b16 %v38
  %v77 = vunpack.c.l.b16 %v39
  %v78 = vunpack.c.l.b16 %v40
  %v79 = vpack.c.b16 %v64, %v63
  %v80 = vpack.c.b16 %v66, %v65
  %v81 = vpack.c.b16 %v68, %v67
  %v82 = vpack.c.b16 %v70, %v69
  %v83 = vpack.c.b16 %v72, %v71
  %v84 = vpack.c.b16 %v74, %v73
  %v85 = vpack.c.b16 %v76, %v75
  %v86 = vpack.c.b16 %v78, %v77
  %95 = vmatprep.subr.bf16.mxu0 0
  %96 = vmatpush1.bf16.msra.mxu0 %v79
  %97 = vmatprep.subr.bf16.mxu0 0
  %98 = vmatpush1.bf16.msra.mxu0 %v80
  %99 = vmatprep.subr.bf16.mxu0 0
  %100 = vmatpush1.bf16.msra.mxu0 %v81
  %101 = vmatprep.subr.bf16.mxu0 0
  %102 = vmatpush1.bf16.msra.mxu0 %v82
  %103 = vmatprep.subr.bf16.mxu0 0
  %104 = vmatpush1.bf16.msra.mxu0 %v83
  %105 = vmatprep.subr.bf16.mxu0 0
  %106 = vmatpush1.bf16.msra.mxu0 %v84
  %107 = vmatprep.subr.bf16.mxu0 0
  %108 = vmatpush1.bf16.msra.mxu0 %v85
  %109 = vmatprep.subr.bf16.mxu0 0
  %110 = vmatpush1.bf16.msra.mxu0 %v86
  %111 = vmatprep.subr.bf16.mxu0 0
  %112 = vmatpush1.bf16.msra.mxu0 0
  %113 = vmatprep.subr.bf16.mxu0 0
  %114 = vmatpush1.bf16.msra.mxu0 0
  %115 = vmatprep.subr.bf16.mxu0 0
  %116 = vmatpush1.bf16.msra.mxu0 0
  %117 = vmatprep.subr.bf16.mxu0 0
  %118 = vmatpush1.bf16.msra.mxu0 0
  %119 = vmatprep.subr.bf16.mxu0 0
  %120 = vmatpush1.bf16.msra.mxu0 0
  %121 = vmatprep.subr.bf16.mxu0 0
  %122 = vmatpush1.bf16.msra.mxu0 0
  %123 = vmatprep.subr.bf16.mxu0 0
  %124 = vmatpush1.bf16.msra.mxu0 0
  %125 = vmatprep.subr.bf16.mxu0 0
  %126 = vmatpush1.bf16.msra.mxu0 0
  %127 = vmatprep.mubr.bf16.mxu0 0
  %128 = vmatmul.mubr.bf16.gmra.mrb[0].mxu0 %v45
  %v129 = vpop.f32.mrb[0].mxu0
  %v130 = vadd.f32 0.0, %v129
  %v131 = vpop.f32.mrb[0].mxu0
  %v132 = vpop.f32.mrb[0].mxu0
  %v133 = vadd.f32 0.0, %v132
  %v134 = vpop.f32.mrb[0].mxu0
  %135 = vdwg.mxu0
  %v136 = vadd.f32 %v21, %v130
  %v137 = vadd.f32 %v22, %v133
  %138 = vst [vmem:[#allocation2] sm:$0xff] %v136
  %139 = vst [vmem:[#allocation2 + $0x8] sm:$0xff] %v137
  // Predicated region
  $region18: #{deeplab_forward.39} parent=0 // pred_check
    %p140 = pneg %p15
  $region19: #{deeplab_forward.39} parent=0 // pred_check_branch
    %142 = sbr.rel (%p140) target = $region21
  $region20: #{deeplab_forward.39} parent=0 // pred_region
    %v143 = vld [vmem:[#allocation2] sm:$0xff]
    %v144 = vld [vmem:[#allocation2 + $0x8] sm:$0xff]
    %v145 = vld [vmem:[%s2] sm:$0x1]
    %v147 = vlaneseq
    %v148 = vshrl.u32 %v147, 7
    %v149 = vsub.s32 0, %v148
    %v150 = vrot.slane %v145, %v149
    %v152 = vadd.f32 %v143, %v150
    %v153 = vadd.f32 %v144, %v150
    %v154 = vpack.c.bf16 %v153, %v152
    %v156 = vunpack.c.l.b16 %v154
    %v157 = vunpack.c.h.b16 %v154
    %v158 = vpack.c.b16 %v156, %v156
    %v159 = vpack.c.b16 %v157, %v157
    %162 = vst [vmem:[%s3] sm:$0xf] %v158
    %163 = vst [vmem:[%s3 + $0x4] sm:$0xf] %v159
  $region21: #{deeplab_forward.39} parent=0 // pred_fallthru
    _
  // Predicated region
  $region22: #{deeplab_forward.39} parent=0 // pred_check
    _
  $region23: #{deeplab_forward.39} parent=0 // pred_check_branch
    %165 = sbr.rel (0) target = $region25
  $region24: #{deeplab_forward.39} parent=0 // pred_region
    _
  $region25: #{deeplab_forward.39} parent=0 // pred_fallthru
    _
  // Predicated region
  $region26: #{deeplab_forward.39} parent=0 // pred_check
    _
  $region27: #{deeplab_forward.39} parent=0 // pred_check_branch
    %167 = sbr.rel (0) target = $region29
  $region28: #{deeplab_forward.39} parent=0 // pred_region
    _
  $region29: #{deeplab_forward.39} parent=0 // pred_fallthru
    _

// kernel: deeplab_forward.48
$region0: #{deeplab_forward.48}
  #allocation0 [shape = 'u32[]', space=smem, size = 0x4, offset = 0x4, fixed_abs, tag = 'smem constant byte address 0x4 - core index']
  #allocation1 [shape = 'u32[144,128]{1,0:T(1,128)}', space=vmem, size = 0x12000, scoped, tag = 'internal scratch']
  #allocation2 [shape = 'f32[16,128]{1,0:T(8,128)}', space=vmem, size = 0x2000, scoped, tag = 'scratch operand']
  %s0 = inlined_call_operand.vmem [shape: bf16[16,256], index: 0, kind: input, shape index: {}]
  %s1 = inlined_call_operand.vmem [shape: bf16[256,128], index: 1, kind: input, shape index: {}]
  %s2 = inlined_call_operand.vmem [shape: f32[1,128], index: 2, kind: input, shape index: {}]
  %s3 = inlined_call_operand.vmem [shape: bf16[16,128], index: 3, kind: output, shape index: {}]
  %s4 = sld [smem:[#allocation0]]
  $region30: #{deeplab_forward.48} parent=0
    _
  %s6 = ssub.s32 1, %s4
  %s7 = scalar_select 0, %s6, %s4
  // Predicated region
  $region2: #{deeplab_forward.48} parent=0 // pred_check
    _
  $region3: #{deeplab_forward.48} parent=0 // pred_check_branch
    %9 = sbr.rel (0) target = $region5
  $region4: #{deeplab_forward.48} parent=0 // pred_region
    _
  $region5: #{deeplab_forward.48} parent=0 // pred_fallthru
    _
  // Predicated region
  $region6: #{deeplab_forward.48} parent=0 // pred_check
    _
  $region7: #{deeplab_forward.48} parent=0 // pred_check_branch
    %11 = sbr.rel (0) target = $region9
  $region8: #{deeplab_forward.48} parent=0 // pred_region
    _
  $region9: #{deeplab_forward.48} parent=0 // pred_fallthru
    _
  // Predicated region
  $region10: #{deeplab_forward.48} parent=0 // pred_check
    _
  $region11: #{deeplab_forward.48} parent=0 // pred_check_branch
    %13 = sbr.rel (0) target = $region13
  $region12: #{deeplab_forward.48} parent=0 // pred_region
    _
  $region13: #{deeplab_forward.48} parent=0 // pred_fallthru
    _
  %p15 = scmp.eq.s32.totalorder 0, 0
  // Predicated region
  $region14: #{deeplab_forward.48} parent=0 // pred_check
    %p16 = pneg %p15
  $region15: #{deeplab_forward.48} parent=0 // pred_check_branch
    %18 = sbr.rel (%p16) target = $region17
  $region16: #{deeplab_forward.48} parent=0 // pred_region
    %19 = vst [vmem:[#allocation2] sm:$0xff] 0.0
    %20 = vst [vmem:[#allocation2 + $0x8] sm:$0xff] 0.0
  $region17: #{deeplab_forward.48} parent=0 // pred_fallthru
    _
  %v21 = vld [vmem:[#allocation2] sm:$0xff]
  %v22 = vld [vmem:[#allocation2 + $0x8] sm:$0xff]
  %v23 = vld [vmem:[%s0] sm:$0xff]
  %v24 = vld [vmem:[%s0 + $0x8] sm:$0xff]
  %v25 = vld [vmem:[%s1] sm:$0xf]
  %v26 = vld [vmem:[%s1 + $0x4] sm:$0xf]
  %v27 = vld [vmem:[%s1 + $0x8] sm:$0xf]
  %v28 = vld [vmem:[%s1 + $0xc] sm:$0xf]
  %v29 = vld [vmem:[%s1 + $0x10] sm:$0xf]
  %v30 = vld [vmem:[%s1 + $0x14] sm:$0xf]
  %v31 = vld [vmem:[%s1 + $0x18] sm:$0xf]
  %v32 = vld [vmem:[%s1 + $0x1c] sm:$0xf]
  %v33 = vld [vmem:[%s1 + $0x20] sm:$0xf]
  %v34 = vld [vmem:[%s1 + $0x24] sm:$0xf]
  %v35 = vld [vmem:[%s1 + $0x28] sm:$0xf]
  %v36 = vld [vmem:[%s1 + $0x2c] sm:$0xf]
  %v37 = vld [vmem:[%s1 + $0x30] sm:$0xf]
  %v38 = vld [vmem:[%s1 + $0x34] sm:$0xf]
  %v39 = vld [vmem:[%s1 + $0x38] sm:$0xf]
  %v40 = vld [vmem:[%s1 + $0x3c] sm:$0xf]
  %v41 = vld [vmem:[%s1 + $0x40] sm:$0xf]
  %v42 = vld [vmem:[%s1 + $0x44] sm:$0xf]
  %v43 = vld [vmem:[%s1 + $0x48] sm:$0xf]
  %v44 = vld [vmem:[%s1 + $0x4c] sm:$0xf]
  %v45 = vld [vmem:[%s1 + $0x50] sm:$0xf]
  %v46 = vld [vmem:[%s1 + $0x54] sm:$0xf]
  %v47 = vld [vmem:[%s1 + $0x58] sm:$0xf]
  %v48 = vld [vmem:[%s1 + $0x5c] sm:$0xf]
  %v49 = vld [vmem:[%s1 + $0x60] sm:$0xf]
  %v50 = vld [vmem:[%s1 + $0x64] sm:$0xf]
  %v51 = vld [vmem:[%s1 + $0x68] sm:$0xf]
  %v52 = vld [vmem:[%s1 + $0x6c] sm:$0xf]
  %v53 = vld [vmem:[%s1 + $0x70] sm:$0xf]
  %v54 = vld [vmem:[%s1 + $0x74] sm:$0xf]
  %v55 = vld [vmem:[%s1 + $0x78] sm:$0xf]
  %v56 = vld [vmem:[%s1 + $0x7c] sm:$0xf]
  %v59 = vunpack.c.l.b16 %v23
  %v60 = vunpack.c.h.b16 %v23
  %v61 = vunpack.c.l.b16 %v24
  %v62 = vunpack.c.h.b16 %v24
  %v63 = vpack.c.b16 %v61, %v59
  %v64 = vpack.c.b16 %v62, %v60
  %v99 = vunpack.c.l.b16 %v25
  %v100 = vunpack.c.l.b16 %v26
  %v101 = vunpack.c.l.b16 %v27
  %v102 = vunpack.c.l.b16 %v28
  %v103 = vunpack.c.l.b16 %v29
  %v104 = vunpack.c.l.b16 %v30
  %v105 = vunpack.c.l.b16 %v31
  %v106 = vunpack.c.l.b16 %v32
  %v107 = vunpack.c.l.b16 %v33
  %v108 = vunpack.c.l.b16 %v34
  %v109 = vunpack.c.l.b16 %v35
  %v110 = vunpack.c.l.b16 %v36
  %v111 = vunpack.c.l.b16 %v37
  %v112 = vunpack.c.l.b16 %v38
  %v113 = vunpack.c.l.b16 %v39
  %v114 = vunpack.c.l.b16 %v40
  %v115 = vunpack.c.l.b16 %v41
  %v116 = vunpack.c.l.b16 %v42
  %v117 = vunpack.c.l.b16 %v43
  %v118 = vunpack.c.l.b16 %v44
  %v119 = vunpack.c.l.b16 %v45
  %v120 = vunpack.c.l.b16 %v46
  %v121 = vunpack.c.l.b16 %v47
  %v122 = vunpack.c.l.b16 %v48
  %v123 = vunpack.c.l.b16 %v49
  %v124 = vunpack.c.l.b16 %v50
  %v125 = vunpack.c.l.b16 %v51
  %v126 = vunpack.c.l.b16 %v52
  %v127 = vunpack.c.l.b16 %v53
  %v128 = vunpack.c.l.b16 %v54
  %v129 = vunpack.c.l.b16 %v55
  %v130 = vunpack.c.l.b16 %v56
  %v131 = vpack.c.b16 %v100, %v99
  %v132 = vpack.c.b16 %v102, %v101
  %v133 = vpack.c.b16 %v104, %v103
  %v134 = vpack.c.b16 %v106, %v105
  %v135 = vpack.c.b16 %v108, %v107
  %v136 = vpack.c.b16 %v110, %v109
  %v137 = vpack.c.b16 %v112, %v111
  %v138 = vpack.c.b16 %v114, %v113
  %v139 = vpack.c.b16 %v116, %v115
  %v140 = vpack.c.b16 %v118, %v117
  %v141 = vpack.c.b16 %v120, %v119
  %v142 = vpack.c.b16 %v122, %v121
  %v143 = vpack.c.b16 %v124, %v123
  %v144 = vpack.c.b16 %v126, %v125
  %v145 = vpack.c.b16 %v128, %v127
  %v146 = vpack.c.b16 %v130, %v129
  %163 = vmatprep.subr.bf16.mxu0 0
  %164 = vmatpush1.bf16.msra.mxu0 %v131
  %165 = vmatprep.subr.bf16.mxu0 0
  %166 = vmatpush1.bf16.msra.mxu0 %v132
  %167 = vmatprep.subr.bf16.mxu0 0
  %168 = vmatpush1.bf16.msra.mxu0 %v133
  %169 = vmatprep.subr.bf16.mxu0 0
  %170 = vmatpush1.bf16.msra.mxu0 %v134
  %171 = vmatprep.subr.bf16.mxu0 0
  %172 = vmatpush1.bf16.msra.mxu0 %v135
  %173 = vmatprep.subr.bf16.mxu0 0
  %174 = vmatpush1.bf16.msra.mxu0 %v136
  %175 = vmatprep.subr.bf16.mxu0 0
  %176 = vmatpush1.bf16.msra.mxu0 %v137
  %177 = vmatprep.subr.bf16.mxu0 0
  %178 = vmatpush1.bf16.msra.mxu0 %v138
  %179 = vmatprep.subr.bf16.mxu0 0
  %180 = vmatpush1.bf16.msra.mxu0 %v139
  %181 = vmatprep.subr.bf16.mxu0 0
  %182 = vmatpush1.bf16.msra.mxu0 %v140
  %183 = vmatprep.subr.bf16.mxu0 0
  %184 = vmatpush1.bf16.msra.mxu0 %v141
  %185 = vmatprep.subr.bf16.mxu0 0
  %186 = vmatpush1.bf16.msra.mxu0 %v142
  %187 = vmatprep.subr.bf16.mxu0 0
  %188 = vmatpush1.bf16.msra.mxu0 %v143
  %189 = vmatprep.subr.bf16.mxu0 0
  %190 = vmatpush1.bf16.msra.mxu0 %v144
  %191 = vmatprep.subr.bf16.mxu0 0
  %192 = vmatpush1.bf16.msra.mxu0 %v145
  %193 = vmatprep.subr.bf16.mxu0 0
  %194 = vmatpush1.bf16.msra.mxu0 %v146
  %195 = vmatprep.mubr.bf16.mxu0 %v64
  %196 = vmatmul.mubr.bf16.gmra.mrb[0].mxu0 %v63
  %v197 = vpop.f32.mrb[0].mxu0
  %v198 = vadd.f32 0.0, %v197
  %v199 = vpop.f32.mrb[0].mxu0
  %v200 = vpop.f32.mrb[0].mxu0
  %v201 = vadd.f32 0.0, %v200
  %v202 = vpop.f32.mrb[0].mxu0
  %203 = vdwg.mxu0
  %v204 = vadd.f32 %v21, %v198
  %v205 = vadd.f32 %v22, %v201
  %206 = vst [vmem:[#allocation2] sm:$0xff] %v204
  %207 = vst [vmem:[#allocation2 + $0x8] sm:$0xff] %v205
  // Predicated region
  $region18: #{deeplab_forward.48} parent=0 // pred_check
    %p208 = pneg %p15
  $region19: #{deeplab_forward.48} parent=0 // pred_check_branch
    %210 = sbr.rel (%p208) target = $region21
  $region20: #{deeplab_forward.48} parent=0 // pred_region
    %v211 = vld [vmem:[#allocation2] sm:$0xff]
    %v212 = vld [vmem:[#allocation2 + $0x8] sm:$0xff]
    %v213 = vld [vmem:[%s2] sm:$0x1]
    %v215 = vlaneseq
    %v216 = vshrl.u32 %v215, 7
    %v217 = vsub.s32 0, %v216
    %v218 = vrot.slane %v213, %v217
    %v220 = vadd.f32 %v211, %v218
    %v221 = vadd.f32 %v212, %v218
    %v222 = vpack.c.bf16 %v221, %v220
    %v224 = vunpack.c.l.b16 %v222
    %v225 = vunpack.c.h.b16 %v222
    %v226 = vpack.c.b16 %v224, %v224
    %v227 = vpack.c.b16 %v225, %v225
    %230 = vst [vmem:[%s3] sm:$0xf] %v226
    %231 = vst [vmem:[%s3 + $0x4] sm:$0xf] %v227
  $region21: #{deeplab_forward.48} parent=0 // pred_fallthru
    _
  // Predicated region
  $region22: #{deeplab_forward.48} parent=0 // pred_check
    _
  $region23: #{deeplab_forward.48} parent=0 // pred_check_branch
    %233 = sbr.rel (0) target = $region25
  $region24: #{deeplab_forward.48} parent=0 // pred_region
    _
  $region25: #{deeplab_forward.48} parent=0 // pred_fallthru
    _
  // Predicated region
  $region26: #{deeplab_forward.48} parent=0 // pred_check
    _
  $region27: #{deeplab_forward.48} parent=0 // pred_check_branch
    %235 = sbr.rel (0) target = $region29
  $region28: #{deeplab_forward.48} parent=0 // pred_region
    _
  $region29: #{deeplab_forward.48} parent=0 // pred_fallthru
    _

// kernel: deeplab_forward.53
$region0: #{deeplab_forward.53}
  #allocation0 [shape = 'u32[]', space=smem, size = 0x4, offset = 0x4, fixed_abs, tag = 'smem constant byte address 0x4 - core index']
  #allocation1 [shape = 'u32[144,128]{1,0:T(1,128)}', space=vmem, size = 0x12000, scoped, tag = 'internal scratch']
  #allocation2 [shape = 'f32[16,256]{1,0:T(8,128)}', space=vmem, size = 0x4000, scoped, tag = 'scratch operand']
  %s0 = inlined_call_operand.vmem [shape: bf16[16,128], index: 0, kind: input, shape index: {}]
  %s1 = inlined_call_operand.vmem [shape: bf16[128,512], index: 1, kind: input, shape index: {}]
  %s2 = inlined_call_operand.vmem [shape: f32[1,512], index: 2, kind: input, shape index: {}]
  %s3 = inlined_call_operand.vmem [shape: bf16[16,512], index: 3, kind: output, shape index: {}]
  %s4 = sld [smem:[#allocation0]]
  $region125: #{deeplab_forward.53} parent=0
    _
  %s6 = ssub.s32 1, %s4
  %s7 = scalar_select 0, %s6, %s4
  $region1: #{deeplab_forward.53} parent=0
    #allocation3 [shape = 'u8[131072]{0}', space=vmem, size = 0x20000, scoped, tag = 'input window, operand 1']
    #allocation4 [shape = 'u8[16384]{0}', space=vmem, size = 0x4000, scoped, tag = 'output window, operand 0']
    loop: start=0, step=1, limit=4
    $region2: #{deeplab_forward.53} parent=1 // loop_pre_header
      _
    $region3: #{deeplab_forward.53} parent=1 // loop_header
      %s9 = sphi 0, %s13
      %p10 = scmp.ge.s32.totalorder %s9, 4
      %s16 = sphi 0, %s35
      %s17 = sphi 0, %s31
      %s18 = sphi 0, %s27
      %s19 = sphi 0, %s16
      %s20 = sphi 0, %s17
      %s21 = sphi 0, %s18
      %s22 = sphi 0, %s19
      %s23 = sphi 0, %s20
      %s24 = sphi 0, %s21
      %s40 = sphi 0, %s42
      %s43 = sphi 0, %s40
      %s44 = sphi 0, %s43
      %s60 = sphi 0, %s44
      %s68 = sphi 0, %s70
      %s71 = sphi 0, %s68
      %s72 = sphi 0, %s71
      %s88 = sphi 0, %s72
      %s94 = sphi 0, %s96
      %s97 = sphi 0, %s94
      %s98 = sphi 0, %s97
      %s114 = sphi 0, %s98
      %s122 = sphi 0, %s124
      %s125 = sphi 0, %s122
      %s126 = sphi 0, %s125
      %s142 = sphi 0, %s126
    $region4: #{deeplab_forward.53} parent=1 // loop_header_branch
      %12 = sbr.rel (%p10) target = $region8
    $region5: #{deeplab_forward.53} parent=1 // loop_body
      %s14 = ssub.s32 %s9, 1
      %s15 = ssub.s32 %s9, 2
      %s25 = sadd.s32 1, %s18
      %p26 = scmp.ge.s32.totalorder %s25, 1
      %s27 = scalar_select %p26, 0, %s25
      %s28 = sadd.s32 1, %s17
      %s29 = scalar_select %p26, %s28, %s17
      %p30 = scmp.ge.s32.totalorder %s29, 2
      %s31 = scalar_select %p30, 0, %s29
      %s32 = sadd.s32 1, %s16
      %s33 = scalar_select %p30, %s32, %s16
      %p34 = scmp.ge.s32.totalorder %s33, 1
      %s35 = scalar_select %p34, 0, %s33
      %s36 = ssub.s32 %s16, %s35
      %s37 = ssub.s32 %s18, %s27
      %s38 = sor.u32 %s36, %s37
      %p39 = scmp.eq.s32.totalorder %s38, 0
      %s41 = sadd.s32 %s40, 1
      %s42 = scalar_select %p39, %s40, %s41
      %p45 = pneg %p39
      %p46 = scmp.eq.s32.totalorder %s9, 1
      %p47 = por %p45, %p46
      %p48 = scmp.ne.s32.totalorder %s40, %s43
      %p49 = scmp.eq.s32.totalorder %s9, 0
      %p50 = por %p48, %p49
      %p51 = scmp.ne.s32.totalorder %s40, %s43
      %p52 = scmp.eq.s32.totalorder %s14, 1
      %p53 = por %p51, %p52
      %p54 = scmp.ne.s32.totalorder %s43, %s44
      %p55 = scmp.eq.s32.totalorder %s14, 0
      %p56 = por %p54, %p55
      %p57 = scmp.ne.s32.totalorder %s43, %s44
      %p58 = scmp.eq.s32.totalorder %s15, 1
      %p59 = por %p57, %p58
      %p61 = scmp.ne.s32.totalorder %s44, %s60
      %p62 = scmp.eq.s32.totalorder %s15, 0
      %p63 = por %p61, %p62
      %s64 = ssub.s32 %s18, %s27
      %s65 = ssub.s32 %s17, %s31
      %s66 = sor.u32 %s64, %s65
      %p67 = scmp.eq.s32.totalorder %s66, 0
      %s69 = sadd.s32 %s68, 1
      %s70 = scalar_select %p67, %s68, %s69
      %p73 = pneg %p67
      %p74 = scmp.eq.s32.totalorder %s9, 1
      %p75 = por %p73, %p74
      %p76 = scmp.ne.s32.totalorder %s68, %s71
      %p77 = scmp.eq.s32.totalorder %s9, 0
      %p78 = por %p76, %p77
      %p79 = scmp.ne.s32.totalorder %s68, %s71
      %p80 = scmp.eq.s32.totalorder %s14, 1
      %p81 = por %p79, %p80
      %p82 = scmp.ne.s32.totalorder %s71, %s72
      %p83 = scmp.eq.s32.totalorder %s14, 0
      %p84 = por %p82, %p83
      %p85 = scmp.ne.s32.totalorder %s71, %s72
      %p86 = scmp.eq.s32.totalorder %s15, 1
      %p87 = por %p85, %p86
      %p89 = scmp.ne.s32.totalorder %s72, %s88
      %p90 = scmp.eq.s32.totalorder %s15, 0
      %p91 = por %p89, %p90
      %s92 = ssub.s32 %s17, %s31
      %p93 = scmp.eq.s32.totalorder %s92, 0
      %s95 = sadd.s32 %s94, 1
      %s96 = scalar_select %p93, %s94, %s95
      %p99 = pneg %p93
      %p100 = scmp.eq.s32.totalorder %s9, 1
      %p101 = por %p99, %p100
      %p102 = scmp.ne.s32.totalorder %s94, %s97
      %p103 = scmp.eq.s32.totalorder %s9, 0
      %p104 = por %p102, %p103
      %p105 = scmp.ne.s32.totalorder %s94, %s97
      %p106 = scmp.eq.s32.totalorder %s14, 1
      %p107 = por %p105, %p106
      %p108 = scmp.ne.s32.totalorder %s97, %s98
      %p109 = scmp.eq.s32.totalorder %s14, 0
      %p110 = por %p108, %p109
      %p111 = scmp.ne.s32.totalorder %s97, %s98
      %p112 = scmp.eq.s32.totalorder %s15, 1
      %p113 = por %p111, %p112
      %p115 = scmp.ne.s32.totalorder %s98, %s114
      %p116 = scmp.eq.s32.totalorder %s15, 0
      %p117 = por %p115, %p116
      %s118 = ssub.s32 %s16, %s35
      %s119 = ssub.s32 %s17, %s31
      %s120 = sor.u32 %s118, %s119
      %p121 = scmp.eq.s32.totalorder %s120, 0
      %s123 = sadd.s32 %s122, 1
      %s124 = scalar_select %p121, %s122, %s123
      %p127 = pneg %p121
      %p128 = scmp.eq.s32.totalorder %s9, 1
      %p129 = por %p127, %p128
      %p130 = scmp.ne.s32.totalorder %s122, %s125
      %p131 = scmp.eq.s32.totalorder %s9, 0
      %p132 = por %p130, %p131
      %p133 = scmp.ne.s32.totalorder %s122, %s125
      %p134 = scmp.eq.s32.totalorder %s14, 1
      %p135 = por %p133, %p134
      %p136 = scmp.ne.s32.totalorder %s125, %s126
      %p137 = scmp.eq.s32.totalorder %s14, 0
      %p138 = por %p136, %p137
      %p139 = scmp.ne.s32.totalorder %s125, %s126
      %p140 = scmp.eq.s32.totalorder %s15, 1
      %p141 = por %p139, %p140
      %p143 = scmp.ne.s32.totalorder %s126, %s142
      %p144 = scmp.eq.s32.totalorder %s15, 0
      %p145 = por %p143, %p144
      %p146 = scmp.le.s32.totalorder 1, %s9
      %p147 = scmp.lt.s32.totalorder %s9, 3
      %p148 = pnand %p146, %p147
      %p149 = pneg %p148
      // Predicated region
      $region9: #{deeplab_forward.53} parent=5 // pred_check
        _
      $region10: #{deeplab_forward.53} parent=5 // pred_check_branch
        %151 = sbr.rel (%p148) target = $region12
      $region11: #{deeplab_forward.53} parent=5 // pred_region
        %s152 = ssub.s32 %s9, 1
        // Predicated region
        $region13: #{deeplab_forward.53} parent=11 // pred_check
          %p153 = pneg %p56
        $region14: #{deeplab_forward.53} parent=11 // pred_check_branch
          %155 = sbr.rel (%p153) target = $region16
        $region15: #{deeplab_forward.53} parent=11 // pred_region
          %s156 = smul.u32 2, %s19
          %p157 = scmp.lt.s32.totalorder %s156, 1
          %s158 = scalar_select %p157, %s156, 1
          %p159 = scmp.lt.s32.totalorder %s21, 0
          %s160 = scalar_select %p159, %s21, 0
          %s161 = sadd.s32 %s160, %s158
          %s162 = smul.addr %s161, 4
          %s163 = scalar_lea.vmem %s0, %s162
          %s164 = smul.u32 2, %s19
        $region16: #{deeplab_forward.53} parent=11 // pred_fallthru
          _
      $region12: #{deeplab_forward.53} parent=5 // pred_fallthru
        _
      %p165 = scmp.lt.s32.totalorder %s9, 2
      // Predicated region
      $region17: #{deeplab_forward.53} parent=5 // pred_check
        %p166 = pneg %p165
      $region18: #{deeplab_forward.53} parent=5 // pred_check_branch
        %168 = sbr.rel (%p166) target = $region20
      $region19: #{deeplab_forward.53} parent=5 // pred_region
        // Predicated region
        $region21: #{deeplab_forward.53} parent=19 // pred_check
          %p169 = pneg %p78
        $region22: #{deeplab_forward.53} parent=19 // pred_check_branch
          %171 = sbr.rel (%p169) target = $region24
        $region23: #{deeplab_forward.53} parent=19 // pred_region
          %s172 = sand.u32 %s68, 1
          %s173 = sand.u32 %s68, 1
          %s174 = smul.addr %s173, 128
          %s175 = scalar_lea.vmem [#allocation3], %s174
          %s176 = smul.u32 16, %s18
          %s177 = smul.u32 2, %s17
          %s178 = smul.addr %s176, 4
          %s179 = sadd.s32 %s177, %s178
          %s180 = smul.addr %s179, 4
          %s181 = scalar_lea.vmem %s1, %s180
          // Predicated region
          $region25: #{deeplab_forward.53} parent=23 // pred_check
            _
          $region26: #{deeplab_forward.53} parent=23 // pred_check_branch
            %183 = sbr.rel (0) target = $region28
          $region27: #{deeplab_forward.53} parent=23 // pred_region
            // Predicated region
            $region29: #{deeplab_forward.53} parent=27 // pred_check
              _
            $region30: #{deeplab_forward.53} parent=27 // pred_check_branch
              %185 = sbr.rel (0) target = $region32
            $region31: #{deeplab_forward.53} parent=27 // pred_region
              // Predicated region
              $region44: #{deeplab_forward.53} parent=31 // pred_check
                _
              $region45: #{deeplab_forward.53} parent=31 // pred_check_branch
                %230 = sbr.rel (0) target = $region47
              $region46: #{deeplab_forward.53} parent=31 // pred_region
                loop: start=0, step=1, limit=1
                $region48: #{deeplab_forward.53} parent=46 // loop_pre_header
                  _
                $region49: #{deeplab_forward.53} parent=46 // loop_header
                  %s232 = sphi 0, %s236
                  %p233 = scmp.ge.s32.totalorder %s232, 1
                  %s237 = sphi %s181, %s181
                  %s238 = sphi %s175, %s175
                $region50: #{deeplab_forward.53} parent=46 // loop_header_branch
                  %235 = sbr.rel (%p233) target = $region54
                $region51: #{deeplab_forward.53} parent=46 // loop_body
                  %v239 = vld [vmem:[%s237] sm:$0xff]
                  %240 = vst [vmem:[%s238] sm:$0xff] %v239
                  %v241 = vld [vmem:[%s237 + $0x10] sm:$0xff]
                  %242 = vst [vmem:[%s238 + $0x8] sm:$0xff] %v241
                  %v243 = vld [vmem:[%s237 + $0x20] sm:$0xff]
                  %244 = vst [vmem:[%s238 + $0x10] sm:$0xff] %v243
                  %v245 = vld [vmem:[%s237 + $0x30] sm:$0xff]
                  %246 = vst [vmem:[%s238 + $0x18] sm:$0xff] %v245
                  %v247 = vld [vmem:[%s237 + $0x40] sm:$0xff]
                  %248 = vst [vmem:[%s238 + $0x20] sm:$0xff] %v247
                  %v249 = vld [vmem:[%s237 + $0x50] sm:$0xff]
                  %250 = vst [vmem:[%s238 + $0x28] sm:$0xff] %v249
                  %v251 = vld [vmem:[%s237 + $0x60] sm:$0xff]
                  %252 = vst [vmem:[%s238 + $0x30] sm:$0xff] %v251
                  %v253 = vld [vmem:[%s237 + $0x70] sm:$0xff]
                  %254 = vst [vmem:[%s238 + $0x38] sm:$0xff] %v253
                  %v255 = vld [vmem:[%s237 + $0x80] sm:$0xff]
                  %256 = vst [vmem:[%s238 + $0x40] sm:$0xff] %v255
                  %v257 = vld [vmem:[%s237 + $0x90] sm:$0xff]
                  %258 = vst [vmem:[%s238 + $0x48] sm:$0xff] %v257
                  %v259 = vld [vmem:[%s237 + $0xa0] sm:$0xff]
                  %260 = vst [vmem:[%s238 + $0x50] sm:$0xff] %v259
                  %v261 = vld [vmem:[%s237 + $0xb0] sm:$0xff]
                  %262 = vst [vmem:[%s238 + $0x58] sm:$0xff] %v261
                  %v263 = vld [vmem:[%s237 + $0xc0] sm:$0xff]
                  %264 = vst [vmem:[%s238 + $0x60] sm:$0xff] %v263
                  %v265 = vld [vmem:[%s237 + $0xd0] sm:$0xff]
                  %266 = vst [vmem:[%s238 + $0x68] sm:$0xff] %v265
                  %v267 = vld [vmem:[%s237 + $0xe0] sm:$0xff]
                  %268 = vst [vmem:[%s238 + $0x70] sm:$0xff] %v267
                  %v269 = vld [vmem:[%s237 + $0xf0] sm:$0xff]
                  %270 = vst [vmem:[%s238 + $0x78] sm:$0xff] %v269
                $region52: #{deeplab_forward.53} parent=46 // loop_footer
                  %s236 = sadd.s32 1, %s232
                $region53: #{deeplab_forward.53} parent=46 // loop_footer_branch
                  %231 = sbr.rel target = $region49
                $region54: #{deeplab_forward.53} parent=46 // loop_exit
                  _
              $region47: #{deeplab_forward.53} parent=31 // pred_fallthru
                _
              // Predicated region
              $region55: #{deeplab_forward.53} parent=31 // pred_check
                _
              $region56: #{deeplab_forward.53} parent=31 // pred_check_branch
                %272 = sbr.rel target = $region58
              $region57: #{deeplab_forward.53} parent=31 // pred_region
                _
              $region58: #{deeplab_forward.53} parent=31 // pred_fallthru
                _
            $region32: #{deeplab_forward.53} parent=27 // pred_fallthru
              _
            // Predicated region
            $region33: #{deeplab_forward.53} parent=27 // pred_check
              _
            $region34: #{deeplab_forward.53} parent=27 // pred_check_branch
              %187 = sbr.rel target = $region36
            $region35: #{deeplab_forward.53} parent=27 // pred_region
              loop: start=0, step=1, limit=1
              $region37: #{deeplab_forward.53} parent=35 // loop_pre_header
                _
              $region38: #{deeplab_forward.53} parent=35 // loop_header
                %s190 = sphi 0, %s194
                %p191 = scmp.ge.s32.totalorder %s190, 1
                %s195 = sphi %s181, %s181
                %s196 = sphi %s175, %s175
              $region39: #{deeplab_forward.53} parent=35 // loop_header_branch
                %193 = sbr.rel (%p191) target = $region43
              $region40: #{deeplab_forward.53} parent=35 // loop_body
                %v197 = vld [vmem:[%s195] sm:$0xff]
                %198 = vst [vmem:[%s196] sm:$0xff] %v197
                %v199 = vld [vmem:[%s195 + $0x10] sm:$0xff]
                %200 = vst [vmem:[%s196 + $0x8] sm:$0xff] %v199
                %v201 = vld [vmem:[%s195 + $0x20] sm:$0xff]
                %202 = vst [vmem:[%s196 + $0x10] sm:$0xff] %v201
                %v203 = vld [vmem:[%s195 + $0x30] sm:$0xff]
                %204 = vst [vmem:[%s196 + $0x18] sm:$0xff] %v203
                %v205 = vld [vmem:[%s195 + $0x40] sm:$0xff]
                %206 = vst [vmem:[%s196 + $0x20] sm:$0xff] %v205
                %v207 = vld [vmem:[%s195 + $0x50] sm:$0xff]
                %208 = vst [vmem:[%s196 + $0x28] sm:$0xff] %v207
                %v209 = vld [vmem:[%s195 + $0x60] sm:$0xff]
                %210 = vst [vmem:[%s196 + $0x30] sm:$0xff] %v209
                %v211 = vld [vmem:[%s195 + $0x70] sm:$0xff]
                %212 = vst [vmem:[%s196 + $0x38] sm:$0xff] %v211
                %v213 = vld [vmem:[%s195 + $0x80] sm:$0xff]
                %214 = vst [vmem:[%s196 + $0x40] sm:$0xff] %v213
                %v215 = vld [vmem:[%s195 + $0x90] sm:$0xff]
                %216 = vst [vmem:[%s196 + $0x48] sm:$0xff] %v215
                %v217 = vld [vmem:[%s195 + $0xa0] sm:$0xff]
                %218 = vst [vmem:[%s196 + $0x50] sm:$0xff] %v217
                %v219 = vld [vmem:[%s195 + $0xb0] sm:$0xff]
                %220 = vst [vmem:[%s196 + $0x58] sm:$0xff] %v219
                %v221 = vld [vmem:[%s195 + $0xc0] sm:$0xff]
                %222 = vst [vmem:[%s196 + $0x60] sm:$0xff] %v221
                %v223 = vld [vmem:[%s195 + $0xd0] sm:$0xff]
                %224 = vst [vmem:[%s196 + $0x68] sm:$0xff] %v223
                %v225 = vld [vmem:[%s195 + $0xe0] sm:$0xff]
                %226 = vst [vmem:[%s196 + $0x70] sm:$0xff] %v225
                %v227 = vld [vmem:[%s195 + $0xf0] sm:$0xff]
                %228 = vst [vmem:[%s196 + $0x78] sm:$0xff] %v227
              $region41: #{deeplab_forward.53} parent=35 // loop_footer
                %s194 = sadd.s32 1, %s190
              $region42: #{deeplab_forward.53} parent=35 // loop_footer_branch
                %189 = sbr.rel target = $region38
              $region43: #{deeplab_forward.53} parent=35 // loop_exit
                _
            $region36: #{deeplab_forward.53} parent=27 // pred_fallthru
              _
          $region28: #{deeplab_forward.53} parent=23 // pred_fallthru
            _
          %273 = vnop
        $region24: #{deeplab_forward.53} parent=19 // pred_fallthru
          _
        // Predicated region
        $region59: #{deeplab_forward.53} parent=19 // pred_check
          %p274 = pneg %p104
        $region60: #{deeplab_forward.53} parent=19 // pred_check_branch
          %276 = sbr.rel (%p274) target = $region62
        $region61: #{deeplab_forward.53} parent=19 // pred_region
          %s277 = smul.u32 2, %s17
          %p278 = scmp.lt.s32.totalorder %s277, 3
          %s279 = scalar_select %p278, %s277, 3
          %s280 = scalar_lea.vmem %s2, %s279
          %s281 = smul.u32 2, %s17
        $region62: #{deeplab_forward.53} parent=19 // pred_fallthru
          _
      $region20: #{deeplab_forward.53} parent=5 // pred_fallthru
        _
      %p282 = scmp.le.s32.totalorder 1, %s9
      %p283 = scmp.lt.s32.totalorder %s9, 3
      %p284 = pnand %p282, %p283
      %p285 = pneg %p284
      // Predicated region
      $region63: #{deeplab_forward.53} parent=5 // pred_check
        _
      $region64: #{deeplab_forward.53} parent=5 // pred_check_branch
        %287 = sbr.rel (%p284) target = $region66
      $region65: #{deeplab_forward.53} parent=5 // pred_region
        %s288 = ssub.s32 %s9, 1
        %s289 = sand.u32 %s71, 1
        %s290 = sand.u32 %s71, 1
        %s291 = smul.addr %s290, 128
        %s292 = scalar_lea.vmem [#allocation3], %s291
        // Predicated region
        $region67: #{deeplab_forward.53} parent=65 // pred_check
          %p293 = pneg %p84
        $region68: #{deeplab_forward.53} parent=65 // pred_check_branch
          %295 = sbr.rel (%p293) target = $region70
        $region69: #{deeplab_forward.53} parent=65 // pred_region
          _
        $region70: #{deeplab_forward.53} parent=65 // pred_fallthru
          _
        %s296 = smul.u32 2, %s19
        %p297 = scmp.lt.s32.totalorder %s296, 1
        %s298 = scalar_select %p297, %s296, 1
        %p299 = scmp.lt.s32.totalorder %s21, 0
        %s300 = scalar_select %p299, %s21, 0
        %s301 = sadd.s32 %s300, %s298
        %s302 = smul.addr %s301, 4
        %s303 = scalar_lea.vmem %s0, %s302
        %p304 = pneg %p56
        %p305 = pneg %p53
        %s306 = sand.u32 %s71, 1
        %s307 = sand.u32 %s71, 1
        %s308 = smul.addr %s307, 128
        %s309 = scalar_lea.vmem [#allocation3], %s308
        %p310 = pneg %p84
        %p311 = pneg %p81
        %s312 = smul.u32 2, %s20
        %p313 = scmp.lt.s32.totalorder %s312, 3
        %s314 = scalar_select %p313, %s312, 3
        %s315 = scalar_lea.vmem %s2, %s314
        %p316 = pneg %p110
        %p317 = pneg %p107
        %p318 = pneg %p138
        %p319 = pneg %p135
        %s320 = sand.u32 %s125, 1
        %s321 = sand.u32 %s125, 1
        %s322 = smul.addr %s321, 16
        %s323 = scalar_lea.vmem [#allocation4], %s322
        %s324 = smul.u32 2, %s19
        %p325 = scmp.lt.s32.totalorder %s324, 1
        %s326 = scalar_select %p325, %s324, 1
        %p327 = scmp.lt.s32.totalorder %s21, 0
        %s328 = scalar_select %p327, %s21, 0
        %s329 = sadd.s32 %s328, %s326
        %s330 = smul.addr %s329, 4
        %s331 = scalar_lea.vmem %s0, %s330
        %s332 = smul.u32 2, %s19
        %s333 = smul.u32 16, %s21
        %s334 = smul.u32 2, %s20
        %s335 = smul.u32 2, %s20
        %p336 = scmp.lt.s32.totalorder %s335, 3
        %s337 = scalar_select %p336, %s335, 3
        %s338 = scalar_lea.vmem %s2, %s337
        %s339 = smul.u32 2, %s20
        %s340 = smul.u32 2, %s19
        %s341 = smul.u32 2, %s20
        %p343 = scmp.eq.s32.totalorder %s21, 0
        // Predicated region
        $region71: #{deeplab_forward.53} parent=65 // pred_check
          %p344 = pneg %p343
        $region72: #{deeplab_forward.53} parent=65 // pred_check_branch
          %346 = sbr.rel (%p344) target = $region74
        $region73: #{deeplab_forward.53} parent=65 // pred_region
          %347 = vst [vmem:[#allocation2] sm:$0xff] 0.0
          %348 = vst [vmem:[#allocation2 + $0x8] sm:$0xff] 0.0
          %349 = vst [vmem:[#allocation2 + $0x10] sm:$0xff] 0.0
          %350 = vst [vmem:[#allocation2 + $0x18] sm:$0xff] 0.0
        $region74: #{deeplab_forward.53} parent=65 // pred_fallthru
          _
        %v351 = vld [vmem:[#allocation2] sm:$0xff]
        %v352 = vld [vmem:[#allocation2 + $0x8] sm:$0xff]
        %v353 = vld [vmem:[#allocation2 + $0x10] sm:$0xff]
        %v354 = vld [vmem:[#allocation2 + $0x18] sm:$0xff]
        %v355 = vld [vmem:[%s331] sm:$0xf]
        %v356 = vld [vmem:[%s331 + $0x4] sm:$0xf]
        %v357 = vld [vmem:[%s292] sm:$0xff]
        %v358 = vld [vmem:[%s292 + $0x8] sm:$0xff]
        %v359 = vld [vmem:[%s292 + $0x10] sm:$0xff]
        %v360 = vld [vmem:[%s292 + $0x18] sm:$0xff]
        %v361 = vld [vmem:[%s292 + $0x20] sm:$0xff]
        %v362 = vld [vmem:[%s292 + $0x28] sm:$0xff]
        %v363 = vld [vmem:[%s292 + $0x30] sm:$0xff]
        %v364 = vld [vmem:[%s292 + $0x38] sm:$0xff]
        %v365 = vld [vmem:[%s292 + $0x40] sm:$0xff]
        %v366 = vld [vmem:[%s292 + $0x48] sm:$0xff]
        %v367 = vld [vmem:[%s292 + $0x50] sm:$0xff]
        %v368 = vld [vmem:[%s292 + $0x58] sm:$0xff]
        %v369 = vld [vmem:[%s292 + $0x60] sm:$0xff]
        %v370 = vld [vmem:[%s292 + $0x68] sm:$0xff]
        %v371 = vld [vmem:[%s292 + $0x70] sm:$0xff]
        %v372 = vld [vmem:[%s292 + $0x78] sm:$0xff]
        %v375 = vunpack.c.l.b16 %v355
        %v376 = vunpack.c.l.b16 %v356
        %v377 = vpack.c.b16 %v376, %v375
        %v395 = vunpack.c.l.b16 %v357
        %v396 = vunpack.c.h.b16 %v357
        %v397 = vunpack.c.l.b16 %v358
        %v398 = vunpack.c.h.b16 %v358
        %v399 = vunpack.c.l.b16 %v359
        %v400 = vunpack.c.h.b16 %v359
        %v401 = vunpack.c.l.b16 %v360
        %v402 = vunpack.c.h.b16 %v360
        %v403 = vunpack.c.l.b16 %v361
        %v404 = vunpack.c.h.b16 %v361
        %v405 = vunpack.c.l.b16 %v362
        %v406 = vunpack.c.h.b16 %v362
        %v407 = vunpack.c.l.b16 %v363
        %v408 = vunpack.c.h.b16 %v363
        %v409 = vunpack.c.l.b16 %v364
        %v410 = vunpack.c.h.b16 %v364
        %v411 = vunpack.c.l.b16 %v365
        %v412 = vunpack.c.h.b16 %v365
        %v413 = vunpack.c.l.b16 %v366
        %v414 = vunpack.c.h.b16 %v366
        %v415 = vunpack.c.l.b16 %v367
        %v416 = vunpack.c.h.b16 %v367
        %v417 = vunpack.c.l.b16 %v368
        %v418 = vunpack.c.h.b16 %v368
        %v419 = vunpack.c.l.b16 %v369
        %v420 = vunpack.c.h.b16 %v369
        %v421 = vunpack.c.l.b16 %v370
        %v422 = vunpack.c.h.b16 %v370
        %v423 = vunpack.c.l.b16 %v371
        %v424 = vunpack.c.h.b16 %v371
        %v425 = vunpack.c.l.b16 %v372
        %v426 = vunpack.c.h.b16 %v372
        %v427 = vpack.c.b16 %v397, %v395
        %v428 = vpack.c.b16 %v398, %v396
        %v429 = vpack.c.b16 %v401, %v399
        %v430 = vpack.c.b16 %v402, %v400
        %v431 = vpack.c.b16 %v405, %v403
        %v432 = vpack.c.b16 %v406, %v404
        %v433 = vpack.c.b16 %v409, %v407
        %v434 = vpack.c.b16 %v410, %v408
        %v435 = vpack.c.b16 %v413, %v411
        %v436 = vpack.c.b16 %v414, %v412
        %v437 = vpack.c.b16 %v417, %v415
        %v438 = vpack.c.b16 %v418, %v416
        %v439 = vpack.c.b16 %v421, %v419
        %v440 = vpack.c.b16 %v422, %v420
        %v441 = vpack.c.b16 %v425, %v423
        %v442 = vpack.c.b16 %v426, %v424
        %459 = vmatprep.subr.bf16.mxu0 %v428
        %460 = vmatpush1.bf16.msra.mxu0 %v427
        %461 = vmatprep.subr.bf16.mxu0 %v430
        %462 = vmatpush1.bf16.msra.mxu0 %v429
        %463 = vmatprep.subr.bf16.mxu0 %v432
        %464 = vmatpush1.bf16.msra.mxu0 %v431
        %465 = vmatprep.subr.bf16.mxu0 %v434
        %466 = vmatpush1.bf16.msra.mxu0 %v433
        %467 = vmatprep.subr.bf16.mxu0 %v436
        %468 = vmatpush1.bf16.msra.mxu0 %v435
        %469 = vmatprep.subr.bf16.mxu0 %v438
        %470 = vmatpush1.bf16.msra.mxu0 %v437
        %471 = vmatprep.subr.bf16.mxu0 %v440
        %472 = vmatpush1.bf16.msra.mxu0 %v439
        %473 = vmatprep.subr.bf16.mxu0 %v442
        %474 = vmatpush1.bf16.msra.mxu0 %v441
        %475 = vmatprep.subr.bf16.mxu0 0
        %476 = vmatpush1.bf16.msra.mxu0 0
        %477 = vmatprep.subr.bf16.mxu0 0
        %478 = vmatpush1.bf16.msra.mxu0 0
        %479 = vmatprep.subr.bf16.mxu0 0
        %480 = vmatpush1.bf16.msra.mxu0 0
        %481 = vmatprep.subr.bf16.mxu0 0
        %482 = vmatpush1.bf16.msra.mxu0 0
        %483 = vmatprep.subr.bf16.mxu0 0
        %484 = vmatpush1.bf16.msra.mxu0 0
        %485 = vmatprep.subr.bf16.mxu0 0
        %486 = vmatpush1.bf16.msra.mxu0 0
        %487 = vmatprep.subr.bf16.mxu0 0
        %488 = vmatpush1.bf16.msra.mxu0 0
        %489 = vmatprep.subr.bf16.mxu0 0
        %490 = vmatpush1.bf16.msra.mxu0 0
        %491 = vmatprep.mubr.bf16.mxu0 0
        %492 = vmatmul.mubr.bf16.gmra.mrb[0].mxu0 %v377
        %v493 = vpop.f32.mrb[0].mxu0
        %v494 = vadd.f32 0.0, %v493
        %v495 = vpop.f32.mrb[0].mxu0
        %v496 = vadd.f32 0.0, %v495
        %v497 = vpop.f32.mrb[0].mxu0
        %v498 = vadd.f32 0.0, %v497
        %v499 = vpop.f32.mrb[0].mxu0
        %v500 = vadd.f32 0.0, %v499
        %501 = vdwg.mxu0
        %v502 = vadd.f32 %v351, %v494
        %v503 = vadd.f32 %v352, %v496
        %v504 = vadd.f32 %v353, %v498
        %v505 = vadd.f32 %v354, %v500
        %506 = vst [vmem:[#allocation2] sm:$0xff] %v502
        %507 = vst [vmem:[#allocation2 + $0x8] sm:$0xff] %v503
        %508 = vst [vmem:[#allocation2 + $0x10] sm:$0xff] %v504
        %509 = vst [vmem:[#allocation2 + $0x18] sm:$0xff] %v505
        // Predicated region
        $region75: #{deeplab_forward.53} parent=65 // pred_check
          %p510 = pneg %p343
        $region76: #{deeplab_forward.53} parent=65 // pred_check_branch
          %512 = sbr.rel (%p510) target = $region78
        $region77: #{deeplab_forward.53} parent=65 // pred_region
          %v513 = vld [vmem:[#allocation2] sm:$0xff]
          %v514 = vld [vmem:[#allocation2 + $0x8] sm:$0xff]
          %v515 = vld [vmem:[#allocation2 + $0x10] sm:$0xff]
          %v516 = vld [vmem:[#allocation2 + $0x18] sm:$0xff]
          %v517 = vld [vmem:[%s338] sm:$0x3]
          %v519 = vlaneseq
          %v520 = vshrl.u32 %v519, 7
          %v521 = vsub.s32 0, %v520
          %v522 = vrot.slane %v517, %v521
          %v523 = vlaneseq
          %v524 = vshrl.u32 %v523, 7
          %v525 = vsub.s32 1, %v524
          %v526 = vrot.slane %v517, %v525
          %v529 = vadd.f32 %v513, %v522
          %v530 = vadd.f32 %v514, %v526
          %v531 = vadd.f32 %v515, %v522
          %v532 = vadd.f32 %v516, %v526
          %v533 = vpack.c.bf16 %v531, %v529
          %v534 = vpack.c.bf16 %v532, %v530
          %v537 = vunpack.c.l.b16 %v533
          %v538 = vunpack.c.l.b16 %v534
          %v539 = vunpack.c.h.b16 %v533
          %v540 = vunpack.c.h.b16 %v534
          %v541 = vpack.c.b16 %v538, %v537
          %v542 = vpack.c.b16 %v540, %v539
          %545 = vst [vmem:[%s323] sm:$0xff] %v541
          %546 = vst [vmem:[%s323 + $0x8] sm:$0xff] %v542
        $region78: #{deeplab_forward.53} parent=65 // pred_fallthru
          _
        %s547 = sand.u32 %s125, 1
        %s548 = sand.u32 %s125, 1
        %s549 = smul.addr %s548, 16
        %s550 = scalar_lea.vmem [#allocation4], %s549
        // Predicated region
        $region79: #{deeplab_forward.53} parent=65 // pred_check
          %p551 = pneg %p135
        $region80: #{deeplab_forward.53} parent=65 // pred_check_branch
          %553 = sbr.rel (%p551) target = $region82
        $region81: #{deeplab_forward.53} parent=65 // pred_region
          %s554 = smul.u32 2, %s19
          %s555 = smul.u32 2, %s20
          %s556 = smul.addr %s554, 4
          %s557 = sadd.s32 %s555, %s556
          %s558 = smul.addr %s557, 4
          %s559 = scalar_lea.vmem %s3, %s558
          // Predicated region
          $region83: #{deeplab_forward.53} parent=81 // pred_check
            _
          $region84: #{deeplab_forward.53} parent=81 // pred_check_branch
            %561 = sbr.rel (0) target = $region86
          $region85: #{deeplab_forward.53} parent=81 // pred_region
            // Predicated region
            $region87: #{deeplab_forward.53} parent=85 // pred_check
              _
            $region88: #{deeplab_forward.53} parent=85 // pred_check_branch
              %563 = sbr.rel (0) target = $region90
            $region89: #{deeplab_forward.53} parent=85 // pred_region
              // Predicated region
              $region102: #{deeplab_forward.53} parent=89 // pred_check
                _
              $region103: #{deeplab_forward.53} parent=89 // pred_check_branch
                %580 = sbr.rel (0) target = $region105
              $region104: #{deeplab_forward.53} parent=89 // pred_region
                loop: start=0, step=1, limit=1
                $region106: #{deeplab_forward.53} parent=104 // loop_pre_header
                  _
                $region107: #{deeplab_forward.53} parent=104 // loop_header
                  %s582 = sphi 0, %s586
                  %p583 = scmp.ge.s32.totalorder %s582, 1
                  %s587 = sphi %s550, %s550
                  %s588 = sphi %s559, %s559
                $region108: #{deeplab_forward.53} parent=104 // loop_header_branch
                  %585 = sbr.rel (%p583) target = $region112
                $region109: #{deeplab_forward.53} parent=104 // loop_body
                  %v589 = vld [vmem:[%s587] sm:$0xff]
                  %590 = vst [vmem:[%s588] sm:$0xff] %v589
                  %v591 = vld [vmem:[%s587 + $0x8] sm:$0xff]
                  %592 = vst [vmem:[%s588 + $0x10] sm:$0xff] %v591
                $region110: #{deeplab_forward.53} parent=104 // loop_footer
                  %s586 = sadd.s32 1, %s582
                $region111: #{deeplab_forward.53} parent=104 // loop_footer_branch
                  %581 = sbr.rel target = $region107
                $region112: #{deeplab_forward.53} parent=104 // loop_exit
                  _
              $region105: #{deeplab_forward.53} parent=89 // pred_fallthru
                _
              // Predicated region
              $region113: #{deeplab_forward.53} parent=89 // pred_check
                _
              $region114: #{deeplab_forward.53} parent=89 // pred_check_branch
                %594 = sbr.rel target = $region116
              $region115: #{deeplab_forward.53} parent=89 // pred_region
                _
              $region116: #{deeplab_forward.53} parent=89 // pred_fallthru
                _
            $region90: #{deeplab_forward.53} parent=85 // pred_fallthru
              _
            // Predicated region
            $region91: #{deeplab_forward.53} parent=85 // pred_check
              _
            $region92: #{deeplab_forward.53} parent=85 // pred_check_branch
              %565 = sbr.rel target = $region94
            $region93: #{deeplab_forward.53} parent=85 // pred_region
              loop: start=0, step=1, limit=1
              $region95: #{deeplab_forward.53} parent=93 // loop_pre_header
                _
              $region96: #{deeplab_forward.53} parent=93 // loop_header
                %s568 = sphi 0, %s572
                %p569 = scmp.ge.s32.totalorder %s568, 1
                %s573 = sphi %s550, %s550
                %s574 = sphi %s559, %s559
              $region97: #{deeplab_forward.53} parent=93 // loop_header_branch
                %571 = sbr.rel (%p569) target = $region101
              $region98: #{deeplab_forward.53} parent=93 // loop_body
                %v575 = vld [vmem:[%s573] sm:$0xff]
                %576 = vst [vmem:[%s574] sm:$0xff] %v575
                %v577 = vld [vmem:[%s573 + $0x8] sm:$0xff]
                %578 = vst [vmem:[%s574 + $0x10] sm:$0xff] %v577
              $region99: #{deeplab_forward.53} parent=93 // loop_footer
                %s572 = sadd.s32 1, %s568
              $region100: #{deeplab_forward.53} parent=93 // loop_footer_branch
                %567 = sbr.rel target = $region96
              $region101: #{deeplab_forward.53} parent=93 // loop_exit
                _
            $region94: #{deeplab_forward.53} parent=85 // pred_fallthru
              _
          $region86: #{deeplab_forward.53} parent=81 // pred_fallthru
            _
          %595 = vnop
        $region82: #{deeplab_forward.53} parent=65 // pred_fallthru
          _
      $region66: #{deeplab_forward.53} parent=5 // pred_fallthru
        _
      %p596 = scmp.le.s32.totalorder 2, %s9
      // Predicated region
      $region117: #{deeplab_forward.53} parent=5 // pred_check
        %p597 = pneg %p596
      $region118: #{deeplab_forward.53} parent=5 // pred_check_branch
        %599 = sbr.rel (%p597) target = $region120
      $region119: #{deeplab_forward.53} parent=5 // pred_region
        %s600 = ssub.s32 %s9, 2
        // Predicated region
        $region121: #{deeplab_forward.53} parent=119 // pred_check
          %p601 = pneg %p141
        $region122: #{deeplab_forward.53} parent=119 // pred_check_branch
          %603 = sbr.rel (%p601) target = $region124
        $region123: #{deeplab_forward.53} parent=119 // pred_region
          %s604 = sand.u32 %s126, 1
          %s605 = sand.u32 %s126, 1
          %s606 = smul.addr %s605, 16
          %s607 = scalar_lea.vmem [#allocation4], %s606
        $region124: #{deeplab_forward.53} parent=119 // pred_fallthru
          _
      $region120: #{deeplab_forward.53} parent=5 // pred_fallthru
        _
    $region6: #{deeplab_forward.53} parent=1 // loop_footer
      %s13 = sadd.s32 1, %s9
    $region7: #{deeplab_forward.53} parent=1 // loop_footer_branch
      %8 = sbr.rel target = $region3
    $region8: #{deeplab_forward.53} parent=1 // loop_exit
      _

// kernel: deeplab_forward.50
$region0: #{deeplab_forward.50}
  #allocation0 [shape = 'u32[]', space=smem, size = 0x4, offset = 0x4, fixed_abs, tag = 'smem constant byte address 0x4 - core index']
  #allocation1 [shape = 'u32[144,128]{1,0:T(1,128)}', space=vmem, size = 0x12000, scoped, tag = 'internal scratch']
  #allocation2 [shape = 'f32[128,128]{1,0:T(8,128)}', space=vmem, size = 0x10000, scoped, tag = 'scratch operand']
  %s0 = inlined_call_operand.vmem [shape: bf16[128,128], index: 0, kind: input, shape index: {}]
  %s1 = inlined_call_operand.vmem [shape: bf16[128,128], index: 1, kind: input, shape index: {}]
  %s2 = inlined_call_operand.vmem [shape: f32[1,128], index: 2, kind: input, shape index: {}]
  %s3 = inlined_call_operand.vmem [shape: bf16[128,128], index: 3, kind: output, shape index: {}]
  %s4 = sld [smem:[#allocation0]]
  $region30: #{deeplab_forward.50} parent=0
    _
  %s6 = ssub.s32 1, %s4
  %s7 = scalar_select 0, %s6, %s4
  // Predicated region
  $region2: #{deeplab_forward.50} parent=0 // pred_check
    _
  $region3: #{deeplab_forward.50} parent=0 // pred_check_branch
    %9 = sbr.rel (0) target = $region5
  $region4: #{deeplab_forward.50} parent=0 // pred_region
    _
  $region5: #{deeplab_forward.50} parent=0 // pred_fallthru
    _
  // Predicated region
  $region6: #{deeplab_forward.50} parent=0 // pred_check
    _
  $region7: #{deeplab_forward.50} parent=0 // pred_check_branch
    %11 = sbr.rel (0) target = $region9
  $region8: #{deeplab_forward.50} parent=0 // pred_region
    _
  $region9: #{deeplab_forward.50} parent=0 // pred_fallthru
    _
  // Predicated region
  $region10: #{deeplab_forward.50} parent=0 // pred_check
    _
  $region11: #{deeplab_forward.50} parent=0 // pred_check_branch
    %13 = sbr.rel (0) target = $region13
  $region12: #{deeplab_forward.50} parent=0 // pred_region
    _
  $region13: #{deeplab_forward.50} parent=0 // pred_fallthru
    _
  %p15 = scmp.eq.s32.totalorder 0, 0
  // Predicated region
  $region14: #{deeplab_forward.50} parent=0 // pred_check
    %p16 = pneg %p15
  $region15: #{deeplab_forward.50} parent=0 // pred_check_branch
    %18 = sbr.rel (%p16) target = $region17
  $region16: #{deeplab_forward.50} parent=0 // pred_region
    %19 = vst [vmem:[#allocation2] sm:$0xff] 0.0
    %20 = vst [vmem:[#allocation2 + $0x8] sm:$0xff] 0.0
    %21 = vst [vmem:[#allocation2 + $0x10] sm:$0xff] 0.0
    %22 = vst [vmem:[#allocation2 + $0x18] sm:$0xff] 0.0
    %23 = vst [vmem:[#allocation2 + $0x20] sm:$0xff] 0.0
    %24 = vst [vmem:[#allocation2 + $0x28] sm:$0xff] 0.0
    %25 = vst [vmem:[#allocation2 + $0x30] sm:$0xff] 0.0
    %26 = vst [vmem:[#allocation2 + $0x38] sm:$0xff] 0.0
    %27 = vst [vmem:[#allocation2 + $0x40] sm:$0xff] 0.0
    %28 = vst [vmem:[#allocation2 + $0x48] sm:$0xff] 0.0
    %29 = vst [vmem:[#allocation2 + $0x50] sm:$0xff] 0.0
    %30 = vst [vmem:[#allocation2 + $0x58] sm:$0xff] 0.0
    %31 = vst [vmem:[#allocation2 + $0x60] sm:$0xff] 0.0
    %32 = vst [vmem:[#allocation2 + $0x68] sm:$0xff] 0.0
    %33 = vst [vmem:[#allocation2 + $0x70] sm:$0xff] 0.0
    %34 = vst [vmem:[#allocation2 + $0x78] sm:$0xff] 0.0
  $region17: #{deeplab_forward.50} parent=0 // pred_fallthru
    _
  %v35 = vld [vmem:[#allocation2] sm:$0xff]
  %v36 = vld [vmem:[#allocation2 + $0x8] sm:$0xff]
  %v37 = vld [vmem:[#allocation2 + $0x10] sm:$0xff]
  %v38 = vld [vmem:[#allocation2 + $0x18] sm:$0xff]
  %v39 = vld [vmem:[#allocation2 + $0x20] sm:$0xff]
  %v40 = vld [vmem:[#allocation2 + $0x28] sm:$0xff]
  %v41 = vld [vmem:[#allocation2 + $0x30] sm:$0xff]
  %v42 = vld [vmem:[#allocation2 + $0x38] sm:$0xff]
  %v43 = vld [vmem:[#allocation2 + $0x40] sm:$0xff]
  %v44 = vld [vmem:[#allocation2 + $0x48] sm:$0xff]
  %v45 = vld [vmem:[#allocation2 + $0x50] sm:$0xff]
  %v46 = vld [vmem:[#allocation2 + $0x58] sm:$0xff]
  %v47 = vld [vmem:[#allocation2 + $0x60] sm:$0xff]
  %v48 = vld [vmem:[#allocation2 + $0x68] sm:$0xff]
  %v49 = vld [vmem:[#allocation2 + $0x70] sm:$0xff]
  %v50 = vld [vmem:[#allocation2 + $0x78] sm:$0xff]
  %v51 = vld [vmem:[%s0] sm:$0xf]
  %v52 = vld [vmem:[%s0 + $0x4] sm:$0xf]
  %v53 = vld [vmem:[%s0 + $0x8] sm:$0xf]
  %v54 = vld [vmem:[%s0 + $0xc] sm:$0xf]
  %v55 = vld [vmem:[%s0 + $0x10] sm:$0xf]
  %v56 = vld [vmem:[%s0 + $0x14] sm:$0xf]
  %v57 = vld [vmem:[%s0 + $0x18] sm:$0xf]
  %v58 = vld [vmem:[%s0 + $0x1c] sm:$0xf]
  %v59 = vld [vmem:[%s0 + $0x20] sm:$0xf]
  %v60 = vld [vmem:[%s0 + $0x24] sm:$0xf]
  %v61 = vld [vmem:[%s0 + $0x28] sm:$0xf]
  %v62 = vld [vmem:[%s0 + $0x2c] sm:$0xf]
  %v63 = vld [vmem:[%s0 + $0x30] sm:$0xf]
  %v64 = vld [vmem:[%s0 + $0x34] sm:$0xf]
  %v65 = vld [vmem:[%s0 + $0x38] sm:$0xf]
  %v66 = vld [vmem:[%s0 + $0x3c] sm:$0xf]
  %v67 = vld [vmem:[%s1] sm:$0xf]
  %v68 = vld [vmem:[%s1 + $0x4] sm:$0xf]
  %v69 = vld [vmem:[%s1 + $0x8] sm:$0xf]
  %v70 = vld [vmem:[%s1 + $0xc] sm:$0xf]
  %v71 = vld [vmem:[%s1 + $0x10] sm:$0xf]
  %v72 = vld [vmem:[%s1 + $0x14] sm:$0xf]
  %v73 = vld [vmem:[%s1 + $0x18] sm:$0xf]
  %v74 = vld [vmem:[%s1 + $0x1c] sm:$0xf]
  %v75 = vld [vmem:[%s1 + $0x20] sm:$0xf]
  %v76 = vld [vmem:[%s1 + $0x24] sm:$0xf]
  %v77 = vld [vmem:[%s1 + $0x28] sm:$0xf]
  %v78 = vld [vmem:[%s1 + $0x2c] sm:$0xf]
  %v79 = vld [vmem:[%s1 + $0x30] sm:$0xf]
  %v80 = vld [vmem:[%s1 + $0x34] sm:$0xf]
  %v81 = vld [vmem:[%s1 + $0x38] sm:$0xf]
  %v82 = vld [vmem:[%s1 + $0x3c] sm:$0xf]
  %v99 = vunpack.c.l.b16 %v51
  %v100 = vunpack.c.l.b16 %v52
  %v101 = vunpack.c.l.b16 %v53
  %v102 = vunpack.c.l.b16 %v54
  %v103 = vunpack.c.l.b16 %v55
  %v104 = vunpack.c.l.b16 %v56
  %v105 = vunpack.c.l.b16 %v57
  %v106 = vunpack.c.l.b16 %v58
  %v107 = vunpack.c.l.b16 %v59
  %v108 = vunpack.c.l.b16 %v60
  %v109 = vunpack.c.l.b16 %v61
  %v110 = vunpack.c.l.b16 %v62
  %v111 = vunpack.c.l.b16 %v63
  %v112 = vunpack.c.l.b16 %v64
  %v113 = vunpack.c.l.b16 %v65
  %v114 = vunpack.c.l.b16 %v66
  %v115 = vpack.c.b16 %v100, %v99
  %v116 = vpack.c.b16 %v102, %v101
  %v117 = vpack.c.b16 %v104, %v103
  %v118 = vpack.c.b16 %v106, %v105
  %v119 = vpack.c.b16 %v108, %v107
  %v120 = vpack.c.b16 %v110, %v109
  %v121 = vpack.c.b16 %v112, %v111
  %v122 = vpack.c.b16 %v114, %v113
  %v147 = vunpack.c.l.b16 %v67
  %v148 = vunpack.c.l.b16 %v68
  %v149 = vunpack.c.l.b16 %v69
  %v150 = vunpack.c.l.b16 %v70
  %v151 = vunpack.c.l.b16 %v71
  %v152 = vunpack.c.l.b16 %v72
  %v153 = vunpack.c.l.b16 %v73
  %v154 = vunpack.c.l.b16 %v74
  %v155 = vunpack.c.l.b16 %v75
  %v156 = vunpack.c.l.b16 %v76
  %v157 = vunpack.c.l.b16 %v77
  %v158 = vunpack.c.l.b16 %v78
  %v159 = vunpack.c.l.b16 %v79
  %v160 = vunpack.c.l.b16 %v80
  %v161 = vunpack.c.l.b16 %v81
  %v162 = vunpack.c.l.b16 %v82
  %v163 = vpack.c.b16 %v148, %v147
  %v164 = vpack.c.b16 %v150, %v149
  %v165 = vpack.c.b16 %v152, %v151
  %v166 = vpack.c.b16 %v154, %v153
  %v167 = vpack.c.b16 %v156, %v155
  %v168 = vpack.c.b16 %v158, %v157
  %v169 = vpack.c.b16 %v160, %v159
  %v170 = vpack.c.b16 %v162, %v161
  %179 = vmatprep.subr.bf16.mxu0 0
  %180 = vmatpush1.bf16.msra.mxu0 %v163
  %181 = vmatprep.subr.bf16.mxu0 0
  %182 = vmatpush1.bf16.msra.mxu0 %v164
  %183 = vmatprep.subr.bf16.mxu0 0
  %184 = vmatpush1.bf16.msra.mxu0 %v165
  %185 = vmatprep.subr.bf16.mxu0 0
  %186 = vmatpush1.bf16.msra.mxu0 %v166
  %187 = vmatprep.subr.bf16.mxu0 0
  %188 = vmatpush1.bf16.msra.mxu0 %v167
  %189 = vmatprep.subr.bf16.mxu0 0
  %190 = vmatpush1.bf16.msra.mxu0 %v168
  %191 = vmatprep.subr.bf16.mxu0 0
  %192 = vmatpush1.bf16.msra.mxu0 %v169
  %193 = vmatprep.subr.bf16.mxu0 0
  %194 = vmatpush1.bf16.msra.mxu0 %v170
  %195 = vmatprep.subr.bf16.mxu0 0
  %196 = vmatpush1.bf16.msra.mxu0 0
  %197 = vmatprep.subr.bf16.mxu0 0
  %198 = vmatpush1.bf16.msra.mxu0 0
  %199 = vmatprep.subr.bf16.mxu0 0
  %200 = vmatpush1.bf16.msra.mxu0 0
  %201 = vmatprep.subr.bf16.mxu0 0
  %202 = vmatpush1.bf16.msra.mxu0 0
  %203 = vmatprep.subr.bf16.mxu0 0
  %204 = vmatpush1.bf16.msra.mxu0 0
  %205 = vmatprep.subr.bf16.mxu0 0
  %206 = vmatpush1.bf16.msra.mxu0 0
  %207 = vmatprep.subr.bf16.mxu0 0
  %208 = vmatpush1.bf16.msra.mxu0 0
  %209 = vmatprep.subr.bf16.mxu0 0
  %210 = vmatpush1.bf16.msra.mxu0 0
  %211 = vmatprep.mubr.bf16.mxu0 0
  %212 = vmatmul.mubr.bf16.gmra.mrb[0].mxu0 %v115
  %v213 = vpop.f32.mrb[0].mxu0
  %v214 = vadd.f32 0.0, %v213
  %v215 = vpop.f32.mrb[0].mxu0
  %v216 = vpop.f32.mrb[0].mxu0
  %v217 = vadd.f32 0.0, %v216
  %v218 = vpop.f32.mrb[0].mxu0
  %219 = vmatprep.mubr.bf16.mxu0 0
  %220 = vmatmul.mubr.bf16.gmra.mrb[0].mxu0 %v116
  %v221 = vpop.f32.mrb[0].mxu0
  %v222 = vadd.f32 0.0, %v221
  %v223 = vpop.f32.mrb[0].mxu0
  %v224 = vpop.f32.mrb[0].mxu0
  %v225 = vadd.f32 0.0, %v224
  %v226 = vpop.f32.mrb[0].mxu0
  %227 = vmatprep.mubr.bf16.mxu0 0
  %228 = vmatmul.mubr.bf16.gmra.mrb[0].mxu0 %v117
  %v229 = vpop.f32.mrb[0].mxu0
  %v230 = vadd.f32 0.0, %v229
  %v231 = vpop.f32.mrb[0].mxu0
  %v232 = vpop.f32.mrb[0].mxu0
  %v233 = vadd.f32 0.0, %v232
  %v234 = vpop.f32.mrb[0].mxu0
  %235 = vmatprep.mubr.bf16.mxu0 0
  %236 = vmatmul.mubr.bf16.gmra.mrb[0].mxu0 %v118
  %v237 = vpop.f32.mrb[0].mxu0
  %v238 = vadd.f32 0.0, %v237
  %v239 = vpop.f32.mrb[0].mxu0
  %v240 = vpop.f32.mrb[0].mxu0
  %v241 = vadd.f32 0.0, %v240
  %v242 = vpop.f32.mrb[0].mxu0
  %243 = vmatprep.mubr.bf16.mxu0 0
  %244 = vmatmul.mubr.bf16.gmra.mrb[0].mxu0 %v119
  %v245 = vpop.f32.mrb[0].mxu0
  %v246 = vadd.f32 0.0, %v245
  %v247 = vpop.f32.mrb[0].mxu0
  %v248 = vpop.f32.mrb[0].mxu0
  %v249 = vadd.f32 0.0, %v248
  %v250 = vpop.f32.mrb[0].mxu0
  %251 = vmatprep.mubr.bf16.mxu0 0
  %252 = vmatmul.mubr.bf16.gmra.mrb[0].mxu0 %v120
  %v253 = vpop.f32.mrb[0].mxu0
  %v254 = vadd.f32 0.0, %v253
  %v255 = vpop.f32.mrb[0].mxu0
  %v256 = vpop.f32.mrb[0].mxu0
  %v257 = vadd.f32 0.0, %v256
  %v258 = vpop.f32.mrb[0].mxu0
  %259 = vmatprep.mubr.bf16.mxu0 0
  %260 = vmatmul.mubr.bf16.gmra.mrb[0].mxu0 %v121
  %v261 = vpop.f32.mrb[0].mxu0
  %v262 = vadd.f32 0.0, %v261
  %v263 = vpop.f32.mrb[0].mxu0
  %v264 = vpop.f32.mrb[0].mxu0
  %v265 = vadd.f32 0.0, %v264
  %v266 = vpop.f32.mrb[0].mxu0
  %267 = vmatprep.mubr.bf16.mxu0 0
  %268 = vmatmul.mubr.bf16.gmra.mrb[0].mxu0 %v122
  %v269 = vpop.f32.mrb[0].mxu0
  %v270 = vadd.f32 0.0, %v269
  %v271 = vpop.f32.mrb[0].mxu0
  %v272 = vpop.f32.mrb[0].mxu0
  %v273 = vadd.f32 0.0, %v272
  %v274 = vpop.f32.mrb[0].mxu0
  %275 = vdwg.mxu0
  %v276 = vadd.f32 %v35, %v214
  %v277 = vadd.f32 %v36, %v217
  %v278 = vadd.f32 %v37, %v222
  %v279 = vadd.f32 %v38, %v225
  %v280 = vadd.f32 %v39, %v230
  %v281 = vadd.f32 %v40, %v233
  %v282 = vadd.f32 %v41, %v238
  %v283 = vadd.f32 %v42, %v241
  %v284 = vadd.f32 %v43, %v246
  %v285 = vadd.f32 %v44, %v249
  %v286 = vadd.f32 %v45, %v254
  %v287 = vadd.f32 %v46, %v257
  %v288 = vadd.f32 %v47, %v262
  %v289 = vadd.f32 %v48, %v265
  %v290 = vadd.f32 %v49, %v270
  %v291 = vadd.f32 %v50, %v273
  %292 = vst [vmem:[#allocation2] sm:$0xff] %v276
  %293 = vst [vmem:[#allocation2 + $0x8] sm:$0xff] %v277
  %294 = vst [vmem:[#allocation2 + $0x10] sm:$0xff] %v278
  %295 = vst [vmem:[#allocation2 + $0x18] sm:$0xff] %v279
  %296 = vst [vmem:[#allocation2 + $0x20] sm:$0xff] %v280
  %297 = vst [vmem:[#allocation2 + $0x28] sm:$0xff] %v281
  %298 = vst [vmem:[#allocation2 + $0x30] sm:$0xff] %v282
  %299 = vst [vmem:[#allocation2 + $0x38] sm:$0xff] %v283
  %300 = vst [vmem:[#allocation2 + $0x40] sm:$0xff] %v284
  %301 = vst [vmem:[#allocation2 + $0x48] sm:$0xff] %v285
  %302 = vst [vmem:[#allocation2 + $0x50] sm:$0xff] %v286
  %303 = vst [vmem:[#allocation2 + $0x58] sm:$0xff] %v287
  %304 = vst [vmem:[#allocation2 + $0x60] sm:$0xff] %v288
  %305 = vst [vmem:[#allocation2 + $0x68] sm:$0xff] %v289
  %306 = vst [vmem:[#allocation2 + $0x70] sm:$0xff] %v290
  %307 = vst [vmem:[#allocation2 + $0x78] sm:$0xff] %v291
  // Predicated region
  $region18: #{deeplab_forward.50} parent=0 // pred_check
    %p308 = pneg %p15
  $region19: #{deeplab_forward.50} parent=0 // pred_check_branch
    %310 = sbr.rel (%p308) target = $region21
  $region20: #{deeplab_forward.50} parent=0 // pred_region
    %v311 = vld [vmem:[#allocation2] sm:$0xff]
    %v312 = vld [vmem:[#allocation2 + $0x8] sm:$0xff]
    %v313 = vld [vmem:[#allocation2 + $0x10] sm:$0xff]
    %v314 = vld [vmem:[#allocation2 + $0x18] sm:$0xff]
    %v315 = vld [vmem:[#allocation2 + $0x20] sm:$0xff]
    %v316 = vld [vmem:[#allocation2 + $0x28] sm:$0xff]
    %v317 = vld [vmem:[#allocation2 + $0x30] sm:$0xff]
    %v318 = vld [vmem:[#allocation2 + $0x38] sm:$0xff]
    %v319 = vld [vmem:[#allocation2 + $0x40] sm:$0xff]
    %v320 = vld [vmem:[#allocation2 + $0x48] sm:$0xff]
    %v321 = vld [vmem:[#allocation2 + $0x50] sm:$0xff]
    %v322 = vld [vmem:[#allocation2 + $0x58] sm:$0xff]
    %v323 = vld [vmem:[#allocation2 + $0x60] sm:$0xff]
    %v324 = vld [vmem:[#allocation2 + $0x68] sm:$0xff]
    %v325 = vld [vmem:[#allocation2 + $0x70] sm:$0xff]
    %v326 = vld [vmem:[#allocation2 + $0x78] sm:$0xff]
    %v327 = vld [vmem:[%s2] sm:$0x1]
    %v329 = vlaneseq
    %v330 = vshrl.u32 %v329, 7
    %v331 = vsub.s32 0, %v330
    %v332 = vrot.slane %v327, %v331
    %v334 = vadd.f32 %v311, %v332
    %v335 = vadd.f32 %v312, %v332
    %v336 = vadd.f32 %v313, %v332
    %v337 = vadd.f32 %v314, %v332
    %v338 = vadd.f32 %v315, %v332
    %v339 = vadd.f32 %v316, %v332
    %v340 = vadd.f32 %v317, %v332
    %v341 = vadd.f32 %v318, %v332
    %v342 = vadd.f32 %v319, %v332
    %v343 = vadd.f32 %v320, %v332
    %v344 = vadd.f32 %v321, %v332
    %v345 = vadd.f32 %v322, %v332
    %v346 = vadd.f32 %v323, %v332
    %v347 = vadd.f32 %v324, %v332
    %v348 = vadd.f32 %v325, %v332
    %v349 = vadd.f32 %v326, %v332
    %v350 = vpack.c.bf16 %v335, %v334
    %v351 = vpack.c.bf16 %v337, %v336
    %v352 = vpack.c.bf16 %v339, %v338
    %v353 = vpack.c.bf16 %v341, %v340
    %v354 = vpack.c.bf16 %v343, %v342
    %v355 = vpack.c.bf16 %v345, %v344
    %v356 = vpack.c.bf16 %v347, %v346
    %v357 = vpack.c.bf16 %v349, %v348
    %v366 = vunpack.c.l.b16 %v350
    %v367 = vunpack.c.h.b16 %v350
    %v368 = vunpack.c.l.b16 %v351
    %v369 = vunpack.c.h.b16 %v351
    %v370 = vunpack.c.l.b16 %v352
    %v371 = vunpack.c.h.b16 %v352
    %v372 = vunpack.c.l.b16 %v353
    %v373 = vunpack.c.h.b16 %v353
    %v374 = vunpack.c.l.b16 %v354
    %v375 = vunpack.c.h.b16 %v354
    %v376 = vunpack.c.l.b16 %v355
    %v377 = vunpack.c.h.b16 %v355
    %v378 = vunpack.c.l.b16 %v356
    %v379 = vunpack.c.h.b16 %v356
    %v380 = vunpack.c.l.b16 %v357
    %v381 = vunpack.c.h.b16 %v357
    %v382 = vpack.c.b16 %v366, %v366
    %v383 = vpack.c.b16 %v367, %v367
    %v384 = vpack.c.b16 %v368, %v368
    %v385 = vpack.c.b16 %v369, %v369
    %v386 = vpack.c.b16 %v370, %v370
    %v387 = vpack.c.b16 %v371, %v371
    %v388 = vpack.c.b16 %v372, %v372
    %v389 = vpack.c.b16 %v373, %v373
    %v390 = vpack.c.b16 %v374, %v374
    %v391 = vpack.c.b16 %v375, %v375
    %v392 = vpack.c.b16 %v376, %v376
    %v393 = vpack.c.b16 %v377, %v377
    %v394 = vpack.c.b16 %v378, %v378
    %v395 = vpack.c.b16 %v379, %v379
    %v396 = vpack.c.b16 %v380, %v380
    %v397 = vpack.c.b16 %v381, %v381
    %414 = vst [vmem:[%s3] sm:$0xf] %v382
    %415 = vst [vmem:[%s3 + $0x4] sm:$0xf] %v383
    %416 = vst [vmem:[%s3 + $0x8] sm:$0xf] %v384
    %417 = vst [vmem:[%s3 + $0xc] sm:$0xf] %v385
    %418 = vst [vmem:[%s3 + $0x10] sm:$0xf] %v386
    %419 = vst [vmem:[%s3 + $0x14] sm:$0xf] %v387
    %420 = vst [vmem:[%s3 + $0x18] sm:$0xf] %v388
    %421 = vst [vmem:[%s3 + $0x1c] sm:$0xf] %v389
    %422 = vst [vmem:[%s3 + $0x20] sm:$0xf] %v390
    %423 = vst [vmem:[%s3 + $0x24] sm:$0xf] %v391
    %424 = vst [vmem:[%s3 + $0x28] sm:$0xf] %v392
    %425 = vst [vmem:[%s3 + $0x2c] sm:$0xf] %v393
    %426 = vst [vmem:[%s3 + $0x30] sm:$0xf] %v394
    %427 = vst [vmem:[%s3 + $0x34] sm:$0xf] %v395
    %428 = vst [vmem:[%s3 + $0x38] sm:$0xf] %v396
    %429 = vst [vmem:[%s3 + $0x3c] sm:$0xf] %v397
  $region21: #{deeplab_forward.50} parent=0 // pred_fallthru
    _
  // Predicated region
  $region22: #{deeplab_forward.50} parent=0 // pred_check
    _
  $region23: #{deeplab_forward.50} parent=0 // pred_check_branch
    %431 = sbr.rel (0) target = $region25
  $region24: #{deeplab_forward.50} parent=0 // pred_region
    _
  $region25: #{deeplab_forward.50} parent=0 // pred_fallthru
    _
  // Predicated region
  $region26: #{deeplab_forward.50} parent=0 // pred_check
    _
  $region27: #{deeplab_forward.50} parent=0 // pred_check_branch
    %433 = sbr.rel (0) target = $region29
  $region28: #{deeplab_forward.50} parent=0 // pred_region
    _
  $region29: #{deeplab_forward.50} parent=0 // pred_fallthru
    _

// kernel: deeplab_forward.54
$region0: #{deeplab_forward.54}
  #allocation0 [shape = 'u32[]', space=smem, size = 0x4, offset = 0x4, fixed_abs, tag = 'smem constant byte address 0x4 - core index']
  #allocation1 [shape = 'u32[144,128]{1,0:T(1,128)}', space=vmem, size = 0x12000, scoped, tag = 'internal scratch']
  #allocation2 [shape = 'f32[128,128]{1,0:T(8,128)}', space=vmem, size = 0x10000, scoped, tag = 'scratch operand']
  %s0 = inlined_call_operand.vmem [shape: bf16[128,128], index: 0, kind: input, shape index: {}]
  %s1 = inlined_call_operand.vmem [shape: bf16[128,128], index: 1, kind: input, shape index: {}]
  %s2 = inlined_call_operand.vmem [shape: f32[1,128], index: 2, kind: input, shape index: {}]
  %s3 = inlined_call_operand.vmem [shape: bf16[128,128], index: 3, kind: output, shape index: {}]
  %s4 = sld [smem:[#allocation0]]
  $region30: #{deeplab_forward.54} parent=0
    _
  %s6 = ssub.s32 1, %s4
  %s7 = scalar_select 0, %s6, %s4
  // Predicated region
  $region2: #{deeplab_forward.54} parent=0 // pred_check
    _
  $region3: #{deeplab_forward.54} parent=0 // pred_check_branch
    %9 = sbr.rel (0) target = $region5
  $region4: #{deeplab_forward.54} parent=0 // pred_region
    _
  $region5: #{deeplab_forward.54} parent=0 // pred_fallthru
    _
  // Predicated region
  $region6: #{deeplab_forward.54} parent=0 // pred_check
    _
  $region7: #{deeplab_forward.54} parent=0 // pred_check_branch
    %11 = sbr.rel (0) target = $region9
  $region8: #{deeplab_forward.54} parent=0 // pred_region
    _
  $region9: #{deeplab_forward.54} parent=0 // pred_fallthru
    _
  // Predicated region
  $region10: #{deeplab_forward.54} parent=0 // pred_check
    _
  $region11: #{deeplab_forward.54} parent=0 // pred_check_branch
    %13 = sbr.rel (0) target = $region13
  $region12: #{deeplab_forward.54} parent=0 // pred_region
    _
  $region13: #{deeplab_forward.54} parent=0 // pred_fallthru
    _
  %p15 = scmp.eq.s32.totalorder 0, 0
  // Predicated region
  $region14: #{deeplab_forward.54} parent=0 // pred_check
    %p16 = pneg %p15
  $region15: #{deeplab_forward.54} parent=0 // pred_check_branch
    %18 = sbr.rel (%p16) target = $region17
  $region16: #{deeplab_forward.54} parent=0 // pred_region
    %19 = vst [vmem:[#allocation2] sm:$0xff] 0.0
    %20 = vst [vmem:[#allocation2 + $0x8] sm:$0xff] 0.0
    %21 = vst [vmem:[#allocation2 + $0x10] sm:$0xff] 0.0
    %22 = vst [vmem:[#allocation2 + $0x18] sm:$0xff] 0.0
    %23 = vst [vmem:[#allocation2 + $0x20] sm:$0xff] 0.0
    %24 = vst [vmem:[#allocation2 + $0x28] sm:$0xff] 0.0
    %25 = vst [vmem:[#allocation2 + $0x30] sm:$0xff] 0.0
    %26 = vst [vmem:[#allocation2 + $0x38] sm:$0xff] 0.0
    %27 = vst [vmem:[#allocation2 + $0x40] sm:$0xff] 0.0
    %28 = vst [vmem:[#allocation2 + $0x48] sm:$0xff] 0.0
    %29 = vst [vmem:[#allocation2 + $0x50] sm:$0xff] 0.0
    %30 = vst [vmem:[#allocation2 + $0x58] sm:$0xff] 0.0
    %31 = vst [vmem:[#allocation2 + $0x60] sm:$0xff] 0.0
    %32 = vst [vmem:[#allocation2 + $0x68] sm:$0xff] 0.0
    %33 = vst [vmem:[#allocation2 + $0x70] sm:$0xff] 0.0
    %34 = vst [vmem:[#allocation2 + $0x78] sm:$0xff] 0.0
  $region17: #{deeplab_forward.54} parent=0 // pred_fallthru
    _
  %v35 = vld [vmem:[#allocation2] sm:$0xff]
  %v36 = vld [vmem:[#allocation2 + $0x8] sm:$0xff]
  %v37 = vld [vmem:[#allocation2 + $0x10] sm:$0xff]
  %v38 = vld [vmem:[#allocation2 + $0x18] sm:$0xff]
  %v39 = vld [vmem:[#allocation2 + $0x20] sm:$0xff]
  %v40 = vld [vmem:[#allocation2 + $0x28] sm:$0xff]
  %v41 = vld [vmem:[#allocation2 + $0x30] sm:$0xff]
  %v42 = vld [vmem:[#allocation2 + $0x38] sm:$0xff]
  %v43 = vld [vmem:[#allocation2 + $0x40] sm:$0xff]
  %v44 = vld [vmem:[#allocation2 + $0x48] sm:$0xff]
  %v45 = vld [vmem:[#allocation2 + $0x50] sm:$0xff]
  %v46 = vld [vmem:[#allocation2 + $0x58] sm:$0xff]
  %v47 = vld [vmem:[#allocation2 + $0x60] sm:$0xff]
  %v48 = vld [vmem:[#allocation2 + $0x68] sm:$0xff]
  %v49 = vld [vmem:[#allocation2 + $0x70] sm:$0xff]
  %v50 = vld [vmem:[#allocation2 + $0x78] sm:$0xff]
  %v51 = vld [vmem:[%s0] sm:$0xf]
  %v52 = vld [vmem:[%s0 + $0x4] sm:$0xf]
  %v53 = vld [vmem:[%s0 + $0x8] sm:$0xf]
  %v54 = vld [vmem:[%s0 + $0xc] sm:$0xf]
  %v55 = vld [vmem:[%s0 + $0x10] sm:$0xf]
  %v56 = vld [vmem:[%s0 + $0x14] sm:$0xf]
  %v57 = vld [vmem:[%s0 + $0x18] sm:$0xf]
  %v58 = vld [vmem:[%s0 + $0x1c] sm:$0xf]
  %v59 = vld [vmem:[%s0 + $0x20] sm:$0xf]
  %v60 = vld [vmem:[%s0 + $0x24] sm:$0xf]
  %v61 = vld [vmem:[%s0 + $0x28] sm:$0xf]
  %v62 = vld [vmem:[%s0 + $0x2c] sm:$0xf]
  %v63 = vld [vmem:[%s0 + $0x30] sm:$0xf]
  %v64 = vld [vmem:[%s0 + $0x34] sm:$0xf]
  %v65 = vld [vmem:[%s0 + $0x38] sm:$0xf]
  %v66 = vld [vmem:[%s0 + $0x3c] sm:$0xf]
  %v67 = vld [vmem:[%s1] sm:$0xf]
  %v68 = vld [vmem:[%s1 + $0x4] sm:$0xf]
  %v69 = vld [vmem:[%s1 + $0x8] sm:$0xf]
  %v70 = vld [vmem:[%s1 + $0xc] sm:$0xf]
  %v71 = vld [vmem:[%s1 + $0x10] sm:$0xf]
  %v72 = vld [vmem:[%s1 + $0x14] sm:$0xf]
  %v73 = vld [vmem:[%s1 + $0x18] sm:$0xf]
  %v74 = vld [vmem:[%s1 + $0x1c] sm:$0xf]
  %v75 = vld [vmem:[%s1 + $0x20] sm:$0xf]
  %v76 = vld [vmem:[%s1 + $0x24] sm:$0xf]
  %v77 = vld [vmem:[%s1 + $0x28] sm:$0xf]
  %v78 = vld [vmem:[%s1 + $0x2c] sm:$0xf]
  %v79 = vld [vmem:[%s1 + $0x30] sm:$0xf]
  %v80 = vld [vmem:[%s1 + $0x34] sm:$0xf]
  %v81 = vld [vmem:[%s1 + $0x38] sm:$0xf]
  %v82 = vld [vmem:[%s1 + $0x3c] sm:$0xf]
  %v99 = vunpack.c.l.b16 %v51
  %v100 = vunpack.c.l.b16 %v52
  %v101 = vunpack.c.l.b16 %v53
  %v102 = vunpack.c.l.b16 %v54
  %v103 = vunpack.c.l.b16 %v55
  %v104 = vunpack.c.l.b16 %v56
  %v105 = vunpack.c.l.b16 %v57
  %v106 = vunpack.c.l.b16 %v58
  %v107 = vunpack.c.l.b16 %v59
  %v108 = vunpack.c.l.b16 %v60
  %v109 = vunpack.c.l.b16 %v61
  %v110 = vunpack.c.l.b16 %v62
  %v111 = vunpack.c.l.b16 %v63
  %v112 = vunpack.c.l.b16 %v64
  %v113 = vunpack.c.l.b16 %v65
  %v114 = vunpack.c.l.b16 %v66
  %v115 = vpack.c.b16 %v100, %v99
  %v116 = vpack.c.b16 %v102, %v101
  %v117 = vpack.c.b16 %v104, %v103
  %v118 = vpack.c.b16 %v106, %v105
  %v119 = vpack.c.b16 %v108, %v107
  %v120 = vpack.c.b16 %v110, %v109
  %v121 = vpack.c.b16 %v112, %v111
  %v122 = vpack.c.b16 %v114, %v113
  %v147 = vunpack.c.l.b16 %v67
  %v148 = vunpack.c.l.b16 %v68
  %v149 = vunpack.c.l.b16 %v69
  %v150 = vunpack.c.l.b16 %v70
  %v151 = vunpack.c.l.b16 %v71
  %v152 = vunpack.c.l.b16 %v72
  %v153 = vunpack.c.l.b16 %v73
  %v154 = vunpack.c.l.b16 %v74
  %v155 = vunpack.c.l.b16 %v75
  %v156 = vunpack.c.l.b16 %v76
  %v157 = vunpack.c.l.b16 %v77
  %v158 = vunpack.c.l.b16 %v78
  %v159 = vunpack.c.l.b16 %v79
  %v160 = vunpack.c.l.b16 %v80
  %v161 = vunpack.c.l.b16 %v81
  %v162 = vunpack.c.l.b16 %v82
  %v163 = vpack.c.b16 %v148, %v147
  %v164 = vpack.c.b16 %v150, %v149
  %v165 = vpack.c.b16 %v152, %v151
  %v166 = vpack.c.b16 %v154, %v153
  %v167 = vpack.c.b16 %v156, %v155
  %v168 = vpack.c.b16 %v158, %v157
  %v169 = vpack.c.b16 %v160, %v159
  %v170 = vpack.c.b16 %v162, %v161
  %179 = vmatprep.subr.bf16.mxu0 0
  %180 = vmatpush1.bf16.msra.mxu0 %v163
  %181 = vmatprep.subr.bf16.mxu0 0
  %182 = vmatpush1.bf16.msra.mxu0 %v164
  %183 = vmatprep.subr.bf16.mxu0 0
  %184 = vmatpush1.bf16.msra.mxu0 %v165
  %185 = vmatprep.subr.bf16.mxu0 0
  %186 = vmatpush1.bf16.msra.mxu0 %v166
  %187 = vmatprep.subr.bf16.mxu0 0
  %188 = vmatpush1.bf16.msra.mxu0 %v167
  %189 = vmatprep.subr.bf16.mxu0 0
  %190 = vmatpush1.bf16.msra.mxu0 %v168
  %191 = vmatprep.subr.bf16.mxu0 0
  %192 = vmatpush1.bf16.msra.mxu0 %v169
  %193 = vmatprep.subr.bf16.mxu0 0
  %194 = vmatpush1.bf16.msra.mxu0 %v170
  %195 = vmatprep.subr.bf16.mxu0 0
  %196 = vmatpush1.bf16.msra.mxu0 0
  %197 = vmatprep.subr.bf16.mxu0 0
  %198 = vmatpush1.bf16.msra.mxu0 0
  %199 = vmatprep.subr.bf16.mxu0 0
  %200 = vmatpush1.bf16.msra.mxu0 0
  %201 = vmatprep.subr.bf16.mxu0 0
  %202 = vmatpush1.bf16.msra.mxu0 0
  %203 = vmatprep.subr.bf16.mxu0 0
  %204 = vmatpush1.bf16.msra.mxu0 0
  %205 = vmatprep.subr.bf16.mxu0 0
  %206 = vmatpush1.bf16.msra.mxu0 0
  %207 = vmatprep.subr.bf16.mxu0 0
  %208 = vmatpush1.bf16.msra.mxu0 0
  %209 = vmatprep.subr.bf16.mxu0 0
  %210 = vmatpush1.bf16.msra.mxu0 0
  %211 = vmatprep.mubr.bf16.mxu0 0
  %212 = vmatmul.mubr.bf16.gmra.mrb[0].mxu0 %v115
  %v213 = vpop.f32.mrb[0].mxu0
  %v214 = vadd.f32 0.0, %v213
  %v215 = vpop.f32.mrb[0].mxu0
  %v216 = vpop.f32.mrb[0].mxu0
  %v217 = vadd.f32 0.0, %v216
  %v218 = vpop.f32.mrb[0].mxu0
  %219 = vmatprep.mubr.bf16.mxu0 0
  %220 = vmatmul.mubr.bf16.gmra.mrb[0].mxu0 %v116
  %v221 = vpop.f32.mrb[0].mxu0
  %v222 = vadd.f32 0.0, %v221
  %v223 = vpop.f32.mrb[0].mxu0
  %v224 = vpop.f32.mrb[0].mxu0
  %v225 = vadd.f32 0.0, %v224
  %v226 = vpop.f32.mrb[0].mxu0
  %227 = vmatprep.mubr.bf16.mxu0 0
  %228 = vmatmul.mubr.bf16.gmra.mrb[0].mxu0 %v117
  %v229 = vpop.f32.mrb[0].mxu0
  %v230 = vadd.f32 0.0, %v229
  %v231 = vpop.f32.mrb[0].mxu0
  %v232 = vpop.f32.mrb[0].mxu0
  %v233 = vadd.f32 0.0, %v232
  %v234 = vpop.f32.mrb[0].mxu0
  %235 = vmatprep.mubr.bf16.mxu0 0
  %236 = vmatmul.mubr.bf16.gmra.mrb[0].mxu0 %v118
  %v237 = vpop.f32.mrb[0].mxu0
  %v238 = vadd.f32 0.0, %v237
  %v239 = vpop.f32.mrb[0].mxu0
  %v240 = vpop.f32.mrb[0].mxu0
  %v241 = vadd.f32 0.0, %v240
  %v242 = vpop.f32.mrb[0].mxu0
  %243 = vmatprep.mubr.bf16.mxu0 0
  %244 = vmatmul.mubr.bf16.gmra.mrb[0].mxu0 %v119
  %v245 = vpop.f32.mrb[0].mxu0
  %v246 = vadd.f32 0.0, %v245
  %v247 = vpop.f32.mrb[0].mxu0
  %v248 = vpop.f32.mrb[0].mxu0
  %v249 = vadd.f32 0.0, %v248
  %v250 = vpop.f32.mrb[0].mxu0
  %251 = vmatprep.mubr.bf16.mxu0 0
  %252 = vmatmul.mubr.bf16.gmra.mrb[0].mxu0 %v120
  %v253 = vpop.f32.mrb[0].mxu0
  %v254 = vadd.f32 0.0, %v253
  %v255 = vpop.f32.mrb[0].mxu0
  %v256 = vpop.f32.mrb[0].mxu0
  %v257 = vadd.f32 0.0, %v256
  %v258 = vpop.f32.mrb[0].mxu0
  %259 = vmatprep.mubr.bf16.mxu0 0
  %260 = vmatmul.mubr.bf16.gmra.mrb[0].mxu0 %v121
  %v261 = vpop.f32.mrb[0].mxu0
  %v262 = vadd.f32 0.0, %v261
  %v263 = vpop.f32.mrb[0].mxu0
  %v264 = vpop.f32.mrb[0].mxu0
  %v265 = vadd.f32 0.0, %v264
  %v266 = vpop.f32.mrb[0].mxu0
  %267 = vmatprep.mubr.bf16.mxu0 0
  %268 = vmatmul.mubr.bf16.gmra.mrb[0].mxu0 %v122
  %v269 = vpop.f32.mrb[0].mxu0
  %v270 = vadd.f32 0.0, %v269
  %v271 = vpop.f32.mrb[0].mxu0
  %v272 = vpop.f32.mrb[0].mxu0
  %v273 = vadd.f32 0.0, %v272
  %v274 = vpop.f32.mrb[0].mxu0
  %275 = vdwg.mxu0
  %v276 = vadd.f32 %v35, %v214
  %v277 = vadd.f32 %v36, %v217
  %v278 = vadd.f32 %v37, %v222
  %v279 = vadd.f32 %v38, %v225
  %v280 = vadd.f32 %v39, %v230
  %v281 = vadd.f32 %v40, %v233
  %v282 = vadd.f32 %v41, %v238
  %v283 = vadd.f32 %v42, %v241
  %v284 = vadd.f32 %v43, %v246
  %v285 = vadd.f32 %v44, %v249
  %v286 = vadd.f32 %v45, %v254
  %v287 = vadd.f32 %v46, %v257
  %v288 = vadd.f32 %v47, %v262
  %v289 = vadd.f32 %v48, %v265
  %v290 = vadd.f32 %v49, %v270
  %v291 = vadd.f32 %v50, %v273
  %292 = vst [vmem:[#allocation2] sm:$0xff] %v276
  %293 = vst [vmem:[#allocation2 + $0x8] sm:$0xff] %v277
  %294 = vst [vmem:[#allocation2 + $0x10] sm:$0xff] %v278
  %295 = vst [vmem:[#allocation2 + $0x18] sm:$0xff] %v279
  %296 = vst [vmem:[#allocation2 + $0x20] sm:$0xff] %v280
  %297 = vst [vmem:[#allocation2 + $0x28] sm:$0xff] %v281
  %298 = vst [vmem:[#allocation2 + $0x30] sm:$0xff] %v282
  %299 = vst [vmem:[#allocation2 + $0x38] sm:$0xff] %v283
  %300 = vst [vmem:[#allocation2 + $0x40] sm:$0xff] %v284
  %301 = vst [vmem:[#allocation2 + $0x48] sm:$0xff] %v285
  %302 = vst [vmem:[#allocation2 + $0x50] sm:$0xff] %v286
  %303 = vst [vmem:[#allocation2 + $0x58] sm:$0xff] %v287
  %304 = vst [vmem:[#allocation2 + $0x60] sm:$0xff] %v288
  %305 = vst [vmem:[#allocation2 + $0x68] sm:$0xff] %v289
  %306 = vst [vmem:[#allocation2 + $0x70] sm:$0xff] %v290
  %307 = vst [vmem:[#allocation2 + $0x78] sm:$0xff] %v291
  // Predicated region
  $region18: #{deeplab_forward.54} parent=0 // pred_check
    %p308 = pneg %p15
  $region19: #{deeplab_forward.54} parent=0 // pred_check_branch
    %310 = sbr.rel (%p308) target = $region21
  $region20: #{deeplab_forward.54} parent=0 // pred_region
    %v311 = vld [vmem:[#allocation2] sm:$0xff]
    %v312 = vld [vmem:[#allocation2 + $0x8] sm:$0xff]
    %v313 = vld [vmem:[#allocation2 + $0x10] sm:$0xff]
    %v314 = vld [vmem:[#allocation2 + $0x18] sm:$0xff]
    %v315 = vld [vmem:[#allocation2 + $0x20] sm:$0xff]
    %v316 = vld [vmem:[#allocation2 + $0x28] sm:$0xff]
    %v317 = vld [vmem:[#allocation2 + $0x30] sm:$0xff]
    %v318 = vld [vmem:[#allocation2 + $0x38] sm:$0xff]
    %v319 = vld [vmem:[#allocation2 + $0x40] sm:$0xff]
    %v320 = vld [vmem:[#allocation2 + $0x48] sm:$0xff]
    %v321 = vld [vmem:[#allocation2 + $0x50] sm:$0xff]
    %v322 = vld [vmem:[#allocation2 + $0x58] sm:$0xff]
    %v323 = vld [vmem:[#allocation2 + $0x60] sm:$0xff]
    %v324 = vld [vmem:[#allocation2 + $0x68] sm:$0xff]
    %v325 = vld [vmem:[#allocation2 + $0x70] sm:$0xff]
    %v326 = vld [vmem:[#allocation2 + $0x78] sm:$0xff]
    %v327 = vld [vmem:[%s2] sm:$0x1]
    %v329 = vlaneseq
    %v330 = vshrl.u32 %v329, 7
    %v331 = vsub.s32 0, %v330
    %v332 = vrot.slane %v327, %v331
    %v334 = vadd.f32 %v311, %v332
    %v335 = vadd.f32 %v312, %v332
    %v336 = vadd.f32 %v313, %v332
    %v337 = vadd.f32 %v314, %v332
    %v338 = vadd.f32 %v315, %v332
    %v339 = vadd.f32 %v316, %v332
    %v340 = vadd.f32 %v317, %v332
    %v341 = vadd.f32 %v318, %v332
    %v342 = vadd.f32 %v319, %v332
    %v343 = vadd.f32 %v320, %v332
    %v344 = vadd.f32 %v321, %v332
    %v345 = vadd.f32 %v322, %v332
    %v346 = vadd.f32 %v323, %v332
    %v347 = vadd.f32 %v324, %v332
    %v348 = vadd.f32 %v325, %v332
    %v349 = vadd.f32 %v326, %v332
    %v350 = vmax.f32 %v334, 0.0
    %v351 = vmax.f32 %v335, 0.0
    %v352 = vmax.f32 %v336, 0.0
    %v353 = vmax.f32 %v337, 0.0
    %v354 = vmax.f32 %v338, 0.0
    %v355 = vmax.f32 %v339, 0.0
    %v356 = vmax.f32 %v340, 0.0
    %v357 = vmax.f32 %v341, 0.0
    %v358 = vmax.f32 %v342, 0.0
    %v359 = vmax.f32 %v343, 0.0
    %v360 = vmax.f32 %v344, 0.0
    %v361 = vmax.f32 %v345, 0.0
    %v362 = vmax.f32 %v346, 0.0
    %v363 = vmax.f32 %v347, 0.0
    %v364 = vmax.f32 %v348, 0.0
    %v365 = vmax.f32 %v349, 0.0
    %v366 = vpack.c.bf16 %v351, %v350
    %v367 = vpack.c.bf16 %v353, %v352
    %v368 = vpack.c.bf16 %v355, %v354
    %v369 = vpack.c.bf16 %v357, %v356
    %v370 = vpack.c.bf16 %v359, %v358
    %v371 = vpack.c.bf16 %v361, %v360
    %v372 = vpack.c.bf16 %v363, %v362
    %v373 = vpack.c.bf16 %v365, %v364
    %v382 = vunpack.c.l.b16 %v366
    %v383 = vunpack.c.h.b16 %v366
    %v384 = vunpack.c.l.b16 %v367
    %v385 = vunpack.c.h.b16 %v367
    %v386 = vunpack.c.l.b16 %v368
    %v387 = vunpack.c.h.b16 %v368
    %v388 = vunpack.c.l.b16 %v369
    %v389 = vunpack.c.h.b16 %v369
    %v390 = vunpack.c.l.b16 %v370
    %v391 = vunpack.c.h.b16 %v370
    %v392 = vunpack.c.l.b16 %v371
    %v393 = vunpack.c.h.b16 %v371
    %v394 = vunpack.c.l.b16 %v372
    %v395 = vunpack.c.h.b16 %v372
    %v396 = vunpack.c.l.b16 %v373
    %v397 = vunpack.c.h.b16 %v373
    %v398 = vpack.c.b16 %v382, %v382
    %v399 = vpack.c.b16 %v383, %v383
    %v400 = vpack.c.b16 %v384, %v384
    %v401 = vpack.c.b16 %v385, %v385
    %v402 = vpack.c.b16 %v386, %v386
    %v403 = vpack.c.b16 %v387, %v387
    %v404 = vpack.c.b16 %v388, %v388
    %v405 = vpack.c.b16 %v389, %v389
    %v406 = vpack.c.b16 %v390, %v390
    %v407 = vpack.c.b16 %v391, %v391
    %v408 = vpack.c.b16 %v392, %v392
    %v409 = vpack.c.b16 %v393, %v393
    %v410 = vpack.c.b16 %v394, %v394
    %v411 = vpack.c.b16 %v395, %v395
    %v412 = vpack.c.b16 %v396, %v396
    %v413 = vpack.c.b16 %v397, %v397
    %430 = vst [vmem:[%s3] sm:$0xf] %v398
    %431 = vst [vmem:[%s3 + $0x4] sm:$0xf] %v399
    %432 = vst [vmem:[%s3 + $0x8] sm:$0xf] %v400
    %433 = vst [vmem:[%s3 + $0xc] sm:$0xf] %v401
    %434 = vst [vmem:[%s3 + $0x10] sm:$0xf] %v402
    %435 = vst [vmem:[%s3 + $0x14] sm:$0xf] %v403
    %436 = vst [vmem:[%s3 + $0x18] sm:$0xf] %v404
    %437 = vst [vmem:[%s3 + $0x1c] sm:$0xf] %v405
    %438 = vst [vmem:[%s3 + $0x20] sm:$0xf] %v406
    %439 = vst [vmem:[%s3 + $0x24] sm:$0xf] %v407
    %440 = vst [vmem:[%s3 + $0x28] sm:$0xf] %v408
    %441 = vst [vmem:[%s3 + $0x2c] sm:$0xf] %v409
    %442 = vst [vmem:[%s3 + $0x30] sm:$0xf] %v410
    %443 = vst [vmem:[%s3 + $0x34] sm:$0xf] %v411
    %444 = vst [vmem:[%s3 + $0x38] sm:$0xf] %v412
    %445 = vst [vmem:[%s3 + $0x3c] sm:$0xf] %v413
  $region21: #{deeplab_forward.54} parent=0 // pred_fallthru
    _
  // Predicated region
  $region22: #{deeplab_forward.54} parent=0 // pred_check
    _
  $region23: #{deeplab_forward.54} parent=0 // pred_check_branch
    %447 = sbr.rel (0) target = $region25
  $region24: #{deeplab_forward.54} parent=0 // pred_region
    _
  $region25: #{deeplab_forward.54} parent=0 // pred_fallthru
    _
  // Predicated region
  $region26: #{deeplab_forward.54} parent=0 // pred_check
    _
  $region27: #{deeplab_forward.54} parent=0 // pred_check_branch
    %449 = sbr.rel (0) target = $region29
  $region28: #{deeplab_forward.54} parent=0 // pred_region
    _
  $region29: #{deeplab_forward.54} parent=0 // pred_fallthru
    _

// kernel: deeplab_forward.55
$region0: #{deeplab_forward.55}
  #allocation0 [shape = 'u32[]', space=smem, size = 0x4, offset = 0x4, fixed_abs, tag = 'smem constant byte address 0x4 - core index']
  #allocation1 [shape = 'u32[144,128]{1,0:T(1,128)}', space=vmem, size = 0x12000, scoped, tag = 'internal scratch']
  #allocation2 [shape = 'f32[128,128]{1,0:T(8,128)}', space=vmem, size = 0x10000, scoped, tag = 'scratch operand']
  %s0 = inlined_call_operand.vmem [shape: bf16[128,512], index: 0, kind: input, shape index: {}]
  %s1 = inlined_call_operand.vmem [shape: bf16[512,128], index: 1, kind: input, shape index: {}]
  %s2 = inlined_call_operand.vmem [shape: f32[1,128], index: 2, kind: input, shape index: {}]
  %s3 = inlined_call_operand.vmem [shape: bf16[128,128], index: 3, kind: output, shape index: {}]
  %s4 = sld [smem:[#allocation0]]
  $region30: #{deeplab_forward.55} parent=0
    _
  %s6 = ssub.s32 1, %s4
  %s7 = scalar_select 0, %s6, %s4
  // Predicated region
  $region2: #{deeplab_forward.55} parent=0 // pred_check
    _
  $region3: #{deeplab_forward.55} parent=0 // pred_check_branch
    %9 = sbr.rel (0) target = $region5
  $region4: #{deeplab_forward.55} parent=0 // pred_region
    _
  $region5: #{deeplab_forward.55} parent=0 // pred_fallthru
    _
  // Predicated region
  $region6: #{deeplab_forward.55} parent=0 // pred_check
    _
  $region7: #{deeplab_forward.55} parent=0 // pred_check_branch
    %11 = sbr.rel (0) target = $region9
  $region8: #{deeplab_forward.55} parent=0 // pred_region
    _
  $region9: #{deeplab_forward.55} parent=0 // pred_fallthru
    _
  // Predicated region
  $region10: #{deeplab_forward.55} parent=0 // pred_check
    _
  $region11: #{deeplab_forward.55} parent=0 // pred_check_branch
    %13 = sbr.rel (0) target = $region13
  $region12: #{deeplab_forward.55} parent=0 // pred_region
    _
  $region13: #{deeplab_forward.55} parent=0 // pred_fallthru
    _
  %p15 = scmp.eq.s32.totalorder 0, 0
  // Predicated region
  $region14: #{deeplab_forward.55} parent=0 // pred_check
    %p16 = pneg %p15
  $region15: #{deeplab_forward.55} parent=0 // pred_check_branch
    %18 = sbr.rel (%p16) target = $region17
  $region16: #{deeplab_forward.55} parent=0 // pred_region
    %19 = vst [vmem:[#allocation2] sm:$0xff] 0.0
    %20 = vst [vmem:[#allocation2 + $0x8] sm:$0xff] 0.0
    %21 = vst [vmem:[#allocation2 + $0x10] sm:$0xff] 0.0
    %22 = vst [vmem:[#allocation2 + $0x18] sm:$0xff] 0.0
    %23 = vst [vmem:[#allocation2 + $0x20] sm:$0xff] 0.0
    %24 = vst [vmem:[#allocation2 + $0x28] sm:$0xff] 0.0
    %25 = vst [vmem:[#allocation2 + $0x30] sm:$0xff] 0.0
    %26 = vst [vmem:[#allocation2 + $0x38] sm:$0xff] 0.0
    %27 = vst [vmem:[#allocation2 + $0x40] sm:$0xff] 0.0
    %28 = vst [vmem:[#allocation2 + $0x48] sm:$0xff] 0.0
    %29 = vst [vmem:[#allocation2 + $0x50] sm:$0xff] 0.0
    %30 = vst [vmem:[#allocation2 + $0x58] sm:$0xff] 0.0
    %31 = vst [vmem:[#allocation2 + $0x60] sm:$0xff] 0.0
    %32 = vst [vmem:[#allocation2 + $0x68] sm:$0xff] 0.0
    %33 = vst [vmem:[#allocation2 + $0x70] sm:$0xff] 0.0
    %34 = vst [vmem:[#allocation2 + $0x78] sm:$0xff] 0.0
  $region17: #{deeplab_forward.55} parent=0 // pred_fallthru
    _
  %v35 = vld [vmem:[#allocation2] sm:$0xff]
  %v36 = vld [vmem:[#allocation2 + $0x8] sm:$0xff]
  %v37 = vld [vmem:[#allocation2 + $0x10] sm:$0xff]
  %v38 = vld [vmem:[#allocation2 + $0x18] sm:$0xff]
  %v39 = vld [vmem:[#allocation2 + $0x20] sm:$0xff]
  %v40 = vld [vmem:[#allocation2 + $0x28] sm:$0xff]
  %v41 = vld [vmem:[#allocation2 + $0x30] sm:$0xff]
  %v42 = vld [vmem:[#allocation2 + $0x38] sm:$0xff]
  %v43 = vld [vmem:[#allocation2 + $0x40] sm:$0xff]
  %v44 = vld [vmem:[#allocation2 + $0x48] sm:$0xff]
  %v45 = vld [vmem:[#allocation2 + $0x50] sm:$0xff]
  %v46 = vld [vmem:[#allocation2 + $0x58] sm:$0xff]
  %v47 = vld [vmem:[#allocation2 + $0x60] sm:$0xff]
  %v48 = vld [vmem:[#allocation2 + $0x68] sm:$0xff]
  %v49 = vld [vmem:[#allocation2 + $0x70] sm:$0xff]
  %v50 = vld [vmem:[#allocation2 + $0x78] sm:$0xff]
  %v51 = vld [vmem:[%s0] sm:$0xff]
  %v52 = vld [vmem:[%s0 + $0x8] sm:$0xff]
  %v53 = vld [vmem:[%s0 + $0x10] sm:$0xff]
  %v54 = vld [vmem:[%s0 + $0x18] sm:$0xff]
  %v55 = vld [vmem:[%s0 + $0x20] sm:$0xff]
  %v56 = vld [vmem:[%s0 + $0x28] sm:$0xff]
  %v57 = vld [vmem:[%s0 + $0x30] sm:$0xff]
  %v58 = vld [vmem:[%s0 + $0x38] sm:$0xff]
  %v59 = vld [vmem:[%s0 + $0x40] sm:$0xff]
  %v60 = vld [vmem:[%s0 + $0x48] sm:$0xff]
  %v61 = vld [vmem:[%s0 + $0x50] sm:$0xff]
  %v62 = vld [vmem:[%s0 + $0x58] sm:$0xff]
  %v63 = vld [vmem:[%s0 + $0x60] sm:$0xff]
  %v64 = vld [vmem:[%s0 + $0x68] sm:$0xff]
  %v65 = vld [vmem:[%s0 + $0x70] sm:$0xff]
  %v66 = vld [vmem:[%s0 + $0x78] sm:$0xff]
  %v67 = vld [vmem:[%s0 + $0x80] sm:$0xff]
  %v68 = vld [vmem:[%s0 + $0x88] sm:$0xff]
  %v69 = vld [vmem:[%s0 + $0x90] sm:$0xff]
  %v70 = vld [vmem:[%s0 + $0x98] sm:$0xff]
  %v71 = vld [vmem:[%s0 + $0xa0] sm:$0xff]
  %v72 = vld [vmem:[%s0 + $0xa8] sm:$0xff]
  %v73 = vld [vmem:[%s0 + $0xb0] sm:$0xff]
  %v74 = vld [vmem:[%s0 + $0xb8] sm:$0xff]
  %v75 = vld [vmem:[%s0 + $0xc0] sm:$0xff]
  %v76 = vld [vmem:[%s0 + $0xc8] sm:$0xff]
  %v77 = vld [vmem:[%s0 + $0xd0] sm:$0xff]
  %v78 = vld [vmem:[%s0 + $0xd8] sm:$0xff]
  %v79 = vld [vmem:[%s0 + $0xe0] sm:$0xff]
  %v80 = vld [vmem:[%s0 + $0xe8] sm:$0xff]
  %v81 = vld [vmem:[%s0 + $0xf0] sm:$0xff]
  %v82 = vld [vmem:[%s0 + $0xf8] sm:$0xff]
  %v83 = vld [vmem:[%s1] sm:$0xf]
  %v84 = vld [vmem:[%s1 + $0x4] sm:$0xf]
  %v85 = vld [vmem:[%s1 + $0x8] sm:$0xf]
  %v86 = vld [vmem:[%s1 + $0xc] sm:$0xf]
  %v87 = vld [vmem:[%s1 + $0x10] sm:$0xf]
  %v88 = vld [vmem:[%s1 + $0x14] sm:$0xf]
  %v89 = vld [vmem:[%s1 + $0x18] sm:$0xf]
  %v90 = vld [vmem:[%s1 + $0x1c] sm:$0xf]
  %v91 = vld [vmem:[%s1 + $0x20] sm:$0xf]
  %v92 = vld [vmem:[%s1 + $0x24] sm:$0xf]
  %v93 = vld [vmem:[%s1 + $0x28] sm:$0xf]
  %v94 = vld [vmem:[%s1 + $0x2c] sm:$0xf]
  %v95 = vld [vmem:[%s1 + $0x30] sm:$0xf]
  %v96 = vld [vmem:[%s1 + $0x34] sm:$0xf]
  %v97 = vld [vmem:[%s1 + $0x38] sm:$0xf]
  %v98 = vld [vmem:[%s1 + $0x3c] sm:$0xf]
  %v99 = vld [vmem:[%s1 + $0x40] sm:$0xf]
  %v100 = vld [vmem:[%s1 + $0x44] sm:$0xf]
  %v101 = vld [vmem:[%s1 + $0x48] sm:$0xf]
  %v102 = vld [vmem:[%s1 + $0x4c] sm:$0xf]
  %v103 = vld [vmem:[%s1 + $0x50] sm:$0xf]
  %v104 = vld [vmem:[%s1 + $0x54] sm:$0xf]
  %v105 = vld [vmem:[%s1 + $0x58] sm:$0xf]
  %v106 = vld [vmem:[%s1 + $0x5c] sm:$0xf]
  %v107 = vld [vmem:[%s1 + $0x60] sm:$0xf]
  %v108 = vld [vmem:[%s1 + $0x64] sm:$0xf]
  %v109 = vld [vmem:[%s1 + $0x68] sm:$0xf]
  %v110 = vld [vmem:[%s1 + $0x6c] sm:$0xf]
  %v111 = vld [vmem:[%s1 + $0x70] sm:$0xf]
  %v112 = vld [vmem:[%s1 + $0x74] sm:$0xf]
  %v113 = vld [vmem:[%s1 + $0x78] sm:$0xf]
  %v114 = vld [vmem:[%s1 + $0x7c] sm:$0xf]
  %v115 = vld [vmem:[%s1 + $0x80] sm:$0xf]
  %v116 = vld [vmem:[%s1 + $0x84] sm:$0xf]
  %v117 = vld [vmem:[%s1 + $0x88] sm:$0xf]
  %v118 = vld [vmem:[%s1 + $0x8c] sm:$0xf]
  %v119 = vld [vmem:[%s1 + $0x90] sm:$0xf]
  %v120 = vld [vmem:[%s1 + $0x94] sm:$0xf]
  %v121 = vld [vmem:[%s1 + $0x98] sm:$0xf]
  %v122 = vld [vmem:[%s1 + $0x9c] sm:$0xf]
  %v123 = vld [vmem:[%s1 + $0xa0] sm:$0xf]
  %v124 = vld [vmem:[%s1 + $0xa4] sm:$0xf]
  %v125 = vld [vmem:[%s1 + $0xa8] sm:$0xf]
  %v126 = vld [vmem:[%s1 + $0xac] sm:$0xf]
  %v127 = vld [vmem:[%s1 + $0xb0] sm:$0xf]
  %v128 = vld [vmem:[%s1 + $0xb4] sm:$0xf]
  %v129 = vld [vmem:[%s1 + $0xb8] sm:$0xf]
  %v130 = vld [vmem:[%s1 + $0xbc] sm:$0xf]
  %v131 = vld [vmem:[%s1 + $0xc0] sm:$0xf]
  %v132 = vld [vmem:[%s1 + $0xc4] sm:$0xf]
  %v133 = vld [vmem:[%s1 + $0xc8] sm:$0xf]
  %v134 = vld [vmem:[%s1 + $0xcc] sm:$0xf]
  %v135 = vld [vmem:[%s1 + $0xd0] sm:$0xf]
  %v136 = vld [vmem:[%s1 + $0xd4] sm:$0xf]
  %v137 = vld [vmem:[%s1 + $0xd8] sm:$0xf]
  %v138 = vld [vmem:[%s1 + $0xdc] sm:$0xf]
  %v139 = vld [vmem:[%s1 + $0xe0] sm:$0xf]
  %v140 = vld [vmem:[%s1 + $0xe4] sm:$0xf]
  %v141 = vld [vmem:[%s1 + $0xe8] sm:$0xf]
  %v142 = vld [vmem:[%s1 + $0xec] sm:$0xf]
  %v143 = vld [vmem:[%s1 + $0xf0] sm:$0xf]
  %v144 = vld [vmem:[%s1 + $0xf4] sm:$0xf]
  %v145 = vld [vmem:[%s1 + $0xf8] sm:$0xf]
  %v146 = vld [vmem:[%s1 + $0xfc] sm:$0xf]
  %v179 = vunpack.c.l.b16 %v51
  %v180 = vunpack.c.h.b16 %v51
  %v181 = vunpack.c.l.b16 %v52
  %v182 = vunpack.c.h.b16 %v52
  %v183 = vunpack.c.l.b16 %v53
  %v184 = vunpack.c.h.b16 %v53
  %v185 = vunpack.c.l.b16 %v54
  %v186 = vunpack.c.h.b16 %v54
  %v187 = vunpack.c.l.b16 %v55
  %v188 = vunpack.c.h.b16 %v55
  %v189 = vunpack.c.l.b16 %v56
  %v190 = vunpack.c.h.b16 %v56
  %v191 = vunpack.c.l.b16 %v57
  %v192 = vunpack.c.h.b16 %v57
  %v193 = vunpack.c.l.b16 %v58
  %v194 = vunpack.c.h.b16 %v58
  %v195 = vunpack.c.l.b16 %v59
  %v196 = vunpack.c.h.b16 %v59
  %v197 = vunpack.c.l.b16 %v60
  %v198 = vunpack.c.h.b16 %v60
  %v199 = vunpack.c.l.b16 %v61
  %v200 = vunpack.c.h.b16 %v61
  %v201 = vunpack.c.l.b16 %v62
  %v202 = vunpack.c.h.b16 %v62
  %v203 = vunpack.c.l.b16 %v63
  %v204 = vunpack.c.h.b16 %v63
  %v205 = vunpack.c.l.b16 %v64
  %v206 = vunpack.c.h.b16 %v64
  %v207 = vunpack.c.l.b16 %v65
  %v208 = vunpack.c.h.b16 %v65
  %v209 = vunpack.c.l.b16 %v66
  %v210 = vunpack.c.h.b16 %v66
  %v211 = vunpack.c.l.b16 %v67
  %v212 = vunpack.c.h.b16 %v67
  %v213 = vunpack.c.l.b16 %v68
  %v214 = vunpack.c.h.b16 %v68
  %v215 = vunpack.c.l.b16 %v69
  %v216 = vunpack.c.h.b16 %v69
  %v217 = vunpack.c.l.b16 %v70
  %v218 = vunpack.c.h.b16 %v70
  %v219 = vunpack.c.l.b16 %v71
  %v220 = vunpack.c.h.b16 %v71
  %v221 = vunpack.c.l.b16 %v72
  %v222 = vunpack.c.h.b16 %v72
  %v223 = vunpack.c.l.b16 %v73
  %v224 = vunpack.c.h.b16 %v73
  %v225 = vunpack.c.l.b16 %v74
  %v226 = vunpack.c.h.b16 %v74
  %v227 = vunpack.c.l.b16 %v75
  %v228 = vunpack.c.h.b16 %v75
  %v229 = vunpack.c.l.b16 %v76
  %v230 = vunpack.c.h.b16 %v76
  %v231 = vunpack.c.l.b16 %v77
  %v232 = vunpack.c.h.b16 %v77
  %v233 = vunpack.c.l.b16 %v78
  %v234 = vunpack.c.h.b16 %v78
  %v235 = vunpack.c.l.b16 %v79
  %v236 = vunpack.c.h.b16 %v79
  %v237 = vunpack.c.l.b16 %v80
  %v238 = vunpack.c.h.b16 %v80
  %v239 = vunpack.c.l.b16 %v81
  %v240 = vunpack.c.h.b16 %v81
  %v241 = vunpack.c.l.b16 %v82
  %v242 = vunpack.c.h.b16 %v82
  %v243 = vpack.c.b16 %v183, %v179
  %v244 = vpack.c.b16 %v184, %v180
  %v245 = vpack.c.b16 %v185, %v181
  %v246 = vpack.c.b16 %v186, %v182
  %v247 = vpack.c.b16 %v191, %v187
  %v248 = vpack.c.b16 %v192, %v188
  %v249 = vpack.c.b16 %v193, %v189
  %v250 = vpack.c.b16 %v194, %v190
  %v251 = vpack.c.b16 %v199, %v195
  %v252 = vpack.c.b16 %v200, %v196
  %v253 = vpack.c.b16 %v201, %v197
  %v254 = vpack.c.b16 %v202, %v198
  %v255 = vpack.c.b16 %v207, %v203
  %v256 = vpack.c.b16 %v208, %v204
  %v257 = vpack.c.b16 %v209, %v205
  %v258 = vpack.c.b16 %v210, %v206
  %v259 = vpack.c.b16 %v215, %v211
  %v260 = vpack.c.b16 %v216, %v212
  %v261 = vpack.c.b16 %v217, %v213
  %v262 = vpack.c.b16 %v218, %v214
  %v263 = vpack.c.b16 %v223, %v219
  %v264 = vpack.c.b16 %v224, %v220
  %v265 = vpack.c.b16 %v225, %v221
  %v266 = vpack.c.b16 %v226, %v222
  %v267 = vpack.c.b16 %v231, %v227
  %v268 = vpack.c.b16 %v232, %v228
  %v269 = vpack.c.b16 %v233, %v229
  %v270 = vpack.c.b16 %v234, %v230
  %v271 = vpack.c.b16 %v239, %v235
  %v272 = vpack.c.b16 %v240, %v236
  %v273 = vpack.c.b16 %v241, %v237
  %v274 = vpack.c.b16 %v242, %v238
  %v371 = vunpack.c.l.b16 %v83
  %v372 = vunpack.c.l.b16 %v84
  %v373 = vunpack.c.l.b16 %v85
  %v374 = vunpack.c.l.b16 %v86
  %v375 = vunpack.c.l.b16 %v87
  %v376 = vunpack.c.l.b16 %v88
  %v377 = vunpack.c.l.b16 %v89
  %v378 = vunpack.c.l.b16 %v90
  %v379 = vunpack.c.l.b16 %v91
  %v380 = vunpack.c.l.b16 %v92
  %v381 = vunpack.c.l.b16 %v93
  %v382 = vunpack.c.l.b16 %v94
  %v383 = vunpack.c.l.b16 %v95
  %v384 = vunpack.c.l.b16 %v96
  %v385 = vunpack.c.l.b16 %v97
  %v386 = vunpack.c.l.b16 %v98
  %v387 = vunpack.c.l.b16 %v99
  %v388 = vunpack.c.l.b16 %v100
  %v389 = vunpack.c.l.b16 %v101
  %v390 = vunpack.c.l.b16 %v102
  %v391 = vunpack.c.l.b16 %v103
  %v392 = vunpack.c.l.b16 %v104
  %v393 = vunpack.c.l.b16 %v105
  %v394 = vunpack.c.l.b16 %v106
  %v395 = vunpack.c.l.b16 %v107
  %v396 = vunpack.c.l.b16 %v108
  %v397 = vunpack.c.l.b16 %v109
  %v398 = vunpack.c.l.b16 %v110
  %v399 = vunpack.c.l.b16 %v111
  %v400 = vunpack.c.l.b16 %v112
  %v401 = vunpack.c.l.b16 %v113
  %v402 = vunpack.c.l.b16 %v114
  %v403 = vunpack.c.l.b16 %v115
  %v404 = vunpack.c.l.b16 %v116
  %v405 = vunpack.c.l.b16 %v117
  %v406 = vunpack.c.l.b16 %v118
  %v407 = vunpack.c.l.b16 %v119
  %v408 = vunpack.c.l.b16 %v120
  %v409 = vunpack.c.l.b16 %v121
  %v410 = vunpack.c.l.b16 %v122
  %v411 = vunpack.c.l.b16 %v123
  %v412 = vunpack.c.l.b16 %v124
  %v413 = vunpack.c.l.b16 %v125
  %v414 = vunpack.c.l.b16 %v126
  %v415 = vunpack.c.l.b16 %v127
  %v416 = vunpack.c.l.b16 %v128
  %v417 = vunpack.c.l.b16 %v129
  %v418 = vunpack.c.l.b16 %v130
  %v419 = vunpack.c.l.b16 %v131
  %v420 = vunpack.c.l.b16 %v132
  %v421 = vunpack.c.l.b16 %v133
  %v422 = vunpack.c.l.b16 %v134
  %v423 = vunpack.c.l.b16 %v135
  %v424 = vunpack.c.l.b16 %v136
  %v425 = vunpack.c.l.b16 %v137
  %v426 = vunpack.c.l.b16 %v138
  %v427 = vunpack.c.l.b16 %v139
  %v428 = vunpack.c.l.b16 %v140
  %v429 = vunpack.c.l.b16 %v141
  %v430 = vunpack.c.l.b16 %v142
  %v431 = vunpack.c.l.b16 %v143
  %v432 = vunpack.c.l.b16 %v144
  %v433 = vunpack.c.l.b16 %v145
  %v434 = vunpack.c.l.b16 %v146
  %v435 = vpack.c.b16 %v372, %v371
  %v436 = vpack.c.b16 %v374, %v373
  %v437 = vpack.c.b16 %v376, %v375
  %v438 = vpack.c.b16 %v378, %v377
  %v439 = vpack.c.b16 %v380, %v379
  %v440 = vpack.c.b16 %v382, %v381
  %v441 = vpack.c.b16 %v384, %v383
  %v442 = vpack.c.b16 %v386, %v385
  %v443 = vpack.c.b16 %v388, %v387
  %v444 = vpack.c.b16 %v390, %v389
  %v445 = vpack.c.b16 %v392, %v391
  %v446 = vpack.c.b16 %v394, %v393
  %v447 = vpack.c.b16 %v396, %v395
  %v448 = vpack.c.b16 %v398, %v397
  %v449 = vpack.c.b16 %v400, %v399
  %v450 = vpack.c.b16 %v402, %v401
  %v451 = vpack.c.b16 %v404, %v403
  %v452 = vpack.c.b16 %v406, %v405
  %v453 = vpack.c.b16 %v408, %v407
  %v454 = vpack.c.b16 %v410, %v409
  %v455 = vpack.c.b16 %v412, %v411
  %v456 = vpack.c.b16 %v414, %v413
  %v457 = vpack.c.b16 %v416, %v415
  %v458 = vpack.c.b16 %v418, %v417
  %v459 = vpack.c.b16 %v420, %v419
  %v460 = vpack.c.b16 %v422, %v421
  %v461 = vpack.c.b16 %v424, %v423
  %v462 = vpack.c.b16 %v426, %v425
  %v463 = vpack.c.b16 %v428, %v427
  %v464 = vpack.c.b16 %v430, %v429
  %v465 = vpack.c.b16 %v432, %v431
  %v466 = vpack.c.b16 %v434, %v433
  %499 = vmatprep.subr.bf16.mxu0 0
  %500 = vmatpush1.bf16.msra.mxu0 %v435
  %501 = vmatprep.subr.bf16.mxu0 0
  %502 = vmatpush1.bf16.msra.mxu0 %v436
  %503 = vmatprep.subr.bf16.mxu0 0
  %504 = vmatpush1.bf16.msra.mxu0 %v437
  %505 = vmatprep.subr.bf16.mxu0 0
  %506 = vmatpush1.bf16.msra.mxu0 %v438
  %507 = vmatprep.subr.bf16.mxu0 0
  %508 = vmatpush1.bf16.msra.mxu0 %v439
  %509 = vmatprep.subr.bf16.mxu0 0
  %510 = vmatpush1.bf16.msra.mxu0 %v440
  %511 = vmatprep.subr.bf16.mxu0 0
  %512 = vmatpush1.bf16.msra.mxu0 %v441
  %513 = vmatprep.subr.bf16.mxu0 0
  %514 = vmatpush1.bf16.msra.mxu0 %v442
  %515 = vmatprep.subr.bf16.mxu0 0
  %516 = vmatpush1.bf16.msra.mxu0 %v443
  %517 = vmatprep.subr.bf16.mxu0 0
  %518 = vmatpush1.bf16.msra.mxu0 %v444
  %519 = vmatprep.subr.bf16.mxu0 0
  %520 = vmatpush1.bf16.msra.mxu0 %v445
  %521 = vmatprep.subr.bf16.mxu0 0
  %522 = vmatpush1.bf16.msra.mxu0 %v446
  %523 = vmatprep.subr.bf16.mxu0 0
  %524 = vmatpush1.bf16.msra.mxu0 %v447
  %525 = vmatprep.subr.bf16.mxu0 0
  %526 = vmatpush1.bf16.msra.mxu0 %v448
  %527 = vmatprep.subr.bf16.mxu0 0
  %528 = vmatpush1.bf16.msra.mxu0 %v449
  %529 = vmatprep.subr.bf16.mxu0 0
  %530 = vmatpush1.bf16.msra.mxu0 %v450
  %531 = vmatprep.mubr.bf16.mxu0 %v244
  %532 = vmatmul.mubr.bf16.gmra.mrb[0].mxu0 %v243
  %v533 = vpop.f32.mrb[0].mxu0
  %v534 = vadd.f32 0.0, %v533
  %v535 = vpop.f32.mrb[0].mxu0
  %v536 = vpop.f32.mrb[0].mxu0
  %v537 = vadd.f32 0.0, %v536
  %v538 = vpop.f32.mrb[0].mxu0
  %539 = vmatprep.mubr.bf16.mxu0 %v248
  %540 = vmatmul.mubr.bf16.gmra.mrb[0].mxu0 %v247
  %v541 = vpop.f32.mrb[0].mxu0
  %v542 = vadd.f32 0.0, %v541
  %v543 = vpop.f32.mrb[0].mxu0
  %v544 = vpop.f32.mrb[0].mxu0
  %v545 = vadd.f32 0.0, %v544
  %v546 = vpop.f32.mrb[0].mxu0
  %547 = vmatprep.mubr.bf16.mxu0 %v252
  %548 = vmatmul.mubr.bf16.gmra.mrb[0].mxu0 %v251
  %v549 = vpop.f32.mrb[0].mxu0
  %v550 = vadd.f32 0.0, %v549
  %v551 = vpop.f32.mrb[0].mxu0
  %v552 = vpop.f32.mrb[0].mxu0
  %v553 = vadd.f32 0.0, %v552
  %v554 = vpop.f32.mrb[0].mxu0
  %555 = vmatprep.mubr.bf16.mxu0 %v256
  %556 = vmatmul.mubr.bf16.gmra.mrb[0].mxu0 %v255
  %v557 = vpop.f32.mrb[0].mxu0
  %v558 = vadd.f32 0.0, %v557
  %v559 = vpop.f32.mrb[0].mxu0
  %v560 = vpop.f32.mrb[0].mxu0
  %v561 = vadd.f32 0.0, %v560
  %v562 = vpop.f32.mrb[0].mxu0
  %563 = vmatprep.mubr.bf16.mxu0 %v260
  %564 = vmatmul.mubr.bf16.gmra.mrb[0].mxu0 %v259
  %v565 = vpop.f32.mrb[0].mxu0
  %v566 = vadd.f32 0.0, %v565
  %v567 = vpop.f32.mrb[0].mxu0
  %v568 = vpop.f32.mrb[0].mxu0
  %v569 = vadd.f32 0.0, %v568
  %v570 = vpop.f32.mrb[0].mxu0
  %571 = vmatprep.mubr.bf16.mxu0 %v264
  %572 = vmatmul.mubr.bf16.gmra.mrb[0].mxu0 %v263
  %v573 = vpop.f32.mrb[0].mxu0
  %v574 = vadd.f32 0.0, %v573
  %v575 = vpop.f32.mrb[0].mxu0
  %v576 = vpop.f32.mrb[0].mxu0
  %v577 = vadd.f32 0.0, %v576
  %v578 = vpop.f32.mrb[0].mxu0
  %579 = vmatprep.mubr.bf16.mxu0 %v268
  %580 = vmatmul.mubr.bf16.gmra.mrb[0].mxu0 %v267
  %v581 = vpop.f32.mrb[0].mxu0
  %v582 = vadd.f32 0.0, %v581
  %v583 = vpop.f32.mrb[0].mxu0
  %v584 = vpop.f32.mrb[0].mxu0
  %v585 = vadd.f32 0.0, %v584
  %v586 = vpop.f32.mrb[0].mxu0
  %587 = vmatprep.mubr.bf16.mxu0 %v272
  %588 = vmatmul.mubr.bf16.gmra.mrb[0].mxu0 %v271
  %v589 = vpop.f32.mrb[0].mxu0
  %v590 = vadd.f32 0.0, %v589
  %v591 = vpop.f32.mrb[0].mxu0
  %v592 = vpop.f32.mrb[0].mxu0
  %v593 = vadd.f32 0.0, %v592
  %v594 = vpop.f32.mrb[0].mxu0
  %595 = vdwg.mxu0
  %596 = vmatprep.subr.bf16.mxu0 0
  %597 = vmatpush1.bf16.msra.mxu0 %v451
  %598 = vmatprep.subr.bf16.mxu0 0
  %599 = vmatpush1.bf16.msra.mxu0 %v452
  %600 = vmatprep.subr.bf16.mxu0 0
  %601 = vmatpush1.bf16.msra.mxu0 %v453
  %602 = vmatprep.subr.bf16.mxu0 0
  %603 = vmatpush1.bf16.msra.mxu0 %v454
  %604 = vmatprep.subr.bf16.mxu0 0
  %605 = vmatpush1.bf16.msra.mxu0 %v455
  %606 = vmatprep.subr.bf16.mxu0 0
  %607 = vmatpush1.bf16.msra.mxu0 %v456
  %608 = vmatprep.subr.bf16.mxu0 0
  %609 = vmatpush1.bf16.msra.mxu0 %v457
  %610 = vmatprep.subr.bf16.mxu0 0
  %611 = vmatpush1.bf16.msra.mxu0 %v458
  %612 = vmatprep.subr.bf16.mxu0 0
  %613 = vmatpush1.bf16.msra.mxu0 %v459
  %614 = vmatprep.subr.bf16.mxu0 0
  %615 = vmatpush1.bf16.msra.mxu0 %v460
  %616 = vmatprep.subr.bf16.mxu0 0
  %617 = vmatpush1.bf16.msra.mxu0 %v461
  %618 = vmatprep.subr.bf16.mxu0 0
  %619 = vmatpush1.bf16.msra.mxu0 %v462
  %620 = vmatprep.subr.bf16.mxu0 0
  %621 = vmatpush1.bf16.msra.mxu0 %v463
  %622 = vmatprep.subr.bf16.mxu0 0
  %623 = vmatpush1.bf16.msra.mxu0 %v464
  %624 = vmatprep.subr.bf16.mxu0 0
  %625 = vmatpush1.bf16.msra.mxu0 %v465
  %626 = vmatprep.subr.bf16.mxu0 0
  %627 = vmatpush1.bf16.msra.mxu0 %v466
  %628 = vmatprep.mubr.bf16.mxu0 %v246
  %629 = vmatmul.mubr.bf16.gmra.mrb[0].mxu0 %v245
  %v630 = vpop.f32.mrb[0].mxu0
  %v631 = vadd.f32 %v534, %v630
  %v632 = vpop.f32.mrb[0].mxu0
  %v633 = vpop.f32.mrb[0].mxu0
  %v634 = vadd.f32 %v537, %v633
  %v635 = vpop.f32.mrb[0].mxu0
  %636 = vmatprep.mubr.bf16.mxu0 %v250
  %637 = vmatmul.mubr.bf16.gmra.mrb[0].mxu0 %v249
  %v638 = vpop.f32.mrb[0].mxu0
  %v639 = vadd.f32 %v542, %v638
  %v640 = vpop.f32.mrb[0].mxu0
  %v641 = vpop.f32.mrb[0].mxu0
  %v642 = vadd.f32 %v545, %v641
  %v643 = vpop.f32.mrb[0].mxu0
  %644 = vmatprep.mubr.bf16.mxu0 %v254
  %645 = vmatmul.mubr.bf16.gmra.mrb[0].mxu0 %v253
  %v646 = vpop.f32.mrb[0].mxu0
  %v647 = vadd.f32 %v550, %v646
  %v648 = vpop.f32.mrb[0].mxu0
  %v649 = vpop.f32.mrb[0].mxu0
  %v650 = vadd.f32 %v553, %v649
  %v651 = vpop.f32.mrb[0].mxu0
  %652 = vmatprep.mubr.bf16.mxu0 %v258
  %653 = vmatmul.mubr.bf16.gmra.mrb[0].mxu0 %v257
  %v654 = vpop.f32.mrb[0].mxu0
  %v655 = vadd.f32 %v558, %v654
  %v656 = vpop.f32.mrb[0].mxu0
  %v657 = vpop.f32.mrb[0].mxu0
  %v658 = vadd.f32 %v561, %v657
  %v659 = vpop.f32.mrb[0].mxu0
  %660 = vmatprep.mubr.bf16.mxu0 %v262
  %661 = vmatmul.mubr.bf16.gmra.mrb[0].mxu0 %v261
  %v662 = vpop.f32.mrb[0].mxu0
  %v663 = vadd.f32 %v566, %v662
  %v664 = vpop.f32.mrb[0].mxu0
  %v665 = vpop.f32.mrb[0].mxu0
  %v666 = vadd.f32 %v569, %v665
  %v667 = vpop.f32.mrb[0].mxu0
  %668 = vmatprep.mubr.bf16.mxu0 %v266
  %669 = vmatmul.mubr.bf16.gmra.mrb[0].mxu0 %v265
  %v670 = vpop.f32.mrb[0].mxu0
  %v671 = vadd.f32 %v574, %v670
  %v672 = vpop.f32.mrb[0].mxu0
  %v673 = vpop.f32.mrb[0].mxu0
  %v674 = vadd.f32 %v577, %v673
  %v675 = vpop.f32.mrb[0].mxu0
  %676 = vmatprep.mubr.bf16.mxu0 %v270
  %677 = vmatmul.mubr.bf16.gmra.mrb[0].mxu0 %v269
  %v678 = vpop.f32.mrb[0].mxu0
  %v679 = vadd.f32 %v582, %v678
  %v680 = vpop.f32.mrb[0].mxu0
  %v681 = vpop.f32.mrb[0].mxu0
  %v682 = vadd.f32 %v585, %v681
  %v683 = vpop.f32.mrb[0].mxu0
  %684 = vmatprep.mubr.bf16.mxu0 %v274
  %685 = vmatmul.mubr.bf16.gmra.mrb[0].mxu0 %v273
  %v686 = vpop.f32.mrb[0].mxu0
  %v687 = vadd.f32 %v590, %v686
  %v688 = vpop.f32.mrb[0].mxu0
  %v689 = vpop.f32.mrb[0].mxu0
  %v690 = vadd.f32 %v593, %v689
  %v691 = vpop.f32.mrb[0].mxu0
  %692 = vdwg.mxu0
  %v693 = vadd.f32 %v35, %v631
  %v694 = vadd.f32 %v36, %v634
  %v695 = vadd.f32 %v37, %v639
  %v696 = vadd.f32 %v38, %v642
  %v697 = vadd.f32 %v39, %v647
  %v698 = vadd.f32 %v40, %v650
  %v699 = vadd.f32 %v41, %v655
  %v700 = vadd.f32 %v42, %v658
  %v701 = vadd.f32 %v43, %v663
  %v702 = vadd.f32 %v44, %v666
  %v703 = vadd.f32 %v45, %v671
  %v704 = vadd.f32 %v46, %v674
  %v705 = vadd.f32 %v47, %v679
  %v706 = vadd.f32 %v48, %v682
  %v707 = vadd.f32 %v49, %v687
  %v708 = vadd.f32 %v50, %v690
  %709 = vst [vmem:[#allocation2] sm:$0xff] %v693
  %710 = vst [vmem:[#allocation2 + $0x8] sm:$0xff] %v694
  %711 = vst [vmem:[#allocation2 + $0x10] sm:$0xff] %v695
  %712 = vst [vmem:[#allocation2 + $0x18] sm:$0xff] %v696
  %713 = vst [vmem:[#allocation2 + $0x20] sm:$0xff] %v697
  %714 = vst [vmem:[#allocation2 + $0x28] sm:$0xff] %v698
  %715 = vst [vmem:[#allocation2 + $0x30] sm:$0xff] %v699
  %716 = vst [vmem:[#allocation2 + $0x38] sm:$0xff] %v700
  %717 = vst [vmem:[#allocation2 + $0x40] sm:$0xff] %v701
  %718 = vst [vmem:[#allocation2 + $0x48] sm:$0xff] %v702
  %719 = vst [vmem:[#allocation2 + $0x50] sm:$0xff] %v703
  %720 = vst [vmem:[#allocation2 + $0x58] sm:$0xff] %v704
  %721 = vst [vmem:[#allocation2 + $0x60] sm:$0xff] %v705
  %722 = vst [vmem:[#allocation2 + $0x68] sm:$0xff] %v706
  %723 = vst [vmem:[#allocation2 + $0x70] sm:$0xff] %v707
  %724 = vst [vmem:[#allocation2 + $0x78] sm:$0xff] %v708
  // Predicated region
  $region18: #{deeplab_forward.55} parent=0 // pred_check
    %p725 = pneg %p15
  $region19: #{deeplab_forward.55} parent=0 // pred_check_branch
    %727 = sbr.rel (%p725) target = $region21
  $region20: #{deeplab_forward.55} parent=0 // pred_region
    %v728 = vld [vmem:[#allocation2] sm:$0xff]
    %v729 = vld [vmem:[#allocation2 + $0x8] sm:$0xff]
    %v730 = vld [vmem:[#allocation2 + $0x10] sm:$0xff]
    %v731 = vld [vmem:[#allocation2 + $0x18] sm:$0xff]
    %v732 = vld [vmem:[#allocation2 + $0x20] sm:$0xff]
    %v733 = vld [vmem:[#allocation2 + $0x28] sm:$0xff]
    %v734 = vld [vmem:[#allocation2 + $0x30] sm:$0xff]
    %v735 = vld [vmem:[#allocation2 + $0x38] sm:$0xff]
    %v736 = vld [vmem:[#allocation2 + $0x40] sm:$0xff]
    %v737 = vld [vmem:[#allocation2 + $0x48] sm:$0xff]
    %v738 = vld [vmem:[#allocation2 + $0x50] sm:$0xff]
    %v739 = vld [vmem:[#allocation2 + $0x58] sm:$0xff]
    %v740 = vld [vmem:[#allocation2 + $0x60] sm:$0xff]
    %v741 = vld [vmem:[#allocation2 + $0x68] sm:$0xff]
    %v742 = vld [vmem:[#allocation2 + $0x70] sm:$0xff]
    %v743 = vld [vmem:[#allocation2 + $0x78] sm:$0xff]
    %v744 = vld [vmem:[%s2] sm:$0x1]
    %v746 = vlaneseq
    %v747 = vshrl.u32 %v746, 7
    %v748 = vsub.s32 0, %v747
    %v749 = vrot.slane %v744, %v748
    %v751 = vadd.f32 %v728, %v749
    %v752 = vadd.f32 %v729, %v749
    %v753 = vadd.f32 %v730, %v749
    %v754 = vadd.f32 %v731, %v749
    %v755 = vadd.f32 %v732, %v749
    %v756 = vadd.f32 %v733, %v749
    %v757 = vadd.f32 %v734, %v749
    %v758 = vadd.f32 %v735, %v749
    %v759 = vadd.f32 %v736, %v749
    %v760 = vadd.f32 %v737, %v749
    %v761 = vadd.f32 %v738, %v749
    %v762 = vadd.f32 %v739, %v749
    %v763 = vadd.f32 %v740, %v749
    %v764 = vadd.f32 %v741, %v749
    %v765 = vadd.f32 %v742, %v749
    %v766 = vadd.f32 %v743, %v749
    %v767 = vpack.c.bf16 %v752, %v751
    %v768 = vpack.c.bf16 %v754, %v753
    %v769 = vpack.c.bf16 %v756, %v755
    %v770 = vpack.c.bf16 %v758, %v757
    %v771 = vpack.c.bf16 %v760, %v759
    %v772 = vpack.c.bf16 %v762, %v761
    %v773 = vpack.c.bf16 %v764, %v763
    %v774 = vpack.c.bf16 %v766, %v765
    %v783 = vunpack.c.l.b16 %v767
    %v784 = vunpack.c.h.b16 %v767
    %v785 = vunpack.c.l.b16 %v768
    %v786 = vunpack.c.h.b16 %v768
    %v787 = vunpack.c.l.b16 %v769
    %v788 = vunpack.c.h.b16 %v769
    %v789 = vunpack.c.l.b16 %v770
    %v790 = vunpack.c.h.b16 %v770
    %v791 = vunpack.c.l.b16 %v771
    %v792 = vunpack.c.h.b16 %v771
    %v793 = vunpack.c.l.b16 %v772
    %v794 = vunpack.c.h.b16 %v772
    %v795 = vunpack.c.l.b16 %v773
    %v796 = vunpack.c.h.b16 %v773
    %v797 = vunpack.c.l.b16 %v774
    %v798 = vunpack.c.h.b16 %v774
    %v799 = vpack.c.b16 %v783, %v783
    %v800 = vpack.c.b16 %v784, %v784
    %v801 = vpack.c.b16 %v785, %v785
    %v802 = vpack.c.b16 %v786, %v786
    %v803 = vpack.c.b16 %v787, %v787
    %v804 = vpack.c.b16 %v788, %v788
    %v805 = vpack.c.b16 %v789, %v789
    %v806 = vpack.c.b16 %v790, %v790
    %v807 = vpack.c.b16 %v791, %v791
    %v808 = vpack.c.b16 %v792, %v792
    %v809 = vpack.c.b16 %v793, %v793
    %v810 = vpack.c.b16 %v794, %v794
    %v811 = vpack.c.b16 %v795, %v795
    %v812 = vpack.c.b16 %v796, %v796
    %v813 = vpack.c.b16 %v797, %v797
    %v814 = vpack.c.b16 %v798, %v798
    %831 = vst [vmem:[%s3] sm:$0xf] %v799
    %832 = vst [vmem:[%s3 + $0x4] sm:$0xf] %v800
    %833 = vst [vmem:[%s3 + $0x8] sm:$0xf] %v801
    %834 = vst [vmem:[%s3 + $0xc] sm:$0xf] %v802
    %835 = vst [vmem:[%s3 + $0x10] sm:$0xf] %v803
    %836 = vst [vmem:[%s3 + $0x14] sm:$0xf] %v804
    %837 = vst [vmem:[%s3 + $0x18] sm:$0xf] %v805
    %838 = vst [vmem:[%s3 + $0x1c] sm:$0xf] %v806
    %839 = vst [vmem:[%s3 + $0x20] sm:$0xf] %v807
    %840 = vst [vmem:[%s3 + $0x24] sm:$0xf] %v808
    %841 = vst [vmem:[%s3 + $0x28] sm:$0xf] %v809
    %842 = vst [vmem:[%s3 + $0x2c] sm:$0xf] %v810
    %843 = vst [vmem:[%s3 + $0x30] sm:$0xf] %v811
    %844 = vst [vmem:[%s3 + $0x34] sm:$0xf] %v812
    %845 = vst [vmem:[%s3 + $0x38] sm:$0xf] %v813
    %846 = vst [vmem:[%s3 + $0x3c] sm:$0xf] %v814
  $region21: #{deeplab_forward.55} parent=0 // pred_fallthru
    _
  // Predicated region
  $region22: #{deeplab_forward.55} parent=0 // pred_check
    _
  $region23: #{deeplab_forward.55} parent=0 // pred_check_branch
    %848 = sbr.rel (0) target = $region25
  $region24: #{deeplab_forward.55} parent=0 // pred_region
    _
  $region25: #{deeplab_forward.55} parent=0 // pred_fallthru
    _
  // Predicated region
  $region26: #{deeplab_forward.55} parent=0 // pred_check
    _
  $region27: #{deeplab_forward.55} parent=0 // pred_check_branch
    %850 = sbr.rel (0) target = $region29
  $region28: #{deeplab_forward.55} parent=0 // pred_region
    _
  $region29: #{deeplab_forward.55} parent=0 // pred_fallthru
    _

// kernel: deeplab_forward.57
$region0: #{deeplab_forward.57}
  #allocation0 [shape = 'u32[]', space=smem, size = 0x4, offset = 0x4, fixed_abs, tag = 'smem constant byte address 0x4 - core index']
  #allocation1 [shape = 'u32[144,128]{1,0:T(1,128)}', space=vmem, size = 0x12000, scoped, tag = 'internal scratch']
  #allocation2 [shape = 'f32[128,128]{1,0:T(8,128)}', space=vmem, size = 0x10000, scoped, tag = 'scratch operand']
  %s0 = inlined_call_operand.vmem [shape: bf16[128,384], index: 0, kind: input, shape index: {}]
  %s1 = inlined_call_operand.vmem [shape: bf16[384,128], index: 1, kind: input, shape index: {}]
  %s2 = inlined_call_operand.vmem [shape: f32[1,128], index: 2, kind: input, shape index: {}]
  %s3 = inlined_call_operand.vmem [shape: bf16[128,128], index: 3, kind: output, shape index: {}]
  %s4 = sld [smem:[#allocation0]]
  $region30: #{deeplab_forward.57} parent=0
    _
  %s6 = ssub.s32 1, %s4
  %s7 = scalar_select 0, %s6, %s4
  // Predicated region
  $region2: #{deeplab_forward.57} parent=0 // pred_check
    _
  $region3: #{deeplab_forward.57} parent=0 // pred_check_branch
    %9 = sbr.rel (0) target = $region5
  $region4: #{deeplab_forward.57} parent=0 // pred_region
    _
  $region5: #{deeplab_forward.57} parent=0 // pred_fallthru
    _
  // Predicated region
  $region6: #{deeplab_forward.57} parent=0 // pred_check
    _
  $region7: #{deeplab_forward.57} parent=0 // pred_check_branch
    %11 = sbr.rel (0) target = $region9
  $region8: #{deeplab_forward.57} parent=0 // pred_region
    _
  $region9: #{deeplab_forward.57} parent=0 // pred_fallthru
    _
  // Predicated region
  $region10: #{deeplab_forward.57} parent=0 // pred_check
    _
  $region11: #{deeplab_forward.57} parent=0 // pred_check_branch
    %13 = sbr.rel (0) target = $region13
  $region12: #{deeplab_forward.57} parent=0 // pred_region
    _
  $region13: #{deeplab_forward.57} parent=0 // pred_fallthru
    _
  %p15 = scmp.eq.s32.totalorder 0, 0
  // Predicated region
  $region14: #{deeplab_forward.57} parent=0 // pred_check
    %p16 = pneg %p15
  $region15: #{deeplab_forward.57} parent=0 // pred_check_branch
    %18 = sbr.rel (%p16) target = $region17
  $region16: #{deeplab_forward.57} parent=0 // pred_region
    %19 = vst [vmem:[#allocation2] sm:$0xff] 0.0
    %20 = vst [vmem:[#allocation2 + $0x8] sm:$0xff] 0.0
    %21 = vst [vmem:[#allocation2 + $0x10] sm:$0xff] 0.0
    %22 = vst [vmem:[#allocation2 + $0x18] sm:$0xff] 0.0
    %23 = vst [vmem:[#allocation2 + $0x20] sm:$0xff] 0.0
    %24 = vst [vmem:[#allocation2 + $0x28] sm:$0xff] 0.0
    %25 = vst [vmem:[#allocation2 + $0x30] sm:$0xff] 0.0
    %26 = vst [vmem:[#allocation2 + $0x38] sm:$0xff] 0.0
    %27 = vst [vmem:[#allocation2 + $0x40] sm:$0xff] 0.0
    %28 = vst [vmem:[#allocation2 + $0x48] sm:$0xff] 0.0
    %29 = vst [vmem:[#allocation2 + $0x50] sm:$0xff] 0.0
    %30 = vst [vmem:[#allocation2 + $0x58] sm:$0xff] 0.0
    %31 = vst [vmem:[#allocation2 + $0x60] sm:$0xff] 0.0
    %32 = vst [vmem:[#allocation2 + $0x68] sm:$0xff] 0.0
    %33 = vst [vmem:[#allocation2 + $0x70] sm:$0xff] 0.0
    %34 = vst [vmem:[#allocation2 + $0x78] sm:$0xff] 0.0
  $region17: #{deeplab_forward.57} parent=0 // pred_fallthru
    _
  %v35 = vld [vmem:[#allocation2] sm:$0xff]
  %v36 = vld [vmem:[#allocation2 + $0x8] sm:$0xff]
  %v37 = vld [vmem:[#allocation2 + $0x10] sm:$0xff]
  %v38 = vld [vmem:[#allocation2 + $0x18] sm:$0xff]
  %v39 = vld [vmem:[#allocation2 + $0x20] sm:$0xff]
  %v40 = vld [vmem:[#allocation2 + $0x28] sm:$0xff]
  %v41 = vld [vmem:[#allocation2 + $0x30] sm:$0xff]
  %v42 = vld [vmem:[#allocation2 + $0x38] sm:$0xff]
  %v43 = vld [vmem:[#allocation2 + $0x40] sm:$0xff]
  %v44 = vld [vmem:[#allocation2 + $0x48] sm:$0xff]
  %v45 = vld [vmem:[#allocation2 + $0x50] sm:$0xff]
  %v46 = vld [vmem:[#allocation2 + $0x58] sm:$0xff]
  %v47 = vld [vmem:[#allocation2 + $0x60] sm:$0xff]
  %v48 = vld [vmem:[#allocation2 + $0x68] sm:$0xff]
  %v49 = vld [vmem:[#allocation2 + $0x70] sm:$0xff]
  %v50 = vld [vmem:[#allocation2 + $0x78] sm:$0xff]
  %v51 = vld [vmem:[%s0] sm:$0xff]
  %v52 = vld [vmem:[%s0 + $0x8] sm:$0xf]
  %v53 = vld [vmem:[%s0 + $0xc] sm:$0xff]
  %v54 = vld [vmem:[%s0 + $0x14] sm:$0xf]
  %v55 = vld [vmem:[%s0 + $0x18] sm:$0xff]
  %v56 = vld [vmem:[%s0 + $0x20] sm:$0xf]
  %v57 = vld [vmem:[%s0 + $0x24] sm:$0xff]
  %v58 = vld [vmem:[%s0 + $0x2c] sm:$0xf]
  %v59 = vld [vmem:[%s0 + $0x30] sm:$0xff]
  %v60 = vld [vmem:[%s0 + $0x38] sm:$0xf]
  %v61 = vld [vmem:[%s0 + $0x3c] sm:$0xff]
  %v62 = vld [vmem:[%s0 + $0x44] sm:$0xf]
  %v63 = vld [vmem:[%s0 + $0x48] sm:$0xff]
  %v64 = vld [vmem:[%s0 + $0x50] sm:$0xf]
  %v65 = vld [vmem:[%s0 + $0x54] sm:$0xff]
  %v66 = vld [vmem:[%s0 + $0x5c] sm:$0xf]
  %v67 = vld [vmem:[%s0 + $0x60] sm:$0xff]
  %v68 = vld [vmem:[%s0 + $0x68] sm:$0xf]
  %v69 = vld [vmem:[%s0 + $0x6c] sm:$0xff]
  %v70 = vld [vmem:[%s0 + $0x74] sm:$0xf]
  %v71 = vld [vmem:[%s0 + $0x78] sm:$0xff]
  %v72 = vld [vmem:[%s0 + $0x80] sm:$0xf]
  %v73 = vld [vmem:[%s0 + $0x84] sm:$0xff]
  %v74 = vld [vmem:[%s0 + $0x8c] sm:$0xf]
  %v75 = vld [vmem:[%s0 + $0x90] sm:$0xff]
  %v76 = vld [vmem:[%s0 + $0x98] sm:$0xf]
  %v77 = vld [vmem:[%s0 + $0x9c] sm:$0xff]
  %v78 = vld [vmem:[%s0 + $0xa4] sm:$0xf]
  %v79 = vld [vmem:[%s0 + $0xa8] sm:$0xff]
  %v80 = vld [vmem:[%s0 + $0xb0] sm:$0xf]
  %v81 = vld [vmem:[%s0 + $0xb4] sm:$0xff]
  %v82 = vld [vmem:[%s0 + $0xbc] sm:$0xf]
  %v83 = vld [vmem:[%s1] sm:$0xf]
  %v84 = vld [vmem:[%s1 + $0x4] sm:$0xf]
  %v85 = vld [vmem:[%s1 + $0x8] sm:$0xf]
  %v86 = vld [vmem:[%s1 + $0xc] sm:$0xf]
  %v87 = vld [vmem:[%s1 + $0x10] sm:$0xf]
  %v88 = vld [vmem:[%s1 + $0x14] sm:$0xf]
  %v89 = vld [vmem:[%s1 + $0x18] sm:$0xf]
  %v90 = vld [vmem:[%s1 + $0x1c] sm:$0xf]
  %v91 = vld [vmem:[%s1 + $0x20] sm:$0xf]
  %v92 = vld [vmem:[%s1 + $0x24] sm:$0xf]
  %v93 = vld [vmem:[%s1 + $0x28] sm:$0xf]
  %v94 = vld [vmem:[%s1 + $0x2c] sm:$0xf]
  %v95 = vld [vmem:[%s1 + $0x30] sm:$0xf]
  %v96 = vld [vmem:[%s1 + $0x34] sm:$0xf]
  %v97 = vld [vmem:[%s1 + $0x38] sm:$0xf]
  %v98 = vld [vmem:[%s1 + $0x3c] sm:$0xf]
  %v99 = vld [vmem:[%s1 + $0x40] sm:$0xf]
  %v100 = vld [vmem:[%s1 + $0x44] sm:$0xf]
  %v101 = vld [vmem:[%s1 + $0x48] sm:$0xf]
  %v102 = vld [vmem:[%s1 + $0x4c] sm:$0xf]
  %v103 = vld [vmem:[%s1 + $0x50] sm:$0xf]
  %v104 = vld [vmem:[%s1 + $0x54] sm:$0xf]
  %v105 = vld [vmem:[%s1 + $0x58] sm:$0xf]
  %v106 = vld [vmem:[%s1 + $0x5c] sm:$0xf]
  %v107 = vld [vmem:[%s1 + $0x60] sm:$0xf]
  %v108 = vld [vmem:[%s1 + $0x64] sm:$0xf]
  %v109 = vld [vmem:[%s1 + $0x68] sm:$0xf]
  %v110 = vld [vmem:[%s1 + $0x6c] sm:$0xf]
  %v111 = vld [vmem:[%s1 + $0x70] sm:$0xf]
  %v112 = vld [vmem:[%s1 + $0x74] sm:$0xf]
  %v113 = vld [vmem:[%s1 + $0x78] sm:$0xf]
  %v114 = vld [vmem:[%s1 + $0x7c] sm:$0xf]
  %v115 = vld [vmem:[%s1 + $0x80] sm:$0xf]
  %v116 = vld [vmem:[%s1 + $0x84] sm:$0xf]
  %v117 = vld [vmem:[%s1 + $0x88] sm:$0xf]
  %v118 = vld [vmem:[%s1 + $0x8c] sm:$0xf]
  %v119 = vld [vmem:[%s1 + $0x90] sm:$0xf]
  %v120 = vld [vmem:[%s1 + $0x94] sm:$0xf]
  %v121 = vld [vmem:[%s1 + $0x98] sm:$0xf]
  %v122 = vld [vmem:[%s1 + $0x9c] sm:$0xf]
  %v123 = vld [vmem:[%s1 + $0xa0] sm:$0xf]
  %v124 = vld [vmem:[%s1 + $0xa4] sm:$0xf]
  %v125 = vld [vmem:[%s1 + $0xa8] sm:$0xf]
  %v126 = vld [vmem:[%s1 + $0xac] sm:$0xf]
  %v127 = vld [vmem:[%s1 + $0xb0] sm:$0xf]
  %v128 = vld [vmem:[%s1 + $0xb4] sm:$0xf]
  %v129 = vld [vmem:[%s1 + $0xb8] sm:$0xf]
  %v130 = vld [vmem:[%s1 + $0xbc] sm:$0xf]
  %v163 = vunpack.c.l.b16 %v51
  %v164 = vunpack.c.h.b16 %v51
  %v165 = vunpack.c.l.b16 %v52
  %v166 = vunpack.c.l.b16 %v53
  %v167 = vunpack.c.h.b16 %v53
  %v168 = vunpack.c.l.b16 %v54
  %v169 = vunpack.c.l.b16 %v55
  %v170 = vunpack.c.h.b16 %v55
  %v171 = vunpack.c.l.b16 %v56
  %v172 = vunpack.c.l.b16 %v57
  %v173 = vunpack.c.h.b16 %v57
  %v174 = vunpack.c.l.b16 %v58
  %v175 = vunpack.c.l.b16 %v59
  %v176 = vunpack.c.h.b16 %v59
  %v177 = vunpack.c.l.b16 %v60
  %v178 = vunpack.c.l.b16 %v61
  %v179 = vunpack.c.h.b16 %v61
  %v180 = vunpack.c.l.b16 %v62
  %v181 = vunpack.c.l.b16 %v63
  %v182 = vunpack.c.h.b16 %v63
  %v183 = vunpack.c.l.b16 %v64
  %v184 = vunpack.c.l.b16 %v65
  %v185 = vunpack.c.h.b16 %v65
  %v186 = vunpack.c.l.b16 %v66
  %v187 = vunpack.c.l.b16 %v67
  %v188 = vunpack.c.h.b16 %v67
  %v189 = vunpack.c.l.b16 %v68
  %v190 = vunpack.c.l.b16 %v69
  %v191 = vunpack.c.h.b16 %v69
  %v192 = vunpack.c.l.b16 %v70
  %v193 = vunpack.c.l.b16 %v71
  %v194 = vunpack.c.h.b16 %v71
  %v195 = vunpack.c.l.b16 %v72
  %v196 = vunpack.c.l.b16 %v73
  %v197 = vunpack.c.h.b16 %v73
  %v198 = vunpack.c.l.b16 %v74
  %v199 = vunpack.c.l.b16 %v75
  %v200 = vunpack.c.h.b16 %v75
  %v201 = vunpack.c.l.b16 %v76
  %v202 = vunpack.c.l.b16 %v77
  %v203 = vunpack.c.h.b16 %v77
  %v204 = vunpack.c.l.b16 %v78
  %v205 = vunpack.c.l.b16 %v79
  %v206 = vunpack.c.h.b16 %v79
  %v207 = vunpack.c.l.b16 %v80
  %v208 = vunpack.c.l.b16 %v81
  %v209 = vunpack.c.h.b16 %v81
  %v210 = vunpack.c.l.b16 %v82
  %v211 = vpack.c.b16 %v166, %v163
  %v212 = vpack.c.b16 %v167, %v164
  %v213 = vpack.c.b16 %v168, %v165
  %v214 = vpack.c.b16 %v172, %v169
  %v215 = vpack.c.b16 %v173, %v170
  %v216 = vpack.c.b16 %v174, %v171
  %v217 = vpack.c.b16 %v178, %v175
  %v218 = vpack.c.b16 %v179, %v176
  %v219 = vpack.c.b16 %v180, %v177
  %v220 = vpack.c.b16 %v184, %v181
  %v221 = vpack.c.b16 %v185, %v182
  %v222 = vpack.c.b16 %v186, %v183
  %v223 = vpack.c.b16 %v190, %v187
  %v224 = vpack.c.b16 %v191, %v188
  %v225 = vpack.c.b16 %v192, %v189
  %v226 = vpack.c.b16 %v196, %v193
  %v227 = vpack.c.b16 %v197, %v194
  %v228 = vpack.c.b16 %v198, %v195
  %v229 = vpack.c.b16 %v202, %v199
  %v230 = vpack.c.b16 %v203, %v200
  %v231 = vpack.c.b16 %v204, %v201
  %v232 = vpack.c.b16 %v208, %v205
  %v233 = vpack.c.b16 %v209, %v206
  %v234 = vpack.c.b16 %v210, %v207
  %v307 = vunpack.c.l.b16 %v83
  %v308 = vunpack.c.l.b16 %v84
  %v309 = vunpack.c.l.b16 %v85
  %v310 = vunpack.c.l.b16 %v86
  %v311 = vunpack.c.l.b16 %v87
  %v312 = vunpack.c.l.b16 %v88
  %v313 = vunpack.c.l.b16 %v89
  %v314 = vunpack.c.l.b16 %v90
  %v315 = vunpack.c.l.b16 %v91
  %v316 = vunpack.c.l.b16 %v92
  %v317 = vunpack.c.l.b16 %v93
  %v318 = vunpack.c.l.b16 %v94
  %v319 = vunpack.c.l.b16 %v95
  %v320 = vunpack.c.l.b16 %v96
  %v321 = vunpack.c.l.b16 %v97
  %v322 = vunpack.c.l.b16 %v98
  %v323 = vunpack.c.l.b16 %v99
  %v324 = vunpack.c.l.b16 %v100
  %v325 = vunpack.c.l.b16 %v101
  %v326 = vunpack.c.l.b16 %v102
  %v327 = vunpack.c.l.b16 %v103
  %v328 = vunpack.c.l.b16 %v104
  %v329 = vunpack.c.l.b16 %v105
  %v330 = vunpack.c.l.b16 %v106
  %v331 = vunpack.c.l.b16 %v107
  %v332 = vunpack.c.l.b16 %v108
  %v333 = vunpack.c.l.b16 %v109
  %v334 = vunpack.c.l.b16 %v110
  %v335 = vunpack.c.l.b16 %v111
  %v336 = vunpack.c.l.b16 %v112
  %v337 = vunpack.c.l.b16 %v113
  %v338 = vunpack.c.l.b16 %v114
  %v339 = vunpack.c.l.b16 %v115
  %v340 = vunpack.c.l.b16 %v116
  %v341 = vunpack.c.l.b16 %v117
  %v342 = vunpack.c.l.b16 %v118
  %v343 = vunpack.c.l.b16 %v119
  %v344 = vunpack.c.l.b16 %v120
  %v345 = vunpack.c.l.b16 %v121
  %v346 = vunpack.c.l.b16 %v122
  %v347 = vunpack.c.l.b16 %v123
  %v348 = vunpack.c.l.b16 %v124
  %v349 = vunpack.c.l.b16 %v125
  %v350 = vunpack.c.l.b16 %v126
  %v351 = vunpack.c.l.b16 %v127
  %v352 = vunpack.c.l.b16 %v128
  %v353 = vunpack.c.l.b16 %v129
  %v354 = vunpack.c.l.b16 %v130
  %v355 = vpack.c.b16 %v308, %v307
  %v356 = vpack.c.b16 %v310, %v309
  %v357 = vpack.c.b16 %v312, %v311
  %v358 = vpack.c.b16 %v314, %v313
  %v359 = vpack.c.b16 %v316, %v315
  %v360 = vpack.c.b16 %v318, %v317
  %v361 = vpack.c.b16 %v320, %v319
  %v362 = vpack.c.b16 %v322, %v321
  %v363 = vpack.c.b16 %v324, %v323
  %v364 = vpack.c.b16 %v326, %v325
  %v365 = vpack.c.b16 %v328, %v327
  %v366 = vpack.c.b16 %v330, %v329
  %v367 = vpack.c.b16 %v332, %v331
  %v368 = vpack.c.b16 %v334, %v333
  %v369 = vpack.c.b16 %v336, %v335
  %v370 = vpack.c.b16 %v338, %v337
  %v371 = vpack.c.b16 %v340, %v339
  %v372 = vpack.c.b16 %v342, %v341
  %v373 = vpack.c.b16 %v344, %v343
  %v374 = vpack.c.b16 %v346, %v345
  %v375 = vpack.c.b16 %v348, %v347
  %v376 = vpack.c.b16 %v350, %v349
  %v377 = vpack.c.b16 %v352, %v351
  %v378 = vpack.c.b16 %v354, %v353
  %403 = vmatprep.subr.bf16.mxu0 0
  %404 = vmatpush1.bf16.msra.mxu0 %v355
  %405 = vmatprep.subr.bf16.mxu0 0
  %406 = vmatpush1.bf16.msra.mxu0 %v356
  %407 = vmatprep.subr.bf16.mxu0 0
  %408 = vmatpush1.bf16.msra.mxu0 %v357
  %409 = vmatprep.subr.bf16.mxu0 0
  %410 = vmatpush1.bf16.msra.mxu0 %v358
  %411 = vmatprep.subr.bf16.mxu0 0
  %412 = vmatpush1.bf16.msra.mxu0 %v359
  %413 = vmatprep.subr.bf16.mxu0 0
  %414 = vmatpush1.bf16.msra.mxu0 %v360
  %415 = vmatprep.subr.bf16.mxu0 0
  %416 = vmatpush1.bf16.msra.mxu0 %v361
  %417 = vmatprep.subr.bf16.mxu0 0
  %418 = vmatpush1.bf16.msra.mxu0 %v362
  %419 = vmatprep.subr.bf16.mxu0 0
  %420 = vmatpush1.bf16.msra.mxu0 %v363
  %421 = vmatprep.subr.bf16.mxu0 0
  %422 = vmatpush1.bf16.msra.mxu0 %v364
  %423 = vmatprep.subr.bf16.mxu0 0
  %424 = vmatpush1.bf16.msra.mxu0 %v365
  %425 = vmatprep.subr.bf16.mxu0 0
  %426 = vmatpush1.bf16.msra.mxu0 %v366
  %427 = vmatprep.subr.bf16.mxu0 0
  %428 = vmatpush1.bf16.msra.mxu0 %v367
  %429 = vmatprep.subr.bf16.mxu0 0
  %430 = vmatpush1.bf16.msra.mxu0 %v368
  %431 = vmatprep.subr.bf16.mxu0 0
  %432 = vmatpush1.bf16.msra.mxu0 %v369
  %433 = vmatprep.subr.bf16.mxu0 0
  %434 = vmatpush1.bf16.msra.mxu0 %v370
  %435 = vmatprep.mubr.bf16.mxu0 %v212
  %436 = vmatmul.mubr.bf16.gmra.mrb[0].mxu0 %v211
  %v437 = vpop.f32.mrb[0].mxu0
  %v438 = vadd.f32 0.0, %v437
  %v439 = vpop.f32.mrb[0].mxu0
  %v440 = vpop.f32.mrb[0].mxu0
  %v441 = vadd.f32 0.0, %v440
  %v442 = vpop.f32.mrb[0].mxu0
  %443 = vmatprep.mubr.bf16.mxu0 %v215
  %444 = vmatmul.mubr.bf16.gmra.mrb[0].mxu0 %v214
  %v445 = vpop.f32.mrb[0].mxu0
  %v446 = vadd.f32 0.0, %v445
  %v447 = vpop.f32.mrb[0].mxu0
  %v448 = vpop.f32.mrb[0].mxu0
  %v449 = vadd.f32 0.0, %v448
  %v450 = vpop.f32.mrb[0].mxu0
  %451 = vmatprep.mubr.bf16.mxu0 %v218
  %452 = vmatmul.mubr.bf16.gmra.mrb[0].mxu0 %v217
  %v453 = vpop.f32.mrb[0].mxu0
  %v454 = vadd.f32 0.0, %v453
  %v455 = vpop.f32.mrb[0].mxu0
  %v456 = vpop.f32.mrb[0].mxu0
  %v457 = vadd.f32 0.0, %v456
  %v458 = vpop.f32.mrb[0].mxu0
  %459 = vmatprep.mubr.bf16.mxu0 %v221
  %460 = vmatmul.mubr.bf16.gmra.mrb[0].mxu0 %v220
  %v461 = vpop.f32.mrb[0].mxu0
  %v462 = vadd.f32 0.0, %v461
  %v463 = vpop.f32.mrb[0].mxu0
  %v464 = vpop.f32.mrb[0].mxu0
  %v465 = vadd.f32 0.0, %v464
  %v466 = vpop.f32.mrb[0].mxu0
  %467 = vmatprep.mubr.bf16.mxu0 %v224
  %468 = vmatmul.mubr.bf16.gmra.mrb[0].mxu0 %v223
  %v469 = vpop.f32.mrb[0].mxu0
  %v470 = vadd.f32 0.0, %v469
  %v471 = vpop.f32.mrb[0].mxu0
  %v472 = vpop.f32.mrb[0].mxu0
  %v473 = vadd.f32 0.0, %v472
  %v474 = vpop.f32.mrb[0].mxu0
  %475 = vmatprep.mubr.bf16.mxu0 %v227
  %476 = vmatmul.mubr.bf16.gmra.mrb[0].mxu0 %v226
  %v477 = vpop.f32.mrb[0].mxu0
  %v478 = vadd.f32 0.0, %v477
  %v479 = vpop.f32.mrb[0].mxu0
  %v480 = vpop.f32.mrb[0].mxu0
  %v481 = vadd.f32 0.0, %v480
  %v482 = vpop.f32.mrb[0].mxu0
  %483 = vmatprep.mubr.bf16.mxu0 %v230
  %484 = vmatmul.mubr.bf16.gmra.mrb[0].mxu0 %v229
  %v485 = vpop.f32.mrb[0].mxu0
  %v486 = vadd.f32 0.0, %v485
  %v487 = vpop.f32.mrb[0].mxu0
  %v488 = vpop.f32.mrb[0].mxu0
  %v489 = vadd.f32 0.0, %v488
  %v490 = vpop.f32.mrb[0].mxu0
  %491 = vmatprep.mubr.bf16.mxu0 %v233
  %492 = vmatmul.mubr.bf16.gmra.mrb[0].mxu0 %v232
  %v493 = vpop.f32.mrb[0].mxu0
  %v494 = vadd.f32 0.0, %v493
  %v495 = vpop.f32.mrb[0].mxu0
  %v496 = vpop.f32.mrb[0].mxu0
  %v497 = vadd.f32 0.0, %v496
  %v498 = vpop.f32.mrb[0].mxu0
  %499 = vdwg.mxu0
  %500 = vmatprep.subr.bf16.mxu0 0
  %501 = vmatpush1.bf16.msra.mxu0 %v371
  %502 = vmatprep.subr.bf16.mxu0 0
  %503 = vmatpush1.bf16.msra.mxu0 %v372
  %504 = vmatprep.subr.bf16.mxu0 0
  %505 = vmatpush1.bf16.msra.mxu0 %v373
  %506 = vmatprep.subr.bf16.mxu0 0
  %507 = vmatpush1.bf16.msra.mxu0 %v374
  %508 = vmatprep.subr.bf16.mxu0 0
  %509 = vmatpush1.bf16.msra.mxu0 %v375
  %510 = vmatprep.subr.bf16.mxu0 0
  %511 = vmatpush1.bf16.msra.mxu0 %v376
  %512 = vmatprep.subr.bf16.mxu0 0
  %513 = vmatpush1.bf16.msra.mxu0 %v377
  %514 = vmatprep.subr.bf16.mxu0 0
  %515 = vmatpush1.bf16.msra.mxu0 %v378
  %516 = vmatprep.subr.bf16.mxu0 0
  %517 = vmatpush1.bf16.msra.mxu0 0
  %518 = vmatprep.subr.bf16.mxu0 0
  %519 = vmatpush1.bf16.msra.mxu0 0
  %520 = vmatprep.subr.bf16.mxu0 0
  %521 = vmatpush1.bf16.msra.mxu0 0
  %522 = vmatprep.subr.bf16.mxu0 0
  %523 = vmatpush1.bf16.msra.mxu0 0
  %524 = vmatprep.subr.bf16.mxu0 0
  %525 = vmatpush1.bf16.msra.mxu0 0
  %526 = vmatprep.subr.bf16.mxu0 0
  %527 = vmatpush1.bf16.msra.mxu0 0
  %528 = vmatprep.subr.bf16.mxu0 0
  %529 = vmatpush1.bf16.msra.mxu0 0
  %530 = vmatprep.subr.bf16.mxu0 0
  %531 = vmatpush1.bf16.msra.mxu0 0
  %532 = vmatprep.mubr.bf16.mxu0 0
  %533 = vmatmul.mubr.bf16.gmra.mrb[0].mxu0 %v213
  %v534 = vpop.f32.mrb[0].mxu0
  %v535 = vadd.f32 %v438, %v534
  %v536 = vpop.f32.mrb[0].mxu0
  %v537 = vpop.f32.mrb[0].mxu0
  %v538 = vadd.f32 %v441, %v537
  %v539 = vpop.f32.mrb[0].mxu0
  %540 = vmatprep.mubr.bf16.mxu0 0
  %541 = vmatmul.mubr.bf16.gmra.mrb[0].mxu0 %v216
  %v542 = vpop.f32.mrb[0].mxu0
  %v543 = vadd.f32 %v446, %v542
  %v544 = vpop.f32.mrb[0].mxu0
  %v545 = vpop.f32.mrb[0].mxu0
  %v546 = vadd.f32 %v449, %v545
  %v547 = vpop.f32.mrb[0].mxu0
  %548 = vmatprep.mubr.bf16.mxu0 0
  %549 = vmatmul.mubr.bf16.gmra.mrb[0].mxu0 %v219
  %v550 = vpop.f32.mrb[0].mxu0
  %v551 = vadd.f32 %v454, %v550
  %v552 = vpop.f32.mrb[0].mxu0
  %v553 = vpop.f32.mrb[0].mxu0
  %v554 = vadd.f32 %v457, %v553
  %v555 = vpop.f32.mrb[0].mxu0
  %556 = vmatprep.mubr.bf16.mxu0 0
  %557 = vmatmul.mubr.bf16.gmra.mrb[0].mxu0 %v222
  %v558 = vpop.f32.mrb[0].mxu0
  %v559 = vadd.f32 %v462, %v558
  %v560 = vpop.f32.mrb[0].mxu0
  %v561 = vpop.f32.mrb[0].mxu0
  %v562 = vadd.f32 %v465, %v561
  %v563 = vpop.f32.mrb[0].mxu0
  %564 = vmatprep.mubr.bf16.mxu0 0
  %565 = vmatmul.mubr.bf16.gmra.mrb[0].mxu0 %v225
  %v566 = vpop.f32.mrb[0].mxu0
  %v567 = vadd.f32 %v470, %v566
  %v568 = vpop.f32.mrb[0].mxu0
  %v569 = vpop.f32.mrb[0].mxu0
  %v570 = vadd.f32 %v473, %v569
  %v571 = vpop.f32.mrb[0].mxu0
  %572 = vmatprep.mubr.bf16.mxu0 0
  %573 = vmatmul.mubr.bf16.gmra.mrb[0].mxu0 %v228
  %v574 = vpop.f32.mrb[0].mxu0
  %v575 = vadd.f32 %v478, %v574
  %v576 = vpop.f32.mrb[0].mxu0
  %v577 = vpop.f32.mrb[0].mxu0
  %v578 = vadd.f32 %v481, %v577
  %v579 = vpop.f32.mrb[0].mxu0
  %580 = vmatprep.mubr.bf16.mxu0 0
  %581 = vmatmul.mubr.bf16.gmra.mrb[0].mxu0 %v231
  %v582 = vpop.f32.mrb[0].mxu0
  %v583 = vadd.f32 %v486, %v582
  %v584 = vpop.f32.mrb[0].mxu0
  %v585 = vpop.f32.mrb[0].mxu0
  %v586 = vadd.f32 %v489, %v585
  %v587 = vpop.f32.mrb[0].mxu0
  %588 = vmatprep.mubr.bf16.mxu0 0
  %589 = vmatmul.mubr.bf16.gmra.mrb[0].mxu0 %v234
  %v590 = vpop.f32.mrb[0].mxu0
  %v591 = vadd.f32 %v494, %v590
  %v592 = vpop.f32.mrb[0].mxu0
  %v593 = vpop.f32.mrb[0].mxu0
  %v594 = vadd.f32 %v497, %v593
  %v595 = vpop.f32.mrb[0].mxu0
  %596 = vdwg.mxu0
  %v597 = vadd.f32 %v35, %v535
  %v598 = vadd.f32 %v36, %v538
  %v599 = vadd.f32 %v37, %v543
  %v600 = vadd.f32 %v38, %v546
  %v601 = vadd.f32 %v39, %v551
  %v602 = vadd.f32 %v40, %v554
  %v603 = vadd.f32 %v41, %v559
  %v604 = vadd.f32 %v42, %v562
  %v605 = vadd.f32 %v43, %v567
  %v606 = vadd.f32 %v44, %v570
  %v607 = vadd.f32 %v45, %v575
  %v608 = vadd.f32 %v46, %v578
  %v609 = vadd.f32 %v47, %v583
  %v610 = vadd.f32 %v48, %v586
  %v611 = vadd.f32 %v49, %v591
  %v612 = vadd.f32 %v50, %v594
  %613 = vst [vmem:[#allocation2] sm:$0xff] %v597
  %614 = vst [vmem:[#allocation2 + $0x8] sm:$0xff] %v598
  %615 = vst [vmem:[#allocation2 + $0x10] sm:$0xff] %v599
  %616 = vst [vmem:[#allocation2 + $0x18] sm:$0xff] %v600
  %617 = vst [vmem:[#allocation2 + $0x20] sm:$0xff] %v601
  %618 = vst [vmem:[#allocation2 + $0x28] sm:$0xff] %v602
  %619 = vst [vmem:[#allocation2 + $0x30] sm:$0xff] %v603
  %620 = vst [vmem:[#allocation2 + $0x38] sm:$0xff] %v604
  %621 = vst [vmem:[#allocation2 + $0x40] sm:$0xff] %v605
  %622 = vst [vmem:[#allocation2 + $0x48] sm:$0xff] %v606
  %623 = vst [vmem:[#allocation2 + $0x50] sm:$0xff] %v607
  %624 = vst [vmem:[#allocation2 + $0x58] sm:$0xff] %v608
  %625 = vst [vmem:[#allocation2 + $0x60] sm:$0xff] %v609
  %626 = vst [vmem:[#allocation2 + $0x68] sm:$0xff] %v610
  %627 = vst [vmem:[#allocation2 + $0x70] sm:$0xff] %v611
  %628 = vst [vmem:[#allocation2 + $0x78] sm:$0xff] %v612
  // Predicated region
  $region18: #{deeplab_forward.57} parent=0 // pred_check
    %p629 = pneg %p15
  $region19: #{deeplab_forward.57} parent=0 // pred_check_branch
    %631 = sbr.rel (%p629) target = $region21
  $region20: #{deeplab_forward.57} parent=0 // pred_region
    %v632 = vld [vmem:[#allocation2] sm:$0xff]
    %v633 = vld [vmem:[#allocation2 + $0x8] sm:$0xff]
    %v634 = vld [vmem:[#allocation2 + $0x10] sm:$0xff]
    %v635 = vld [vmem:[#allocation2 + $0x18] sm:$0xff]
    %v636 = vld [vmem:[#allocation2 + $0x20] sm:$0xff]
    %v637 = vld [vmem:[#allocation2 + $0x28] sm:$0xff]
    %v638 = vld [vmem:[#allocation2 + $0x30] sm:$0xff]
    %v639 = vld [vmem:[#allocation2 + $0x38] sm:$0xff]
    %v640 = vld [vmem:[#allocation2 + $0x40] sm:$0xff]
    %v641 = vld [vmem:[#allocation2 + $0x48] sm:$0xff]
    %v642 = vld [vmem:[#allocation2 + $0x50] sm:$0xff]
    %v643 = vld [vmem:[#allocation2 + $0x58] sm:$0xff]
    %v644 = vld [vmem:[#allocation2 + $0x60] sm:$0xff]
    %v645 = vld [vmem:[#allocation2 + $0x68] sm:$0xff]
    %v646 = vld [vmem:[#allocation2 + $0x70] sm:$0xff]
    %v647 = vld [vmem:[#allocation2 + $0x78] sm:$0xff]
    %v648 = vld [vmem:[%s2] sm:$0x1]
    %v650 = vlaneseq
    %v651 = vshrl.u32 %v650, 7
    %v652 = vsub.s32 0, %v651
    %v653 = vrot.slane %v648, %v652
    %v655 = vadd.f32 %v632, %v653
    %v656 = vadd.f32 %v633, %v653
    %v657 = vadd.f32 %v634, %v653
    %v658 = vadd.f32 %v635, %v653
    %v659 = vadd.f32 %v636, %v653
    %v660 = vadd.f32 %v637, %v653
    %v661 = vadd.f32 %v638, %v653
    %v662 = vadd.f32 %v639, %v653
    %v663 = vadd.f32 %v640, %v653
    %v664 = vadd.f32 %v641, %v653
    %v665 = vadd.f32 %v642, %v653
    %v666 = vadd.f32 %v643, %v653
    %v667 = vadd.f32 %v644, %v653
    %v668 = vadd.f32 %v645, %v653
    %v669 = vadd.f32 %v646, %v653
    %v670 = vadd.f32 %v647, %v653
    %v671 = vpack.c.bf16 %v656, %v655
    %v672 = vpack.c.bf16 %v658, %v657
    %v673 = vpack.c.bf16 %v660, %v659
    %v674 = vpack.c.bf16 %v662, %v661
    %v675 = vpack.c.bf16 %v664, %v663
    %v676 = vpack.c.bf16 %v666, %v665
    %v677 = vpack.c.bf16 %v668, %v667
    %v678 = vpack.c.bf16 %v670, %v669
    %v687 = vunpack.c.l.b16 %v671
    %v688 = vunpack.c.h.b16 %v671
    %v689 = vunpack.c.l.b16 %v672
    %v690 = vunpack.c.h.b16 %v672
    %v691 = vunpack.c.l.b16 %v673
    %v692 = vunpack.c.h.b16 %v673
    %v693 = vunpack.c.l.b16 %v674
    %v694 = vunpack.c.h.b16 %v674
    %v695 = vunpack.c.l.b16 %v675
    %v696 = vunpack.c.h.b16 %v675
    %v697 = vunpack.c.l.b16 %v676
    %v698 = vunpack.c.h.b16 %v676
    %v699 = vunpack.c.l.b16 %v677
    %v700 = vunpack.c.h.b16 %v677
    %v701 = vunpack.c.l.b16 %v678
    %v702 = vunpack.c.h.b16 %v678
    %v703 = vpack.c.b16 %v687, %v687
    %v704 = vpack.c.b16 %v688, %v688
    %v705 = vpack.c.b16 %v689, %v689
    %v706 = vpack.c.b16 %v690, %v690
    %v707 = vpack.c.b16 %v691, %v691
    %v708 = vpack.c.b16 %v692, %v692
    %v709 = vpack.c.b16 %v693, %v693
    %v710 = vpack.c.b16 %v694, %v694
    %v711 = vpack.c.b16 %v695, %v695
    %v712 = vpack.c.b16 %v696, %v696
    %v713 = vpack.c.b16 %v697, %v697
    %v714 = vpack.c.b16 %v698, %v698
    %v715 = vpack.c.b16 %v699, %v699
    %v716 = vpack.c.b16 %v700, %v700
    %v717 = vpack.c.b16 %v701, %v701
    %v718 = vpack.c.b16 %v702, %v702
    %735 = vst [vmem:[%s3] sm:$0xf] %v703
    %736 = vst [vmem:[%s3 + $0x4] sm:$0xf] %v704
    %737 = vst [vmem:[%s3 + $0x8] sm:$0xf] %v705
    %738 = vst [vmem:[%s3 + $0xc] sm:$0xf] %v706
    %739 = vst [vmem:[%s3 + $0x10] sm:$0xf] %v707
    %740 = vst [vmem:[%s3 + $0x14] sm:$0xf] %v708
    %741 = vst [vmem:[%s3 + $0x18] sm:$0xf] %v709
    %742 = vst [vmem:[%s3 + $0x1c] sm:$0xf] %v710
    %743 = vst [vmem:[%s3 + $0x20] sm:$0xf] %v711
    %744 = vst [vmem:[%s3 + $0x24] sm:$0xf] %v712
    %745 = vst [vmem:[%s3 + $0x28] sm:$0xf] %v713
    %746 = vst [vmem:[%s3 + $0x2c] sm:$0xf] %v714
    %747 = vst [vmem:[%s3 + $0x30] sm:$0xf] %v715
    %748 = vst [vmem:[%s3 + $0x34] sm:$0xf] %v716
    %749 = vst [vmem:[%s3 + $0x38] sm:$0xf] %v717
    %750 = vst [vmem:[%s3 + $0x3c] sm:$0xf] %v718
  $region21: #{deeplab_forward.57} parent=0 // pred_fallthru
    _
  // Predicated region
  $region22: #{deeplab_forward.57} parent=0 // pred_check
    _
  $region23: #{deeplab_forward.57} parent=0 // pred_check_branch
    %752 = sbr.rel (0) target = $region25
  $region24: #{deeplab_forward.57} parent=0 // pred_region
    _
  $region25: #{deeplab_forward.57} parent=0 // pred_fallthru
    _
  // Predicated region
  $region26: #{deeplab_forward.57} parent=0 // pred_check
    _
  $region27: #{deeplab_forward.57} parent=0 // pred_check_branch
    %754 = sbr.rel (0) target = $region29
  $region28: #{deeplab_forward.57} parent=0 // pred_region
    _
  $region29: #{deeplab_forward.57} parent=0 // pred_fallthru
    _

// kernel: deeplab_forward.60
$region0: #{deeplab_forward.60}
  #allocation0 [shape = 'u32[]', space=smem, size = 0x4, offset = 0x4, fixed_abs, tag = 'smem constant byte address 0x4 - core index']
  #allocation1 [shape = 'u32[144,128]{1,0:T(1,128)}', space=vmem, size = 0x12000, scoped, tag = 'internal scratch']
  #allocation2 [shape = 'f32[32,256]{1,0:T(8,128)}', space=vmem, size = 0x8000, scoped, tag = 'scratch operand']
  %s0 = inlined_call_operand.vmem [shape: bf16[32,128], index: 0, kind: input, shape index: {}]
  %s1 = inlined_call_operand.vmem [shape: bf16[128,512], index: 1, kind: input, shape index: {}]
  %s2 = inlined_call_operand.vmem [shape: f32[1,512], index: 2, kind: input, shape index: {}]
  %s3 = inlined_call_operand.vmem [shape: bf16[32,512], index: 3, kind: output, shape index: {}]
  %s4 = sld [smem:[#allocation0]]
  $region125: #{deeplab_forward.60} parent=0
    _
  %s6 = ssub.s32 1, %s4
  %s7 = scalar_select 0, %s6, %s4
  $region1: #{deeplab_forward.60} parent=0
    #allocation3 [shape = 'u8[131072]{0}', space=vmem, size = 0x20000, scoped, tag = 'input window, operand 1']
    #allocation4 [shape = 'u8[32768]{0}', space=vmem, size = 0x8000, scoped, tag = 'output window, operand 0']
    loop: start=0, step=1, limit=4
    $region2: #{deeplab_forward.60} parent=1 // loop_pre_header
      _
    $region3: #{deeplab_forward.60} parent=1 // loop_header
      %s9 = sphi 0, %s13
      %p10 = scmp.ge.s32.totalorder %s9, 4
      %s16 = sphi 0, %s35
      %s17 = sphi 0, %s31
      %s18 = sphi 0, %s27
      %s19 = sphi 0, %s16
      %s20 = sphi 0, %s17
      %s21 = sphi 0, %s18
      %s22 = sphi 0, %s19
      %s23 = sphi 0, %s20
      %s24 = sphi 0, %s21
      %s40 = sphi 0, %s42
      %s43 = sphi 0, %s40
      %s44 = sphi 0, %s43
      %s60 = sphi 0, %s44
      %s68 = sphi 0, %s70
      %s71 = sphi 0, %s68
      %s72 = sphi 0, %s71
      %s88 = sphi 0, %s72
      %s94 = sphi 0, %s96
      %s97 = sphi 0, %s94
      %s98 = sphi 0, %s97
      %s114 = sphi 0, %s98
      %s122 = sphi 0, %s124
      %s125 = sphi 0, %s122
      %s126 = sphi 0, %s125
      %s142 = sphi 0, %s126
    $region4: #{deeplab_forward.60} parent=1 // loop_header_branch
      %12 = sbr.rel (%p10) target = $region8
    $region5: #{deeplab_forward.60} parent=1 // loop_body
      %s14 = ssub.s32 %s9, 1
      %s15 = ssub.s32 %s9, 2
      %s25 = sadd.s32 1, %s18
      %p26 = scmp.ge.s32.totalorder %s25, 1
      %s27 = scalar_select %p26, 0, %s25
      %s28 = sadd.s32 1, %s17
      %s29 = scalar_select %p26, %s28, %s17
      %p30 = scmp.ge.s32.totalorder %s29, 2
      %s31 = scalar_select %p30, 0, %s29
      %s32 = sadd.s32 1, %s16
      %s33 = scalar_select %p30, %s32, %s16
      %p34 = scmp.ge.s32.totalorder %s33, 1
      %s35 = scalar_select %p34, 0, %s33
      %s36 = ssub.s32 %s16, %s35
      %s37 = ssub.s32 %s18, %s27
      %s38 = sor.u32 %s36, %s37
      %p39 = scmp.eq.s32.totalorder %s38, 0
      %s41 = sadd.s32 %s40, 1
      %s42 = scalar_select %p39, %s40, %s41
      %p45 = pneg %p39
      %p46 = scmp.eq.s32.totalorder %s9, 1
      %p47 = por %p45, %p46
      %p48 = scmp.ne.s32.totalorder %s40, %s43
      %p49 = scmp.eq.s32.totalorder %s9, 0
      %p50 = por %p48, %p49
      %p51 = scmp.ne.s32.totalorder %s40, %s43
      %p52 = scmp.eq.s32.totalorder %s14, 1
      %p53 = por %p51, %p52
      %p54 = scmp.ne.s32.totalorder %s43, %s44
      %p55 = scmp.eq.s32.totalorder %s14, 0
      %p56 = por %p54, %p55
      %p57 = scmp.ne.s32.totalorder %s43, %s44
      %p58 = scmp.eq.s32.totalorder %s15, 1
      %p59 = por %p57, %p58
      %p61 = scmp.ne.s32.totalorder %s44, %s60
      %p62 = scmp.eq.s32.totalorder %s15, 0
      %p63 = por %p61, %p62
      %s64 = ssub.s32 %s18, %s27
      %s65 = ssub.s32 %s17, %s31
      %s66 = sor.u32 %s64, %s65
      %p67 = scmp.eq.s32.totalorder %s66, 0
      %s69 = sadd.s32 %s68, 1
      %s70 = scalar_select %p67, %s68, %s69
      %p73 = pneg %p67
      %p74 = scmp.eq.s32.totalorder %s9, 1
      %p75 = por %p73, %p74
      %p76 = scmp.ne.s32.totalorder %s68, %s71
      %p77 = scmp.eq.s32.totalorder %s9, 0
      %p78 = por %p76, %p77
      %p79 = scmp.ne.s32.totalorder %s68, %s71
      %p80 = scmp.eq.s32.totalorder %s14, 1
      %p81 = por %p79, %p80
      %p82 = scmp.ne.s32.totalorder %s71, %s72
      %p83 = scmp.eq.s32.totalorder %s14, 0
      %p84 = por %p82, %p83
      %p85 = scmp.ne.s32.totalorder %s71, %s72
      %p86 = scmp.eq.s32.totalorder %s15, 1
      %p87 = por %p85, %p86
      %p89 = scmp.ne.s32.totalorder %s72, %s88
      %p90 = scmp.eq.s32.totalorder %s15, 0
      %p91 = por %p89, %p90
      %s92 = ssub.s32 %s17, %s31
      %p93 = scmp.eq.s32.totalorder %s92, 0
      %s95 = sadd.s32 %s94, 1
      %s96 = scalar_select %p93, %s94, %s95
      %p99 = pneg %p93
      %p100 = scmp.eq.s32.totalorder %s9, 1
      %p101 = por %p99, %p100
      %p102 = scmp.ne.s32.totalorder %s94, %s97
      %p103 = scmp.eq.s32.totalorder %s9, 0
      %p104 = por %p102, %p103
      %p105 = scmp.ne.s32.totalorder %s94, %s97
      %p106 = scmp.eq.s32.totalorder %s14, 1
      %p107 = por %p105, %p106
      %p108 = scmp.ne.s32.totalorder %s97, %s98
      %p109 = scmp.eq.s32.totalorder %s14, 0
      %p110 = por %p108, %p109
      %p111 = scmp.ne.s32.totalorder %s97, %s98
      %p112 = scmp.eq.s32.totalorder %s15, 1
      %p113 = por %p111, %p112
      %p115 = scmp.ne.s32.totalorder %s98, %s114
      %p116 = scmp.eq.s32.totalorder %s15, 0
      %p117 = por %p115, %p116
      %s118 = ssub.s32 %s16, %s35
      %s119 = ssub.s32 %s17, %s31
      %s120 = sor.u32 %s118, %s119
      %p121 = scmp.eq.s32.totalorder %s120, 0
      %s123 = sadd.s32 %s122, 1
      %s124 = scalar_select %p121, %s122, %s123
      %p127 = pneg %p121
      %p128 = scmp.eq.s32.totalorder %s9, 1
      %p129 = por %p127, %p128
      %p130 = scmp.ne.s32.totalorder %s122, %s125
      %p131 = scmp.eq.s32.totalorder %s9, 0
      %p132 = por %p130, %p131
      %p133 = scmp.ne.s32.totalorder %s122, %s125
      %p134 = scmp.eq.s32.totalorder %s14, 1
      %p135 = por %p133, %p134
      %p136 = scmp.ne.s32.totalorder %s125, %s126
      %p137 = scmp.eq.s32.totalorder %s14, 0
      %p138 = por %p136, %p137
      %p139 = scmp.ne.s32.totalorder %s125, %s126
      %p140 = scmp.eq.s32.totalorder %s15, 1
      %p141 = por %p139, %p140
      %p143 = scmp.ne.s32.totalorder %s126, %s142
      %p144 = scmp.eq.s32.totalorder %s15, 0
      %p145 = por %p143, %p144
      %p146 = scmp.le.s32.totalorder 1, %s9
      %p147 = scmp.lt.s32.totalorder %s9, 3
      %p148 = pnand %p146, %p147
      %p149 = pneg %p148
      // Predicated region
      $region9: #{deeplab_forward.60} parent=5 // pred_check
        _
      $region10: #{deeplab_forward.60} parent=5 // pred_check_branch
        %151 = sbr.rel (%p148) target = $region12
      $region11: #{deeplab_forward.60} parent=5 // pred_region
        %s152 = ssub.s32 %s9, 1
        // Predicated region
        $region13: #{deeplab_forward.60} parent=11 // pred_check
          %p153 = pneg %p56
        $region14: #{deeplab_forward.60} parent=11 // pred_check_branch
          %155 = sbr.rel (%p153) target = $region16
        $region15: #{deeplab_forward.60} parent=11 // pred_region
          %s156 = smul.u32 4, %s19
          %p157 = scmp.lt.s32.totalorder %s156, 3
          %s158 = scalar_select %p157, %s156, 3
          %p159 = scmp.lt.s32.totalorder %s21, 0
          %s160 = scalar_select %p159, %s21, 0
          %s161 = sadd.s32 %s160, %s158
          %s162 = smul.addr %s161, 4
          %s163 = scalar_lea.vmem %s0, %s162
          %s164 = smul.u32 4, %s19
        $region16: #{deeplab_forward.60} parent=11 // pred_fallthru
          _
      $region12: #{deeplab_forward.60} parent=5 // pred_fallthru
        _
      %p165 = scmp.lt.s32.totalorder %s9, 2
      // Predicated region
      $region17: #{deeplab_forward.60} parent=5 // pred_check
        %p166 = pneg %p165
      $region18: #{deeplab_forward.60} parent=5 // pred_check_branch
        %168 = sbr.rel (%p166) target = $region20
      $region19: #{deeplab_forward.60} parent=5 // pred_region
        // Predicated region
        $region21: #{deeplab_forward.60} parent=19 // pred_check
          %p169 = pneg %p78
        $region22: #{deeplab_forward.60} parent=19 // pred_check_branch
          %171 = sbr.rel (%p169) target = $region24
        $region23: #{deeplab_forward.60} parent=19 // pred_region
          %s172 = sand.u32 %s68, 1
          %s173 = sand.u32 %s68, 1
          %s174 = smul.addr %s173, 128
          %s175 = scalar_lea.vmem [#allocation3], %s174
          %s176 = smul.u32 16, %s18
          %s177 = smul.u32 2, %s17
          %s178 = smul.addr %s176, 4
          %s179 = sadd.s32 %s177, %s178
          %s180 = smul.addr %s179, 4
          %s181 = scalar_lea.vmem %s1, %s180
          // Predicated region
          $region25: #{deeplab_forward.60} parent=23 // pred_check
            _
          $region26: #{deeplab_forward.60} parent=23 // pred_check_branch
            %183 = sbr.rel (0) target = $region28
          $region27: #{deeplab_forward.60} parent=23 // pred_region
            // Predicated region
            $region29: #{deeplab_forward.60} parent=27 // pred_check
              _
            $region30: #{deeplab_forward.60} parent=27 // pred_check_branch
              %185 = sbr.rel (0) target = $region32
            $region31: #{deeplab_forward.60} parent=27 // pred_region
              // Predicated region
              $region44: #{deeplab_forward.60} parent=31 // pred_check
                _
              $region45: #{deeplab_forward.60} parent=31 // pred_check_branch
                %230 = sbr.rel (0) target = $region47
              $region46: #{deeplab_forward.60} parent=31 // pred_region
                loop: start=0, step=1, limit=1
                $region48: #{deeplab_forward.60} parent=46 // loop_pre_header
                  _
                $region49: #{deeplab_forward.60} parent=46 // loop_header
                  %s232 = sphi 0, %s236
                  %p233 = scmp.ge.s32.totalorder %s232, 1
                  %s237 = sphi %s181, %s181
                  %s238 = sphi %s175, %s175
                $region50: #{deeplab_forward.60} parent=46 // loop_header_branch
                  %235 = sbr.rel (%p233) target = $region54
                $region51: #{deeplab_forward.60} parent=46 // loop_body
                  %v239 = vld [vmem:[%s237] sm:$0xff]
                  %240 = vst [vmem:[%s238] sm:$0xff] %v239
                  %v241 = vld [vmem:[%s237 + $0x10] sm:$0xff]
                  %242 = vst [vmem:[%s238 + $0x8] sm:$0xff] %v241
                  %v243 = vld [vmem:[%s237 + $0x20] sm:$0xff]
                  %244 = vst [vmem:[%s238 + $0x10] sm:$0xff] %v243
                  %v245 = vld [vmem:[%s237 + $0x30] sm:$0xff]
                  %246 = vst [vmem:[%s238 + $0x18] sm:$0xff] %v245
                  %v247 = vld [vmem:[%s237 + $0x40] sm:$0xff]
                  %248 = vst [vmem:[%s238 + $0x20] sm:$0xff] %v247
                  %v249 = vld [vmem:[%s237 + $0x50] sm:$0xff]
                  %250 = vst [vmem:[%s238 + $0x28] sm:$0xff] %v249
                  %v251 = vld [vmem:[%s237 + $0x60] sm:$0xff]
                  %252 = vst [vmem:[%s238 + $0x30] sm:$0xff] %v251
                  %v253 = vld [vmem:[%s237 + $0x70] sm:$0xff]
                  %254 = vst [vmem:[%s238 + $0x38] sm:$0xff] %v253
                  %v255 = vld [vmem:[%s237 + $0x80] sm:$0xff]
                  %256 = vst [vmem:[%s238 + $0x40] sm:$0xff] %v255
                  %v257 = vld [vmem:[%s237 + $0x90] sm:$0xff]
                  %258 = vst [vmem:[%s238 + $0x48] sm:$0xff] %v257
                  %v259 = vld [vmem:[%s237 + $0xa0] sm:$0xff]
                  %260 = vst [vmem:[%s238 + $0x50] sm:$0xff] %v259
                  %v261 = vld [vmem:[%s237 + $0xb0] sm:$0xff]
                  %262 = vst [vmem:[%s238 + $0x58] sm:$0xff] %v261
                  %v263 = vld [vmem:[%s237 + $0xc0] sm:$0xff]
                  %264 = vst [vmem:[%s238 + $0x60] sm:$0xff] %v263
                  %v265 = vld [vmem:[%s237 + $0xd0] sm:$0xff]
                  %266 = vst [vmem:[%s238 + $0x68] sm:$0xff] %v265
                  %v267 = vld [vmem:[%s237 + $0xe0] sm:$0xff]
                  %268 = vst [vmem:[%s238 + $0x70] sm:$0xff] %v267
                  %v269 = vld [vmem:[%s237 + $0xf0] sm:$0xff]
                  %270 = vst [vmem:[%s238 + $0x78] sm:$0xff] %v269
                $region52: #{deeplab_forward.60} parent=46 // loop_footer
                  %s236 = sadd.s32 1, %s232
                $region53: #{deeplab_forward.60} parent=46 // loop_footer_branch
                  %231 = sbr.rel target = $region49
                $region54: #{deeplab_forward.60} parent=46 // loop_exit
                  _
              $region47: #{deeplab_forward.60} parent=31 // pred_fallthru
                _
              // Predicated region
              $region55: #{deeplab_forward.60} parent=31 // pred_check
                _
              $region56: #{deeplab_forward.60} parent=31 // pred_check_branch
                %272 = sbr.rel target = $region58
              $region57: #{deeplab_forward.60} parent=31 // pred_region
                _
              $region58: #{deeplab_forward.60} parent=31 // pred_fallthru
                _
            $region32: #{deeplab_forward.60} parent=27 // pred_fallthru
              _
            // Predicated region
            $region33: #{deeplab_forward.60} parent=27 // pred_check
              _
            $region34: #{deeplab_forward.60} parent=27 // pred_check_branch
              %187 = sbr.rel target = $region36
            $region35: #{deeplab_forward.60} parent=27 // pred_region
              loop: start=0, step=1, limit=1
              $region37: #{deeplab_forward.60} parent=35 // loop_pre_header
                _
              $region38: #{deeplab_forward.60} parent=35 // loop_header
                %s190 = sphi 0, %s194
                %p191 = scmp.ge.s32.totalorder %s190, 1
                %s195 = sphi %s181, %s181
                %s196 = sphi %s175, %s175
              $region39: #{deeplab_forward.60} parent=35 // loop_header_branch
                %193 = sbr.rel (%p191) target = $region43
              $region40: #{deeplab_forward.60} parent=35 // loop_body
                %v197 = vld [vmem:[%s195] sm:$0xff]
                %198 = vst [vmem:[%s196] sm:$0xff] %v197
                %v199 = vld [vmem:[%s195 + $0x10] sm:$0xff]
                %200 = vst [vmem:[%s196 + $0x8] sm:$0xff] %v199
                %v201 = vld [vmem:[%s195 + $0x20] sm:$0xff]
                %202 = vst [vmem:[%s196 + $0x10] sm:$0xff] %v201
                %v203 = vld [vmem:[%s195 + $0x30] sm:$0xff]
                %204 = vst [vmem:[%s196 + $0x18] sm:$0xff] %v203
                %v205 = vld [vmem:[%s195 + $0x40] sm:$0xff]
                %206 = vst [vmem:[%s196 + $0x20] sm:$0xff] %v205
                %v207 = vld [vmem:[%s195 + $0x50] sm:$0xff]
                %208 = vst [vmem:[%s196 + $0x28] sm:$0xff] %v207
                %v209 = vld [vmem:[%s195 + $0x60] sm:$0xff]
                %210 = vst [vmem:[%s196 + $0x30] sm:$0xff] %v209
                %v211 = vld [vmem:[%s195 + $0x70] sm:$0xff]
                %212 = vst [vmem:[%s196 + $0x38] sm:$0xff] %v211
                %v213 = vld [vmem:[%s195 + $0x80] sm:$0xff]
                %214 = vst [vmem:[%s196 + $0x40] sm:$0xff] %v213
                %v215 = vld [vmem:[%s195 + $0x90] sm:$0xff]
                %216 = vst [vmem:[%s196 + $0x48] sm:$0xff] %v215
                %v217 = vld [vmem:[%s195 + $0xa0] sm:$0xff]
                %218 = vst [vmem:[%s196 + $0x50] sm:$0xff] %v217
                %v219 = vld [vmem:[%s195 + $0xb0] sm:$0xff]
                %220 = vst [vmem:[%s196 + $0x58] sm:$0xff] %v219
                %v221 = vld [vmem:[%s195 + $0xc0] sm:$0xff]
                %222 = vst [vmem:[%s196 + $0x60] sm:$0xff] %v221
                %v223 = vld [vmem:[%s195 + $0xd0] sm:$0xff]
                %224 = vst [vmem:[%s196 + $0x68] sm:$0xff] %v223
                %v225 = vld [vmem:[%s195 + $0xe0] sm:$0xff]
                %226 = vst [vmem:[%s196 + $0x70] sm:$0xff] %v225
                %v227 = vld [vmem:[%s195 + $0xf0] sm:$0xff]
                %228 = vst [vmem:[%s196 + $0x78] sm:$0xff] %v227
              $region41: #{deeplab_forward.60} parent=35 // loop_footer
                %s194 = sadd.s32 1, %s190
              $region42: #{deeplab_forward.60} parent=35 // loop_footer_branch
                %189 = sbr.rel target = $region38
              $region43: #{deeplab_forward.60} parent=35 // loop_exit
                _
            $region36: #{deeplab_forward.60} parent=27 // pred_fallthru
              _
          $region28: #{deeplab_forward.60} parent=23 // pred_fallthru
            _
          %273 = vnop
        $region24: #{deeplab_forward.60} parent=19 // pred_fallthru
          _
        // Predicated region
        $region59: #{deeplab_forward.60} parent=19 // pred_check
          %p274 = pneg %p104
        $region60: #{deeplab_forward.60} parent=19 // pred_check_branch
          %276 = sbr.rel (%p274) target = $region62
        $region61: #{deeplab_forward.60} parent=19 // pred_region
          %s277 = smul.u32 2, %s17
          %p278 = scmp.lt.s32.totalorder %s277, 3
          %s279 = scalar_select %p278, %s277, 3
          %s280 = scalar_lea.vmem %s2, %s279
          %s281 = smul.u32 2, %s17
        $region62: #{deeplab_forward.60} parent=19 // pred_fallthru
          _
      $region20: #{deeplab_forward.60} parent=5 // pred_fallthru
        _
      %p282 = scmp.le.s32.totalorder 1, %s9
      %p283 = scmp.lt.s32.totalorder %s9, 3
      %p284 = pnand %p282, %p283
      %p285 = pneg %p284
      // Predicated region
      $region63: #{deeplab_forward.60} parent=5 // pred_check
        _
      $region64: #{deeplab_forward.60} parent=5 // pred_check_branch
        %287 = sbr.rel (%p284) target = $region66
      $region65: #{deeplab_forward.60} parent=5 // pred_region
        %s288 = ssub.s32 %s9, 1
        %s289 = sand.u32 %s71, 1
        %s290 = sand.u32 %s71, 1
        %s291 = smul.addr %s290, 128
        %s292 = scalar_lea.vmem [#allocation3], %s291
        // Predicated region
        $region67: #{deeplab_forward.60} parent=65 // pred_check
          %p293 = pneg %p84
        $region68: #{deeplab_forward.60} parent=65 // pred_check_branch
          %295 = sbr.rel (%p293) target = $region70
        $region69: #{deeplab_forward.60} parent=65 // pred_region
          _
        $region70: #{deeplab_forward.60} parent=65 // pred_fallthru
          _
        %s296 = smul.u32 4, %s19
        %p297 = scmp.lt.s32.totalorder %s296, 3
        %s298 = scalar_select %p297, %s296, 3
        %p299 = scmp.lt.s32.totalorder %s21, 0
        %s300 = scalar_select %p299, %s21, 0
        %s301 = sadd.s32 %s300, %s298
        %s302 = smul.addr %s301, 4
        %s303 = scalar_lea.vmem %s0, %s302
        %p304 = pneg %p56
        %p305 = pneg %p53
        %s306 = sand.u32 %s71, 1
        %s307 = sand.u32 %s71, 1
        %s308 = smul.addr %s307, 128
        %s309 = scalar_lea.vmem [#allocation3], %s308
        %p310 = pneg %p84
        %p311 = pneg %p81
        %s312 = smul.u32 2, %s20
        %p313 = scmp.lt.s32.totalorder %s312, 3
        %s314 = scalar_select %p313, %s312, 3
        %s315 = scalar_lea.vmem %s2, %s314
        %p316 = pneg %p110
        %p317 = pneg %p107
        %p318 = pneg %p138
        %p319 = pneg %p135
        %s320 = sand.u32 %s125, 1
        %s321 = sand.u32 %s125, 1
        %s322 = smul.addr %s321, 32
        %s323 = scalar_lea.vmem [#allocation4], %s322
        %s324 = smul.u32 4, %s19
        %p325 = scmp.lt.s32.totalorder %s324, 3
        %s326 = scalar_select %p325, %s324, 3
        %p327 = scmp.lt.s32.totalorder %s21, 0
        %s328 = scalar_select %p327, %s21, 0
        %s329 = sadd.s32 %s328, %s326
        %s330 = smul.addr %s329, 4
        %s331 = scalar_lea.vmem %s0, %s330
        %s332 = smul.u32 4, %s19
        %s333 = smul.u32 16, %s21
        %s334 = smul.u32 2, %s20
        %s335 = smul.u32 2, %s20
        %p336 = scmp.lt.s32.totalorder %s335, 3
        %s337 = scalar_select %p336, %s335, 3
        %s338 = scalar_lea.vmem %s2, %s337
        %s339 = smul.u32 2, %s20
        %s340 = smul.u32 4, %s19
        %s341 = smul.u32 2, %s20
        %p343 = scmp.eq.s32.totalorder %s21, 0
        // Predicated region
        $region71: #{deeplab_forward.60} parent=65 // pred_check
          %p344 = pneg %p343
        $region72: #{deeplab_forward.60} parent=65 // pred_check_branch
          %346 = sbr.rel (%p344) target = $region74
        $region73: #{deeplab_forward.60} parent=65 // pred_region
          %347 = vst [vmem:[#allocation2] sm:$0xff] 0.0
          %348 = vst [vmem:[#allocation2 + $0x8] sm:$0xff] 0.0
          %349 = vst [vmem:[#allocation2 + $0x10] sm:$0xff] 0.0
          %350 = vst [vmem:[#allocation2 + $0x18] sm:$0xff] 0.0
          %351 = vst [vmem:[#allocation2 + $0x20] sm:$0xff] 0.0
          %352 = vst [vmem:[#allocation2 + $0x28] sm:$0xff] 0.0
          %353 = vst [vmem:[#allocation2 + $0x30] sm:$0xff] 0.0
          %354 = vst [vmem:[#allocation2 + $0x38] sm:$0xff] 0.0
        $region74: #{deeplab_forward.60} parent=65 // pred_fallthru
          _
        %v355 = vld [vmem:[#allocation2] sm:$0xff]
        %v356 = vld [vmem:[#allocation2 + $0x8] sm:$0xff]
        %v357 = vld [vmem:[#allocation2 + $0x10] sm:$0xff]
        %v358 = vld [vmem:[#allocation2 + $0x18] sm:$0xff]
        %v359 = vld [vmem:[#allocation2 + $0x20] sm:$0xff]
        %v360 = vld [vmem:[#allocation2 + $0x28] sm:$0xff]
        %v361 = vld [vmem:[#allocation2 + $0x30] sm:$0xff]
        %v362 = vld [vmem:[#allocation2 + $0x38] sm:$0xff]
        %v363 = vld [vmem:[%s331] sm:$0xf]
        %v364 = vld [vmem:[%s331 + $0x4] sm:$0xf]
        %v365 = vld [vmem:[%s331 + $0x8] sm:$0xf]
        %v366 = vld [vmem:[%s331 + $0xc] sm:$0xf]
        %v367 = vld [vmem:[%s292] sm:$0xff]
        %v368 = vld [vmem:[%s292 + $0x8] sm:$0xff]
        %v369 = vld [vmem:[%s292 + $0x10] sm:$0xff]
        %v370 = vld [vmem:[%s292 + $0x18] sm:$0xff]
        %v371 = vld [vmem:[%s292 + $0x20] sm:$0xff]
        %v372 = vld [vmem:[%s292 + $0x28] sm:$0xff]
        %v373 = vld [vmem:[%s292 + $0x30] sm:$0xff]
        %v374 = vld [vmem:[%s292 + $0x38] sm:$0xff]
        %v375 = vld [vmem:[%s292 + $0x40] sm:$0xff]
        %v376 = vld [vmem:[%s292 + $0x48] sm:$0xff]
        %v377 = vld [vmem:[%s292 + $0x50] sm:$0xff]
        %v378 = vld [vmem:[%s292 + $0x58] sm:$0xff]
        %v379 = vld [vmem:[%s292 + $0x60] sm:$0xff]
        %v380 = vld [vmem:[%s292 + $0x68] sm:$0xff]
        %v381 = vld [vmem:[%s292 + $0x70] sm:$0xff]
        %v382 = vld [vmem:[%s292 + $0x78] sm:$0xff]
        %v387 = vunpack.c.l.b16 %v363
        %v388 = vunpack.c.l.b16 %v364
        %v389 = vunpack.c.l.b16 %v365
        %v390 = vunpack.c.l.b16 %v366
        %v391 = vpack.c.b16 %v388, %v387
        %v392 = vpack.c.b16 %v390, %v389
        %v411 = vunpack.c.l.b16 %v367
        %v412 = vunpack.c.h.b16 %v367
        %v413 = vunpack.c.l.b16 %v368
        %v414 = vunpack.c.h.b16 %v368
        %v415 = vunpack.c.l.b16 %v369
        %v416 = vunpack.c.h.b16 %v369
        %v417 = vunpack.c.l.b16 %v370
        %v418 = vunpack.c.h.b16 %v370
        %v419 = vunpack.c.l.b16 %v371
        %v420 = vunpack.c.h.b16 %v371
        %v421 = vunpack.c.l.b16 %v372
        %v422 = vunpack.c.h.b16 %v372
        %v423 = vunpack.c.l.b16 %v373
        %v424 = vunpack.c.h.b16 %v373
        %v425 = vunpack.c.l.b16 %v374
        %v426 = vunpack.c.h.b16 %v374
        %v427 = vunpack.c.l.b16 %v375
        %v428 = vunpack.c.h.b16 %v375
        %v429 = vunpack.c.l.b16 %v376
        %v430 = vunpack.c.h.b16 %v376
        %v431 = vunpack.c.l.b16 %v377
        %v432 = vunpack.c.h.b16 %v377
        %v433 = vunpack.c.l.b16 %v378
        %v434 = vunpack.c.h.b16 %v378
        %v435 = vunpack.c.l.b16 %v379
        %v436 = vunpack.c.h.b16 %v379
        %v437 = vunpack.c.l.b16 %v380
        %v438 = vunpack.c.h.b16 %v380
        %v439 = vunpack.c.l.b16 %v381
        %v440 = vunpack.c.h.b16 %v381
        %v441 = vunpack.c.l.b16 %v382
        %v442 = vunpack.c.h.b16 %v382
        %v443 = vpack.c.b16 %v413, %v411
        %v444 = vpack.c.b16 %v414, %v412
        %v445 = vpack.c.b16 %v417, %v415
        %v446 = vpack.c.b16 %v418, %v416
        %v447 = vpack.c.b16 %v421, %v419
        %v448 = vpack.c.b16 %v422, %v420
        %v449 = vpack.c.b16 %v425, %v423
        %v450 = vpack.c.b16 %v426, %v424
        %v451 = vpack.c.b16 %v429, %v427
        %v452 = vpack.c.b16 %v430, %v428
        %v453 = vpack.c.b16 %v433, %v431
        %v454 = vpack.c.b16 %v434, %v432
        %v455 = vpack.c.b16 %v437, %v435
        %v456 = vpack.c.b16 %v438, %v436
        %v457 = vpack.c.b16 %v441, %v439
        %v458 = vpack.c.b16 %v442, %v440
        %475 = vmatprep.subr.bf16.mxu0 %v444
        %476 = vmatpush1.bf16.msra.mxu0 %v443
        %477 = vmatprep.subr.bf16.mxu0 %v446
        %478 = vmatpush1.bf16.msra.mxu0 %v445
        %479 = vmatprep.subr.bf16.mxu0 %v448
        %480 = vmatpush1.bf16.msra.mxu0 %v447
        %481 = vmatprep.subr.bf16.mxu0 %v450
        %482 = vmatpush1.bf16.msra.mxu0 %v449
        %483 = vmatprep.subr.bf16.mxu0 %v452
        %484 = vmatpush1.bf16.msra.mxu0 %v451
        %485 = vmatprep.subr.bf16.mxu0 %v454
        %486 = vmatpush1.bf16.msra.mxu0 %v453
        %487 = vmatprep.subr.bf16.mxu0 %v456
        %488 = vmatpush1.bf16.msra.mxu0 %v455
        %489 = vmatprep.subr.bf16.mxu0 %v458
        %490 = vmatpush1.bf16.msra.mxu0 %v457
        %491 = vmatprep.subr.bf16.mxu0 0
        %492 = vmatpush1.bf16.msra.mxu0 0
        %493 = vmatprep.subr.bf16.mxu0 0
        %494 = vmatpush1.bf16.msra.mxu0 0
        %495 = vmatprep.subr.bf16.mxu0 0
        %496 = vmatpush1.bf16.msra.mxu0 0
        %497 = vmatprep.subr.bf16.mxu0 0
        %498 = vmatpush1.bf16.msra.mxu0 0
        %499 = vmatprep.subr.bf16.mxu0 0
        %500 = vmatpush1.bf16.msra.mxu0 0
        %501 = vmatprep.subr.bf16.mxu0 0
        %502 = vmatpush1.bf16.msra.mxu0 0
        %503 = vmatprep.subr.bf16.mxu0 0
        %504 = vmatpush1.bf16.msra.mxu0 0
        %505 = vmatprep.subr.bf16.mxu0 0
        %506 = vmatpush1.bf16.msra.mxu0 0
        %507 = vmatprep.mubr.bf16.mxu0 0
        %508 = vmatmul.mubr.bf16.gmra.mrb[0].mxu0 %v391
        %v509 = vpop.f32.mrb[0].mxu0
        %v510 = vadd.f32 0.0, %v509
        %v511 = vpop.f32.mrb[0].mxu0
        %v512 = vadd.f32 0.0, %v511
        %v513 = vpop.f32.mrb[0].mxu0
        %v514 = vadd.f32 0.0, %v513
        %v515 = vpop.f32.mrb[0].mxu0
        %v516 = vadd.f32 0.0, %v515
        %517 = vmatprep.mubr.bf16.mxu0 0
        %518 = vmatmul.mubr.bf16.gmra.mrb[0].mxu0 %v392
        %v519 = vpop.f32.mrb[0].mxu0
        %v520 = vadd.f32 0.0, %v519
        %v521 = vpop.f32.mrb[0].mxu0
        %v522 = vadd.f32 0.0, %v521
        %v523 = vpop.f32.mrb[0].mxu0
        %v524 = vadd.f32 0.0, %v523
        %v525 = vpop.f32.mrb[0].mxu0
        %v526 = vadd.f32 0.0, %v525
        %527 = vdwg.mxu0
        %v528 = vadd.f32 %v355, %v510
        %v529 = vadd.f32 %v356, %v512
        %v530 = vadd.f32 %v357, %v514
        %v531 = vadd.f32 %v358, %v516
        %v532 = vadd.f32 %v359, %v520
        %v533 = vadd.f32 %v360, %v522
        %v534 = vadd.f32 %v361, %v524
        %v535 = vadd.f32 %v362, %v526
        %536 = vst [vmem:[#allocation2] sm:$0xff] %v528
        %537 = vst [vmem:[#allocation2 + $0x8] sm:$0xff] %v529
        %538 = vst [vmem:[#allocation2 + $0x10] sm:$0xff] %v530
        %539 = vst [vmem:[#allocation2 + $0x18] sm:$0xff] %v531
        %540 = vst [vmem:[#allocation2 + $0x20] sm:$0xff] %v532
        %541 = vst [vmem:[#allocation2 + $0x28] sm:$0xff] %v533
        %542 = vst [vmem:[#allocation2 + $0x30] sm:$0xff] %v534
        %543 = vst [vmem:[#allocation2 + $0x38] sm:$0xff] %v535
        // Predicated region
        $region75: #{deeplab_forward.60} parent=65 // pred_check
          %p544 = pneg %p343
        $region76: #{deeplab_forward.60} parent=65 // pred_check_branch
          %546 = sbr.rel (%p544) target = $region78
        $region77: #{deeplab_forward.60} parent=65 // pred_region
          %v547 = vld [vmem:[#allocation2] sm:$0xff]
          %v548 = vld [vmem:[#allocation2 + $0x8] sm:$0xff]
          %v549 = vld [vmem:[#allocation2 + $0x10] sm:$0xff]
          %v550 = vld [vmem:[#allocation2 + $0x18] sm:$0xff]
          %v551 = vld [vmem:[#allocation2 + $0x20] sm:$0xff]
          %v552 = vld [vmem:[#allocation2 + $0x28] sm:$0xff]
          %v553 = vld [vmem:[#allocation2 + $0x30] sm:$0xff]
          %v554 = vld [vmem:[#allocation2 + $0x38] sm:$0xff]
          %v555 = vld [vmem:[%s338] sm:$0x3]
          %v557 = vlaneseq
          %v558 = vshrl.u32 %v557, 7
          %v559 = vsub.s32 0, %v558
          %v560 = vrot.slane %v555, %v559
          %v561 = vlaneseq
          %v562 = vshrl.u32 %v561, 7
          %v563 = vsub.s32 1, %v562
          %v564 = vrot.slane %v555, %v563
          %v567 = vadd.f32 %v547, %v560
          %v568 = vadd.f32 %v548, %v564
          %v569 = vadd.f32 %v549, %v560
          %v570 = vadd.f32 %v550, %v564
          %v571 = vadd.f32 %v551, %v560
          %v572 = vadd.f32 %v552, %v564
          %v573 = vadd.f32 %v553, %v560
          %v574 = vadd.f32 %v554, %v564
          %v575 = vpack.c.bf16 %v569, %v567
          %v576 = vpack.c.bf16 %v570, %v568
          %v577 = vpack.c.bf16 %v573, %v571
          %v578 = vpack.c.bf16 %v574, %v572
          %v583 = vunpack.c.l.b16 %v575
          %v584 = vunpack.c.l.b16 %v576
          %v585 = vunpack.c.h.b16 %v575
          %v586 = vunpack.c.h.b16 %v576
          %v587 = vunpack.c.l.b16 %v577
          %v588 = vunpack.c.l.b16 %v578
          %v589 = vunpack.c.h.b16 %v577
          %v590 = vunpack.c.h.b16 %v578
          %v591 = vpack.c.b16 %v584, %v583
          %v592 = vpack.c.b16 %v586, %v585
          %v593 = vpack.c.b16 %v588, %v587
          %v594 = vpack.c.b16 %v590, %v589
          %599 = vst [vmem:[%s323] sm:$0xff] %v591
          %600 = vst [vmem:[%s323 + $0x8] sm:$0xff] %v592
          %601 = vst [vmem:[%s323 + $0x10] sm:$0xff] %v593
          %602 = vst [vmem:[%s323 + $0x18] sm:$0xff] %v594
        $region78: #{deeplab_forward.60} parent=65 // pred_fallthru
          _
        %s603 = sand.u32 %s125, 1
        %s604 = sand.u32 %s125, 1
        %s605 = smul.addr %s604, 32
        %s606 = scalar_lea.vmem [#allocation4], %s605
        // Predicated region
        $region79: #{deeplab_forward.60} parent=65 // pred_check
          %p607 = pneg %p135
        $region80: #{deeplab_forward.60} parent=65 // pred_check_branch
          %609 = sbr.rel (%p607) target = $region82
        $region81: #{deeplab_forward.60} parent=65 // pred_region
          %s610 = smul.u32 4, %s19
          %s611 = smul.u32 2, %s20
          %s612 = smul.addr %s610, 4
          %s613 = sadd.s32 %s611, %s612
          %s614 = smul.addr %s613, 4
          %s615 = scalar_lea.vmem %s3, %s614
          // Predicated region
          $region83: #{deeplab_forward.60} parent=81 // pred_check
            _
          $region84: #{deeplab_forward.60} parent=81 // pred_check_branch
            %617 = sbr.rel (0) target = $region86
          $region85: #{deeplab_forward.60} parent=81 // pred_region
            // Predicated region
            $region87: #{deeplab_forward.60} parent=85 // pred_check
              _
            $region88: #{deeplab_forward.60} parent=85 // pred_check_branch
              %619 = sbr.rel (0) target = $region90
            $region89: #{deeplab_forward.60} parent=85 // pred_region
              // Predicated region
              $region102: #{deeplab_forward.60} parent=89 // pred_check
                _
              $region103: #{deeplab_forward.60} parent=89 // pred_check_branch
                %640 = sbr.rel (0) target = $region105
              $region104: #{deeplab_forward.60} parent=89 // pred_region
                loop: start=0, step=1, limit=1
                $region106: #{deeplab_forward.60} parent=104 // loop_pre_header
                  _
                $region107: #{deeplab_forward.60} parent=104 // loop_header
                  %s642 = sphi 0, %s646
                  %p643 = scmp.ge.s32.totalorder %s642, 1
                  %s647 = sphi %s606, %s606
                  %s648 = sphi %s615, %s615
                $region108: #{deeplab_forward.60} parent=104 // loop_header_branch
                  %645 = sbr.rel (%p643) target = $region112
                $region109: #{deeplab_forward.60} parent=104 // loop_body
                  %v649 = vld [vmem:[%s647] sm:$0xff]
                  %650 = vst [vmem:[%s648] sm:$0xff] %v649
                  %v651 = vld [vmem:[%s647 + $0x8] sm:$0xff]
                  %652 = vst [vmem:[%s648 + $0x10] sm:$0xff] %v651
                  %v653 = vld [vmem:[%s647 + $0x10] sm:$0xff]
                  %654 = vst [vmem:[%s648 + $0x20] sm:$0xff] %v653
                  %v655 = vld [vmem:[%s647 + $0x18] sm:$0xff]
                  %656 = vst [vmem:[%s648 + $0x30] sm:$0xff] %v655
                $region110: #{deeplab_forward.60} parent=104 // loop_footer
                  %s646 = sadd.s32 1, %s642
                $region111: #{deeplab_forward.60} parent=104 // loop_footer_branch
                  %641 = sbr.rel target = $region107
                $region112: #{deeplab_forward.60} parent=104 // loop_exit
                  _
              $region105: #{deeplab_forward.60} parent=89 // pred_fallthru
                _
              // Predicated region
              $region113: #{deeplab_forward.60} parent=89 // pred_check
                _
              $region114: #{deeplab_forward.60} parent=89 // pred_check_branch
                %658 = sbr.rel target = $region116
              $region115: #{deeplab_forward.60} parent=89 // pred_region
                _
              $region116: #{deeplab_forward.60} parent=89 // pred_fallthru
                _
            $region90: #{deeplab_forward.60} parent=85 // pred_fallthru
              _
            // Predicated region
            $region91: #{deeplab_forward.60} parent=85 // pred_check
              _
            $region92: #{deeplab_forward.60} parent=85 // pred_check_branch
              %621 = sbr.rel target = $region94
            $region93: #{deeplab_forward.60} parent=85 // pred_region
              loop: start=0, step=1, limit=1
              $region95: #{deeplab_forward.60} parent=93 // loop_pre_header
                _
              $region96: #{deeplab_forward.60} parent=93 // loop_header
                %s624 = sphi 0, %s628
                %p625 = scmp.ge.s32.totalorder %s624, 1
                %s629 = sphi %s606, %s606
                %s630 = sphi %s615, %s615
              $region97: #{deeplab_forward.60} parent=93 // loop_header_branch
                %627 = sbr.rel (%p625) target = $region101
              $region98: #{deeplab_forward.60} parent=93 // loop_body
                %v631 = vld [vmem:[%s629] sm:$0xff]
                %632 = vst [vmem:[%s630] sm:$0xff] %v631
                %v633 = vld [vmem:[%s629 + $0x8] sm:$0xff]
                %634 = vst [vmem:[%s630 + $0x10] sm:$0xff] %v633
                %v635 = vld [vmem:[%s629 + $0x10] sm:$0xff]
                %636 = vst [vmem:[%s630 + $0x20] sm:$0xff] %v635
                %v637 = vld [vmem:[%s629 + $0x18] sm:$0xff]
                %638 = vst [vmem:[%s630 + $0x30] sm:$0xff] %v637
              $region99: #{deeplab_forward.60} parent=93 // loop_footer
                %s628 = sadd.s32 1, %s624
              $region100: #{deeplab_forward.60} parent=93 // loop_footer_branch
                %623 = sbr.rel target = $region96
              $region101: #{deeplab_forward.60} parent=93 // loop_exit
                _
            $region94: #{deeplab_forward.60} parent=85 // pred_fallthru
              _
          $region86: #{deeplab_forward.60} parent=81 // pred_fallthru
            _
          %659 = vnop
        $region82: #{deeplab_forward.60} parent=65 // pred_fallthru
          _
      $region66: #{deeplab_forward.60} parent=5 // pred_fallthru
        _
      %p660 = scmp.le.s32.totalorder 2, %s9
      // Predicated region
      $region117: #{deeplab_forward.60} parent=5 // pred_check
        %p661 = pneg %p660
      $region118: #{deeplab_forward.60} parent=5 // pred_check_branch
        %663 = sbr.rel (%p661) target = $region120
      $region119: #{deeplab_forward.60} parent=5 // pred_region
        %s664 = ssub.s32 %s9, 2
        // Predicated region
        $region121: #{deeplab_forward.60} parent=119 // pred_check
          %p665 = pneg %p141
        $region122: #{deeplab_forward.60} parent=119 // pred_check_branch
          %667 = sbr.rel (%p665) target = $region124
        $region123: #{deeplab_forward.60} parent=119 // pred_region
          %s668 = sand.u32 %s126, 1
          %s669 = sand.u32 %s126, 1
          %s670 = smul.addr %s669, 32
          %s671 = scalar_lea.vmem [#allocation4], %s670
        $region124: #{deeplab_forward.60} parent=119 // pred_fallthru
          _
      $region120: #{deeplab_forward.60} parent=5 // pred_fallthru
        _
    $region6: #{deeplab_forward.60} parent=1 // loop_footer
      %s13 = sadd.s32 1, %s9
    $region7: #{deeplab_forward.60} parent=1 // loop_footer_branch
      %8 = sbr.rel target = $region3
    $region8: #{deeplab_forward.60} parent=1 // loop_exit
      _

// kernel: deeplab_forward.61
$region0: #{deeplab_forward.61}
  #allocation0 [shape = 'u32[]', space=smem, size = 0x4, offset = 0x4, fixed_abs, tag = 'smem constant byte address 0x4 - core index']
  #allocation1 [shape = 'u32[144,128]{1,0:T(1,128)}', space=vmem, size = 0x12000, scoped, tag = 'internal scratch']
  #allocation2 [shape = 'f32[32,256]{1,0:T(8,128)}', space=vmem, size = 0x8000, scoped, tag = 'scratch operand']
  %s0 = inlined_call_operand.vmem [shape: bf16[32,128], index: 0, kind: input, shape index: {}]
  %s1 = inlined_call_operand.vmem [shape: bf16[128,1536], index: 1, kind: input, shape index: {}]
  %s2 = inlined_call_operand.vmem [shape: f32[1,1536], index: 2, kind: input, shape index: {}]
  %s3 = inlined_call_operand.vmem [shape: f32[32,1536], index: 3, kind: output, shape index: {}]
  %s4 = sld [smem:[#allocation0]]
  $region110: #{deeplab_forward.61} parent=0
    _
  %s6 = ssub.s32 1, %s4
  %s7 = scalar_select 0, %s6, %s4
  $region1: #{deeplab_forward.61} parent=0
    #allocation3 [shape = 'u8[131072]{0}', space=vmem, size = 0x20000, scoped, tag = 'input window, operand 1']
    #allocation4 [shape = 'u8[65536]{0}', space=vmem, size = 0x10000, scoped, tag = 'output window, operand 0']
    loop: start=0, step=1, limit=8
    $region2: #{deeplab_forward.61} parent=1 // loop_pre_header
      _
    $region3: #{deeplab_forward.61} parent=1 // loop_header
      %s9 = sphi 0, %s13
      %p10 = scmp.ge.s32.totalorder %s9, 8
      %s16 = sphi 0, %s35
      %s17 = sphi 0, %s31
      %s18 = sphi 0, %s27
      %s19 = sphi 0, %s16
      %s20 = sphi 0, %s17
      %s21 = sphi 0, %s18
      %s22 = sphi 0, %s19
      %s23 = sphi 0, %s20
      %s24 = sphi 0, %s21
      %s40 = sphi 0, %s42
      %s43 = sphi 0, %s40
      %s44 = sphi 0, %s43
      %s60 = sphi 0, %s44
      %s68 = sphi 0, %s70
      %s71 = sphi 0, %s68
      %s72 = sphi 0, %s71
      %s88 = sphi 0, %s72
      %s94 = sphi 0, %s96
      %s97 = sphi 0, %s94
      %s98 = sphi 0, %s97
      %s114 = sphi 0, %s98
      %s122 = sphi 0, %s124
      %s125 = sphi 0, %s122
      %s126 = sphi 0, %s125
      %s142 = sphi 0, %s126
    $region4: #{deeplab_forward.61} parent=1 // loop_header_branch
      %12 = sbr.rel (%p10) target = $region8
    $region5: #{deeplab_forward.61} parent=1 // loop_body
      %s14 = ssub.s32 %s9, 1
      %s15 = ssub.s32 %s9, 2
      %s25 = sadd.s32 1, %s18
      %p26 = scmp.ge.s32.totalorder %s25, 1
      %s27 = scalar_select %p26, 0, %s25
      %s28 = sadd.s32 1, %s17
      %s29 = scalar_select %p26, %s28, %s17
      %p30 = scmp.ge.s32.totalorder %s29, 6
      %s31 = scalar_select %p30, 0, %s29
      %s32 = sadd.s32 1, %s16
      %s33 = scalar_select %p30, %s32, %s16
      %p34 = scmp.ge.s32.totalorder %s33, 1
      %s35 = scalar_select %p34, 0, %s33
      %s36 = ssub.s32 %s16, %s35
      %s37 = ssub.s32 %s18, %s27
      %s38 = sor.u32 %s36, %s37
      %p39 = scmp.eq.s32.totalorder %s38, 0
      %s41 = sadd.s32 %s40, 1
      %s42 = scalar_select %p39, %s40, %s41
      %p45 = pneg %p39
      %p46 = scmp.eq.s32.totalorder %s9, 5
      %p47 = por %p45, %p46
      %p48 = scmp.ne.s32.totalorder %s40, %s43
      %p49 = scmp.eq.s32.totalorder %s9, 0
      %p50 = por %p48, %p49
      %p51 = scmp.ne.s32.totalorder %s40, %s43
      %p52 = scmp.eq.s32.totalorder %s14, 5
      %p53 = por %p51, %p52
      %p54 = scmp.ne.s32.totalorder %s43, %s44
      %p55 = scmp.eq.s32.totalorder %s14, 0
      %p56 = por %p54, %p55
      %p57 = scmp.ne.s32.totalorder %s43, %s44
      %p58 = scmp.eq.s32.totalorder %s15, 5
      %p59 = por %p57, %p58
      %p61 = scmp.ne.s32.totalorder %s44, %s60
      %p62 = scmp.eq.s32.totalorder %s15, 0
      %p63 = por %p61, %p62
      %s64 = ssub.s32 %s18, %s27
      %s65 = ssub.s32 %s17, %s31
      %s66 = sor.u32 %s64, %s65
      %p67 = scmp.eq.s32.totalorder %s66, 0
      %s69 = sadd.s32 %s68, 1
      %s70 = scalar_select %p67, %s68, %s69
      %p73 = pneg %p67
      %p74 = scmp.eq.s32.totalorder %s9, 5
      %p75 = por %p73, %p74
      %p76 = scmp.ne.s32.totalorder %s68, %s71
      %p77 = scmp.eq.s32.totalorder %s9, 0
      %p78 = por %p76, %p77
      %p79 = scmp.ne.s32.totalorder %s68, %s71
      %p80 = scmp.eq.s32.totalorder %s14, 5
      %p81 = por %p79, %p80
      %p82 = scmp.ne.s32.totalorder %s71, %s72
      %p83 = scmp.eq.s32.totalorder %s14, 0
      %p84 = por %p82, %p83
      %p85 = scmp.ne.s32.totalorder %s71, %s72
      %p86 = scmp.eq.s32.totalorder %s15, 5
      %p87 = por %p85, %p86
      %p89 = scmp.ne.s32.totalorder %s72, %s88
      %p90 = scmp.eq.s32.totalorder %s15, 0
      %p91 = por %p89, %p90
      %s92 = ssub.s32 %s17, %s31
      %p93 = scmp.eq.s32.totalorder %s92, 0
      %s95 = sadd.s32 %s94, 1
      %s96 = scalar_select %p93, %s94, %s95
      %p99 = pneg %p93
      %p100 = scmp.eq.s32.totalorder %s9, 5
      %p101 = por %p99, %p100
      %p102 = scmp.ne.s32.totalorder %s94, %s97
      %p103 = scmp.eq.s32.totalorder %s9, 0
      %p104 = por %p102, %p103
      %p105 = scmp.ne.s32.totalorder %s94, %s97
      %p106 = scmp.eq.s32.totalorder %s14, 5
      %p107 = por %p105, %p106
      %p108 = scmp.ne.s32.totalorder %s97, %s98
      %p109 = scmp.eq.s32.totalorder %s14, 0
      %p110 = por %p108, %p109
      %p111 = scmp.ne.s32.totalorder %s97, %s98
      %p112 = scmp.eq.s32.totalorder %s15, 5
      %p113 = por %p111, %p112
      %p115 = scmp.ne.s32.totalorder %s98, %s114
      %p116 = scmp.eq.s32.totalorder %s15, 0
      %p117 = por %p115, %p116
      %s118 = ssub.s32 %s16, %s35
      %s119 = ssub.s32 %s17, %s31
      %s120 = sor.u32 %s118, %s119
      %p121 = scmp.eq.s32.totalorder %s120, 0
      %s123 = sadd.s32 %s122, 1
      %s124 = scalar_select %p121, %s122, %s123
      %p127 = pneg %p121
      %p128 = scmp.eq.s32.totalorder %s9, 5
      %p129 = por %p127, %p128
      %p130 = scmp.ne.s32.totalorder %s122, %s125
      %p131 = scmp.eq.s32.totalorder %s9, 0
      %p132 = por %p130, %p131
      %p133 = scmp.ne.s32.totalorder %s122, %s125
      %p134 = scmp.eq.s32.totalorder %s14, 5
      %p135 = por %p133, %p134
      %p136 = scmp.ne.s32.totalorder %s125, %s126
      %p137 = scmp.eq.s32.totalorder %s14, 0
      %p138 = por %p136, %p137
      %p139 = scmp.ne.s32.totalorder %s125, %s126
      %p140 = scmp.eq.s32.totalorder %s15, 5
      %p141 = por %p139, %p140
      %p143 = scmp.ne.s32.totalorder %s126, %s142
      %p144 = scmp.eq.s32.totalorder %s15, 0
      %p145 = por %p143, %p144
      %p146 = scmp.le.s32.totalorder 1, %s9
      %p147 = scmp.lt.s32.totalorder %s9, 7
      %p148 = pnand %p146, %p147
      %p149 = pneg %p148
      // Predicated region
      $region9: #{deeplab_forward.61} parent=5 // pred_check
        _
      $region10: #{deeplab_forward.61} parent=5 // pred_check_branch
        %151 = sbr.rel (%p148) target = $region12
      $region11: #{deeplab_forward.61} parent=5 // pred_region
        %s152 = ssub.s32 %s9, 1
        // Predicated region
        $region13: #{deeplab_forward.61} parent=11 // pred_check
          %p153 = pneg %p56
        $region14: #{deeplab_forward.61} parent=11 // pred_check_branch
          %155 = sbr.rel (%p153) target = $region16
        $region15: #{deeplab_forward.61} parent=11 // pred_region
          %s156 = smul.u32 4, %s19
          %p157 = scmp.lt.s32.totalorder %s156, 3
          %s158 = scalar_select %p157, %s156, 3
          %p159 = scmp.lt.s32.totalorder %s21, 0
          %s160 = scalar_select %p159, %s21, 0
          %s161 = sadd.s32 %s160, %s158
          %s162 = smul.addr %s161, 4
          %s163 = scalar_lea.vmem %s0, %s162
          %s164 = smul.u32 4, %s19
        $region16: #{deeplab_forward.61} parent=11 // pred_fallthru
          _
      $region12: #{deeplab_forward.61} parent=5 // pred_fallthru
        _
      %p165 = scmp.lt.s32.totalorder %s9, 6
      // Predicated region
      $region17: #{deeplab_forward.61} parent=5 // pred_check
        %p166 = pneg %p165
      $region18: #{deeplab_forward.61} parent=5 // pred_check_branch
        %168 = sbr.rel (%p166) target = $region20
      $region19: #{deeplab_forward.61} parent=5 // pred_region
        // Predicated region
        $region21: #{deeplab_forward.61} parent=19 // pred_check
          %p169 = pneg %p78
        $region22: #{deeplab_forward.61} parent=19 // pred_check_branch
          %171 = sbr.rel (%p169) target = $region24
        $region23: #{deeplab_forward.61} parent=19 // pred_region
          %s172 = sand.u32 %s68, 1
          %s173 = sand.u32 %s68, 1
          %s174 = smul.addr %s173, 128
          %s175 = scalar_lea.vmem [#allocation3], %s174
          %s176 = smul.u32 16, %s18
          %s177 = smul.u32 2, %s17
          %s178 = smul.addr %s176, 12
          %s179 = sadd.s32 %s177, %s178
          %s180 = smul.addr %s179, 4
          %s181 = scalar_lea.vmem %s1, %s180
          // Predicated region
          $region25: #{deeplab_forward.61} parent=23 // pred_check
            _
          $region26: #{deeplab_forward.61} parent=23 // pred_check_branch
            %183 = sbr.rel (0) target = $region28
          $region27: #{deeplab_forward.61} parent=23 // pred_region
            // Predicated region
            $region29: #{deeplab_forward.61} parent=27 // pred_check
              _
            $region30: #{deeplab_forward.61} parent=27 // pred_check_branch
              %185 = sbr.rel (0) target = $region32
            $region31: #{deeplab_forward.61} parent=27 // pred_region
              // Predicated region
              $region44: #{deeplab_forward.61} parent=31 // pred_check
                _
              $region45: #{deeplab_forward.61} parent=31 // pred_check_branch
                %230 = sbr.rel (0) target = $region47
              $region46: #{deeplab_forward.61} parent=31 // pred_region
                loop: start=0, step=1, limit=1
                $region48: #{deeplab_forward.61} parent=46 // loop_pre_header
                  _
                $region49: #{deeplab_forward.61} parent=46 // loop_header
                  %s232 = sphi 0, %s236
                  %p233 = scmp.ge.s32.totalorder %s232, 1
                  %s237 = sphi %s181, %s181
                  %s238 = sphi %s175, %s175
                $region50: #{deeplab_forward.61} parent=46 // loop_header_branch
                  %235 = sbr.rel (%p233) target = $region54
                $region51: #{deeplab_forward.61} parent=46 // loop_body
                  %v239 = vld [vmem:[%s237] sm:$0xff]
                  %240 = vst [vmem:[%s238] sm:$0xff] %v239
                  %v241 = vld [vmem:[%s237 + $0x30] sm:$0xff]
                  %242 = vst [vmem:[%s238 + $0x8] sm:$0xff] %v241
                  %v243 = vld [vmem:[%s237 + $0x60] sm:$0xff]
                  %244 = vst [vmem:[%s238 + $0x10] sm:$0xff] %v243
                  %v245 = vld [vmem:[%s237 + $0x90] sm:$0xff]
                  %246 = vst [vmem:[%s238 + $0x18] sm:$0xff] %v245
                  %v247 = vld [vmem:[%s237 + $0xc0] sm:$0xff]
                  %248 = vst [vmem:[%s238 + $0x20] sm:$0xff] %v247
                  %v249 = vld [vmem:[%s237 + $0xf0] sm:$0xff]
                  %250 = vst [vmem:[%s238 + $0x28] sm:$0xff] %v249
                  %v251 = vld [vmem:[%s237 + $0x120] sm:$0xff]
                  %252 = vst [vmem:[%s238 + $0x30] sm:$0xff] %v251
                  %v253 = vld [vmem:[%s237 + $0x150] sm:$0xff]
                  %254 = vst [vmem:[%s238 + $0x38] sm:$0xff] %v253
                  %v255 = vld [vmem:[%s237 + $0x180] sm:$0xff]
                  %256 = vst [vmem:[%s238 + $0x40] sm:$0xff] %v255
                  %v257 = vld [vmem:[%s237 + $0x1b0] sm:$0xff]
                  %258 = vst [vmem:[%s238 + $0x48] sm:$0xff] %v257
                  %v259 = vld [vmem:[%s237 + $0x1e0] sm:$0xff]
                  %260 = vst [vmem:[%s238 + $0x50] sm:$0xff] %v259
                  %v261 = vld [vmem:[%s237 + $0x210] sm:$0xff]
                  %262 = vst [vmem:[%s238 + $0x58] sm:$0xff] %v261
                  %v263 = vld [vmem:[%s237 + $0x240] sm:$0xff]
                  %264 = vst [vmem:[%s238 + $0x60] sm:$0xff] %v263
                  %v265 = vld [vmem:[%s237 + $0x270] sm:$0xff]
                  %266 = vst [vmem:[%s238 + $0x68] sm:$0xff] %v265
                  %v267 = vld [vmem:[%s237 + $0x2a0] sm:$0xff]
                  %268 = vst [vmem:[%s238 + $0x70] sm:$0xff] %v267
                  %v269 = vld [vmem:[%s237 + $0x2d0] sm:$0xff]
                  %270 = vst [vmem:[%s238 + $0x78] sm:$0xff] %v269
                $region52: #{deeplab_forward.61} parent=46 // loop_footer
                  %s236 = sadd.s32 1, %s232
                $region53: #{deeplab_forward.61} parent=46 // loop_footer_branch
                  %231 = sbr.rel target = $region49
                $region54: #{deeplab_forward.61} parent=46 // loop_exit
                  _
              $region47: #{deeplab_forward.61} parent=31 // pred_fallthru
                _
              // Predicated region
              $region55: #{deeplab_forward.61} parent=31 // pred_check
                _
              $region56: #{deeplab_forward.61} parent=31 // pred_check_branch
                %272 = sbr.rel target = $region58
              $region57: #{deeplab_forward.61} parent=31 // pred_region
                _
              $region58: #{deeplab_forward.61} parent=31 // pred_fallthru
                _
            $region32: #{deeplab_forward.61} parent=27 // pred_fallthru
              _
            // Predicated region
            $region33: #{deeplab_forward.61} parent=27 // pred_check
              _
            $region34: #{deeplab_forward.61} parent=27 // pred_check_branch
              %187 = sbr.rel target = $region36
            $region35: #{deeplab_forward.61} parent=27 // pred_region
              loop: start=0, step=1, limit=1
              $region37: #{deeplab_forward.61} parent=35 // loop_pre_header
                _
              $region38: #{deeplab_forward.61} parent=35 // loop_header
                %s190 = sphi 0, %s194
                %p191 = scmp.ge.s32.totalorder %s190, 1
                %s195 = sphi %s181, %s181
                %s196 = sphi %s175, %s175
              $region39: #{deeplab_forward.61} parent=35 // loop_header_branch
                %193 = sbr.rel (%p191) target = $region43
              $region40: #{deeplab_forward.61} parent=35 // loop_body
                %v197 = vld [vmem:[%s195] sm:$0xff]
                %198 = vst [vmem:[%s196] sm:$0xff] %v197
                %v199 = vld [vmem:[%s195 + $0x30] sm:$0xff]
                %200 = vst [vmem:[%s196 + $0x8] sm:$0xff] %v199
                %v201 = vld [vmem:[%s195 + $0x60] sm:$0xff]
                %202 = vst [vmem:[%s196 + $0x10] sm:$0xff] %v201
                %v203 = vld [vmem:[%s195 + $0x90] sm:$0xff]
                %204 = vst [vmem:[%s196 + $0x18] sm:$0xff] %v203
                %v205 = vld [vmem:[%s195 + $0xc0] sm:$0xff]
                %206 = vst [vmem:[%s196 + $0x20] sm:$0xff] %v205
                %v207 = vld [vmem:[%s195 + $0xf0] sm:$0xff]
                %208 = vst [vmem:[%s196 + $0x28] sm:$0xff] %v207
                %v209 = vld [vmem:[%s195 + $0x120] sm:$0xff]
                %210 = vst [vmem:[%s196 + $0x30] sm:$0xff] %v209
                %v211 = vld [vmem:[%s195 + $0x150] sm:$0xff]
                %212 = vst [vmem:[%s196 + $0x38] sm:$0xff] %v211
                %v213 = vld [vmem:[%s195 + $0x180] sm:$0xff]
                %214 = vst [vmem:[%s196 + $0x40] sm:$0xff] %v213
                %v215 = vld [vmem:[%s195 + $0x1b0] sm:$0xff]
                %216 = vst [vmem:[%s196 + $0x48] sm:$0xff] %v215
                %v217 = vld [vmem:[%s195 + $0x1e0] sm:$0xff]
                %218 = vst [vmem:[%s196 + $0x50] sm:$0xff] %v217
                %v219 = vld [vmem:[%s195 + $0x210] sm:$0xff]
                %220 = vst [vmem:[%s196 + $0x58] sm:$0xff] %v219
                %v221 = vld [vmem:[%s195 + $0x240] sm:$0xff]
                %222 = vst [vmem:[%s196 + $0x60] sm:$0xff] %v221
                %v223 = vld [vmem:[%s195 + $0x270] sm:$0xff]
                %224 = vst [vmem:[%s196 + $0x68] sm:$0xff] %v223
                %v225 = vld [vmem:[%s195 + $0x2a0] sm:$0xff]
                %226 = vst [vmem:[%s196 + $0x70] sm:$0xff] %v225
                %v227 = vld [vmem:[%s195 + $0x2d0] sm:$0xff]
                %228 = vst [vmem:[%s196 + $0x78] sm:$0xff] %v227
              $region41: #{deeplab_forward.61} parent=35 // loop_footer
                %s194 = sadd.s32 1, %s190
              $region42: #{deeplab_forward.61} parent=35 // loop_footer_branch
                %189 = sbr.rel target = $region38
              $region43: #{deeplab_forward.61} parent=35 // loop_exit
                _
            $region36: #{deeplab_forward.61} parent=27 // pred_fallthru
              _
          $region28: #{deeplab_forward.61} parent=23 // pred_fallthru
            _
          %273 = vnop
        $region24: #{deeplab_forward.61} parent=19 // pred_fallthru
          _
        // Predicated region
        $region59: #{deeplab_forward.61} parent=19 // pred_check
          %p274 = pneg %p104
        $region60: #{deeplab_forward.61} parent=19 // pred_check_branch
          %276 = sbr.rel (%p274) target = $region62
        $region61: #{deeplab_forward.61} parent=19 // pred_region
          %s277 = smul.u32 2, %s17
          %p278 = scmp.lt.s32.totalorder %s277, 11
          %s279 = scalar_select %p278, %s277, 11
          %s280 = scalar_lea.vmem %s2, %s279
          %s281 = smul.u32 2, %s17
        $region62: #{deeplab_forward.61} parent=19 // pred_fallthru
          _
      $region20: #{deeplab_forward.61} parent=5 // pred_fallthru
        _
      %p282 = scmp.le.s32.totalorder 1, %s9
      %p283 = scmp.lt.s32.totalorder %s9, 7
      %p284 = pnand %p282, %p283
      %p285 = pneg %p284
      // Predicated region
      $region63: #{deeplab_forward.61} parent=5 // pred_check
        _
      $region64: #{deeplab_forward.61} parent=5 // pred_check_branch
        %287 = sbr.rel (%p284) target = $region66
      $region65: #{deeplab_forward.61} parent=5 // pred_region
        %s288 = ssub.s32 %s9, 1
        %s289 = sand.u32 %s71, 1
        %s290 = sand.u32 %s71, 1
        %s291 = smul.addr %s290, 128
        %s292 = scalar_lea.vmem [#allocation3], %s291
        // Predicated region
        $region67: #{deeplab_forward.61} parent=65 // pred_check
          %p293 = pneg %p84
        $region68: #{deeplab_forward.61} parent=65 // pred_check_branch
          %295 = sbr.rel (%p293) target = $region70
        $region69: #{deeplab_forward.61} parent=65 // pred_region
          _
        $region70: #{deeplab_forward.61} parent=65 // pred_fallthru
          _
        %s296 = smul.u32 4, %s19
        %p297 = scmp.lt.s32.totalorder %s296, 3
        %s298 = scalar_select %p297, %s296, 3
        %p299 = scmp.lt.s32.totalorder %s21, 0
        %s300 = scalar_select %p299, %s21, 0
        %s301 = sadd.s32 %s300, %s298
        %s302 = smul.addr %s301, 4
        %s303 = scalar_lea.vmem %s0, %s302
        %p304 = pneg %p56
        %p305 = pneg %p53
        %s306 = sand.u32 %s71, 1
        %s307 = sand.u32 %s71, 1
        %s308 = smul.addr %s307, 128
        %s309 = scalar_lea.vmem [#allocation3], %s308
        %p310 = pneg %p84
        %p311 = pneg %p81
        %s312 = smul.u32 2, %s20
        %p313 = scmp.lt.s32.totalorder %s312, 11
        %s314 = scalar_select %p313, %s312, 11
        %s315 = scalar_lea.vmem %s2, %s314
        %p316 = pneg %p110
        %p317 = pneg %p107
        %p318 = pneg %p138
        %p319 = pneg %p135
        %s320 = sand.u32 %s125, 1
        %s321 = sand.u32 %s125, 1
        %s322 = smul.addr %s321, 64
        %s323 = scalar_lea.vmem [#allocation4], %s322
        %s324 = smul.u32 4, %s19
        %p325 = scmp.lt.s32.totalorder %s324, 3
        %s326 = scalar_select %p325, %s324, 3
        %p327 = scmp.lt.s32.totalorder %s21, 0
        %s328 = scalar_select %p327, %s21, 0
        %s329 = sadd.s32 %s328, %s326
        %s330 = smul.addr %s329, 4
        %s331 = scalar_lea.vmem %s0, %s330
        %s332 = smul.u32 4, %s19
        %s333 = smul.u32 16, %s21
        %s334 = smul.u32 2, %s20
        %s335 = smul.u32 2, %s20
        %p336 = scmp.lt.s32.totalorder %s335, 11
        %s337 = scalar_select %p336, %s335, 11
        %s338 = scalar_lea.vmem %s2, %s337
        %s339 = smul.u32 2, %s20
        %s340 = smul.u32 4, %s19
        %s341 = smul.u32 2, %s20
        %p343 = scmp.eq.s32.totalorder %s21, 0
        // Predicated region
        $region71: #{deeplab_forward.61} parent=65 // pred_check
          %p344 = pneg %p343
        $region72: #{deeplab_forward.61} parent=65 // pred_check_branch
          %346 = sbr.rel (%p344) target = $region74
        $region73: #{deeplab_forward.61} parent=65 // pred_region
          %347 = vst [vmem:[#allocation2] sm:$0xff] 0.0
          %348 = vst [vmem:[#allocation2 + $0x8] sm:$0xff] 0.0
          %349 = vst [vmem:[#allocation2 + $0x10] sm:$0xff] 0.0
          %350 = vst [vmem:[#allocation2 + $0x18] sm:$0xff] 0.0
          %351 = vst [vmem:[#allocation2 + $0x20] sm:$0xff] 0.0
          %352 = vst [vmem:[#allocation2 + $0x28] sm:$0xff] 0.0
          %353 = vst [vmem:[#allocation2 + $0x30] sm:$0xff] 0.0
          %354 = vst [vmem:[#allocation2 + $0x38] sm:$0xff] 0.0
        $region74: #{deeplab_forward.61} parent=65 // pred_fallthru
          _
        %v355 = vld [vmem:[#allocation2] sm:$0xff]
        %v356 = vld [vmem:[#allocation2 + $0x8] sm:$0xff]
        %v357 = vld [vmem:[#allocation2 + $0x10] sm:$0xff]
        %v358 = vld [vmem:[#allocation2 + $0x18] sm:$0xff]
        %v359 = vld [vmem:[#allocation2 + $0x20] sm:$0xff]
        %v360 = vld [vmem:[#allocation2 + $0x28] sm:$0xff]
        %v361 = vld [vmem:[#allocation2 + $0x30] sm:$0xff]
        %v362 = vld [vmem:[#allocation2 + $0x38] sm:$0xff]
        %v363 = vld [vmem:[%s331] sm:$0xf]
        %v364 = vld [vmem:[%s331 + $0x4] sm:$0xf]
        %v365 = vld [vmem:[%s331 + $0x8] sm:$0xf]
        %v366 = vld [vmem:[%s331 + $0xc] sm:$0xf]
        %v367 = vld [vmem:[%s292] sm:$0xff]
        %v368 = vld [vmem:[%s292 + $0x8] sm:$0xff]
        %v369 = vld [vmem:[%s292 + $0x10] sm:$0xff]
        %v370 = vld [vmem:[%s292 + $0x18] sm:$0xff]
        %v371 = vld [vmem:[%s292 + $0x20] sm:$0xff]
        %v372 = vld [vmem:[%s292 + $0x28] sm:$0xff]
        %v373 = vld [vmem:[%s292 + $0x30] sm:$0xff]
        %v374 = vld [vmem:[%s292 + $0x38] sm:$0xff]
        %v375 = vld [vmem:[%s292 + $0x40] sm:$0xff]
        %v376 = vld [vmem:[%s292 + $0x48] sm:$0xff]
        %v377 = vld [vmem:[%s292 + $0x50] sm:$0xff]
        %v378 = vld [vmem:[%s292 + $0x58] sm:$0xff]
        %v379 = vld [vmem:[%s292 + $0x60] sm:$0xff]
        %v380 = vld [vmem:[%s292 + $0x68] sm:$0xff]
        %v381 = vld [vmem:[%s292 + $0x70] sm:$0xff]
        %v382 = vld [vmem:[%s292 + $0x78] sm:$0xff]
        %v387 = vunpack.c.l.b16 %v363
        %v388 = vunpack.c.l.b16 %v364
        %v389 = vunpack.c.l.b16 %v365
        %v390 = vunpack.c.l.b16 %v366
        %v391 = vpack.c.b16 %v388, %v387
        %v392 = vpack.c.b16 %v390, %v389
        %v411 = vunpack.c.l.b16 %v367
        %v412 = vunpack.c.h.b16 %v367
        %v413 = vunpack.c.l.b16 %v368
        %v414 = vunpack.c.h.b16 %v368
        %v415 = vunpack.c.l.b16 %v369
        %v416 = vunpack.c.h.b16 %v369
        %v417 = vunpack.c.l.b16 %v370
        %v418 = vunpack.c.h.b16 %v370
        %v419 = vunpack.c.l.b16 %v371
        %v420 = vunpack.c.h.b16 %v371
        %v421 = vunpack.c.l.b16 %v372
        %v422 = vunpack.c.h.b16 %v372
        %v423 = vunpack.c.l.b16 %v373
        %v424 = vunpack.c.h.b16 %v373
        %v425 = vunpack.c.l.b16 %v374
        %v426 = vunpack.c.h.b16 %v374
        %v427 = vunpack.c.l.b16 %v375
        %v428 = vunpack.c.h.b16 %v375
        %v429 = vunpack.c.l.b16 %v376
        %v430 = vunpack.c.h.b16 %v376
        %v431 = vunpack.c.l.b16 %v377
        %v432 = vunpack.c.h.b16 %v377
        %v433 = vunpack.c.l.b16 %v378
        %v434 = vunpack.c.h.b16 %v378
        %v435 = vunpack.c.l.b16 %v379
        %v436 = vunpack.c.h.b16 %v379
        %v437 = vunpack.c.l.b16 %v380
        %v438 = vunpack.c.h.b16 %v380
        %v439 = vunpack.c.l.b16 %v381
        %v440 = vunpack.c.h.b16 %v381
        %v441 = vunpack.c.l.b16 %v382
        %v442 = vunpack.c.h.b16 %v382
        %v443 = vpack.c.b16 %v413, %v411
        %v444 = vpack.c.b16 %v414, %v412
        %v445 = vpack.c.b16 %v417, %v415
        %v446 = vpack.c.b16 %v418, %v416
        %v447 = vpack.c.b16 %v421, %v419
        %v448 = vpack.c.b16 %v422, %v420
        %v449 = vpack.c.b16 %v425, %v423
        %v450 = vpack.c.b16 %v426, %v424
        %v451 = vpack.c.b16 %v429, %v427
        %v452 = vpack.c.b16 %v430, %v428
        %v453 = vpack.c.b16 %v433, %v431
        %v454 = vpack.c.b16 %v434, %v432
        %v455 = vpack.c.b16 %v437, %v435
        %v456 = vpack.c.b16 %v438, %v436
        %v457 = vpack.c.b16 %v441, %v439
        %v458 = vpack.c.b16 %v442, %v440
        %475 = vmatprep.subr.bf16.mxu0 %v444
        %476 = vmatpush1.bf16.msra.mxu0 %v443
        %477 = vmatprep.subr.bf16.mxu0 %v446
        %478 = vmatpush1.bf16.msra.mxu0 %v445
        %479 = vmatprep.subr.bf16.mxu0 %v448
        %480 = vmatpush1.bf16.msra.mxu0 %v447
        %481 = vmatprep.subr.bf16.mxu0 %v450
        %482 = vmatpush1.bf16.msra.mxu0 %v449
        %483 = vmatprep.subr.bf16.mxu0 %v452
        %484 = vmatpush1.bf16.msra.mxu0 %v451
        %485 = vmatprep.subr.bf16.mxu0 %v454
        %486 = vmatpush1.bf16.msra.mxu0 %v453
        %487 = vmatprep.subr.bf16.mxu0 %v456
        %488 = vmatpush1.bf16.msra.mxu0 %v455
        %489 = vmatprep.subr.bf16.mxu0 %v458
        %490 = vmatpush1.bf16.msra.mxu0 %v457
        %491 = vmatprep.subr.bf16.mxu0 0
        %492 = vmatpush1.bf16.msra.mxu0 0
        %493 = vmatprep.subr.bf16.mxu0 0
        %494 = vmatpush1.bf16.msra.mxu0 0
        %495 = vmatprep.subr.bf16.mxu0 0
        %496 = vmatpush1.bf16.msra.mxu0 0
        %497 = vmatprep.subr.bf16.mxu0 0
        %498 = vmatpush1.bf16.msra.mxu0 0
        %499 = vmatprep.subr.bf16.mxu0 0
        %500 = vmatpush1.bf16.msra.mxu0 0
        %501 = vmatprep.subr.bf16.mxu0 0
        %502 = vmatpush1.bf16.msra.mxu0 0
        %503 = vmatprep.subr.bf16.mxu0 0
        %504 = vmatpush1.bf16.msra.mxu0 0
        %505 = vmatprep.subr.bf16.mxu0 0
        %506 = vmatpush1.bf16.msra.mxu0 0
        %507 = vmatprep.mubr.bf16.mxu0 0
        %508 = vmatmul.mubr.bf16.gmra.mrb[0].mxu0 %v391
        %v509 = vpop.f32.mrb[0].mxu0
        %v510 = vadd.f32 0.0, %v509
        %v511 = vpop.f32.mrb[0].mxu0
        %v512 = vadd.f32 0.0, %v511
        %v513 = vpop.f32.mrb[0].mxu0
        %v514 = vadd.f32 0.0, %v513
        %v515 = vpop.f32.mrb[0].mxu0
        %v516 = vadd.f32 0.0, %v515
        %517 = vmatprep.mubr.bf16.mxu0 0
        %518 = vmatmul.mubr.bf16.gmra.mrb[0].mxu0 %v392
        %v519 = vpop.f32.mrb[0].mxu0
        %v520 = vadd.f32 0.0, %v519
        %v521 = vpop.f32.mrb[0].mxu0
        %v522 = vadd.f32 0.0, %v521
        %v523 = vpop.f32.mrb[0].mxu0
        %v524 = vadd.f32 0.0, %v523
        %v525 = vpop.f32.mrb[0].mxu0
        %v526 = vadd.f32 0.0, %v525
        %527 = vdwg.mxu0
        %v528 = vadd.f32 %v355, %v510
        %v529 = vadd.f32 %v356, %v512
        %v530 = vadd.f32 %v357, %v514
        %v531 = vadd.f32 %v358, %v516
        %v532 = vadd.f32 %v359, %v520
        %v533 = vadd.f32 %v360, %v522
        %v534 = vadd.f32 %v361, %v524
        %v535 = vadd.f32 %v362, %v526
        %536 = vst [vmem:[#allocation2] sm:$0xff] %v528
        %537 = vst [vmem:[#allocation2 + $0x8] sm:$0xff] %v529
        %538 = vst [vmem:[#allocation2 + $0x10] sm:$0xff] %v530
        %539 = vst [vmem:[#allocation2 + $0x18] sm:$0xff] %v531
        %540 = vst [vmem:[#allocation2 + $0x20] sm:$0xff] %v532
        %541 = vst [vmem:[#allocation2 + $0x28] sm:$0xff] %v533
        %542 = vst [vmem:[#allocation2 + $0x30] sm:$0xff] %v534
        %543 = vst [vmem:[#allocation2 + $0x38] sm:$0xff] %v535
        // Predicated region
        $region75: #{deeplab_forward.61} parent=65 // pred_check
          %p544 = pneg %p343
        $region76: #{deeplab_forward.61} parent=65 // pred_check_branch
          %546 = sbr.rel (%p544) target = $region78
        $region77: #{deeplab_forward.61} parent=65 // pred_region
          %v547 = vld [vmem:[#allocation2] sm:$0xff]
          %v548 = vld [vmem:[#allocation2 + $0x8] sm:$0xff]
          %v549 = vld [vmem:[#allocation2 + $0x10] sm:$0xff]
          %v550 = vld [vmem:[#allocation2 + $0x18] sm:$0xff]
          %v551 = vld [vmem:[#allocation2 + $0x20] sm:$0xff]
          %v552 = vld [vmem:[#allocation2 + $0x28] sm:$0xff]
          %v553 = vld [vmem:[#allocation2 + $0x30] sm:$0xff]
          %v554 = vld [vmem:[#allocation2 + $0x38] sm:$0xff]
          %v555 = vld [vmem:[%s338] sm:$0x3]
          %v557 = vlaneseq
          %v558 = vshrl.u32 %v557, 7
          %v559 = vsub.s32 0, %v558
          %v560 = vrot.slane %v555, %v559
          %v561 = vlaneseq
          %v562 = vshrl.u32 %v561, 7
          %v563 = vsub.s32 1, %v562
          %v564 = vrot.slane %v555, %v563
          %v567 = vadd.f32 %v547, %v560
          %v568 = vadd.f32 %v548, %v564
          %v569 = vadd.f32 %v549, %v560
          %v570 = vadd.f32 %v550, %v564
          %v571 = vadd.f32 %v551, %v560
          %v572 = vadd.f32 %v552, %v564
          %v573 = vadd.f32 %v553, %v560
          %v574 = vadd.f32 %v554, %v564
          %575 = vst [vmem:[%s323] sm:$0xff] %v567
          %576 = vst [vmem:[%s323 + $0x8] sm:$0xff] %v568
          %577 = vst [vmem:[%s323 + $0x10] sm:$0xff] %v569
          %578 = vst [vmem:[%s323 + $0x18] sm:$0xff] %v570
          %579 = vst [vmem:[%s323 + $0x20] sm:$0xff] %v571
          %580 = vst [vmem:[%s323 + $0x28] sm:$0xff] %v572
          %581 = vst [vmem:[%s323 + $0x30] sm:$0xff] %v573
          %582 = vst [vmem:[%s323 + $0x38] sm:$0xff] %v574
        $region78: #{deeplab_forward.61} parent=65 // pred_fallthru
          _
        %s583 = sand.u32 %s125, 1
        %s584 = sand.u32 %s125, 1
        %s585 = smul.addr %s584, 64
        %s586 = scalar_lea.vmem [#allocation4], %s585
        // Predicated region
        $region79: #{deeplab_forward.61} parent=65 // pred_check
          %p587 = pneg %p135
        $region80: #{deeplab_forward.61} parent=65 // pred_check_branch
          %589 = sbr.rel (%p587) target = $region82
        $region81: #{deeplab_forward.61} parent=65 // pred_region
          %s590 = smul.u32 4, %s19
          %s591 = smul.u32 2, %s20
          %s592 = smul.addr %s590, 12
          %s593 = sadd.s32 %s591, %s592
          %s594 = smul.addr %s593, 8
          %s595 = scalar_lea.vmem %s3, %s594
          // Predicated region
          $region83: #{deeplab_forward.61} parent=81 // pred_check
            _
          $region84: #{deeplab_forward.61} parent=81 // pred_check_branch
            %597 = sbr.rel (0) target = $region86
          $region85: #{deeplab_forward.61} parent=81 // pred_region
            // Predicated region
            $region87: #{deeplab_forward.61} parent=85 // pred_check
              _
            $region88: #{deeplab_forward.61} parent=85 // pred_check_branch
              %599 = sbr.rel (0) target = $region90
            $region89: #{deeplab_forward.61} parent=85 // pred_region
              loop: start=0, step=1, limit=1
              $region91: #{deeplab_forward.61} parent=89 // loop_pre_header
                _
              $region92: #{deeplab_forward.61} parent=89 // loop_header
                %s601 = sphi 0, %s605
                %p602 = scmp.ge.s32.totalorder %s601, 1
                %s606 = sphi %s586, %s586
                %s607 = sphi %s595, %s595
              $region93: #{deeplab_forward.61} parent=89 // loop_header_branch
                %604 = sbr.rel (%p602) target = $region97
              $region94: #{deeplab_forward.61} parent=89 // loop_body
                %v608 = vld [vmem:[%s606] sm:$0xff]
                %609 = vst [vmem:[%s607] sm:$0xff] %v608
                %v610 = vld [vmem:[%s606 + $0x8] sm:$0xff]
                %611 = vst [vmem:[%s607 + $0x8] sm:$0xff] %v610
                %v612 = vld [vmem:[%s606 + $0x10] sm:$0xff]
                %613 = vst [vmem:[%s607 + $0x60] sm:$0xff] %v612
                %v614 = vld [vmem:[%s606 + $0x18] sm:$0xff]
                %615 = vst [vmem:[%s607 + $0x68] sm:$0xff] %v614
                %v616 = vld [vmem:[%s606 + $0x20] sm:$0xff]
                %617 = vst [vmem:[%s607 + $0xc0] sm:$0xff] %v616
                %v618 = vld [vmem:[%s606 + $0x28] sm:$0xff]
                %619 = vst [vmem:[%s607 + $0xc8] sm:$0xff] %v618
                %v620 = vld [vmem:[%s606 + $0x30] sm:$0xff]
                %621 = vst [vmem:[%s607 + $0x120] sm:$0xff] %v620
                %v622 = vld [vmem:[%s606 + $0x38] sm:$0xff]
                %623 = vst [vmem:[%s607 + $0x128] sm:$0xff] %v622
              $region95: #{deeplab_forward.61} parent=89 // loop_footer
                %s605 = sadd.s32 1, %s601
              $region96: #{deeplab_forward.61} parent=89 // loop_footer_branch
                %600 = sbr.rel target = $region92
              $region97: #{deeplab_forward.61} parent=89 // loop_exit
                _
            $region90: #{deeplab_forward.61} parent=85 // pred_fallthru
              _
            // Predicated region
            $region98: #{deeplab_forward.61} parent=85 // pred_check
              _
            $region99: #{deeplab_forward.61} parent=85 // pred_check_branch
              %625 = sbr.rel target = $region101
            $region100: #{deeplab_forward.61} parent=85 // pred_region
              _
            $region101: #{deeplab_forward.61} parent=85 // pred_fallthru
              _
          $region86: #{deeplab_forward.61} parent=81 // pred_fallthru
            _
          %626 = vnop
        $region82: #{deeplab_forward.61} parent=65 // pred_fallthru
          _
      $region66: #{deeplab_forward.61} parent=5 // pred_fallthru
        _
      %p627 = scmp.le.s32.totalorder 2, %s9
      // Predicated region
      $region102: #{deeplab_forward.61} parent=5 // pred_check
        %p628 = pneg %p627
      $region103: #{deeplab_forward.61} parent=5 // pred_check_branch
        %630 = sbr.rel (%p628) target = $region105
      $region104: #{deeplab_forward.61} parent=5 // pred_region
        %s631 = ssub.s32 %s9, 2
        // Predicated region
        $region106: #{deeplab_forward.61} parent=104 // pred_check
          %p632 = pneg %p141
        $region107: #{deeplab_forward.61} parent=104 // pred_check_branch
          %634 = sbr.rel (%p632) target = $region109
        $region108: #{deeplab_forward.61} parent=104 // pred_region
          %s635 = sand.u32 %s126, 1
          %s636 = sand.u32 %s126, 1
          %s637 = smul.addr %s636, 64
          %s638 = scalar_lea.vmem [#allocation4], %s637
        $region109: #{deeplab_forward.61} parent=104 // pred_fallthru
          _
      $region105: #{deeplab_forward.61} parent=5 // pred_fallthru
        _
    $region6: #{deeplab_forward.61} parent=1 // loop_footer
      %s13 = sadd.s32 1, %s9
    $region7: #{deeplab_forward.61} parent=1 // loop_footer_branch
      %8 = sbr.rel target = $region3
    $region8: #{deeplab_forward.61} parent=1 // loop_exit
      _

</llo_original>
